<compile_context>
chip_gen: v5e
topology: v5e:2x2
jax: 0.10.0
libtpu: 0.0.40
codegen_flags: <defaults>
</compile_context>

<pallas_src>
import functools
import math

import jax
import jax.numpy as jnp
from jax.experimental import pallas as pl
from jax.experimental.pallas import tpu as pltpu

# Hyper-params: ProDesign(dim=32, layer_num=3)
D = 32            # model dim
H = 8             # attention heads
HD = D // H       # head dim
L = 3             # encoder layers
FF = 4 * D        # feed-forward dim
F_IN = 34         # input feature dim
N_OUT = 20        # output classes
N_OUT_PAD = 128   # lane-dense padded classifier width (sliced back to 20)
EPS = 1e-5        # PyTorch LayerNorm default eps
NEG_BIG = -1e9    # finite key-padding bias (avoids NaN for all-masked rows)


def _round_up(x, m):
    return (x + m - 1) // m * m


def _layer_norm(x, gamma, beta):
    mu = jnp.mean(x, axis=-1, keepdims=True)
    var = jnp.mean((x - mu) ** 2, axis=-1, keepdims=True)
    return (x - mu) * jax.lax.rsqrt(var + EPS) * gamma + beta


def _gelu(x):
    # exact (erf-based) GELU, matching PyTorch activation='gelu'
    return 0.5 * x * (1.0 + jax.lax.erf(x / jnp.sqrt(jnp.float32(2.0))))


def _tile_heads(t, bb, seq):
    # (bb, seq, D) -> (bb, H*seq, D): repeat the seq block once per head along
    # axis 1 (seq == 8 keeps the merge sublane-aligned).
    return jnp.broadcast_to(t[:, None, :, :], (bb, H, seq, D)).reshape(bb, H * seq, D)


def prodesign_kernel(feat_ref, mask_f_ref, mask_big_ref, sel_ref, gsum_ref,
                     w_in_ref, b_in_ref,
                     ln1_g_ref, ln1_b_ref,
                     wq_ref, bq_ref, wk_ref, bk_ref, wv_ref, bv_ref,
                     out_w_ref, out_b_ref, ln2_g_ref, ln2_b_ref,
                     ff1_w_ref, ff1_b_ref, ff2_w_ref, ff2_b_ref,
                     w_fc_ref, b_fc_ref, o_ref, *, bb, seq):
    n_tok = bb * seq
    hs = H * seq

    feat = feat_ref[...]           # (Bb*S, 34)  token-major feature tile
    mask_f = mask_f_ref[...]       # (Bb*S, 1)   token-major mask (for pooling)
    mask_big = mask_big_ref[...]   # (Bb, 1, H*S) key mask tiled per head block

    # Hoisted (computed once per tile): additive key-padding bias, head-block
    # selector broadcast, block-diagonal group-sum matrix.
    kbias = jnp.where(mask_big > 0.5, 0.0, NEG_BIG)                  # (Bb, 1, H*S)
    sel_b = jnp.broadcast_to(sel_ref[...][None], (bb, hs, D))        # (Bb, H*S, D)
    gsum = gsum_ref[...]                                             # (H*S, H*S)

    # Input projection 34 -> D on the whole token tile.
    x = jnp.dot(feat, w_in_ref[...],
                preferred_element_type=jnp.float32) + b_in_ref[...]  # (Bb*S, D)

    for l in range(L):
        # ---- pre-norm multi-head self-attention (scale folded into Wq/bq) ----
        h = _layer_norm(x, ln1_g_ref[l], ln1_b_ref[l])
        q = jnp.dot(h, wq_ref[l], preferred_element_type=jnp.float32) + bq_ref[l]
        k = jnp.dot(h, wk_ref[l], preferred_element_type=jnp.float32) + bk_ref[l]
        v = jnp.dot(h, wv_ref[l], preferred_element_type=jnp.float32) + bv_ref[l]

        q3 = q.reshape(bb, seq, D)
        # Head-block expansion: row h*S+j keeps only head h's channels of
        # token j, so one batched matmul computes all heads' scores at once.
        k_big = _tile_heads(k.reshape(bb, seq, D), bb, seq) * sel_b   # (Bb, H*S, D)
        v_big = _tile_heads(v.reshape(bb, seq, D), bb, seq) * sel_b   # (Bb, H*S, D)

        s = jnp.einsum("bqd,bkd->bqk", q3, k_big,
                       preferred_element_type=jnp.float32) + kbias    # (Bb, S, H*S)
        m = jnp.max(s, axis=-1, keepdims=True)                        # global row max
        e = jnp.exp(s - m)
        # Per-head softmax denominators, broadcast back over the key axis via
        # one dense matmul with the block-diagonal ones matrix.
        denom = jnp.dot(e.reshape(n_tok, hs), gsum,
                        preferred_element_type=jnp.float32).reshape(bb, seq, hs)
        p = e * pl.reciprocal(denom, approx=True)
        ctx = jnp.einsum("bqk,bkd->bqd", p, v_big,
                         preferred_element_type=jnp.float32)          # (Bb, S, D)
        attn = jnp.dot(ctx.reshape(n_tok, D), out_w_ref[l],
                       preferred_element_type=jnp.float32) + out_b_ref[l]
        x = x + attn

        # ---- pre-norm feed-forward block ----
        h = _layer_norm(x, ln2_g_ref[l], ln2_b_ref[l])
        h = jnp.dot(h, ff1_w_ref[l], preferred_element_type=jnp.float32) + ff1_b_ref[l]
        h = _gelu(h)
        h = jnp.dot(h, ff2_w_ref[l], preferred_element_type=jnp.float32) + ff2_b_ref[l]
        x = x + h

    # ---- masked mean pool + classifier head (padded to 128 lanes) ----
    xm = (x * mask_f).reshape(bb, seq, D)                    # zero padded tokens
    pooled = jnp.sum(xm, axis=1)                             # (Bb, D)
    count = jnp.maximum(jnp.sum(mask_big, axis=-1) * (1.0 / H), 1.0)   # (Bb, 1)
    pooled = pooled / count
    o_ref[...] = jnp.dot(pooled, w_fc_ref[...],
                         preferred_element_type=jnp.float32) + b_fc_ref[...]


def prodesign_forward(nei_feature, nei_mask, params, block_b=128):
    """Pallas forward. block_b = batch elements per grid step (VMEM-bounded)."""
    B, S, _ = nei_feature.shape
    s_pad = _round_up(S, 8)
    bb = min(_round_up(B, 8), _round_up(block_b, 8))
    b_pad = _round_up(B, bb)
    hs = H * s_pad

    feat = nei_feature.astype(jnp.float32)
    mask = nei_mask.astype(jnp.float32)
    if s_pad != S:                       # padded tokens are fully masked
        feat = jnp.pad(feat, ((0, 0), (0, s_pad - S), (0, 0)))
        mask = jnp.pad(mask, ((0, 0), (0, s_pad - S)))
    if b_pad != B:                       # padded batch rows are fully masked
        feat = jnp.pad(feat, ((0, b_pad - B), (0, 0), (0, 0)))
        mask = jnp.pad(mask, ((0, b_pad - B), (0, 0)))

    feat_flat = feat.reshape(b_pad * s_pad, F_IN)
    mask_flat = mask.reshape(b_pad * s_pad, 1)
    mask_big = jnp.tile(mask, (1, H)).reshape(b_pad, 1, hs)   # key mask per head block

    # Head-block constants: selector (key slot h*S+j keeps channels of head h)
    # and block-diagonal ones matrix for per-head softmax denominators.
    key_head = jnp.arange(hs) // s_pad                         # (H*S,)
    ch_head = jnp.arange(D) // HD                              # (D,)
    sel_big = (key_head[:, None] == ch_head[None, :]).astype(jnp.float32)   # (H*S, D)
    gsum = (key_head[:, None] == key_head[None, :]).astype(jnp.float32)     # (H*S, H*S)

    # Wrapper-side weight prep: split fused QKV, fold 1/sqrt(HD) into Q,
    # pad classifier head to a lane-dense 128-wide output.
    scale = 1.0 / math.sqrt(HD)
    wq = params["qkv_w"][:, :, :D] * scale
    wk = params["qkv_w"][:, :, D:2 * D]
    wv = params["qkv_w"][:, :, 2 * D:]
    bq = params["qkv_b"][:, :, :D] * scale
    bk = params["qkv_b"][:, :, D:2 * D]
    bv = params["qkv_b"][:, :, 2 * D:]
    w_fc = jnp.pad(params["w_fc"], ((0, 0), (0, N_OUT_PAD - N_OUT)))
    b_fc = jnp.pad(params["b_fc"], ((0, 0), (0, N_OUT_PAD - N_OUT)))

    weights = [params["w_in"], params["b_in"],
               params["ln1_g"], params["ln1_b"],
               wq, bq, wk, bk, wv, bv,
               params["out_w"], params["out_b"],
               params["ln2_g"], params["ln2_b"],
               params["ff1_w"], params["ff1_b"],
               params["ff2_w"], params["ff2_b"],
               w_fc, b_fc]

    def full_spec(a):
        zeros = (0,) * a.ndim
        return pl.BlockSpec(a.shape, lambda b, z=zeros: z)

    in_specs = [
        pl.BlockSpec((bb * s_pad, F_IN), lambda b: (b, 0)),    # token-major features
        pl.BlockSpec((bb * s_pad, 1), lambda b: (b, 0)),       # token-major mask
        pl.BlockSpec((bb, 1, hs), lambda b: (b, 0, 0)),        # head-tiled key mask
        full_spec(sel_big),
        full_spec(gsum),
    ] + [full_spec(w) for w in weights]

    out = pl.pallas_call(
        functools.partial(prodesign_kernel, bb=bb, seq=s_pad),
        out_shape=jax.ShapeDtypeStruct((b_pad, N_OUT_PAD), jnp.float32),
        grid_spec=pltpu.PrefetchScalarGridSpec(
            num_scalar_prefetch=0,
            grid=(b_pad // bb,),
            in_specs=in_specs,
            out_specs=pl.BlockSpec((bb, N_OUT_PAD), lambda b: (b, 0)),
        ),
        compiler_params=pltpu.CompilerParams(
            dimension_semantics=("parallel",),
            vmem_limit_bytes=32 * 1024 * 1024,
        ),
    )(feat_flat, mask_flat, mask_big, sel_big, gsum, *weights)
    return out[:B, :N_OUT]


def init_params(key):
    ks = jax.random.split(key, 16)

    def nrm(k, shape, scale=0.05):
        return scale * jax.random.normal(k, shape, dtype=jnp.float32)

    return dict(
        w_in=nrm(ks[0], (F_IN, D)),
        b_in=nrm(ks[1], (1, D)),
        ln1_g=1.0 + nrm(ks[2], (L, 1, D)),
        ln1_b=nrm(ks[3], (L, 1, D)),
        qkv_w=nrm(ks[4], (L, D, 3 * D)),
        qkv_b=nrm(ks[5], (L, 1, 3 * D)),
        out_w=nrm(ks[6], (L, D, D)),
        out_b=nrm(ks[7], (L, 1, D)),
        ln2_g=1.0 + nrm(ks[8], (L, 1, D)),
        ln2_b=nrm(ks[9], (L, 1, D)),
        ff1_w=nrm(ks[10], (L, D, FF)),
        ff1_b=nrm(ks[11], (L, 1, FF)),
        ff2_w=nrm(ks[12], (L, FF, D)),
        ff2_b=nrm(ks[13], (L, 1, D)),
        w_fc=nrm(ks[14], (D, N_OUT)),
        b_fc=nrm(ks[15], (1, N_OUT)),
    )


def prodesign_ref(nei_feature, nei_mask, params):
    """Pure-JAX reference mirroring the PyTorch forward (dropout = identity)."""
    B, S, _ = nei_feature.shape
    mask = nei_mask.astype(jnp.float32)                      # (B, S)
    x = nei_feature @ params["w_in"] + params["b_in"]        # (B, S, D)
    for l in range(L):
        h = _layer_norm(x, params["ln1_g"][l, 0], params["ln1_b"][l, 0])
        qkv = h @ params["qkv_w"][l] + params["qkv_b"][l, 0]
        q, k, v = qkv[..., :D], qkv[..., D:2 * D], qkv[..., 2 * D:]
        q = q.reshape(B, S, H, HD); k = k.reshape(B, S, H, HD); v = v.reshape(B, S, H, HD)
        s = jnp.einsum("bqhd,bkhd->bhqk", q, k) / math.sqrt(HD)
        s = jnp.where(mask[:, None, None, :] > 0.5, s, -jnp.inf)
        p = jax.nn.softmax(s, axis=-1)
        a = jnp.einsum("bhqk,bkhd->bqhd", p, v).reshape(B, S, D)
        a = a @ params["out_w"][l] + params["out_b"][l, 0]
        x = x + a
        h = _layer_norm(x, params["ln2_g"][l, 0], params["ln2_b"][l, 0])
        h = _gelu(h @ params["ff1_w"][l] + params["ff1_b"][l, 0])
        h = h @ params["ff2_w"][l] + params["ff2_b"][l, 0]
        x = x + h
    pooled = (x * mask[..., None]).sum(1) / jnp.maximum(mask.sum(-1, keepdims=True), 1.0)
    return pooled @ params["w_fc"] + params["b_fc"]


if __name__ == "__main__":
    B, S = 2, 8
    key = jax.random.PRNGKey(0)
    kf, kp = jax.random.split(key)
    nei_feature = jax.random.normal(kf, (B, S, F_IN), dtype=jnp.float32)
    lengths = jnp.array([6, 8], dtype=jnp.int32)             # some padded positions
    nei_mask = jnp.arange(S)[None, :] < lengths[:, None]     # (B, S) bool
    params = init_params(kp)

    out = prodesign_forward(nei_feature, nei_mask, params)
    jax.block_until_ready(out)

    ref = prodesign_ref(nei_feature, nei_mask, params)
    if not bool(jnp.allclose(out, ref, rtol=2e-3, atol=2e-3)):
        raise AssertionError("Pallas kernel output mismatch vs JAX reference")
    print("KERNEL_OK")
</pallas_src>

<mosaic_0001>
module attributes {stable_mosaic.version = 11 : i64} {
  func.func @prodesign_kernel(%arg0: i32, %arg1: memref<64x34xf32, #tpu.memory_space<vmem>>, %arg2: memref<64x1xf32, #tpu.memory_space<vmem>>, %arg3: memref<8x1x64xf32, #tpu.memory_space<vmem>>, %arg4: memref<64x32xf32, #tpu.memory_space<vmem>>, %arg5: memref<64x64xf32, #tpu.memory_space<vmem>>, %arg6: memref<34x32xf32, #tpu.memory_space<vmem>>, %arg7: memref<1x32xf32, #tpu.memory_space<vmem>>, %arg8: memref<3x1x32xf32, #tpu.memory_space<vmem>>, %arg9: memref<3x1x32xf32, #tpu.memory_space<vmem>>, %arg10: memref<3x32x32xf32, #tpu.memory_space<vmem>>, %arg11: memref<3x1x32xf32, #tpu.memory_space<vmem>>, %arg12: memref<3x32x32xf32, #tpu.memory_space<vmem>>, %arg13: memref<3x1x32xf32, #tpu.memory_space<vmem>>, %arg14: memref<3x32x32xf32, #tpu.memory_space<vmem>>, %arg15: memref<3x1x32xf32, #tpu.memory_space<vmem>>, %arg16: memref<3x32x32xf32, #tpu.memory_space<vmem>>, %arg17: memref<3x1x32xf32, #tpu.memory_space<vmem>>, %arg18: memref<3x1x32xf32, #tpu.memory_space<vmem>>, %arg19: memref<3x1x32xf32, #tpu.memory_space<vmem>>, %arg20: memref<3x32x128xf32, #tpu.memory_space<vmem>>, %arg21: memref<3x1x128xf32, #tpu.memory_space<vmem>>, %arg22: memref<3x128x32xf32, #tpu.memory_space<vmem>>, %arg23: memref<3x1x32xf32, #tpu.memory_space<vmem>>, %arg24: memref<32x128xf32, #tpu.memory_space<vmem>>, %arg25: memref<1x128xf32, #tpu.memory_space<vmem>>, %arg26: memref<8x128xf32, #tpu.memory_space<vmem>>) attributes {dimension_semantics = [#tpu.dimension_semantics<parallel>], iteration_bounds = array<i64: 1>, scalar_prefetch = 0 : i64, scratch_operands = 0 : i64, tpu.core_type = #tpu.core_type<tc>, window_params = [{transform_indices = @transform_0, window_bounds = array<i64: 64, 34>}, {transform_indices = @transform_1, window_bounds = array<i64: 64, 1>}, {transform_indices = @transform_2, window_bounds = array<i64: 8, 1, 64>}, {pipeline_mode = #tpu.pipeline_mode<synchronous>, transform_indices = @transform_3, window_bounds = array<i64: 64, 32>}, {pipeline_mode = #tpu.pipeline_mode<synchronous>, transform_indices = @transform_4, window_bounds = array<i64: 64, 64>}, {pipeline_mode = #tpu.pipeline_mode<synchronous>, transform_indices = @transform_5, window_bounds = array<i64: 34, 32>}, {pipeline_mode = #tpu.pipeline_mode<synchronous>, transform_indices = @transform_6, window_bounds = array<i64: 1, 32>}, {pipeline_mode = #tpu.pipeline_mode<synchronous>, transform_indices = @transform_7, window_bounds = array<i64: 3, 1, 32>}, {pipeline_mode = #tpu.pipeline_mode<synchronous>, transform_indices = @transform_8, window_bounds = array<i64: 3, 1, 32>}, {pipeline_mode = #tpu.pipeline_mode<synchronous>, transform_indices = @transform_9, window_bounds = array<i64: 3, 32, 32>}, {pipeline_mode = #tpu.pipeline_mode<synchronous>, transform_indices = @transform_10, window_bounds = array<i64: 3, 1, 32>}, {pipeline_mode = #tpu.pipeline_mode<synchronous>, transform_indices = @transform_11, window_bounds = array<i64: 3, 32, 32>}, {pipeline_mode = #tpu.pipeline_mode<synchronous>, transform_indices = @transform_12, window_bounds = array<i64: 3, 1, 32>}, {pipeline_mode = #tpu.pipeline_mode<synchronous>, transform_indices = @transform_13, window_bounds = array<i64: 3, 32, 32>}, {pipeline_mode = #tpu.pipeline_mode<synchronous>, transform_indices = @transform_14, window_bounds = array<i64: 3, 1, 32>}, {pipeline_mode = #tpu.pipeline_mode<synchronous>, transform_indices = @transform_15, window_bounds = array<i64: 3, 32, 32>}, {pipeline_mode = #tpu.pipeline_mode<synchronous>, transform_indices = @transform_16, window_bounds = array<i64: 3, 1, 32>}, {pipeline_mode = #tpu.pipeline_mode<synchronous>, transform_indices = @transform_17, window_bounds = array<i64: 3, 1, 32>}, {pipeline_mode = #tpu.pipeline_mode<synchronous>, transform_indices = @transform_18, window_bounds = array<i64: 3, 1, 32>}, {pipeline_mode = #tpu.pipeline_mode<synchronous>, transform_indices = @transform_19, window_bounds = array<i64: 3, 32, 128>}, {pipeline_mode = #tpu.pipeline_mode<synchronous>, transform_indices = @transform_20, window_bounds = array<i64: 3, 1, 128>}, {pipeline_mode = #tpu.pipeline_mode<synchronous>, transform_indices = @transform_21, window_bounds = array<i64: 3, 128, 32>}, {pipeline_mode = #tpu.pipeline_mode<synchronous>, transform_indices = @transform_22, window_bounds = array<i64: 3, 1, 32>}, {pipeline_mode = #tpu.pipeline_mode<synchronous>, transform_indices = @transform_23, window_bounds = array<i64: 32, 128>}, {pipeline_mode = #tpu.pipeline_mode<synchronous>, transform_indices = @transform_24, window_bounds = array<i64: 1, 128>}, {transform_indices = @transform_25, window_bounds = array<i64: 8, 128>}]} {
    %c0 = arith.constant 0 : index
    %c0_0 = arith.constant 0 : index
    %0 = vector.load %arg1[%c0, %c0_0] : memref<64x34xf32, #tpu.memory_space<vmem>>, vector<64x34xf32>
    %c0_1 = arith.constant 0 : index
    %c0_2 = arith.constant 0 : index
    %1 = vector.load %arg2[%c0_1, %c0_2] : memref<64x1xf32, #tpu.memory_space<vmem>>, vector<64x1xf32>
    %c0_3 = arith.constant 0 : index
    %c0_4 = arith.constant 0 : index
    %c0_5 = arith.constant 0 : index
    %2 = vector.load %arg3[%c0_3, %c0_4, %c0_5] : memref<8x1x64xf32, #tpu.memory_space<vmem>>, vector<8x1x64xf32>
    %cst = arith.constant 5.000000e-01 : f32
    %3 = vector.broadcast %cst : f32 to vector<8x1x64xf32>
    %4 = arith.cmpf ogt, %2, %3 : vector<8x1x64xf32>
    %cst_6 = arith.constant 0.000000e+00 : f32
    %cst_7 = arith.constant -1.000000e+09 : f32
    %5 = vector.broadcast %cst_6 : f32 to vector<8x1x64xf32>
    %6 = vector.broadcast %cst_7 : f32 to vector<8x1x64xf32>
    %7 = arith.select %4, %5, %6 : vector<8x1x64xi1>, vector<8x1x64xf32>
    %c0_8 = arith.constant 0 : index
    %c0_9 = arith.constant 0 : index
    %8 = vector.load %arg4[%c0_8, %c0_9] : memref<64x32xf32, #tpu.memory_space<vmem>>, vector<64x32xf32>
    %9 = vector.shape_cast %8 : vector<64x32xf32> to vector<1x64x32xf32>
    %10 = vector.shape_cast %9 : vector<1x64x32xf32> to vector<1x64x32xf32>
    %11 = vector.broadcast %10 : vector<1x64x32xf32> to vector<8x64x32xf32>
    %c0_10 = arith.constant 0 : index
    %c0_11 = arith.constant 0 : index
    %12 = vector.load %arg5[%c0_10, %c0_11] : memref<64x64xf32, #tpu.memory_space<vmem>>, vector<64x64xf32>
    %c0_12 = arith.constant 0 : index
    %c0_13 = arith.constant 0 : index
    %13 = vector.load %arg6[%c0_12, %c0_13] : memref<34x32xf32, #tpu.memory_space<vmem>>, vector<34x32xf32>
    %cst_14 = arith.constant dense<0.000000e+00> : vector<64x32xf32>
    %14 = tpu.matmul %0, %13, %cst_14 {dimension_numbers = #tpu.dot_dimension_numbers<[1], [0], [0], [1], [0, 0, 1, 1], [], []>} : vector<64x34xf32>, vector<34x32xf32>, vector<64x32xf32> -> vector<64x32xf32>
    %c0_15 = arith.constant 0 : index
    %c0_16 = arith.constant 0 : index
    %15 = vector.load %arg7[%c0_15, %c0_16] : memref<1x32xf32, #tpu.memory_space<vmem>>, vector<1x32xf32>
    %16 = vector.broadcast %15 : vector<1x32xf32> to vector<64x32xf32>
    %17 = arith.addf %14, %16 : vector<64x32xf32>
    %c0_17 = arith.constant 0 : index
    %c0_18 = arith.constant 0 : index
    %c0_19 = arith.constant 0 : index
    %18 = vector.load %arg8[%c0_17, %c0_18, %c0_19] : memref<3x1x32xf32, #tpu.memory_space<vmem>>, vector<1x1x32xf32>
    %19 = vector.shape_cast %18 : vector<1x1x32xf32> to vector<1x32xf32>
    %c0_20 = arith.constant 0 : index
    %c0_21 = arith.constant 0 : index
    %c0_22 = arith.constant 0 : index
    %20 = vector.load %arg9[%c0_20, %c0_21, %c0_22] : memref<3x1x32xf32, #tpu.memory_space<vmem>>, vector<1x1x32xf32>
    %21 = vector.shape_cast %20 : vector<1x1x32xf32> to vector<1x32xf32>
    %cst_23 = arith.constant dense<0.000000e+00> : vector<64xf32>
    %22 = vector.multi_reduction <add>, %17, %cst_23 [1] : vector<64x32xf32> to vector<64xf32>
    %23 = vector.shape_cast %22 : vector<64xf32> to vector<64x1xf32>
    %cst_24 = arith.constant 3.200000e+01 : f32
    %24 = vector.broadcast %cst_24 : f32 to vector<64x1xf32>
    %25 = arith.divf %23, %24 : vector<64x1xf32>
    %26 = vector.broadcast %25 : vector<64x1xf32> to vector<64x32xf32>
    %27 = arith.subf %17, %26 : vector<64x32xf32>
    %28 = arith.mulf %27, %27 : vector<64x32xf32>
    %cst_25 = arith.constant dense<0.000000e+00> : vector<64xf32>
    %29 = vector.multi_reduction <add>, %28, %cst_25 [1] : vector<64x32xf32> to vector<64xf32>
    %30 = vector.shape_cast %29 : vector<64xf32> to vector<64x1xf32>
    %cst_26 = arith.constant 3.200000e+01 : f32
    %31 = vector.broadcast %cst_26 : f32 to vector<64x1xf32>
    %32 = arith.divf %30, %31 : vector<64x1xf32>
    %33 = vector.broadcast %25 : vector<64x1xf32> to vector<64x32xf32>
    %34 = arith.subf %17, %33 : vector<64x32xf32>
    %cst_27 = arith.constant 9.99999974E-6 : f32
    %35 = vector.broadcast %cst_27 : f32 to vector<64x1xf32>
    %36 = arith.addf %32, %35 : vector<64x1xf32>
    %37 = math.rsqrt %36 : vector<64x1xf32>
    %38 = vector.broadcast %37 : vector<64x1xf32> to vector<64x32xf32>
    %39 = arith.mulf %34, %38 : vector<64x32xf32>
    %40 = vector.broadcast %19 : vector<1x32xf32> to vector<64x32xf32>
    %41 = arith.mulf %39, %40 : vector<64x32xf32>
    %42 = vector.broadcast %21 : vector<1x32xf32> to vector<64x32xf32>
    %43 = arith.addf %41, %42 : vector<64x32xf32>
    %c0_28 = arith.constant 0 : index
    %c0_29 = arith.constant 0 : index
    %c0_30 = arith.constant 0 : index
    %44 = vector.load %arg10[%c0_28, %c0_29, %c0_30] : memref<3x32x32xf32, #tpu.memory_space<vmem>>, vector<1x32x32xf32>
    %45 = vector.shape_cast %44 : vector<1x32x32xf32> to vector<32x32xf32>
    %cst_31 = arith.constant dense<0.000000e+00> : vector<64x32xf32>
    %46 = tpu.matmul %43, %45, %cst_31 {dimension_numbers = #tpu.dot_dimension_numbers<[1], [0], [0], [1], [0, 0, 1, 1], [], []>} : vector<64x32xf32>, vector<32x32xf32>, vector<64x32xf32> -> vector<64x32xf32>
    %c0_32 = arith.constant 0 : index
    %c0_33 = arith.constant 0 : index
    %c0_34 = arith.constant 0 : index
    %47 = vector.load %arg11[%c0_32, %c0_33, %c0_34] : memref<3x1x32xf32, #tpu.memory_space<vmem>>, vector<1x1x32xf32>
    %48 = vector.shape_cast %47 : vector<1x1x32xf32> to vector<1x32xf32>
    %49 = vector.broadcast %48 : vector<1x32xf32> to vector<64x32xf32>
    %50 = arith.addf %46, %49 : vector<64x32xf32>
    %c0_35 = arith.constant 0 : index
    %c0_36 = arith.constant 0 : index
    %c0_37 = arith.constant 0 : index
    %51 = vector.load %arg12[%c0_35, %c0_36, %c0_37] : memref<3x32x32xf32, #tpu.memory_space<vmem>>, vector<1x32x32xf32>
    %52 = vector.shape_cast %51 : vector<1x32x32xf32> to vector<32x32xf32>
    %cst_38 = arith.constant dense<0.000000e+00> : vector<64x32xf32>
    %53 = tpu.matmul %43, %52, %cst_38 {dimension_numbers = #tpu.dot_dimension_numbers<[1], [0], [0], [1], [0, 0, 1, 1], [], []>} : vector<64x32xf32>, vector<32x32xf32>, vector<64x32xf32> -> vector<64x32xf32>
    %c0_39 = arith.constant 0 : index
    %c0_40 = arith.constant 0 : index
    %c0_41 = arith.constant 0 : index
    %54 = vector.load %arg13[%c0_39, %c0_40, %c0_41] : memref<3x1x32xf32, #tpu.memory_space<vmem>>, vector<1x1x32xf32>
    %55 = vector.shape_cast %54 : vector<1x1x32xf32> to vector<1x32xf32>
    %56 = vector.broadcast %55 : vector<1x32xf32> to vector<64x32xf32>
    %57 = arith.addf %53, %56 : vector<64x32xf32>
    %c0_42 = arith.constant 0 : index
    %c0_43 = arith.constant 0 : index
    %c0_44 = arith.constant 0 : index
    %58 = vector.load %arg14[%c0_42, %c0_43, %c0_44] : memref<3x32x32xf32, #tpu.memory_space<vmem>>, vector<1x32x32xf32>
    %59 = vector.shape_cast %58 : vector<1x32x32xf32> to vector<32x32xf32>
    %cst_45 = arith.constant dense<0.000000e+00> : vector<64x32xf32>
    %60 = tpu.matmul %43, %59, %cst_45 {dimension_numbers = #tpu.dot_dimension_numbers<[1], [0], [0], [1], [0, 0, 1, 1], [], []>} : vector<64x32xf32>, vector<32x32xf32>, vector<64x32xf32> -> vector<64x32xf32>
    %c0_46 = arith.constant 0 : index
    %c0_47 = arith.constant 0 : index
    %c0_48 = arith.constant 0 : index
    %61 = vector.load %arg15[%c0_46, %c0_47, %c0_48] : memref<3x1x32xf32, #tpu.memory_space<vmem>>, vector<1x1x32xf32>
    %62 = vector.shape_cast %61 : vector<1x1x32xf32> to vector<1x32xf32>
    %63 = vector.broadcast %62 : vector<1x32xf32> to vector<64x32xf32>
    %64 = arith.addf %60, %63 : vector<64x32xf32>
    %65 = vector.shape_cast %50 : vector<64x32xf32> to vector<8x8x32xf32>
    %66 = vector.shape_cast %57 : vector<64x32xf32> to vector<8x8x32xf32>
    %67 = vector.shape_cast %66 : vector<8x8x32xf32> to vector<8x1x8x32xf32>
    %68 = vector.shape_cast %67 : vector<8x1x8x32xf32> to vector<8x1x8x32xf32>
    %69 = vector.broadcast %68 : vector<8x1x8x32xf32> to vector<8x8x8x32xf32>
    %70 = vector.shape_cast %69 : vector<8x8x8x32xf32> to vector<8x64x32xf32>
    %71 = arith.mulf %70, %11 : vector<8x64x32xf32>
    %72 = vector.shape_cast %64 : vector<64x32xf32> to vector<8x8x32xf32>
    %73 = vector.shape_cast %72 : vector<8x8x32xf32> to vector<8x1x8x32xf32>
    %74 = vector.shape_cast %73 : vector<8x1x8x32xf32> to vector<8x1x8x32xf32>
    %75 = vector.broadcast %74 : vector<8x1x8x32xf32> to vector<8x8x8x32xf32>
    %76 = vector.shape_cast %75 : vector<8x8x8x32xf32> to vector<8x64x32xf32>
    %77 = arith.mulf %76, %11 : vector<8x64x32xf32>
    "tpu.trace_start"() <{level = 10 : i32, message = "bqd,bkd->bqk"}> : () -> ()
    %cst_49 = arith.constant dense<0.000000e+00> : vector<8x8x64xf32>
    %78 = tpu.matmul %65, %71, %cst_49 {dimension_numbers = #tpu.dot_dimension_numbers<[2], [2], [1], [1], [0, 0, 0, 1, 1, 1], [0], [0]>} : vector<8x8x32xf32>, vector<8x64x32xf32>, vector<8x8x64xf32> -> vector<8x8x64xf32>
    "tpu.trace_stop"() : () -> ()
    %79 = vector.broadcast %7 : vector<8x1x64xf32> to vector<8x8x64xf32>
    %80 = arith.addf %78, %79 : vector<8x8x64xf32>
    %cst_50 = arith.constant dense<0xFF800000> : vector<8x8xf32>
    %81 = vector.multi_reduction <maximumf>, %80, %cst_50 [2] : vector<8x8x64xf32> to vector<8x8xf32>
    %82 = vector.shape_cast %81 : vector<8x8xf32> to vector<8x8x1xf32>
    %83 = vector.broadcast %82 : vector<8x8x1xf32> to vector<8x8x64xf32>
    %84 = arith.subf %80, %83 : vector<8x8x64xf32>
    %85 = math.exp %84 : vector<8x8x64xf32>
    %86 = vector.shape_cast %85 : vector<8x8x64xf32> to vector<64x64xf32>
    %cst_51 = arith.constant dense<0.000000e+00> : vector<64x64xf32>
    %87 = tpu.matmul %86, %12, %cst_51 {dimension_numbers = #tpu.dot_dimension_numbers<[1], [0], [0], [1], [0, 0, 1, 1], [], []>} : vector<64x64xf32>, vector<64x64xf32>, vector<64x64xf32> -> vector<64x64xf32>
    %88 = vector.shape_cast %87 : vector<64x64xf32> to vector<8x8x64xf32>
    %89 = tpu.reciprocal %88 {approx = true} : vector<8x8x64xf32> -> vector<8x8x64xf32>
    %90 = arith.mulf %85, %89 : vector<8x8x64xf32>
    "tpu.trace_start"() <{level = 10 : i32, message = "bqk,bkd->bqd"}> : () -> ()
    %cst_52 = arith.constant dense<0.000000e+00> : vector<8x8x32xf32>
    %91 = tpu.matmul %90, %77, %cst_52 {dimension_numbers = #tpu.dot_dimension_numbers<[2], [1], [1], [2], [0, 0, 0, 1, 1, 2], [0], [0]>} : vector<8x8x64xf32>, vector<8x64x32xf32>, vector<8x8x32xf32> -> vector<8x8x32xf32>
    "tpu.trace_stop"() : () -> ()
    %92 = vector.shape_cast %91 : vector<8x8x32xf32> to vector<64x32xf32>
    %c0_53 = arith.constant 0 : index
    %c0_54 = arith.constant 0 : index
    %c0_55 = arith.constant 0 : index
    %93 = vector.load %arg16[%c0_53, %c0_54, %c0_55] : memref<3x32x32xf32, #tpu.memory_space<vmem>>, vector<1x32x32xf32>
    %94 = vector.shape_cast %93 : vector<1x32x32xf32> to vector<32x32xf32>
    %cst_56 = arith.constant dense<0.000000e+00> : vector<64x32xf32>
    %95 = tpu.matmul %92, %94, %cst_56 {dimension_numbers = #tpu.dot_dimension_numbers<[1], [0], [0], [1], [0, 0, 1, 1], [], []>} : vector<64x32xf32>, vector<32x32xf32>, vector<64x32xf32> -> vector<64x32xf32>
    %c0_57 = arith.constant 0 : index
    %c0_58 = arith.constant 0 : index
    %c0_59 = arith.constant 0 : index
    %96 = vector.load %arg17[%c0_57, %c0_58, %c0_59] : memref<3x1x32xf32, #tpu.memory_space<vmem>>, vector<1x1x32xf32>
    %97 = vector.shape_cast %96 : vector<1x1x32xf32> to vector<1x32xf32>
    %98 = vector.broadcast %97 : vector<1x32xf32> to vector<64x32xf32>
    %99 = arith.addf %95, %98 : vector<64x32xf32>
    %100 = arith.addf %17, %99 : vector<64x32xf32>
    %c0_60 = arith.constant 0 : index
    %c0_61 = arith.constant 0 : index
    %c0_62 = arith.constant 0 : index
    %101 = vector.load %arg18[%c0_60, %c0_61, %c0_62] : memref<3x1x32xf32, #tpu.memory_space<vmem>>, vector<1x1x32xf32>
    %102 = vector.shape_cast %101 : vector<1x1x32xf32> to vector<1x32xf32>
    %c0_63 = arith.constant 0 : index
    %c0_64 = arith.constant 0 : index
    %c0_65 = arith.constant 0 : index
    %103 = vector.load %arg19[%c0_63, %c0_64, %c0_65] : memref<3x1x32xf32, #tpu.memory_space<vmem>>, vector<1x1x32xf32>
    %104 = vector.shape_cast %103 : vector<1x1x32xf32> to vector<1x32xf32>
    %cst_66 = arith.constant dense<0.000000e+00> : vector<64xf32>
    %105 = vector.multi_reduction <add>, %100, %cst_66 [1] : vector<64x32xf32> to vector<64xf32>
    %106 = vector.shape_cast %105 : vector<64xf32> to vector<64x1xf32>
    %cst_67 = arith.constant 3.200000e+01 : f32
    %107 = vector.broadcast %cst_67 : f32 to vector<64x1xf32>
    %108 = arith.divf %106, %107 : vector<64x1xf32>
    %109 = vector.broadcast %108 : vector<64x1xf32> to vector<64x32xf32>
    %110 = arith.subf %100, %109 : vector<64x32xf32>
    %111 = arith.mulf %110, %110 : vector<64x32xf32>
    %cst_68 = arith.constant dense<0.000000e+00> : vector<64xf32>
    %112 = vector.multi_reduction <add>, %111, %cst_68 [1] : vector<64x32xf32> to vector<64xf32>
    %113 = vector.shape_cast %112 : vector<64xf32> to vector<64x1xf32>
    %cst_69 = arith.constant 3.200000e+01 : f32
    %114 = vector.broadcast %cst_69 : f32 to vector<64x1xf32>
    %115 = arith.divf %113, %114 : vector<64x1xf32>
    %116 = vector.broadcast %108 : vector<64x1xf32> to vector<64x32xf32>
    %117 = arith.subf %100, %116 : vector<64x32xf32>
    %cst_70 = arith.constant 9.99999974E-6 : f32
    %118 = vector.broadcast %cst_70 : f32 to vector<64x1xf32>
    %119 = arith.addf %115, %118 : vector<64x1xf32>
    %120 = math.rsqrt %119 : vector<64x1xf32>
    %121 = vector.broadcast %120 : vector<64x1xf32> to vector<64x32xf32>
    %122 = arith.mulf %117, %121 : vector<64x32xf32>
    %123 = vector.broadcast %102 : vector<1x32xf32> to vector<64x32xf32>
    %124 = arith.mulf %122, %123 : vector<64x32xf32>
    %125 = vector.broadcast %104 : vector<1x32xf32> to vector<64x32xf32>
    %126 = arith.addf %124, %125 : vector<64x32xf32>
    %c0_71 = arith.constant 0 : index
    %c0_72 = arith.constant 0 : index
    %c0_73 = arith.constant 0 : index
    %127 = vector.load %arg20[%c0_71, %c0_72, %c0_73] : memref<3x32x128xf32, #tpu.memory_space<vmem>>, vector<1x32x128xf32>
    %128 = vector.shape_cast %127 : vector<1x32x128xf32> to vector<32x128xf32>
    %cst_74 = arith.constant dense<0.000000e+00> : vector<64x128xf32>
    %129 = tpu.matmul %126, %128, %cst_74 {dimension_numbers = #tpu.dot_dimension_numbers<[1], [0], [0], [1], [0, 0, 1, 1], [], []>} : vector<64x32xf32>, vector<32x128xf32>, vector<64x128xf32> -> vector<64x128xf32>
    %c0_75 = arith.constant 0 : index
    %c0_76 = arith.constant 0 : index
    %c0_77 = arith.constant 0 : index
    %130 = vector.load %arg21[%c0_75, %c0_76, %c0_77] : memref<3x1x128xf32, #tpu.memory_space<vmem>>, vector<1x1x128xf32>
    %131 = vector.shape_cast %130 : vector<1x1x128xf32> to vector<1x128xf32>
    %132 = vector.broadcast %131 : vector<1x128xf32> to vector<64x128xf32>
    %133 = arith.addf %129, %132 : vector<64x128xf32>
    %cst_78 = arith.constant 5.000000e-01 : f32
    %134 = vector.broadcast %cst_78 : f32 to vector<64x128xf32>
    %135 = arith.mulf %134, %133 : vector<64x128xf32>
    %cst_79 = arith.constant 2.000000e+00 : f32
    %136 = math.sqrt %cst_79 : f32
    %137 = vector.broadcast %136 : f32 to vector<64x128xf32>
    %138 = arith.divf %133, %137 : vector<64x128xf32>
    %139 = math.erf %138 : vector<64x128xf32>
    %cst_80 = arith.constant 1.000000e+00 : f32
    %140 = vector.broadcast %cst_80 : f32 to vector<64x128xf32>
    %141 = arith.addf %140, %139 : vector<64x128xf32>
    %142 = arith.mulf %135, %141 : vector<64x128xf32>
    %c0_81 = arith.constant 0 : index
    %c0_82 = arith.constant 0 : index
    %c0_83 = arith.constant 0 : index
    %143 = vector.load %arg22[%c0_81, %c0_82, %c0_83] : memref<3x128x32xf32, #tpu.memory_space<vmem>>, vector<1x128x32xf32>
    %144 = vector.shape_cast %143 : vector<1x128x32xf32> to vector<128x32xf32>
    %cst_84 = arith.constant dense<0.000000e+00> : vector<64x32xf32>
    %145 = tpu.matmul %142, %144, %cst_84 {dimension_numbers = #tpu.dot_dimension_numbers<[1], [0], [0], [1], [0, 0, 1, 1], [], []>} : vector<64x128xf32>, vector<128x32xf32>, vector<64x32xf32> -> vector<64x32xf32>
    %c0_85 = arith.constant 0 : index
    %c0_86 = arith.constant 0 : index
    %c0_87 = arith.constant 0 : index
    %146 = vector.load %arg23[%c0_85, %c0_86, %c0_87] : memref<3x1x32xf32, #tpu.memory_space<vmem>>, vector<1x1x32xf32>
    %147 = vector.shape_cast %146 : vector<1x1x32xf32> to vector<1x32xf32>
    %148 = vector.broadcast %147 : vector<1x32xf32> to vector<64x32xf32>
    %149 = arith.addf %145, %148 : vector<64x32xf32>
    %150 = arith.addf %100, %149 : vector<64x32xf32>
    %c1 = arith.constant 1 : index
    %c0_88 = arith.constant 0 : index
    %c0_89 = arith.constant 0 : index
    %151 = vector.load %arg8[%c1, %c0_88, %c0_89] : memref<3x1x32xf32, #tpu.memory_space<vmem>>, vector<1x1x32xf32>
    %152 = vector.shape_cast %151 : vector<1x1x32xf32> to vector<1x32xf32>
    %c1_90 = arith.constant 1 : index
    %c0_91 = arith.constant 0 : index
    %c0_92 = arith.constant 0 : index
    %153 = vector.load %arg9[%c1_90, %c0_91, %c0_92] : memref<3x1x32xf32, #tpu.memory_space<vmem>>, vector<1x1x32xf32>
    %154 = vector.shape_cast %153 : vector<1x1x32xf32> to vector<1x32xf32>
    %cst_93 = arith.constant dense<0.000000e+00> : vector<64xf32>
    %155 = vector.multi_reduction <add>, %150, %cst_93 [1] : vector<64x32xf32> to vector<64xf32>
    %156 = vector.shape_cast %155 : vector<64xf32> to vector<64x1xf32>
    %cst_94 = arith.constant 3.200000e+01 : f32
    %157 = vector.broadcast %cst_94 : f32 to vector<64x1xf32>
    %158 = arith.divf %156, %157 : vector<64x1xf32>
    %159 = vector.broadcast %158 : vector<64x1xf32> to vector<64x32xf32>
    %160 = arith.subf %150, %159 : vector<64x32xf32>
    %161 = arith.mulf %160, %160 : vector<64x32xf32>
    %cst_95 = arith.constant dense<0.000000e+00> : vector<64xf32>
    %162 = vector.multi_reduction <add>, %161, %cst_95 [1] : vector<64x32xf32> to vector<64xf32>
    %163 = vector.shape_cast %162 : vector<64xf32> to vector<64x1xf32>
    %cst_96 = arith.constant 3.200000e+01 : f32
    %164 = vector.broadcast %cst_96 : f32 to vector<64x1xf32>
    %165 = arith.divf %163, %164 : vector<64x1xf32>
    %166 = vector.broadcast %158 : vector<64x1xf32> to vector<64x32xf32>
    %167 = arith.subf %150, %166 : vector<64x32xf32>
    %cst_97 = arith.constant 9.99999974E-6 : f32
    %168 = vector.broadcast %cst_97 : f32 to vector<64x1xf32>
    %169 = arith.addf %165, %168 : vector<64x1xf32>
    %170 = math.rsqrt %169 : vector<64x1xf32>
    %171 = vector.broadcast %170 : vector<64x1xf32> to vector<64x32xf32>
    %172 = arith.mulf %167, %171 : vector<64x32xf32>
    %173 = vector.broadcast %152 : vector<1x32xf32> to vector<64x32xf32>
    %174 = arith.mulf %172, %173 : vector<64x32xf32>
    %175 = vector.broadcast %154 : vector<1x32xf32> to vector<64x32xf32>
    %176 = arith.addf %174, %175 : vector<64x32xf32>
    %c1_98 = arith.constant 1 : index
    %c0_99 = arith.constant 0 : index
    %c0_100 = arith.constant 0 : index
    %177 = vector.load %arg10[%c1_98, %c0_99, %c0_100] : memref<3x32x32xf32, #tpu.memory_space<vmem>>, vector<1x32x32xf32>
    %178 = vector.shape_cast %177 : vector<1x32x32xf32> to vector<32x32xf32>
    %cst_101 = arith.constant dense<0.000000e+00> : vector<64x32xf32>
    %179 = tpu.matmul %176, %178, %cst_101 {dimension_numbers = #tpu.dot_dimension_numbers<[1], [0], [0], [1], [0, 0, 1, 1], [], []>} : vector<64x32xf32>, vector<32x32xf32>, vector<64x32xf32> -> vector<64x32xf32>
    %c1_102 = arith.constant 1 : index
    %c0_103 = arith.constant 0 : index
    %c0_104 = arith.constant 0 : index
    %180 = vector.load %arg11[%c1_102, %c0_103, %c0_104] : memref<3x1x32xf32, #tpu.memory_space<vmem>>, vector<1x1x32xf32>
    %181 = vector.shape_cast %180 : vector<1x1x32xf32> to vector<1x32xf32>
    %182 = vector.broadcast %181 : vector<1x32xf32> to vector<64x32xf32>
    %183 = arith.addf %179, %182 : vector<64x32xf32>
    %c1_105 = arith.constant 1 : index
    %c0_106 = arith.constant 0 : index
    %c0_107 = arith.constant 0 : index
    %184 = vector.load %arg12[%c1_105, %c0_106, %c0_107] : memref<3x32x32xf32, #tpu.memory_space<vmem>>, vector<1x32x32xf32>
    %185 = vector.shape_cast %184 : vector<1x32x32xf32> to vector<32x32xf32>
    %cst_108 = arith.constant dense<0.000000e+00> : vector<64x32xf32>
    %186 = tpu.matmul %176, %185, %cst_108 {dimension_numbers = #tpu.dot_dimension_numbers<[1], [0], [0], [1], [0, 0, 1, 1], [], []>} : vector<64x32xf32>, vector<32x32xf32>, vector<64x32xf32> -> vector<64x32xf32>
    %c1_109 = arith.constant 1 : index
    %c0_110 = arith.constant 0 : index
    %c0_111 = arith.constant 0 : index
    %187 = vector.load %arg13[%c1_109, %c0_110, %c0_111] : memref<3x1x32xf32, #tpu.memory_space<vmem>>, vector<1x1x32xf32>
    %188 = vector.shape_cast %187 : vector<1x1x32xf32> to vector<1x32xf32>
    %189 = vector.broadcast %188 : vector<1x32xf32> to vector<64x32xf32>
    %190 = arith.addf %186, %189 : vector<64x32xf32>
    %c1_112 = arith.constant 1 : index
    %c0_113 = arith.constant 0 : index
    %c0_114 = arith.constant 0 : index
    %191 = vector.load %arg14[%c1_112, %c0_113, %c0_114] : memref<3x32x32xf32, #tpu.memory_space<vmem>>, vector<1x32x32xf32>
    %192 = vector.shape_cast %191 : vector<1x32x32xf32> to vector<32x32xf32>
    %cst_115 = arith.constant dense<0.000000e+00> : vector<64x32xf32>
    %193 = tpu.matmul %176, %192, %cst_115 {dimension_numbers = #tpu.dot_dimension_numbers<[1], [0], [0], [1], [0, 0, 1, 1], [], []>} : vector<64x32xf32>, vector<32x32xf32>, vector<64x32xf32> -> vector<64x32xf32>
    %c1_116 = arith.constant 1 : index
    %c0_117 = arith.constant 0 : index
    %c0_118 = arith.constant 0 : index
    %194 = vector.load %arg15[%c1_116, %c0_117, %c0_118] : memref<3x1x32xf32, #tpu.memory_space<vmem>>, vector<1x1x32xf32>
    %195 = vector.shape_cast %194 : vector<1x1x32xf32> to vector<1x32xf32>
    %196 = vector.broadcast %195 : vector<1x32xf32> to vector<64x32xf32>
    %197 = arith.addf %193, %196 : vector<64x32xf32>
    %198 = vector.shape_cast %183 : vector<64x32xf32> to vector<8x8x32xf32>
    %199 = vector.shape_cast %190 : vector<64x32xf32> to vector<8x8x32xf32>
    %200 = vector.shape_cast %199 : vector<8x8x32xf32> to vector<8x1x8x32xf32>
    %201 = vector.shape_cast %200 : vector<8x1x8x32xf32> to vector<8x1x8x32xf32>
    %202 = vector.broadcast %201 : vector<8x1x8x32xf32> to vector<8x8x8x32xf32>
    %203 = vector.shape_cast %202 : vector<8x8x8x32xf32> to vector<8x64x32xf32>
    %204 = arith.mulf %203, %11 : vector<8x64x32xf32>
    %205 = vector.shape_cast %197 : vector<64x32xf32> to vector<8x8x32xf32>
    %206 = vector.shape_cast %205 : vector<8x8x32xf32> to vector<8x1x8x32xf32>
    %207 = vector.shape_cast %206 : vector<8x1x8x32xf32> to vector<8x1x8x32xf32>
    %208 = vector.broadcast %207 : vector<8x1x8x32xf32> to vector<8x8x8x32xf32>
    %209 = vector.shape_cast %208 : vector<8x8x8x32xf32> to vector<8x64x32xf32>
    %210 = arith.mulf %209, %11 : vector<8x64x32xf32>
    "tpu.trace_start"() <{level = 10 : i32, message = "bqd,bkd->bqk"}> : () -> ()
    %cst_119 = arith.constant dense<0.000000e+00> : vector<8x8x64xf32>
    %211 = tpu.matmul %198, %204, %cst_119 {dimension_numbers = #tpu.dot_dimension_numbers<[2], [2], [1], [1], [0, 0, 0, 1, 1, 1], [0], [0]>} : vector<8x8x32xf32>, vector<8x64x32xf32>, vector<8x8x64xf32> -> vector<8x8x64xf32>
    "tpu.trace_stop"() : () -> ()
    %212 = vector.broadcast %7 : vector<8x1x64xf32> to vector<8x8x64xf32>
    %213 = arith.addf %211, %212 : vector<8x8x64xf32>
    %cst_120 = arith.constant dense<0xFF800000> : vector<8x8xf32>
    %214 = vector.multi_reduction <maximumf>, %213, %cst_120 [2] : vector<8x8x64xf32> to vector<8x8xf32>
    %215 = vector.shape_cast %214 : vector<8x8xf32> to vector<8x8x1xf32>
    %216 = vector.broadcast %215 : vector<8x8x1xf32> to vector<8x8x64xf32>
    %217 = arith.subf %213, %216 : vector<8x8x64xf32>
    %218 = math.exp %217 : vector<8x8x64xf32>
    %219 = vector.shape_cast %218 : vector<8x8x64xf32> to vector<64x64xf32>
    %cst_121 = arith.constant dense<0.000000e+00> : vector<64x64xf32>
    %220 = tpu.matmul %219, %12, %cst_121 {dimension_numbers = #tpu.dot_dimension_numbers<[1], [0], [0], [1], [0, 0, 1, 1], [], []>} : vector<64x64xf32>, vector<64x64xf32>, vector<64x64xf32> -> vector<64x64xf32>
    %221 = vector.shape_cast %220 : vector<64x64xf32> to vector<8x8x64xf32>
    %222 = tpu.reciprocal %221 {approx = true} : vector<8x8x64xf32> -> vector<8x8x64xf32>
    %223 = arith.mulf %218, %222 : vector<8x8x64xf32>
    "tpu.trace_start"() <{level = 10 : i32, message = "bqk,bkd->bqd"}> : () -> ()
    %cst_122 = arith.constant dense<0.000000e+00> : vector<8x8x32xf32>
    %224 = tpu.matmul %223, %210, %cst_122 {dimension_numbers = #tpu.dot_dimension_numbers<[2], [1], [1], [2], [0, 0, 0, 1, 1, 2], [0], [0]>} : vector<8x8x64xf32>, vector<8x64x32xf32>, vector<8x8x32xf32> -> vector<8x8x32xf32>
    "tpu.trace_stop"() : () -> ()
    %225 = vector.shape_cast %224 : vector<8x8x32xf32> to vector<64x32xf32>
    %c1_123 = arith.constant 1 : index
    %c0_124 = arith.constant 0 : index
    %c0_125 = arith.constant 0 : index
    %226 = vector.load %arg16[%c1_123, %c0_124, %c0_125] : memref<3x32x32xf32, #tpu.memory_space<vmem>>, vector<1x32x32xf32>
    %227 = vector.shape_cast %226 : vector<1x32x32xf32> to vector<32x32xf32>
    %cst_126 = arith.constant dense<0.000000e+00> : vector<64x32xf32>
    %228 = tpu.matmul %225, %227, %cst_126 {dimension_numbers = #tpu.dot_dimension_numbers<[1], [0], [0], [1], [0, 0, 1, 1], [], []>} : vector<64x32xf32>, vector<32x32xf32>, vector<64x32xf32> -> vector<64x32xf32>
    %c1_127 = arith.constant 1 : index
    %c0_128 = arith.constant 0 : index
    %c0_129 = arith.constant 0 : index
    %229 = vector.load %arg17[%c1_127, %c0_128, %c0_129] : memref<3x1x32xf32, #tpu.memory_space<vmem>>, vector<1x1x32xf32>
    %230 = vector.shape_cast %229 : vector<1x1x32xf32> to vector<1x32xf32>
    %231 = vector.broadcast %230 : vector<1x32xf32> to vector<64x32xf32>
    %232 = arith.addf %228, %231 : vector<64x32xf32>
    %233 = arith.addf %150, %232 : vector<64x32xf32>
    %c1_130 = arith.constant 1 : index
    %c0_131 = arith.constant 0 : index
    %c0_132 = arith.constant 0 : index
    %234 = vector.load %arg18[%c1_130, %c0_131, %c0_132] : memref<3x1x32xf32, #tpu.memory_space<vmem>>, vector<1x1x32xf32>
    %235 = vector.shape_cast %234 : vector<1x1x32xf32> to vector<1x32xf32>
    %c1_133 = arith.constant 1 : index
    %c0_134 = arith.constant 0 : index
    %c0_135 = arith.constant 0 : index
    %236 = vector.load %arg19[%c1_133, %c0_134, %c0_135] : memref<3x1x32xf32, #tpu.memory_space<vmem>>, vector<1x1x32xf32>
    %237 = vector.shape_cast %236 : vector<1x1x32xf32> to vector<1x32xf32>
    %cst_136 = arith.constant dense<0.000000e+00> : vector<64xf32>
    %238 = vector.multi_reduction <add>, %233, %cst_136 [1] : vector<64x32xf32> to vector<64xf32>
    %239 = vector.shape_cast %238 : vector<64xf32> to vector<64x1xf32>
    %cst_137 = arith.constant 3.200000e+01 : f32
    %240 = vector.broadcast %cst_137 : f32 to vector<64x1xf32>
    %241 = arith.divf %239, %240 : vector<64x1xf32>
    %242 = vector.broadcast %241 : vector<64x1xf32> to vector<64x32xf32>
    %243 = arith.subf %233, %242 : vector<64x32xf32>
    %244 = arith.mulf %243, %243 : vector<64x32xf32>
    %cst_138 = arith.constant dense<0.000000e+00> : vector<64xf32>
    %245 = vector.multi_reduction <add>, %244, %cst_138 [1] : vector<64x32xf32> to vector<64xf32>
    %246 = vector.shape_cast %245 : vector<64xf32> to vector<64x1xf32>
    %cst_139 = arith.constant 3.200000e+01 : f32
    %247 = vector.broadcast %cst_139 : f32 to vector<64x1xf32>
    %248 = arith.divf %246, %247 : vector<64x1xf32>
    %249 = vector.broadcast %241 : vector<64x1xf32> to vector<64x32xf32>
    %250 = arith.subf %233, %249 : vector<64x32xf32>
    %cst_140 = arith.constant 9.99999974E-6 : f32
    %251 = vector.broadcast %cst_140 : f32 to vector<64x1xf32>
    %252 = arith.addf %248, %251 : vector<64x1xf32>
    %253 = math.rsqrt %252 : vector<64x1xf32>
    %254 = vector.broadcast %253 : vector<64x1xf32> to vector<64x32xf32>
    %255 = arith.mulf %250, %254 : vector<64x32xf32>
    %256 = vector.broadcast %235 : vector<1x32xf32> to vector<64x32xf32>
    %257 = arith.mulf %255, %256 : vector<64x32xf32>
    %258 = vector.broadcast %237 : vector<1x32xf32> to vector<64x32xf32>
    %259 = arith.addf %257, %258 : vector<64x32xf32>
    %c1_141 = arith.constant 1 : index
    %c0_142 = arith.constant 0 : index
    %c0_143 = arith.constant 0 : index
    %260 = vector.load %arg20[%c1_141, %c0_142, %c0_143] : memref<3x32x128xf32, #tpu.memory_space<vmem>>, vector<1x32x128xf32>
    %261 = vector.shape_cast %260 : vector<1x32x128xf32> to vector<32x128xf32>
    %cst_144 = arith.constant dense<0.000000e+00> : vector<64x128xf32>
    %262 = tpu.matmul %259, %261, %cst_144 {dimension_numbers = #tpu.dot_dimension_numbers<[1], [0], [0], [1], [0, 0, 1, 1], [], []>} : vector<64x32xf32>, vector<32x128xf32>, vector<64x128xf32> -> vector<64x128xf32>
    %c1_145 = arith.constant 1 : index
    %c0_146 = arith.constant 0 : index
    %c0_147 = arith.constant 0 : index
    %263 = vector.load %arg21[%c1_145, %c0_146, %c0_147] : memref<3x1x128xf32, #tpu.memory_space<vmem>>, vector<1x1x128xf32>
    %264 = vector.shape_cast %263 : vector<1x1x128xf32> to vector<1x128xf32>
    %265 = vector.broadcast %264 : vector<1x128xf32> to vector<64x128xf32>
    %266 = arith.addf %262, %265 : vector<64x128xf32>
    %cst_148 = arith.constant 5.000000e-01 : f32
    %267 = vector.broadcast %cst_148 : f32 to vector<64x128xf32>
    %268 = arith.mulf %267, %266 : vector<64x128xf32>
    %cst_149 = arith.constant 2.000000e+00 : f32
    %269 = math.sqrt %cst_149 : f32
    %270 = vector.broadcast %269 : f32 to vector<64x128xf32>
    %271 = arith.divf %266, %270 : vector<64x128xf32>
    %272 = math.erf %271 : vector<64x128xf32>
    %cst_150 = arith.constant 1.000000e+00 : f32
    %273 = vector.broadcast %cst_150 : f32 to vector<64x128xf32>
    %274 = arith.addf %273, %272 : vector<64x128xf32>
    %275 = arith.mulf %268, %274 : vector<64x128xf32>
    %c1_151 = arith.constant 1 : index
    %c0_152 = arith.constant 0 : index
    %c0_153 = arith.constant 0 : index
    %276 = vector.load %arg22[%c1_151, %c0_152, %c0_153] : memref<3x128x32xf32, #tpu.memory_space<vmem>>, vector<1x128x32xf32>
    %277 = vector.shape_cast %276 : vector<1x128x32xf32> to vector<128x32xf32>
    %cst_154 = arith.constant dense<0.000000e+00> : vector<64x32xf32>
    %278 = tpu.matmul %275, %277, %cst_154 {dimension_numbers = #tpu.dot_dimension_numbers<[1], [0], [0], [1], [0, 0, 1, 1], [], []>} : vector<64x128xf32>, vector<128x32xf32>, vector<64x32xf32> -> vector<64x32xf32>
    %c1_155 = arith.constant 1 : index
    %c0_156 = arith.constant 0 : index
    %c0_157 = arith.constant 0 : index
    %279 = vector.load %arg23[%c1_155, %c0_156, %c0_157] : memref<3x1x32xf32, #tpu.memory_space<vmem>>, vector<1x1x32xf32>
    %280 = vector.shape_cast %279 : vector<1x1x32xf32> to vector<1x32xf32>
    %281 = vector.broadcast %280 : vector<1x32xf32> to vector<64x32xf32>
    %282 = arith.addf %278, %281 : vector<64x32xf32>
    %283 = arith.addf %233, %282 : vector<64x32xf32>
    %c2 = arith.constant 2 : index
    %c0_158 = arith.constant 0 : index
    %c0_159 = arith.constant 0 : index
    %284 = vector.load %arg8[%c2, %c0_158, %c0_159] : memref<3x1x32xf32, #tpu.memory_space<vmem>>, vector<1x1x32xf32>
    %285 = vector.shape_cast %284 : vector<1x1x32xf32> to vector<1x32xf32>
    %c2_160 = arith.constant 2 : index
    %c0_161 = arith.constant 0 : index
    %c0_162 = arith.constant 0 : index
    %286 = vector.load %arg9[%c2_160, %c0_161, %c0_162] : memref<3x1x32xf32, #tpu.memory_space<vmem>>, vector<1x1x32xf32>
    %287 = vector.shape_cast %286 : vector<1x1x32xf32> to vector<1x32xf32>
    %cst_163 = arith.constant dense<0.000000e+00> : vector<64xf32>
    %288 = vector.multi_reduction <add>, %283, %cst_163 [1] : vector<64x32xf32> to vector<64xf32>
    %289 = vector.shape_cast %288 : vector<64xf32> to vector<64x1xf32>
    %cst_164 = arith.constant 3.200000e+01 : f32
    %290 = vector.broadcast %cst_164 : f32 to vector<64x1xf32>
    %291 = arith.divf %289, %290 : vector<64x1xf32>
    %292 = vector.broadcast %291 : vector<64x1xf32> to vector<64x32xf32>
    %293 = arith.subf %283, %292 : vector<64x32xf32>
    %294 = arith.mulf %293, %293 : vector<64x32xf32>
    %cst_165 = arith.constant dense<0.000000e+00> : vector<64xf32>
    %295 = vector.multi_reduction <add>, %294, %cst_165 [1] : vector<64x32xf32> to vector<64xf32>
    %296 = vector.shape_cast %295 : vector<64xf32> to vector<64x1xf32>
    %cst_166 = arith.constant 3.200000e+01 : f32
    %297 = vector.broadcast %cst_166 : f32 to vector<64x1xf32>
    %298 = arith.divf %296, %297 : vector<64x1xf32>
    %299 = vector.broadcast %291 : vector<64x1xf32> to vector<64x32xf32>
    %300 = arith.subf %283, %299 : vector<64x32xf32>
    %cst_167 = arith.constant 9.99999974E-6 : f32
    %301 = vector.broadcast %cst_167 : f32 to vector<64x1xf32>
    %302 = arith.addf %298, %301 : vector<64x1xf32>
    %303 = math.rsqrt %302 : vector<64x1xf32>
    %304 = vector.broadcast %303 : vector<64x1xf32> to vector<64x32xf32>
    %305 = arith.mulf %300, %304 : vector<64x32xf32>
    %306 = vector.broadcast %285 : vector<1x32xf32> to vector<64x32xf32>
    %307 = arith.mulf %305, %306 : vector<64x32xf32>
    %308 = vector.broadcast %287 : vector<1x32xf32> to vector<64x32xf32>
    %309 = arith.addf %307, %308 : vector<64x32xf32>
    %c2_168 = arith.constant 2 : index
    %c0_169 = arith.constant 0 : index
    %c0_170 = arith.constant 0 : index
    %310 = vector.load %arg10[%c2_168, %c0_169, %c0_170] : memref<3x32x32xf32, #tpu.memory_space<vmem>>, vector<1x32x32xf32>
    %311 = vector.shape_cast %310 : vector<1x32x32xf32> to vector<32x32xf32>
    %cst_171 = arith.constant dense<0.000000e+00> : vector<64x32xf32>
    %312 = tpu.matmul %309, %311, %cst_171 {dimension_numbers = #tpu.dot_dimension_numbers<[1], [0], [0], [1], [0, 0, 1, 1], [], []>} : vector<64x32xf32>, vector<32x32xf32>, vector<64x32xf32> -> vector<64x32xf32>
    %c2_172 = arith.constant 2 : index
    %c0_173 = arith.constant 0 : index
    %c0_174 = arith.constant 0 : index
    %313 = vector.load %arg11[%c2_172, %c0_173, %c0_174] : memref<3x1x32xf32, #tpu.memory_space<vmem>>, vector<1x1x32xf32>
    %314 = vector.shape_cast %313 : vector<1x1x32xf32> to vector<1x32xf32>
    %315 = vector.broadcast %314 : vector<1x32xf32> to vector<64x32xf32>
    %316 = arith.addf %312, %315 : vector<64x32xf32>
    %c2_175 = arith.constant 2 : index
    %c0_176 = arith.constant 0 : index
    %c0_177 = arith.constant 0 : index
    %317 = vector.load %arg12[%c2_175, %c0_176, %c0_177] : memref<3x32x32xf32, #tpu.memory_space<vmem>>, vector<1x32x32xf32>
    %318 = vector.shape_cast %317 : vector<1x32x32xf32> to vector<32x32xf32>
    %cst_178 = arith.constant dense<0.000000e+00> : vector<64x32xf32>
    %319 = tpu.matmul %309, %318, %cst_178 {dimension_numbers = #tpu.dot_dimension_numbers<[1], [0], [0], [1], [0, 0, 1, 1], [], []>} : vector<64x32xf32>, vector<32x32xf32>, vector<64x32xf32> -> vector<64x32xf32>
    %c2_179 = arith.constant 2 : index
    %c0_180 = arith.constant 0 : index
    %c0_181 = arith.constant 0 : index
    %320 = vector.load %arg13[%c2_179, %c0_180, %c0_181] : memref<3x1x32xf32, #tpu.memory_space<vmem>>, vector<1x1x32xf32>
    %321 = vector.shape_cast %320 : vector<1x1x32xf32> to vector<1x32xf32>
    %322 = vector.broadcast %321 : vector<1x32xf32> to vector<64x32xf32>
    %323 = arith.addf %319, %322 : vector<64x32xf32>
    %c2_182 = arith.constant 2 : index
    %c0_183 = arith.constant 0 : index
    %c0_184 = arith.constant 0 : index
    %324 = vector.load %arg14[%c2_182, %c0_183, %c0_184] : memref<3x32x32xf32, #tpu.memory_space<vmem>>, vector<1x32x32xf32>
    %325 = vector.shape_cast %324 : vector<1x32x32xf32> to vector<32x32xf32>
    %cst_185 = arith.constant dense<0.000000e+00> : vector<64x32xf32>
    %326 = tpu.matmul %309, %325, %cst_185 {dimension_numbers = #tpu.dot_dimension_numbers<[1], [0], [0], [1], [0, 0, 1, 1], [], []>} : vector<64x32xf32>, vector<32x32xf32>, vector<64x32xf32> -> vector<64x32xf32>
    %c2_186 = arith.constant 2 : index
    %c0_187 = arith.constant 0 : index
    %c0_188 = arith.constant 0 : index
    %327 = vector.load %arg15[%c2_186, %c0_187, %c0_188] : memref<3x1x32xf32, #tpu.memory_space<vmem>>, vector<1x1x32xf32>
    %328 = vector.shape_cast %327 : vector<1x1x32xf32> to vector<1x32xf32>
    %329 = vector.broadcast %328 : vector<1x32xf32> to vector<64x32xf32>
    %330 = arith.addf %326, %329 : vector<64x32xf32>
    %331 = vector.shape_cast %316 : vector<64x32xf32> to vector<8x8x32xf32>
    %332 = vector.shape_cast %323 : vector<64x32xf32> to vector<8x8x32xf32>
    %333 = vector.shape_cast %332 : vector<8x8x32xf32> to vector<8x1x8x32xf32>
    %334 = vector.shape_cast %333 : vector<8x1x8x32xf32> to vector<8x1x8x32xf32>
    %335 = vector.broadcast %334 : vector<8x1x8x32xf32> to vector<8x8x8x32xf32>
    %336 = vector.shape_cast %335 : vector<8x8x8x32xf32> to vector<8x64x32xf32>
    %337 = arith.mulf %336, %11 : vector<8x64x32xf32>
    %338 = vector.shape_cast %330 : vector<64x32xf32> to vector<8x8x32xf32>
    %339 = vector.shape_cast %338 : vector<8x8x32xf32> to vector<8x1x8x32xf32>
    %340 = vector.shape_cast %339 : vector<8x1x8x32xf32> to vector<8x1x8x32xf32>
    %341 = vector.broadcast %340 : vector<8x1x8x32xf32> to vector<8x8x8x32xf32>
    %342 = vector.shape_cast %341 : vector<8x8x8x32xf32> to vector<8x64x32xf32>
    %343 = arith.mulf %342, %11 : vector<8x64x32xf32>
    "tpu.trace_start"() <{level = 10 : i32, message = "bqd,bkd->bqk"}> : () -> ()
    %cst_189 = arith.constant dense<0.000000e+00> : vector<8x8x64xf32>
    %344 = tpu.matmul %331, %337, %cst_189 {dimension_numbers = #tpu.dot_dimension_numbers<[2], [2], [1], [1], [0, 0, 0, 1, 1, 1], [0], [0]>} : vector<8x8x32xf32>, vector<8x64x32xf32>, vector<8x8x64xf32> -> vector<8x8x64xf32>
    "tpu.trace_stop"() : () -> ()
    %345 = vector.broadcast %7 : vector<8x1x64xf32> to vector<8x8x64xf32>
    %346 = arith.addf %344, %345 : vector<8x8x64xf32>
    %cst_190 = arith.constant dense<0xFF800000> : vector<8x8xf32>
    %347 = vector.multi_reduction <maximumf>, %346, %cst_190 [2] : vector<8x8x64xf32> to vector<8x8xf32>
    %348 = vector.shape_cast %347 : vector<8x8xf32> to vector<8x8x1xf32>
    %349 = vector.broadcast %348 : vector<8x8x1xf32> to vector<8x8x64xf32>
    %350 = arith.subf %346, %349 : vector<8x8x64xf32>
    %351 = math.exp %350 : vector<8x8x64xf32>
    %352 = vector.shape_cast %351 : vector<8x8x64xf32> to vector<64x64xf32>
    %cst_191 = arith.constant dense<0.000000e+00> : vector<64x64xf32>
    %353 = tpu.matmul %352, %12, %cst_191 {dimension_numbers = #tpu.dot_dimension_numbers<[1], [0], [0], [1], [0, 0, 1, 1], [], []>} : vector<64x64xf32>, vector<64x64xf32>, vector<64x64xf32> -> vector<64x64xf32>
    %354 = vector.shape_cast %353 : vector<64x64xf32> to vector<8x8x64xf32>
    %355 = tpu.reciprocal %354 {approx = true} : vector<8x8x64xf32> -> vector<8x8x64xf32>
    %356 = arith.mulf %351, %355 : vector<8x8x64xf32>
    "tpu.trace_start"() <{level = 10 : i32, message = "bqk,bkd->bqd"}> : () -> ()
    %cst_192 = arith.constant dense<0.000000e+00> : vector<8x8x32xf32>
    %357 = tpu.matmul %356, %343, %cst_192 {dimension_numbers = #tpu.dot_dimension_numbers<[2], [1], [1], [2], [0, 0, 0, 1, 1, 2], [0], [0]>} : vector<8x8x64xf32>, vector<8x64x32xf32>, vector<8x8x32xf32> -> vector<8x8x32xf32>
    "tpu.trace_stop"() : () -> ()
    %358 = vector.shape_cast %357 : vector<8x8x32xf32> to vector<64x32xf32>
    %c2_193 = arith.constant 2 : index
    %c0_194 = arith.constant 0 : index
    %c0_195 = arith.constant 0 : index
    %359 = vector.load %arg16[%c2_193, %c0_194, %c0_195] : memref<3x32x32xf32, #tpu.memory_space<vmem>>, vector<1x32x32xf32>
    %360 = vector.shape_cast %359 : vector<1x32x32xf32> to vector<32x32xf32>
    %cst_196 = arith.constant dense<0.000000e+00> : vector<64x32xf32>
    %361 = tpu.matmul %358, %360, %cst_196 {dimension_numbers = #tpu.dot_dimension_numbers<[1], [0], [0], [1], [0, 0, 1, 1], [], []>} : vector<64x32xf32>, vector<32x32xf32>, vector<64x32xf32> -> vector<64x32xf32>
    %c2_197 = arith.constant 2 : index
    %c0_198 = arith.constant 0 : index
    %c0_199 = arith.constant 0 : index
    %362 = vector.load %arg17[%c2_197, %c0_198, %c0_199] : memref<3x1x32xf32, #tpu.memory_space<vmem>>, vector<1x1x32xf32>
    %363 = vector.shape_cast %362 : vector<1x1x32xf32> to vector<1x32xf32>
    %364 = vector.broadcast %363 : vector<1x32xf32> to vector<64x32xf32>
    %365 = arith.addf %361, %364 : vector<64x32xf32>
    %366 = arith.addf %283, %365 : vector<64x32xf32>
    %c2_200 = arith.constant 2 : index
    %c0_201 = arith.constant 0 : index
    %c0_202 = arith.constant 0 : index
    %367 = vector.load %arg18[%c2_200, %c0_201, %c0_202] : memref<3x1x32xf32, #tpu.memory_space<vmem>>, vector<1x1x32xf32>
    %368 = vector.shape_cast %367 : vector<1x1x32xf32> to vector<1x32xf32>
    %c2_203 = arith.constant 2 : index
    %c0_204 = arith.constant 0 : index
    %c0_205 = arith.constant 0 : index
    %369 = vector.load %arg19[%c2_203, %c0_204, %c0_205] : memref<3x1x32xf32, #tpu.memory_space<vmem>>, vector<1x1x32xf32>
    %370 = vector.shape_cast %369 : vector<1x1x32xf32> to vector<1x32xf32>
    %cst_206 = arith.constant dense<0.000000e+00> : vector<64xf32>
    %371 = vector.multi_reduction <add>, %366, %cst_206 [1] : vector<64x32xf32> to vector<64xf32>
    %372 = vector.shape_cast %371 : vector<64xf32> to vector<64x1xf32>
    %cst_207 = arith.constant 3.200000e+01 : f32
    %373 = vector.broadcast %cst_207 : f32 to vector<64x1xf32>
    %374 = arith.divf %372, %373 : vector<64x1xf32>
    %375 = vector.broadcast %374 : vector<64x1xf32> to vector<64x32xf32>
    %376 = arith.subf %366, %375 : vector<64x32xf32>
    %377 = arith.mulf %376, %376 : vector<64x32xf32>
    %cst_208 = arith.constant dense<0.000000e+00> : vector<64xf32>
    %378 = vector.multi_reduction <add>, %377, %cst_208 [1] : vector<64x32xf32> to vector<64xf32>
    %379 = vector.shape_cast %378 : vector<64xf32> to vector<64x1xf32>
    %cst_209 = arith.constant 3.200000e+01 : f32
    %380 = vector.broadcast %cst_209 : f32 to vector<64x1xf32>
    %381 = arith.divf %379, %380 : vector<64x1xf32>
    %382 = vector.broadcast %374 : vector<64x1xf32> to vector<64x32xf32>
    %383 = arith.subf %366, %382 : vector<64x32xf32>
    %cst_210 = arith.constant 9.99999974E-6 : f32
    %384 = vector.broadcast %cst_210 : f32 to vector<64x1xf32>
    %385 = arith.addf %381, %384 : vector<64x1xf32>
    %386 = math.rsqrt %385 : vector<64x1xf32>
    %387 = vector.broadcast %386 : vector<64x1xf32> to vector<64x32xf32>
    %388 = arith.mulf %383, %387 : vector<64x32xf32>
    %389 = vector.broadcast %368 : vector<1x32xf32> to vector<64x32xf32>
    %390 = arith.mulf %388, %389 : vector<64x32xf32>
    %391 = vector.broadcast %370 : vector<1x32xf32> to vector<64x32xf32>
    %392 = arith.addf %390, %391 : vector<64x32xf32>
    %c2_211 = arith.constant 2 : index
    %c0_212 = arith.constant 0 : index
    %c0_213 = arith.constant 0 : index
    %393 = vector.load %arg20[%c2_211, %c0_212, %c0_213] : memref<3x32x128xf32, #tpu.memory_space<vmem>>, vector<1x32x128xf32>
    %394 = vector.shape_cast %393 : vector<1x32x128xf32> to vector<32x128xf32>
    %cst_214 = arith.constant dense<0.000000e+00> : vector<64x128xf32>
    %395 = tpu.matmul %392, %394, %cst_214 {dimension_numbers = #tpu.dot_dimension_numbers<[1], [0], [0], [1], [0, 0, 1, 1], [], []>} : vector<64x32xf32>, vector<32x128xf32>, vector<64x128xf32> -> vector<64x128xf32>
    %c2_215 = arith.constant 2 : index
    %c0_216 = arith.constant 0 : index
    %c0_217 = arith.constant 0 : index
    %396 = vector.load %arg21[%c2_215, %c0_216, %c0_217] : memref<3x1x128xf32, #tpu.memory_space<vmem>>, vector<1x1x128xf32>
    %397 = vector.shape_cast %396 : vector<1x1x128xf32> to vector<1x128xf32>
    %398 = vector.broadcast %397 : vector<1x128xf32> to vector<64x128xf32>
    %399 = arith.addf %395, %398 : vector<64x128xf32>
    %cst_218 = arith.constant 5.000000e-01 : f32
    %400 = vector.broadcast %cst_218 : f32 to vector<64x128xf32>
    %401 = arith.mulf %400, %399 : vector<64x128xf32>
    %cst_219 = arith.constant 2.000000e+00 : f32
    %402 = math.sqrt %cst_219 : f32
    %403 = vector.broadcast %402 : f32 to vector<64x128xf32>
    %404 = arith.divf %399, %403 : vector<64x128xf32>
    %405 = math.erf %404 : vector<64x128xf32>
    %cst_220 = arith.constant 1.000000e+00 : f32
    %406 = vector.broadcast %cst_220 : f32 to vector<64x128xf32>
    %407 = arith.addf %406, %405 : vector<64x128xf32>
    %408 = arith.mulf %401, %407 : vector<64x128xf32>
    %c2_221 = arith.constant 2 : index
    %c0_222 = arith.constant 0 : index
    %c0_223 = arith.constant 0 : index
    %409 = vector.load %arg22[%c2_221, %c0_222, %c0_223] : memref<3x128x32xf32, #tpu.memory_space<vmem>>, vector<1x128x32xf32>
    %410 = vector.shape_cast %409 : vector<1x128x32xf32> to vector<128x32xf32>
    %cst_224 = arith.constant dense<0.000000e+00> : vector<64x32xf32>
    %411 = tpu.matmul %408, %410, %cst_224 {dimension_numbers = #tpu.dot_dimension_numbers<[1], [0], [0], [1], [0, 0, 1, 1], [], []>} : vector<64x128xf32>, vector<128x32xf32>, vector<64x32xf32> -> vector<64x32xf32>
    %c2_225 = arith.constant 2 : index
    %c0_226 = arith.constant 0 : index
    %c0_227 = arith.constant 0 : index
    %412 = vector.load %arg23[%c2_225, %c0_226, %c0_227] : memref<3x1x32xf32, #tpu.memory_space<vmem>>, vector<1x1x32xf32>
    %413 = vector.shape_cast %412 : vector<1x1x32xf32> to vector<1x32xf32>
    %414 = vector.broadcast %413 : vector<1x32xf32> to vector<64x32xf32>
    %415 = arith.addf %411, %414 : vector<64x32xf32>
    %416 = arith.addf %366, %415 : vector<64x32xf32>
    %417 = vector.broadcast %1 : vector<64x1xf32> to vector<64x32xf32>
    %418 = arith.mulf %416, %417 : vector<64x32xf32>
    %419 = vector.shape_cast %418 : vector<64x32xf32> to vector<8x8x32xf32>
    %cst_228 = arith.constant dense<0.000000e+00> : vector<8x32xf32>
    %420 = vector.multi_reduction <add>, %419, %cst_228 [1] : vector<8x8x32xf32> to vector<8x32xf32>
    %cst_229 = arith.constant dense<0.000000e+00> : vector<8x1xf32>
    %421 = vector.multi_reduction <add>, %2, %cst_229 [2] : vector<8x1x64xf32> to vector<8x1xf32>
    %cst_230 = arith.constant 1.250000e-01 : f32
    %422 = vector.broadcast %cst_230 : f32 to vector<8x1xf32>
    %423 = arith.mulf %421, %422 : vector<8x1xf32>
    %cst_231 = arith.constant 1.000000e+00 : f32
    %424 = vector.broadcast %cst_231 : f32 to vector<8x1xf32>
    %425 = arith.maximumf %423, %424 : vector<8x1xf32>
    %426 = vector.broadcast %425 : vector<8x1xf32> to vector<8x32xf32>
    %427 = arith.divf %420, %426 : vector<8x32xf32>
    %c0_232 = arith.constant 0 : index
    %c0_233 = arith.constant 0 : index
    %428 = vector.load %arg24[%c0_232, %c0_233] : memref<32x128xf32, #tpu.memory_space<vmem>>, vector<32x128xf32>
    %cst_234 = arith.constant dense<0.000000e+00> : vector<8x128xf32>
    %429 = tpu.matmul %427, %428, %cst_234 {dimension_numbers = #tpu.dot_dimension_numbers<[1], [0], [0], [1], [0, 0, 1, 1], [], []>} : vector<8x32xf32>, vector<32x128xf32>, vector<8x128xf32> -> vector<8x128xf32>
    %c0_235 = arith.constant 0 : index
    %c0_236 = arith.constant 0 : index
    %430 = vector.load %arg25[%c0_235, %c0_236] : memref<1x128xf32, #tpu.memory_space<vmem>>, vector<1x128xf32>
    %431 = vector.broadcast %430 : vector<1x128xf32> to vector<8x128xf32>
    %432 = arith.addf %429, %431 : vector<8x128xf32>
    %c0_237 = arith.constant 0 : index
    %c0_238 = arith.constant 0 : index
    %433 = vector.load %arg26[%c0_237, %c0_238] : memref<8x128xf32, #tpu.memory_space<vmem>>, vector<8x128xf32>
    tpu.vector_store %arg26[%c0_237, %c0_238], %432 {strides = array<i32>} : memref<8x128xf32, #tpu.memory_space<vmem>>, vector<8x128xf32>,
    return
  }
  func.func @transform_0(%arg0: i32) -> (i32, i32) {
    %c0_i32 = arith.constant 0 : i32
    %c0_i32_0 = arith.constant 0 : i32
    return %arg0, %c0_i32 : i32, i32
  }
  func.func @transform_1(%arg0: i32) -> (i32, i32) {
    %c0_i32 = arith.constant 0 : i32
    %c0_i32_0 = arith.constant 0 : i32
    return %arg0, %c0_i32 : i32, i32
  }
  func.func @transform_2(%arg0: i32) -> (i32, i32, i32) {
    %c0_i32 = arith.constant 0 : i32
    %c0_i32_0 = arith.constant 0 : i32
    %c0_i32_1 = arith.constant 0 : i32
    return %arg0, %c0_i32, %c0_i32_0 : i32, i32, i32
  }
  func.func @transform_3(%arg0: i32) -> (i32, i32) {
    %c0_i32 = arith.constant 0 : i32
    %c0_i32_0 = arith.constant 0 : i32
    %c0_i32_1 = arith.constant 0 : i32
    return %c0_i32, %c0_i32_0 : i32, i32
  }
  func.func @transform_4(%arg0: i32) -> (i32, i32) {
    %c0_i32 = arith.constant 0 : i32
    %c0_i32_0 = arith.constant 0 : i32
    %c0_i32_1 = arith.constant 0 : i32
    return %c0_i32, %c0_i32_0 : i32, i32
  }
  func.func @transform_5(%arg0: i32) -> (i32, i32) {
    %c0_i32 = arith.constant 0 : i32
    %c0_i32_0 = arith.constant 0 : i32
    %c0_i32_1 = arith.constant 0 : i32
    return %c0_i32, %c0_i32_0 : i32, i32
  }
  func.func @transform_6(%arg0: i32) -> (i32, i32) {
    %c0_i32 = arith.constant 0 : i32
    %c0_i32_0 = arith.constant 0 : i32
    %c0_i32_1 = arith.constant 0 : i32
    return %c0_i32, %c0_i32_0 : i32, i32
  }
  func.func @transform_7(%arg0: i32) -> (i32, i32, i32) {
    %c0_i32 = arith.constant 0 : i32
    %c0_i32_0 = arith.constant 0 : i32
    %c0_i32_1 = arith.constant 0 : i32
    %c0_i32_2 = arith.constant 0 : i32
    return %c0_i32, %c0_i32_0, %c0_i32_1 : i32, i32, i32
  }
  func.func @transform_8(%arg0: i32) -> (i32, i32, i32) {
    %c0_i32 = arith.constant 0 : i32
    %c0_i32_0 = arith.constant 0 : i32
    %c0_i32_1 = arith.constant 0 : i32
    %c0_i32_2 = arith.constant 0 : i32
    return %c0_i32, %c0_i32_0, %c0_i32_1 : i32, i32, i32
  }
  func.func @transform_9(%arg0: i32) -> (i32, i32, i32) {
    %c0_i32 = arith.constant 0 : i32
    %c0_i32_0 = arith.constant 0 : i32
    %c0_i32_1 = arith.constant 0 : i32
    %c0_i32_2 = arith.constant 0 : i32
    return %c0_i32, %c0_i32_0, %c0_i32_1 : i32, i32, i32
  }
  func.func @transform_10(%arg0: i32) -> (i32, i32, i32) {
    %c0_i32 = arith.constant 0 : i32
    %c0_i32_0 = arith.constant 0 : i32
    %c0_i32_1 = arith.constant 0 : i32
    %c0_i32_2 = arith.constant 0 : i32
    return %c0_i32, %c0_i32_0, %c0_i32_1 : i32, i32, i32
  }
  func.func @transform_11(%arg0: i32) -> (i32, i32, i32) {
    %c0_i32 = arith.constant 0 : i32
    %c0_i32_0 = arith.constant 0 : i32
    %c0_i32_1 = arith.constant 0 : i32
    %c0_i32_2 = arith.constant 0 : i32
    return %c0_i32, %c0_i32_0, %c0_i32_1 : i32, i32, i32
  }
  func.func @transform_12(%arg0: i32) -> (i32, i32, i32) {
    %c0_i32 = arith.constant 0 : i32
    %c0_i32_0 = arith.constant 0 : i32
    %c0_i32_1 = arith.constant 0 : i32
    %c0_i32_2 = arith.constant 0 : i32
    return %c0_i32, %c0_i32_0, %c0_i32_1 : i32, i32, i32
  }
  func.func @transform_13(%arg0: i32) -> (i32, i32, i32) {
    %c0_i32 = arith.constant 0 : i32
    %c0_i32_0 = arith.constant 0 : i32
    %c0_i32_1 = arith.constant 0 : i32
    %c0_i32_2 = arith.constant 0 : i32
    return %c0_i32, %c0_i32_0, %c0_i32_1 : i32, i32, i32
  }
  func.func @transform_14(%arg0: i32) -> (i32, i32, i32) {
    %c0_i32 = arith.constant 0 : i32
    %c0_i32_0 = arith.constant 0 : i32
    %c0_i32_1 = arith.constant 0 : i32
    %c0_i32_2 = arith.constant 0 : i32
    return %c0_i32, %c0_i32_0, %c0_i32_1 : i32, i32, i32
  }
  func.func @transform_15(%arg0: i32) -> (i32, i32, i32) {
    %c0_i32 = arith.constant 0 : i32
    %c0_i32_0 = arith.constant 0 : i32
    %c0_i32_1 = arith.constant 0 : i32
    %c0_i32_2 = arith.constant 0 : i32
    return %c0_i32, %c0_i32_0, %c0_i32_1 : i32, i32, i32
  }
  func.func @transform_16(%arg0: i32) -> (i32, i32, i32) {
    %c0_i32 = arith.constant 0 : i32
    %c0_i32_0 = arith.constant 0 : i32
    %c0_i32_1 = arith.constant 0 : i32
    %c0_i32_2 = arith.constant 0 : i32
    return %c0_i32, %c0_i32_0, %c0_i32_1 : i32, i32, i32
  }
  func.func @transform_17(%arg0: i32) -> (i32, i32, i32) {
    %c0_i32 = arith.constant 0 : i32
    %c0_i32_0 = arith.constant 0 : i32
    %c0_i32_1 = arith.constant 0 : i32
    %c0_i32_2 = arith.constant 0 : i32
    return %c0_i32, %c0_i32_0, %c0_i32_1 : i32, i32, i32
  }
  func.func @transform_18(%arg0: i32) -> (i32, i32, i32) {
    %c0_i32 = arith.constant 0 : i32
    %c0_i32_0 = arith.constant 0 : i32
    %c0_i32_1 = arith.constant 0 : i32
    %c0_i32_2 = arith.constant 0 : i32
    return %c0_i32, %c0_i32_0, %c0_i32_1 : i32, i32, i32
  }
  func.func @transform_19(%arg0: i32) -> (i32, i32, i32) {
    %c0_i32 = arith.constant 0 : i32
    %c0_i32_0 = arith.constant 0 : i32
    %c0_i32_1 = arith.constant 0 : i32
    %c0_i32_2 = arith.constant 0 : i32
    return %c0_i32, %c0_i32_0, %c0_i32_1 : i32, i32, i32
  }
  func.func @transform_20(%arg0: i32) -> (i32, i32, i32) {
    %c0_i32 = arith.constant 0 : i32
    %c0_i32_0 = arith.constant 0 : i32
    %c0_i32_1 = arith.constant 0 : i32
    %c0_i32_2 = arith.constant 0 : i32
    return %c0_i32, %c0_i32_0, %c0_i32_1 : i32, i32, i32
  }
  func.func @transform_21(%arg0: i32) -> (i32, i32, i32) {
    %c0_i32 = arith.constant 0 : i32
    %c0_i32_0 = arith.constant 0 : i32
    %c0_i32_1 = arith.constant 0 : i32
    %c0_i32_2 = arith.constant 0 : i32
    return %c0_i32, %c0_i32_0, %c0_i32_1 : i32, i32, i32
  }
  func.func @transform_22(%arg0: i32) -> (i32, i32, i32) {
    %c0_i32 = arith.constant 0 : i32
    %c0_i32_0 = arith.constant 0 : i32
    %c0_i32_1 = arith.constant 0 : i32
    %c0_i32_2 = arith.constant 0 : i32
    return %c0_i32, %c0_i32_0, %c0_i32_1 : i32, i32, i32
  }
  func.func @transform_23(%arg0: i32) -> (i32, i32) {
    %c0_i32 = arith.constant 0 : i32
    %c0_i32_0 = arith.constant 0 : i32
    %c0_i32_1 = arith.constant 0 : i32
    return %c0_i32, %c0_i32_0 : i32, i32
  }
  func.func @transform_24(%arg0: i32) -> (i32, i32) {
    %c0_i32 = arith.constant 0 : i32
    %c0_i32_0 = arith.constant 0 : i32
    %c0_i32_1 = arith.constant 0 : i32
    return %c0_i32, %c0_i32_0 : i32, i32
  }
  func.func @transform_25(%arg0: i32) -> (i32, i32) {
    %c0_i32 = arith.constant 0 : i32
    %c0_i32_0 = arith.constant 0 : i32
    return %arg0, %c0_i32 : i32, i32
  }
}

</mosaic_0001>

<llo_original>
// kernel: tpu_custom_call.1
$region0: #{tpu_custom_call.1}
  #allocation0 [shape = 'u32[]', space=smem, size = 0x4, offset = 0x4, fixed_abs, tag = 'smem constant byte address 0x4 - core index']
  #allocation1 [shape = 'u32[72,128]{1,0:T(1,128)}', space=vmem, size = 0x9000, scoped, tag = 'internal scratch']
  %s0 = inlined_call_operand.vmem [shape: f32[64,34], index: 0, kind: input, shape index: {}]
  %s1 = inlined_call_operand.vmem [shape: f32[64,1], index: 1, kind: input, shape index: {}]
  %s2 = inlined_call_operand.vmem [shape: f32[8,1,64], index: 2, kind: input, shape index: {}]
  %s3 = inlined_call_operand.vmem [shape: f32[64,32], index: 3, kind: input, shape index: {}]
  %s4 = inlined_call_operand.vmem [shape: f32[64,64], index: 4, kind: input, shape index: {}]
  %s5 = inlined_call_operand.vmem [shape: f32[34,32], index: 5, kind: input, shape index: {}]
  %s6 = inlined_call_operand.vmem [shape: f32[1,32], index: 6, kind: input, shape index: {}]
  %s7 = inlined_call_operand.vmem [shape: f32[3,1,32], index: 7, kind: input, shape index: {}]
  %s8 = inlined_call_operand.vmem [shape: f32[3,1,32], index: 8, kind: input, shape index: {}]
  %s9 = inlined_call_operand.vmem [shape: f32[3,32,32], index: 9, kind: input, shape index: {}]
  %s10 = inlined_call_operand.vmem [shape: f32[3,1,32], index: 10, kind: input, shape index: {}]
  %s11 = inlined_call_operand.vmem [shape: f32[3,32,32], index: 11, kind: input, shape index: {}]
  %s12 = inlined_call_operand.vmem [shape: f32[3,1,32], index: 12, kind: input, shape index: {}]
  %s13 = inlined_call_operand.vmem [shape: f32[3,32,32], index: 13, kind: input, shape index: {}]
  %s14 = inlined_call_operand.vmem [shape: f32[3,1,32], index: 14, kind: input, shape index: {}]
  %s15 = inlined_call_operand.vmem [shape: f32[3,32,32], index: 15, kind: input, shape index: {}]
  %s16 = inlined_call_operand.vmem [shape: f32[3,1,32], index: 16, kind: input, shape index: {}]
  %s17 = inlined_call_operand.vmem [shape: f32[3,1,32], index: 17, kind: input, shape index: {}]
  %s18 = inlined_call_operand.vmem [shape: f32[3,1,32], index: 18, kind: input, shape index: {}]
  %s19 = inlined_call_operand.vmem [shape: f32[3,32,128], index: 19, kind: input, shape index: {}]
  %s20 = inlined_call_operand.vmem [shape: f32[3,1,128], index: 20, kind: input, shape index: {}]
  %s21 = inlined_call_operand.vmem [shape: f32[3,128,32], index: 21, kind: input, shape index: {}]
  %s22 = inlined_call_operand.vmem [shape: f32[3,1,32], index: 22, kind: input, shape index: {}]
  %s23 = inlined_call_operand.vmem [shape: f32[32,128], index: 23, kind: input, shape index: {}]
  %s24 = inlined_call_operand.vmem [shape: f32[1,128], index: 24, kind: input, shape index: {}]
  %s25 = inlined_call_operand.hbm [shape: f32[8,128], index: 25, kind: output, shape index: {}]
  %s26 = sld [smem:[#allocation0]]
  $region110: #{tpu_custom_call.1} parent=0
    _
  %s28 = ssub.s32 1, %s26
  %s29 = scalar_select 0, %s28, %s26
  $region1: #{tpu_custom_call.1} parent=0
    #allocation2 [shape = 'u8[4096]{0}', space=vmem, size = 0x1000, scoped, tag = 'output window, operand 0, single buffered']
    #allocation3 [shape = 's32[1]{0}', space=sflag, size = 0x4, scoped, tag = 'scoped memory for tpu_custom_call.1']
    %30 = vsyncpa [#allocation3], 0
    // Predicated region
    $region2: #{tpu_custom_call.1} parent=1 // pred_check
      _
    $region3: #{tpu_custom_call.1} parent=1 // pred_check_branch
      %32 = sbr.rel (0) target = $region5
    $region4: #{tpu_custom_call.1} parent=1 // pred_region
      _
    $region5: #{tpu_custom_call.1} parent=1 // pred_fallthru
      _
    // Predicated region
    $region6: #{tpu_custom_call.1} parent=1 // pred_check
      _
    $region7: #{tpu_custom_call.1} parent=1 // pred_check_branch
      %34 = sbr.rel (0) target = $region9
    $region8: #{tpu_custom_call.1} parent=1 // pred_region
      _
    $region9: #{tpu_custom_call.1} parent=1 // pred_fallthru
      _
    // Predicated region
    $region10: #{tpu_custom_call.1} parent=1 // pred_check
      _
    $region11: #{tpu_custom_call.1} parent=1 // pred_check_branch
      %36 = sbr.rel (0) target = $region13
    $region12: #{tpu_custom_call.1} parent=1 // pred_region
      _
    $region13: #{tpu_custom_call.1} parent=1 // pred_fallthru
      _
    // Predicated region
    $region14: #{tpu_custom_call.1} parent=1 // pred_check
      _
    $region15: #{tpu_custom_call.1} parent=1 // pred_check_branch
      %38 = sbr.rel (0) target = $region17
    $region16: #{tpu_custom_call.1} parent=1 // pred_region
      _
    $region17: #{tpu_custom_call.1} parent=1 // pred_fallthru
      _
    // Predicated region
    $region18: #{tpu_custom_call.1} parent=1 // pred_check
      _
    $region19: #{tpu_custom_call.1} parent=1 // pred_check_branch
      %40 = sbr.rel (0) target = $region21
    $region20: #{tpu_custom_call.1} parent=1 // pred_region
      _
    $region21: #{tpu_custom_call.1} parent=1 // pred_fallthru
      _
    // Predicated region
    $region22: #{tpu_custom_call.1} parent=1 // pred_check
      _
    $region23: #{tpu_custom_call.1} parent=1 // pred_check_branch
      %42 = sbr.rel (0) target = $region25
    $region24: #{tpu_custom_call.1} parent=1 // pred_region
      _
    $region25: #{tpu_custom_call.1} parent=1 // pred_fallthru
      _
    // Predicated region
    $region26: #{tpu_custom_call.1} parent=1 // pred_check
      _
    $region27: #{tpu_custom_call.1} parent=1 // pred_check_branch
      %44 = sbr.rel (0) target = $region29
    $region28: #{tpu_custom_call.1} parent=1 // pred_region
      _
    $region29: #{tpu_custom_call.1} parent=1 // pred_fallthru
      _
    // Predicated region
    $region30: #{tpu_custom_call.1} parent=1 // pred_check
      _
    $region31: #{tpu_custom_call.1} parent=1 // pred_check_branch
      %46 = sbr.rel (0) target = $region33
    $region32: #{tpu_custom_call.1} parent=1 // pred_region
      _
    $region33: #{tpu_custom_call.1} parent=1 // pred_fallthru
      _
    // Predicated region
    $region34: #{tpu_custom_call.1} parent=1 // pred_check
      _
    $region35: #{tpu_custom_call.1} parent=1 // pred_check_branch
      %48 = sbr.rel (0) target = $region37
    $region36: #{tpu_custom_call.1} parent=1 // pred_region
      _
    $region37: #{tpu_custom_call.1} parent=1 // pred_fallthru
      _
    // Predicated region
    $region38: #{tpu_custom_call.1} parent=1 // pred_check
      _
    $region39: #{tpu_custom_call.1} parent=1 // pred_check_branch
      %50 = sbr.rel (0) target = $region41
    $region40: #{tpu_custom_call.1} parent=1 // pred_region
      _
    $region41: #{tpu_custom_call.1} parent=1 // pred_fallthru
      _
    // Predicated region
    $region42: #{tpu_custom_call.1} parent=1 // pred_check
      _
    $region43: #{tpu_custom_call.1} parent=1 // pred_check_branch
      %52 = sbr.rel (0) target = $region45
    $region44: #{tpu_custom_call.1} parent=1 // pred_region
      _
    $region45: #{tpu_custom_call.1} parent=1 // pred_fallthru
      _
    // Predicated region
    $region46: #{tpu_custom_call.1} parent=1 // pred_check
      _
    $region47: #{tpu_custom_call.1} parent=1 // pred_check_branch
      %54 = sbr.rel (0) target = $region49
    $region48: #{tpu_custom_call.1} parent=1 // pred_region
      _
    $region49: #{tpu_custom_call.1} parent=1 // pred_fallthru
      _
    // Predicated region
    $region50: #{tpu_custom_call.1} parent=1 // pred_check
      _
    $region51: #{tpu_custom_call.1} parent=1 // pred_check_branch
      %56 = sbr.rel (0) target = $region53
    $region52: #{tpu_custom_call.1} parent=1 // pred_region
      _
    $region53: #{tpu_custom_call.1} parent=1 // pred_fallthru
      _
    // Predicated region
    $region54: #{tpu_custom_call.1} parent=1 // pred_check
      _
    $region55: #{tpu_custom_call.1} parent=1 // pred_check_branch
      %58 = sbr.rel (0) target = $region57
    $region56: #{tpu_custom_call.1} parent=1 // pred_region
      _
    $region57: #{tpu_custom_call.1} parent=1 // pred_fallthru
      _
    // Predicated region
    $region58: #{tpu_custom_call.1} parent=1 // pred_check
      _
    $region59: #{tpu_custom_call.1} parent=1 // pred_check_branch
      %60 = sbr.rel (0) target = $region61
    $region60: #{tpu_custom_call.1} parent=1 // pred_region
      _
    $region61: #{tpu_custom_call.1} parent=1 // pred_fallthru
      _
    // Predicated region
    $region62: #{tpu_custom_call.1} parent=1 // pred_check
      _
    $region63: #{tpu_custom_call.1} parent=1 // pred_check_branch
      %62 = sbr.rel (0) target = $region65
    $region64: #{tpu_custom_call.1} parent=1 // pred_region
      _
    $region65: #{tpu_custom_call.1} parent=1 // pred_fallthru
      _
    // Predicated region
    $region66: #{tpu_custom_call.1} parent=1 // pred_check
      _
    $region67: #{tpu_custom_call.1} parent=1 // pred_check_branch
      %64 = sbr.rel (0) target = $region69
    $region68: #{tpu_custom_call.1} parent=1 // pred_region
      _
    $region69: #{tpu_custom_call.1} parent=1 // pred_fallthru
      _
    // Predicated region
    $region70: #{tpu_custom_call.1} parent=1 // pred_check
      _
    $region71: #{tpu_custom_call.1} parent=1 // pred_check_branch
      %66 = sbr.rel (0) target = $region73
    $region72: #{tpu_custom_call.1} parent=1 // pred_region
      _
    $region73: #{tpu_custom_call.1} parent=1 // pred_fallthru
      _
    // Predicated region
    $region74: #{tpu_custom_call.1} parent=1 // pred_check
      _
    $region75: #{tpu_custom_call.1} parent=1 // pred_check_branch
      %68 = sbr.rel (0) target = $region77
    $region76: #{tpu_custom_call.1} parent=1 // pred_region
      _
    $region77: #{tpu_custom_call.1} parent=1 // pred_fallthru
      _
    // Predicated region
    $region78: #{tpu_custom_call.1} parent=1 // pred_check
      _
    $region79: #{tpu_custom_call.1} parent=1 // pred_check_branch
      %70 = sbr.rel (0) target = $region81
    $region80: #{tpu_custom_call.1} parent=1 // pred_region
      _
    $region81: #{tpu_custom_call.1} parent=1 // pred_fallthru
      _
    // Predicated region
    $region82: #{tpu_custom_call.1} parent=1 // pred_check
      _
    $region83: #{tpu_custom_call.1} parent=1 // pred_check_branch
      %72 = sbr.rel (0) target = $region85
    $region84: #{tpu_custom_call.1} parent=1 // pred_region
      _
    $region85: #{tpu_custom_call.1} parent=1 // pred_fallthru
      _
    // Predicated region
    $region86: #{tpu_custom_call.1} parent=1 // pred_check
      _
    $region87: #{tpu_custom_call.1} parent=1 // pred_check_branch
      %74 = sbr.rel (0) target = $region89
    $region88: #{tpu_custom_call.1} parent=1 // pred_region
      _
    $region89: #{tpu_custom_call.1} parent=1 // pred_fallthru
      _
    // Predicated region
    $region90: #{tpu_custom_call.1} parent=1 // pred_check
      _
    $region91: #{tpu_custom_call.1} parent=1 // pred_check_branch
      %76 = sbr.rel (0) target = $region93
    $region92: #{tpu_custom_call.1} parent=1 // pred_region
      _
    $region93: #{tpu_custom_call.1} parent=1 // pred_fallthru
      _
    // Predicated region
    $region94: #{tpu_custom_call.1} parent=1 // pred_check
      _
    $region95: #{tpu_custom_call.1} parent=1 // pred_check_branch
      %78 = sbr.rel (0) target = $region97
    $region96: #{tpu_custom_call.1} parent=1 // pred_region
      _
    $region97: #{tpu_custom_call.1} parent=1 // pred_fallthru
      _
    // Predicated region
    $region98: #{tpu_custom_call.1} parent=1 // pred_check
      _
    $region99: #{tpu_custom_call.1} parent=1 // pred_check_branch
      %80 = sbr.rel (0) target = $region101
    $region100: #{tpu_custom_call.1} parent=1 // pred_region
      _
    $region101: #{tpu_custom_call.1} parent=1 // pred_fallthru
      _
    %v81 = vld [vmem:[%s0] sm:$0xff]
    %v82 = vld [vmem:[%s0 + $0x8] sm:$0xff]
    %v83 = vld [vmem:[%s0 + $0x10] sm:$0xff]
    %v84 = vld [vmem:[%s0 + $0x18] sm:$0xff]
    %v85 = vld [vmem:[%s0 + $0x20] sm:$0xff]
    %v86 = vld [vmem:[%s0 + $0x28] sm:$0xff]
    %v87 = vld [vmem:[%s0 + $0x30] sm:$0xff]
    %v88 = vld [vmem:[%s0 + $0x38] sm:$0xff]
    %v89 = vld [vmem:[%s1] sm:$0xff]
    %v90 = vld [vmem:[%s1 + $0x8] sm:$0xff]
    %v91 = vld [vmem:[%s1 + $0x10] sm:$0xff]
    %v92 = vld [vmem:[%s1 + $0x18] sm:$0xff]
    %v93 = vld [vmem:[%s1 + $0x20] sm:$0xff]
    %v94 = vld [vmem:[%s1 + $0x28] sm:$0xff]
    %v95 = vld [vmem:[%s1 + $0x30] sm:$0xff]
    %v96 = vld [vmem:[%s1 + $0x38] sm:$0xff]
    %v97 = vld [vmem:[%s2] sm:$0x1]
    %v98 = vld [vmem:[%s2 + $0x1] sm:$0x1]
    %v99 = vld [vmem:[%s2 + $0x2] sm:$0x1]
    %v100 = vld [vmem:[%s2 + $0x3] sm:$0x1]
    %v101 = vld [vmem:[%s2 + $0x4] sm:$0x1]
    %v102 = vld [vmem:[%s2 + $0x5] sm:$0x1]
    %v103 = vld [vmem:[%s2 + $0x6] sm:$0x1]
    %v104 = vld [vmem:[%s2 + $0x7] sm:$0x1]
    %vm105 = vcmp.gt.f32.partialorder %v97, 0.5
    %vm106 = vcmp.gt.f32.partialorder %v98, 0.5
    %vm107 = vcmp.gt.f32.partialorder %v99, 0.5
    %vm108 = vcmp.gt.f32.partialorder %v100, 0.5
    %vm109 = vcmp.gt.f32.partialorder %v101, 0.5
    %vm110 = vcmp.gt.f32.partialorder %v102, 0.5
    %vm111 = vcmp.gt.f32.partialorder %v103, 0.5
    %vm112 = vcmp.gt.f32.partialorder %v104, 0.5
    %v113 = vsel %vm105, 0.0, -1e+09
    %v114 = vsel %vm106, 0.0, -1e+09
    %v115 = vsel %vm107, 0.0, -1e+09
    %v116 = vsel %vm108, 0.0, -1e+09
    %v117 = vsel %vm109, 0.0, -1e+09
    %v118 = vsel %vm110, 0.0, -1e+09
    %v119 = vsel %vm111, 0.0, -1e+09
    %v120 = vsel %vm112, 0.0, -1e+09
    %v121 = vld [vmem:[%s3] sm:$0xff]
    %v122 = vld [vmem:[%s3 + $0x8] sm:$0xff]
    %v123 = vld [vmem:[%s3 + $0x10] sm:$0xff]
    %v124 = vld [vmem:[%s3 + $0x18] sm:$0xff]
    %v125 = vld [vmem:[%s3 + $0x20] sm:$0xff]
    %v126 = vld [vmem:[%s3 + $0x28] sm:$0xff]
    %v127 = vld [vmem:[%s3 + $0x30] sm:$0xff]
    %v128 = vld [vmem:[%s3 + $0x38] sm:$0xff]
    %v129 = vld [vmem:[%s4] sm:$0xff]
    %v130 = vld [vmem:[%s4 + $0x8] sm:$0xff]
    %v131 = vld [vmem:[%s4 + $0x10] sm:$0xff]
    %v132 = vld [vmem:[%s4 + $0x18] sm:$0xff]
    %v133 = vld [vmem:[%s4 + $0x20] sm:$0xff]
    %v134 = vld [vmem:[%s4 + $0x28] sm:$0xff]
    %v135 = vld [vmem:[%s4 + $0x30] sm:$0xff]
    %v136 = vld [vmem:[%s4 + $0x38] sm:$0xff]
    %v137 = vld [vmem:[%s5] sm:$0xff]
    %v138 = vld [vmem:[%s5 + $0x8] sm:$0xff]
    %v139 = vld [vmem:[%s5 + $0x10] sm:$0xff]
    %v140 = vld [vmem:[%s5 + $0x18] sm:$0xff]
    %v141 = vld [vmem:[%s5 + $0x20] sm:$0x3]
    %v142 = vld [vmem:[%s6] sm:$0x1]
    %v144 = vperm.slane %v142, 0
    %vm146 = vcmask 277504
    %v148 = vsel %vm146, %v81, 0
    %v151 = vsel %vm146, %v82, 0
    %v154 = vsel %vm146, %v83, 0
    %v157 = vsel %vm146, %v84, 0
    %v160 = vsel %vm146, %v85, 0
    %v163 = vsel %vm146, %v86, 0
    %v166 = vsel %vm146, %v87, 0
    %v169 = vsel %vm146, %v88, 0
    %vm171 = vcmask 1041408
    %v173 = vsel %vm171, %v141, 0
    %175 = vmatpush.msra.mxu0 0.0
    %176 = vmatpush.msra.mxu0 0.0
    %177 = vmatpush.msra.mxu0 0.0
    %178 = vmatpush.msra.mxu0 0.0
    %179 = vmatpush.msra.mxu0 0.0
    %180 = vmatpush.msra.mxu0 0.0
    %181 = vmatpush.msra.mxu0 0.0
    %182 = vmatpush.msra.mxu0 0.0
    %183 = vmatpush.msra.mxu0 0.0
    %184 = vmatpush.msra.mxu0 0.0
    %185 = vmatpush.msra.mxu0 0.0
    %186 = vmatpush.msra.mxu0 %v173
    %187 = vmatpush.msra.mxu0 %v140
    %188 = vmatpush.msra.mxu0 %v139
    %189 = vmatpush.msra.mxu0 %v138
    %190 = vmatpush.msra.mxu0 %v137
    %191 = vmatmul.f32.gmra.mxu0 %v148
    %v192 = vpop.f32.mrf.mxu0
    %v193 = vadd.f32 %v144, %v192
    %194 = vmatmul.f32.gmra.mxu0 %v151
    %v195 = vpop.f32.mrf.mxu0
    %v196 = vadd.f32 %v144, %v195
    %197 = vmatmul.f32.gmra.mxu0 %v154
    %v198 = vpop.f32.mrf.mxu0
    %v199 = vadd.f32 %v144, %v198
    %200 = vmatmul.f32.gmra.mxu0 %v157
    %v201 = vpop.f32.mrf.mxu0
    %v202 = vadd.f32 %v144, %v201
    %203 = vmatmul.f32.gmra.mxu0 %v160
    %v204 = vpop.f32.mrf.mxu0
    %v205 = vadd.f32 %v144, %v204
    %206 = vmatmul.f32.gmra.mxu0 %v163
    %v207 = vpop.f32.mrf.mxu0
    %v208 = vadd.f32 %v144, %v207
    %209 = vmatmul.f32.gmra.mxu0 %v166
    %v210 = vpop.f32.mrf.mxu0
    %v211 = vadd.f32 %v144, %v210
    %212 = vmatmul.f32.gmra.mxu0 %v169
    %v213 = vpop.f32.mrf.mxu0
    %v214 = vadd.f32 %v144, %v213
    %215 = vdwg.mxu0
    %v216 = vld [vmem:[%s7] sm:$0x1]
    %v217 = vld [vmem:[%s8] sm:$0x1]
    %vm218 = vcmask 261120
    %v219 = vsel %vm218, %v193, 0.0
    %220 = vadd.xlane.f32.xlu0 %v219
    %v221 = vpop.xlane.xlu0 %220
    %v222 = vsel %vm218, %v196, 0.0
    %223 = vadd.xlane.f32.xlu0 %v222
    %v224 = vpop.xlane.xlu0 %223
    %v225 = vsel %vm218, %v199, 0.0
    %226 = vadd.xlane.f32.xlu0 %v225
    %v227 = vpop.xlane.xlu0 %226
    %v228 = vsel %vm218, %v202, 0.0
    %229 = vadd.xlane.f32.xlu0 %v228
    %v230 = vpop.xlane.xlu0 %229
    %v231 = vsel %vm218, %v205, 0.0
    %232 = vadd.xlane.f32.xlu0 %v231
    %v233 = vpop.xlane.xlu0 %232
    %v234 = vsel %vm218, %v208, 0.0
    %235 = vadd.xlane.f32.xlu0 %v234
    %v236 = vpop.xlane.xlu0 %235
    %v237 = vsel %vm218, %v211, 0.0
    %238 = vadd.xlane.f32.xlu0 %v237
    %v239 = vpop.xlane.xlu0 %238
    %v240 = vsel %vm218, %v214, 0.0
    %241 = vadd.xlane.f32.xlu0 %v240
    %v242 = vpop.xlane.xlu0 %241
    %v243 = vrcp.pop 32.0
    %v244 = vmul.f32 32.0, %v243
    %v245 = vsub.f32 1.0, %v244
    %v246 = vmul.f32 %v243, %v245
    %v247 = vadd.f32 %v243, %v246
    %vm248 = vweird.f32 %v243
    %v249 = vsel %vm248, %v243, %v247
    %v250 = vmul.f32 %v221, %v249
    %v251 = vmul.f32 %v224, %v249
    %v252 = vmul.f32 %v227, %v249
    %v253 = vmul.f32 %v230, %v249
    %v254 = vmul.f32 %v233, %v249
    %v255 = vmul.f32 %v236, %v249
    %v256 = vmul.f32 %v239, %v249
    %v257 = vmul.f32 %v242, %v249
    %v258 = vsub.f32 %v193, %v250
    %v259 = vsub.f32 %v196, %v251
    %v260 = vsub.f32 %v199, %v252
    %v261 = vsub.f32 %v202, %v253
    %v262 = vsub.f32 %v205, %v254
    %v263 = vsub.f32 %v208, %v255
    %v264 = vsub.f32 %v211, %v256
    %v265 = vsub.f32 %v214, %v257
    %v266 = vmul.f32 %v258, %v258
    %v267 = vmul.f32 %v259, %v259
    %v268 = vmul.f32 %v260, %v260
    %v269 = vmul.f32 %v261, %v261
    %v270 = vmul.f32 %v262, %v262
    %v271 = vmul.f32 %v263, %v263
    %v272 = vmul.f32 %v264, %v264
    %v273 = vmul.f32 %v265, %v265
    %v274 = vsel %vm218, %v266, 0.0
    %275 = vadd.xlane.f32.xlu0 %v274
    %v276 = vpop.xlane.xlu0 %275
    %v277 = vsel %vm218, %v267, 0.0
    %278 = vadd.xlane.f32.xlu0 %v277
    %v279 = vpop.xlane.xlu0 %278
    %v280 = vsel %vm218, %v268, 0.0
    %281 = vadd.xlane.f32.xlu0 %v280
    %v282 = vpop.xlane.xlu0 %281
    %v283 = vsel %vm218, %v269, 0.0
    %284 = vadd.xlane.f32.xlu0 %v283
    %v285 = vpop.xlane.xlu0 %284
    %v286 = vsel %vm218, %v270, 0.0
    %287 = vadd.xlane.f32.xlu0 %v286
    %v288 = vpop.xlane.xlu0 %287
    %v289 = vsel %vm218, %v271, 0.0
    %290 = vadd.xlane.f32.xlu0 %v289
    %v291 = vpop.xlane.xlu0 %290
    %v292 = vsel %vm218, %v272, 0.0
    %293 = vadd.xlane.f32.xlu0 %v292
    %v294 = vpop.xlane.xlu0 %293
    %v295 = vsel %vm218, %v273, 0.0
    %296 = vadd.xlane.f32.xlu0 %v295
    %v297 = vpop.xlane.xlu0 %296
    %v298 = vmul.f32 %v276, %v249
    %v299 = vmul.f32 %v279, %v249
    %v300 = vmul.f32 %v282, %v249
    %v301 = vmul.f32 %v285, %v249
    %v302 = vmul.f32 %v288, %v249
    %v303 = vmul.f32 %v291, %v249
    %v304 = vmul.f32 %v294, %v249
    %v305 = vmul.f32 %v297, %v249
    %v306 = vadd.f32 %v298, 1e-05
    %v307 = vadd.f32 %v299, 1e-05
    %v308 = vadd.f32 %v300, 1e-05
    %v309 = vadd.f32 %v301, 1e-05
    %v310 = vadd.f32 %v302, 1e-05
    %v311 = vadd.f32 %v303, 1e-05
    %v312 = vadd.f32 %v304, 1e-05
    %v313 = vadd.f32 %v305, 1e-05
    %v314 = vrsqrt.pop %v306
    %v315 = vmul.f32 %v314, %v306
    %v316 = vmul.f32 %v315, %v314
    %v317 = vmul.f32 0.5, %v316
    %v318 = vsub.f32 1.5, %v317
    %v319 = vmul.f32 %v314, %v318
    %vm320 = vweird.f32 %v306
    %vm321 = vweird.f32 %v314
    %vm322 = vmor %vm320, %vm321
    %v323 = vsel %vm322, %v314, %v319
    %v324 = vrsqrt.pop %v307
    %v325 = vmul.f32 %v324, %v307
    %v326 = vmul.f32 %v325, %v324
    %v327 = vmul.f32 0.5, %v326
    %v328 = vsub.f32 1.5, %v327
    %v329 = vmul.f32 %v324, %v328
    %vm330 = vweird.f32 %v307
    %vm331 = vweird.f32 %v324
    %vm332 = vmor %vm330, %vm331
    %v333 = vsel %vm332, %v324, %v329
    %v334 = vrsqrt.pop %v308
    %v335 = vmul.f32 %v334, %v308
    %v336 = vmul.f32 %v335, %v334
    %v337 = vmul.f32 0.5, %v336
    %v338 = vsub.f32 1.5, %v337
    %v339 = vmul.f32 %v334, %v338
    %vm340 = vweird.f32 %v308
    %vm341 = vweird.f32 %v334
    %vm342 = vmor %vm340, %vm341
    %v343 = vsel %vm342, %v334, %v339
    %v344 = vrsqrt.pop %v309
    %v345 = vmul.f32 %v344, %v309
    %v346 = vmul.f32 %v345, %v344
    %v347 = vmul.f32 0.5, %v346
    %v348 = vsub.f32 1.5, %v347
    %v349 = vmul.f32 %v344, %v348
    %vm350 = vweird.f32 %v309
    %vm351 = vweird.f32 %v344
    %vm352 = vmor %vm350, %vm351
    %v353 = vsel %vm352, %v344, %v349
    %v354 = vrsqrt.pop %v310
    %v355 = vmul.f32 %v354, %v310
    %v356 = vmul.f32 %v355, %v354
    %v357 = vmul.f32 0.5, %v356
    %v358 = vsub.f32 1.5, %v357
    %v359 = vmul.f32 %v354, %v358
    %vm360 = vweird.f32 %v310
    %vm361 = vweird.f32 %v354
    %vm362 = vmor %vm360, %vm361
    %v363 = vsel %vm362, %v354, %v359
    %v364 = vrsqrt.pop %v311
    %v365 = vmul.f32 %v364, %v311
    %v366 = vmul.f32 %v365, %v364
    %v367 = vmul.f32 0.5, %v366
    %v368 = vsub.f32 1.5, %v367
    %v369 = vmul.f32 %v364, %v368
    %vm370 = vweird.f32 %v311
    %vm371 = vweird.f32 %v364
    %vm372 = vmor %vm370, %vm371
    %v373 = vsel %vm372, %v364, %v369
    %v374 = vrsqrt.pop %v312
    %v375 = vmul.f32 %v374, %v312
    %v376 = vmul.f32 %v375, %v374
    %v377 = vmul.f32 0.5, %v376
    %v378 = vsub.f32 1.5, %v377
    %v379 = vmul.f32 %v374, %v378
    %vm380 = vweird.f32 %v312
    %vm381 = vweird.f32 %v374
    %vm382 = vmor %vm380, %vm381
    %v383 = vsel %vm382, %v374, %v379
    %v384 = vrsqrt.pop %v313
    %v385 = vmul.f32 %v384, %v313
    %v386 = vmul.f32 %v385, %v384
    %v387 = vmul.f32 0.5, %v386
    %v388 = vsub.f32 1.5, %v387
    %v389 = vmul.f32 %v384, %v388
    %vm390 = vweird.f32 %v313
    %vm391 = vweird.f32 %v384
    %vm392 = vmor %vm390, %vm391
    %v393 = vsel %vm392, %v384, %v389
    %v394 = vmul.f32 %v258, %v323
    %v395 = vmul.f32 %v259, %v333
    %v396 = vmul.f32 %v260, %v343
    %v397 = vmul.f32 %v261, %v353
    %v398 = vmul.f32 %v262, %v363
    %v399 = vmul.f32 %v263, %v373
    %v400 = vmul.f32 %v264, %v383
    %v401 = vmul.f32 %v265, %v393
    %v403 = vperm.slane %v216, 0
    %v405 = vmul.f32 %v394, %v403
    %v406 = vmul.f32 %v395, %v403
    %v407 = vmul.f32 %v396, %v403
    %v408 = vmul.f32 %v397, %v403
    %v409 = vmul.f32 %v398, %v403
    %v410 = vmul.f32 %v399, %v403
    %v411 = vmul.f32 %v400, %v403
    %v412 = vmul.f32 %v401, %v403
    %v414 = vperm.slane %v217, 0
    %v416 = vadd.f32 %v405, %v414
    %v417 = vadd.f32 %v406, %v414
    %v418 = vadd.f32 %v407, %v414
    %v419 = vadd.f32 %v408, %v414
    %v420 = vadd.f32 %v409, %v414
    %v421 = vadd.f32 %v410, %v414
    %v422 = vadd.f32 %v411, %v414
    %v423 = vadd.f32 %v412, %v414
    %v424 = vld [vmem:[%s9] sm:$0xff]
    %v425 = vld [vmem:[%s9 + $0x8] sm:$0xff]
    %v426 = vld [vmem:[%s9 + $0x10] sm:$0xff]
    %v427 = vld [vmem:[%s9 + $0x18] sm:$0xff]
    %v428 = vld [vmem:[%s10] sm:$0x1]
    %v430 = vperm.slane %v428, 0
    %v433 = vsel %vm218, %v416, 0
    %v436 = vsel %vm218, %v417, 0
    %v439 = vsel %vm218, %v418, 0
    %v442 = vsel %vm218, %v419, 0
    %v445 = vsel %vm218, %v420, 0
    %v448 = vsel %vm218, %v421, 0
    %v451 = vsel %vm218, %v422, 0
    %v454 = vsel %vm218, %v423, 0
    %456 = vmatpush.msra.mxu0 0.0
    %457 = vmatpush.msra.mxu0 0.0
    %458 = vmatpush.msra.mxu0 0.0
    %459 = vmatpush.msra.mxu0 0.0
    %460 = vmatpush.msra.mxu0 0.0
    %461 = vmatpush.msra.mxu0 0.0
    %462 = vmatpush.msra.mxu0 0.0
    %463 = vmatpush.msra.mxu0 0.0
    %464 = vmatpush.msra.mxu0 0.0
    %465 = vmatpush.msra.mxu0 0.0
    %466 = vmatpush.msra.mxu0 0.0
    %467 = vmatpush.msra.mxu0 0.0
    %468 = vmatpush.msra.mxu0 %v427
    %469 = vmatpush.msra.mxu0 %v426
    %470 = vmatpush.msra.mxu0 %v425
    %471 = vmatpush.msra.mxu0 %v424
    %472 = vmatmul.f32.gmra.mxu0 %v433
    %v473 = vpop.f32.mrf.mxu0
    %v474 = vadd.f32 %v430, %v473
    %475 = vmatmul.f32.gmra.mxu0 %v436
    %v476 = vpop.f32.mrf.mxu0
    %v477 = vadd.f32 %v430, %v476
    %478 = vmatmul.f32.gmra.mxu0 %v439
    %v479 = vpop.f32.mrf.mxu0
    %v480 = vadd.f32 %v430, %v479
    %481 = vmatmul.f32.gmra.mxu0 %v442
    %v482 = vpop.f32.mrf.mxu0
    %v483 = vadd.f32 %v430, %v482
    %484 = vmatmul.f32.gmra.mxu0 %v445
    %v485 = vpop.f32.mrf.mxu0
    %v486 = vadd.f32 %v430, %v485
    %487 = vmatmul.f32.gmra.mxu0 %v448
    %v488 = vpop.f32.mrf.mxu0
    %v489 = vadd.f32 %v430, %v488
    %490 = vmatmul.f32.gmra.mxu0 %v451
    %v491 = vpop.f32.mrf.mxu0
    %v492 = vadd.f32 %v430, %v491
    %493 = vmatmul.f32.gmra.mxu0 %v454
    %v494 = vpop.f32.mrf.mxu0
    %v495 = vadd.f32 %v430, %v494
    %496 = vdwg.mxu0
    %v497 = vld [vmem:[%s11] sm:$0xff]
    %v498 = vld [vmem:[%s11 + $0x8] sm:$0xff]
    %v499 = vld [vmem:[%s11 + $0x10] sm:$0xff]
    %v500 = vld [vmem:[%s11 + $0x18] sm:$0xff]
    %v501 = vld [vmem:[%s12] sm:$0x1]
    %v503 = vperm.slane %v501, 0
    %505 = vmatpush.msra.mxu0 0.0
    %506 = vmatpush.msra.mxu0 0.0
    %507 = vmatpush.msra.mxu0 0.0
    %508 = vmatpush.msra.mxu0 0.0
    %509 = vmatpush.msra.mxu0 0.0
    %510 = vmatpush.msra.mxu0 0.0
    %511 = vmatpush.msra.mxu0 0.0
    %512 = vmatpush.msra.mxu0 0.0
    %513 = vmatpush.msra.mxu0 0.0
    %514 = vmatpush.msra.mxu0 0.0
    %515 = vmatpush.msra.mxu0 0.0
    %516 = vmatpush.msra.mxu0 0.0
    %517 = vmatpush.msra.mxu0 %v500
    %518 = vmatpush.msra.mxu0 %v499
    %519 = vmatpush.msra.mxu0 %v498
    %520 = vmatpush.msra.mxu0 %v497
    %521 = vmatmul.f32.gmra.mxu0 %v433
    %v522 = vpop.f32.mrf.mxu0
    %v523 = vadd.f32 %v503, %v522
    %524 = vmatmul.f32.gmra.mxu0 %v436
    %v525 = vpop.f32.mrf.mxu0
    %v526 = vadd.f32 %v503, %v525
    %527 = vmatmul.f32.gmra.mxu0 %v439
    %v528 = vpop.f32.mrf.mxu0
    %v529 = vadd.f32 %v503, %v528
    %530 = vmatmul.f32.gmra.mxu0 %v442
    %v531 = vpop.f32.mrf.mxu0
    %v532 = vadd.f32 %v503, %v531
    %533 = vmatmul.f32.gmra.mxu0 %v445
    %v534 = vpop.f32.mrf.mxu0
    %v535 = vadd.f32 %v503, %v534
    %536 = vmatmul.f32.gmra.mxu0 %v448
    %v537 = vpop.f32.mrf.mxu0
    %v538 = vadd.f32 %v503, %v537
    %539 = vmatmul.f32.gmra.mxu0 %v451
    %v540 = vpop.f32.mrf.mxu0
    %v541 = vadd.f32 %v503, %v540
    %542 = vmatmul.f32.gmra.mxu0 %v454
    %v543 = vpop.f32.mrf.mxu0
    %v544 = vadd.f32 %v503, %v543
    %545 = vdwg.mxu0
    %v546 = vld [vmem:[%s13] sm:$0xff]
    %v547 = vld [vmem:[%s13 + $0x8] sm:$0xff]
    %v548 = vld [vmem:[%s13 + $0x10] sm:$0xff]
    %v549 = vld [vmem:[%s13 + $0x18] sm:$0xff]
    %v550 = vld [vmem:[%s14] sm:$0x1]
    %v552 = vperm.slane %v550, 0
    %554 = vmatpush.msra.mxu0 0.0
    %555 = vmatpush.msra.mxu0 0.0
    %556 = vmatpush.msra.mxu0 0.0
    %557 = vmatpush.msra.mxu0 0.0
    %558 = vmatpush.msra.mxu0 0.0
    %559 = vmatpush.msra.mxu0 0.0
    %560 = vmatpush.msra.mxu0 0.0
    %561 = vmatpush.msra.mxu0 0.0
    %562 = vmatpush.msra.mxu0 0.0
    %563 = vmatpush.msra.mxu0 0.0
    %564 = vmatpush.msra.mxu0 0.0
    %565 = vmatpush.msra.mxu0 0.0
    %566 = vmatpush.msra.mxu0 %v549
    %567 = vmatpush.msra.mxu0 %v548
    %568 = vmatpush.msra.mxu0 %v547
    %569 = vmatpush.msra.mxu0 %v546
    %570 = vmatmul.f32.gmra.mxu0 %v433
    %v571 = vpop.f32.mrf.mxu0
    %v572 = vadd.f32 %v552, %v571
    %573 = vmatmul.f32.gmra.mxu0 %v436
    %v574 = vpop.f32.mrf.mxu0
    %v575 = vadd.f32 %v552, %v574
    %576 = vmatmul.f32.gmra.mxu0 %v439
    %v577 = vpop.f32.mrf.mxu0
    %v578 = vadd.f32 %v552, %v577
    %579 = vmatmul.f32.gmra.mxu0 %v442
    %v580 = vpop.f32.mrf.mxu0
    %v581 = vadd.f32 %v552, %v580
    %582 = vmatmul.f32.gmra.mxu0 %v445
    %v583 = vpop.f32.mrf.mxu0
    %v584 = vadd.f32 %v552, %v583
    %585 = vmatmul.f32.gmra.mxu0 %v448
    %v586 = vpop.f32.mrf.mxu0
    %v587 = vadd.f32 %v552, %v586
    %588 = vmatmul.f32.gmra.mxu0 %v451
    %v589 = vpop.f32.mrf.mxu0
    %v590 = vadd.f32 %v552, %v589
    %591 = vmatmul.f32.gmra.mxu0 %v454
    %v592 = vpop.f32.mrf.mxu0
    %v593 = vadd.f32 %v552, %v592
    %594 = vdwg.mxu0
    %v595 = vmul.f32 %v523, %v121
    %v596 = vmul.f32 %v523, %v122
    %v597 = vmul.f32 %v523, %v123
    %v598 = vmul.f32 %v523, %v124
    %v599 = vmul.f32 %v523, %v125
    %v600 = vmul.f32 %v523, %v126
    %v601 = vmul.f32 %v523, %v127
    %v602 = vmul.f32 %v523, %v128
    %v603 = vmul.f32 %v526, %v121
    %v604 = vmul.f32 %v526, %v122
    %v605 = vmul.f32 %v526, %v123
    %v606 = vmul.f32 %v526, %v124
    %v607 = vmul.f32 %v526, %v125
    %v608 = vmul.f32 %v526, %v126
    %v609 = vmul.f32 %v526, %v127
    %v610 = vmul.f32 %v526, %v128
    %v611 = vmul.f32 %v529, %v121
    %v612 = vmul.f32 %v529, %v122
    %v613 = vmul.f32 %v529, %v123
    %v614 = vmul.f32 %v529, %v124
    %v615 = vmul.f32 %v529, %v125
    %v616 = vmul.f32 %v529, %v126
    %v617 = vmul.f32 %v529, %v127
    %v618 = vmul.f32 %v529, %v128
    %v619 = vmul.f32 %v532, %v121
    %v620 = vmul.f32 %v532, %v122
    %v621 = vmul.f32 %v532, %v123
    %v622 = vmul.f32 %v532, %v124
    %v623 = vmul.f32 %v532, %v125
    %v624 = vmul.f32 %v532, %v126
    %v625 = vmul.f32 %v532, %v127
    %v626 = vmul.f32 %v532, %v128
    %v627 = vmul.f32 %v535, %v121
    %v628 = vmul.f32 %v535, %v122
    %v629 = vmul.f32 %v535, %v123
    %v630 = vmul.f32 %v535, %v124
    %v631 = vmul.f32 %v535, %v125
    %v632 = vmul.f32 %v535, %v126
    %v633 = vmul.f32 %v535, %v127
    %v634 = vmul.f32 %v535, %v128
    %v635 = vmul.f32 %v538, %v121
    %v636 = vmul.f32 %v538, %v122
    %v637 = vmul.f32 %v538, %v123
    %v638 = vmul.f32 %v538, %v124
    %v639 = vmul.f32 %v538, %v125
    %v640 = vmul.f32 %v538, %v126
    %v641 = vmul.f32 %v538, %v127
    %v642 = vmul.f32 %v538, %v128
    %v643 = vmul.f32 %v541, %v121
    %v644 = vmul.f32 %v541, %v122
    %v645 = vmul.f32 %v541, %v123
    %v646 = vmul.f32 %v541, %v124
    %v647 = vmul.f32 %v541, %v125
    %v648 = vmul.f32 %v541, %v126
    %v649 = vmul.f32 %v541, %v127
    %v650 = vmul.f32 %v541, %v128
    %v651 = vmul.f32 %v544, %v121
    %v652 = vmul.f32 %v544, %v122
    %v653 = vmul.f32 %v544, %v123
    %v654 = vmul.f32 %v544, %v124
    %v655 = vmul.f32 %v544, %v125
    %v656 = vmul.f32 %v544, %v126
    %v657 = vmul.f32 %v544, %v127
    %v658 = vmul.f32 %v544, %v128
    %v659 = vmul.f32 %v572, %v121
    %v660 = vmul.f32 %v572, %v122
    %v661 = vmul.f32 %v572, %v123
    %v662 = vmul.f32 %v572, %v124
    %v663 = vmul.f32 %v572, %v125
    %v664 = vmul.f32 %v572, %v126
    %v665 = vmul.f32 %v572, %v127
    %v666 = vmul.f32 %v572, %v128
    %v667 = vmul.f32 %v575, %v121
    %v668 = vmul.f32 %v575, %v122
    %v669 = vmul.f32 %v575, %v123
    %v670 = vmul.f32 %v575, %v124
    %v671 = vmul.f32 %v575, %v125
    %v672 = vmul.f32 %v575, %v126
    %v673 = vmul.f32 %v575, %v127
    %v674 = vmul.f32 %v575, %v128
    %v675 = vmul.f32 %v578, %v121
    %v676 = vmul.f32 %v578, %v122
    %v677 = vmul.f32 %v578, %v123
    %v678 = vmul.f32 %v578, %v124
    %v679 = vmul.f32 %v578, %v125
    %v680 = vmul.f32 %v578, %v126
    %v681 = vmul.f32 %v578, %v127
    %v682 = vmul.f32 %v578, %v128
    %v683 = vmul.f32 %v581, %v121
    %v684 = vmul.f32 %v581, %v122
    %v685 = vmul.f32 %v581, %v123
    %v686 = vmul.f32 %v581, %v124
    %v687 = vmul.f32 %v581, %v125
    %v688 = vmul.f32 %v581, %v126
    %v689 = vmul.f32 %v581, %v127
    %v690 = vmul.f32 %v581, %v128
    %v691 = vmul.f32 %v584, %v121
    %v692 = vmul.f32 %v584, %v122
    %v693 = vmul.f32 %v584, %v123
    %v694 = vmul.f32 %v584, %v124
    %v695 = vmul.f32 %v584, %v125
    %v696 = vmul.f32 %v584, %v126
    %v697 = vmul.f32 %v584, %v127
    %v698 = vmul.f32 %v584, %v128
    %v699 = vmul.f32 %v587, %v121
    %v700 = vmul.f32 %v587, %v122
    %v701 = vmul.f32 %v587, %v123
    %v702 = vmul.f32 %v587, %v124
    %v703 = vmul.f32 %v587, %v125
    %v704 = vmul.f32 %v587, %v126
    %v705 = vmul.f32 %v587, %v127
    %v706 = vmul.f32 %v587, %v128
    %v707 = vmul.f32 %v590, %v121
    %v708 = vmul.f32 %v590, %v122
    %v709 = vmul.f32 %v590, %v123
    %v710 = vmul.f32 %v590, %v124
    %v711 = vmul.f32 %v590, %v125
    %v712 = vmul.f32 %v590, %v126
    %v713 = vmul.f32 %v590, %v127
    %v714 = vmul.f32 %v590, %v128
    %v715 = vmul.f32 %v593, %v121
    %v716 = vmul.f32 %v593, %v122
    %v717 = vmul.f32 %v593, %v123
    %v718 = vmul.f32 %v593, %v124
    %v719 = vmul.f32 %v593, %v125
    %v720 = vmul.f32 %v593, %v126
    %v721 = vmul.f32 %v593, %v127
    %v722 = vmul.f32 %v593, %v128
    %v731 = vperm.slane %v113, 0
    %v732 = vperm.slane %v114, 0
    %v733 = vperm.slane %v115, 0
    %v734 = vperm.slane %v116, 0
    %v735 = vperm.slane %v117, 0
    %v736 = vperm.slane %v118, 0
    %v737 = vperm.slane %v119, 0
    %v738 = vperm.slane %v120, 0
    %v748 = vsel %vm218, %v474, 0
    %v751 = vsel %vm218, %v595, 0
    %v754 = vsel %vm218, %v596, 0
    %v757 = vsel %vm218, %v597, 0
    %v760 = vsel %vm218, %v598, 0
    %v763 = vsel %vm218, %v599, 0
    %v766 = vsel %vm218, %v600, 0
    %v769 = vsel %vm218, %v601, 0
    %v772 = vsel %vm218, %v602, 0
    %774 = vmatpush.xpose.msra.mxu0 0.0
    %775 = vmatpush.xpose.msra.mxu0 0.0
    %776 = vmatpush.xpose.msra.mxu0 0.0
    %777 = vmatpush.xpose.msra.mxu0 0.0
    %778 = vmatpush.xpose.msra.mxu0 0.0
    %779 = vmatpush.xpose.msra.mxu0 0.0
    %780 = vmatpush.xpose.msra.mxu0 0.0
    %781 = vmatpush.xpose.msra.mxu0 0.0
    %782 = vmatpush.xpose.msra.mxu0 %v772
    %783 = vmatpush.xpose.msra.mxu0 %v769
    %784 = vmatpush.xpose.msra.mxu0 %v766
    %785 = vmatpush.xpose.msra.mxu0 %v763
    %786 = vmatpush.xpose.msra.mxu0 %v760
    %787 = vmatpush.xpose.msra.mxu0 %v757
    %788 = vmatpush.xpose.msra.mxu0 %v754
    %789 = vmatpush.xpose.msra.mxu0 %v751
    %790 = vmatmul.f32.gmra.mxu0 %v748
    %v791 = vpop.f32.mrf.mxu0
    %v792 = vadd.f32 %v731, %v791
    %793 = vdwg.mxu0
    %v795 = vsel %vm218, %v477, 0
    %v798 = vsel %vm218, %v603, 0
    %v801 = vsel %vm218, %v604, 0
    %v804 = vsel %vm218, %v605, 0
    %v807 = vsel %vm218, %v606, 0
    %v810 = vsel %vm218, %v607, 0
    %v813 = vsel %vm218, %v608, 0
    %v816 = vsel %vm218, %v609, 0
    %v819 = vsel %vm218, %v610, 0
    %821 = vmatpush.xpose.msra.mxu0 0.0
    %822 = vmatpush.xpose.msra.mxu0 0.0
    %823 = vmatpush.xpose.msra.mxu0 0.0
    %824 = vmatpush.xpose.msra.mxu0 0.0
    %825 = vmatpush.xpose.msra.mxu0 0.0
    %826 = vmatpush.xpose.msra.mxu0 0.0
    %827 = vmatpush.xpose.msra.mxu0 0.0
    %828 = vmatpush.xpose.msra.mxu0 0.0
    %829 = vmatpush.xpose.msra.mxu0 %v819
    %830 = vmatpush.xpose.msra.mxu0 %v816
    %831 = vmatpush.xpose.msra.mxu0 %v813
    %832 = vmatpush.xpose.msra.mxu0 %v810
    %833 = vmatpush.xpose.msra.mxu0 %v807
    %834 = vmatpush.xpose.msra.mxu0 %v804
    %835 = vmatpush.xpose.msra.mxu0 %v801
    %836 = vmatpush.xpose.msra.mxu0 %v798
    %837 = vmatmul.f32.gmra.mxu0 %v795
    %v838 = vpop.f32.mrf.mxu0
    %v839 = vadd.f32 %v732, %v838
    %840 = vdwg.mxu0
    %v842 = vsel %vm218, %v480, 0
    %v845 = vsel %vm218, %v611, 0
    %v848 = vsel %vm218, %v612, 0
    %v851 = vsel %vm218, %v613, 0
    %v854 = vsel %vm218, %v614, 0
    %v857 = vsel %vm218, %v615, 0
    %v860 = vsel %vm218, %v616, 0
    %v863 = vsel %vm218, %v617, 0
    %v866 = vsel %vm218, %v618, 0
    %868 = vmatpush.xpose.msra.mxu0 0.0
    %869 = vmatpush.xpose.msra.mxu0 0.0
    %870 = vmatpush.xpose.msra.mxu0 0.0
    %871 = vmatpush.xpose.msra.mxu0 0.0
    %872 = vmatpush.xpose.msra.mxu0 0.0
    %873 = vmatpush.xpose.msra.mxu0 0.0
    %874 = vmatpush.xpose.msra.mxu0 0.0
    %875 = vmatpush.xpose.msra.mxu0 0.0
    %876 = vmatpush.xpose.msra.mxu0 %v866
    %877 = vmatpush.xpose.msra.mxu0 %v863
    %878 = vmatpush.xpose.msra.mxu0 %v860
    %879 = vmatpush.xpose.msra.mxu0 %v857
    %880 = vmatpush.xpose.msra.mxu0 %v854
    %881 = vmatpush.xpose.msra.mxu0 %v851
    %882 = vmatpush.xpose.msra.mxu0 %v848
    %883 = vmatpush.xpose.msra.mxu0 %v845
    %884 = vmatmul.f32.gmra.mxu0 %v842
    %v885 = vpop.f32.mrf.mxu0
    %v886 = vadd.f32 %v733, %v885
    %887 = vdwg.mxu0
    %v889 = vsel %vm218, %v483, 0
    %v892 = vsel %vm218, %v619, 0
    %v895 = vsel %vm218, %v620, 0
    %v898 = vsel %vm218, %v621, 0
    %v901 = vsel %vm218, %v622, 0
    %v904 = vsel %vm218, %v623, 0
    %v907 = vsel %vm218, %v624, 0
    %v910 = vsel %vm218, %v625, 0
    %v913 = vsel %vm218, %v626, 0
    %915 = vmatpush.xpose.msra.mxu0 0.0
    %916 = vmatpush.xpose.msra.mxu0 0.0
    %917 = vmatpush.xpose.msra.mxu0 0.0
    %918 = vmatpush.xpose.msra.mxu0 0.0
    %919 = vmatpush.xpose.msra.mxu0 0.0
    %920 = vmatpush.xpose.msra.mxu0 0.0
    %921 = vmatpush.xpose.msra.mxu0 0.0
    %922 = vmatpush.xpose.msra.mxu0 0.0
    %923 = vmatpush.xpose.msra.mxu0 %v913
    %924 = vmatpush.xpose.msra.mxu0 %v910
    %925 = vmatpush.xpose.msra.mxu0 %v907
    %926 = vmatpush.xpose.msra.mxu0 %v904
    %927 = vmatpush.xpose.msra.mxu0 %v901
    %928 = vmatpush.xpose.msra.mxu0 %v898
    %929 = vmatpush.xpose.msra.mxu0 %v895
    %930 = vmatpush.xpose.msra.mxu0 %v892
    %931 = vmatmul.f32.gmra.mxu0 %v889
    %v932 = vpop.f32.mrf.mxu0
    %v933 = vadd.f32 %v734, %v932
    %934 = vdwg.mxu0
    %v936 = vsel %vm218, %v486, 0
    %v939 = vsel %vm218, %v627, 0
    %v942 = vsel %vm218, %v628, 0
    %v945 = vsel %vm218, %v629, 0
    %v948 = vsel %vm218, %v630, 0
    %v951 = vsel %vm218, %v631, 0
    %v954 = vsel %vm218, %v632, 0
    %v957 = vsel %vm218, %v633, 0
    %v960 = vsel %vm218, %v634, 0
    %962 = vmatpush.xpose.msra.mxu0 0.0
    %963 = vmatpush.xpose.msra.mxu0 0.0
    %964 = vmatpush.xpose.msra.mxu0 0.0
    %965 = vmatpush.xpose.msra.mxu0 0.0
    %966 = vmatpush.xpose.msra.mxu0 0.0
    %967 = vmatpush.xpose.msra.mxu0 0.0
    %968 = vmatpush.xpose.msra.mxu0 0.0
    %969 = vmatpush.xpose.msra.mxu0 0.0
    %970 = vmatpush.xpose.msra.mxu0 %v960
    %971 = vmatpush.xpose.msra.mxu0 %v957
    %972 = vmatpush.xpose.msra.mxu0 %v954
    %973 = vmatpush.xpose.msra.mxu0 %v951
    %974 = vmatpush.xpose.msra.mxu0 %v948
    %975 = vmatpush.xpose.msra.mxu0 %v945
    %976 = vmatpush.xpose.msra.mxu0 %v942
    %977 = vmatpush.xpose.msra.mxu0 %v939
    %978 = vmatmul.f32.gmra.mxu0 %v936
    %v979 = vpop.f32.mrf.mxu0
    %v980 = vadd.f32 %v735, %v979
    %981 = vdwg.mxu0
    %v983 = vsel %vm218, %v489, 0
    %v986 = vsel %vm218, %v635, 0
    %v989 = vsel %vm218, %v636, 0
    %v992 = vsel %vm218, %v637, 0
    %v995 = vsel %vm218, %v638, 0
    %v998 = vsel %vm218, %v639, 0
    %v1001 = vsel %vm218, %v640, 0
    %v1004 = vsel %vm218, %v641, 0
    %v1007 = vsel %vm218, %v642, 0
    %1009 = vmatpush.xpose.msra.mxu0 0.0
    %1010 = vmatpush.xpose.msra.mxu0 0.0
    %1011 = vmatpush.xpose.msra.mxu0 0.0
    %1012 = vmatpush.xpose.msra.mxu0 0.0
    %1013 = vmatpush.xpose.msra.mxu0 0.0
    %1014 = vmatpush.xpose.msra.mxu0 0.0
    %1015 = vmatpush.xpose.msra.mxu0 0.0
    %1016 = vmatpush.xpose.msra.mxu0 0.0
    %1017 = vmatpush.xpose.msra.mxu0 %v1007
    %1018 = vmatpush.xpose.msra.mxu0 %v1004
    %1019 = vmatpush.xpose.msra.mxu0 %v1001
    %1020 = vmatpush.xpose.msra.mxu0 %v998
    %1021 = vmatpush.xpose.msra.mxu0 %v995
    %1022 = vmatpush.xpose.msra.mxu0 %v992
    %1023 = vmatpush.xpose.msra.mxu0 %v989
    %1024 = vmatpush.xpose.msra.mxu0 %v986
    %1025 = vmatmul.f32.gmra.mxu0 %v983
    %v1026 = vpop.f32.mrf.mxu0
    %v1027 = vadd.f32 %v736, %v1026
    %1028 = vdwg.mxu0
    %v1030 = vsel %vm218, %v492, 0
    %v1033 = vsel %vm218, %v643, 0
    %v1036 = vsel %vm218, %v644, 0
    %v1039 = vsel %vm218, %v645, 0
    %v1042 = vsel %vm218, %v646, 0
    %v1045 = vsel %vm218, %v647, 0
    %v1048 = vsel %vm218, %v648, 0
    %v1051 = vsel %vm218, %v649, 0
    %v1054 = vsel %vm218, %v650, 0
    %1056 = vmatpush.xpose.msra.mxu0 0.0
    %1057 = vmatpush.xpose.msra.mxu0 0.0
    %1058 = vmatpush.xpose.msra.mxu0 0.0
    %1059 = vmatpush.xpose.msra.mxu0 0.0
    %1060 = vmatpush.xpose.msra.mxu0 0.0
    %1061 = vmatpush.xpose.msra.mxu0 0.0
    %1062 = vmatpush.xpose.msra.mxu0 0.0
    %1063 = vmatpush.xpose.msra.mxu0 0.0
    %1064 = vmatpush.xpose.msra.mxu0 %v1054
    %1065 = vmatpush.xpose.msra.mxu0 %v1051
    %1066 = vmatpush.xpose.msra.mxu0 %v1048
    %1067 = vmatpush.xpose.msra.mxu0 %v1045
    %1068 = vmatpush.xpose.msra.mxu0 %v1042
    %1069 = vmatpush.xpose.msra.mxu0 %v1039
    %1070 = vmatpush.xpose.msra.mxu0 %v1036
    %1071 = vmatpush.xpose.msra.mxu0 %v1033
    %1072 = vmatmul.f32.gmra.mxu0 %v1030
    %v1073 = vpop.f32.mrf.mxu0
    %v1074 = vadd.f32 %v737, %v1073
    %1075 = vdwg.mxu0
    %v1077 = vsel %vm218, %v495, 0
    %v1080 = vsel %vm218, %v651, 0
    %v1083 = vsel %vm218, %v652, 0
    %v1086 = vsel %vm218, %v653, 0
    %v1089 = vsel %vm218, %v654, 0
    %v1092 = vsel %vm218, %v655, 0
    %v1095 = vsel %vm218, %v656, 0
    %v1098 = vsel %vm218, %v657, 0
    %v1101 = vsel %vm218, %v658, 0
    %1103 = vmatpush.xpose.msra.mxu0 0.0
    %1104 = vmatpush.xpose.msra.mxu0 0.0
    %1105 = vmatpush.xpose.msra.mxu0 0.0
    %1106 = vmatpush.xpose.msra.mxu0 0.0
    %1107 = vmatpush.xpose.msra.mxu0 0.0
    %1108 = vmatpush.xpose.msra.mxu0 0.0
    %1109 = vmatpush.xpose.msra.mxu0 0.0
    %1110 = vmatpush.xpose.msra.mxu0 0.0
    %1111 = vmatpush.xpose.msra.mxu0 %v1101
    %1112 = vmatpush.xpose.msra.mxu0 %v1098
    %1113 = vmatpush.xpose.msra.mxu0 %v1095
    %1114 = vmatpush.xpose.msra.mxu0 %v1092
    %1115 = vmatpush.xpose.msra.mxu0 %v1089
    %1116 = vmatpush.xpose.msra.mxu0 %v1086
    %1117 = vmatpush.xpose.msra.mxu0 %v1083
    %1118 = vmatpush.xpose.msra.mxu0 %v1080
    %1119 = vmatmul.f32.gmra.mxu0 %v1077
    %v1120 = vpop.f32.mrf.mxu0
    %v1121 = vadd.f32 %v738, %v1120
    %1122 = vdwg.mxu0
    %vm1123 = vcmask 523264
    %v1124 = vsel %vm1123, %v792, -inf
    %1125 = vmax.xlane.f32.xlu0 %v1124
    %v1126 = vpop.xlane.xlu0 %1125
    %v1127 = vsel %vm1123, %v839, -inf
    %1128 = vmax.xlane.f32.xlu0 %v1127
    %v1129 = vpop.xlane.xlu0 %1128
    %v1130 = vsel %vm1123, %v886, -inf
    %1131 = vmax.xlane.f32.xlu0 %v1130
    %v1132 = vpop.xlane.xlu0 %1131
    %v1133 = vsel %vm1123, %v933, -inf
    %1134 = vmax.xlane.f32.xlu0 %v1133
    %v1135 = vpop.xlane.xlu0 %1134
    %v1136 = vsel %vm1123, %v980, -inf
    %1137 = vmax.xlane.f32.xlu0 %v1136
    %v1138 = vpop.xlane.xlu0 %1137
    %v1139 = vsel %vm1123, %v1027, -inf
    %1140 = vmax.xlane.f32.xlu0 %v1139
    %v1141 = vpop.xlane.xlu0 %1140
    %v1142 = vsel %vm1123, %v1074, -inf
    %1143 = vmax.xlane.f32.xlu0 %v1142
    %v1144 = vpop.xlane.xlu0 %1143
    %v1145 = vsel %vm1123, %v1121, -inf
    %1146 = vmax.xlane.f32.xlu0 %v1145
    %v1147 = vpop.xlane.xlu0 %1146
    %v1148 = vsub.f32 %v792, %v1126
    %v1149 = vsub.f32 %v839, %v1129
    %v1150 = vsub.f32 %v886, %v1132
    %v1151 = vsub.f32 %v933, %v1135
    %v1152 = vsub.f32 %v980, %v1138
    %v1153 = vsub.f32 %v1027, %v1141
    %v1154 = vsub.f32 %v1074, %v1144
    %v1155 = vsub.f32 %v1121, %v1147
    %v1156 = vmul.f32 %v1148, 1.442695
    %v1157 = vpow.pop %v1156
    %v1158 = vmul.f32 %v1149, 1.442695
    %v1159 = vpow.pop %v1158
    %v1160 = vmul.f32 %v1150, 1.442695
    %v1161 = vpow.pop %v1160
    %v1162 = vmul.f32 %v1151, 1.442695
    %v1163 = vpow.pop %v1162
    %v1164 = vmul.f32 %v1152, 1.442695
    %v1165 = vpow.pop %v1164
    %v1166 = vmul.f32 %v1153, 1.442695
    %v1167 = vpow.pop %v1166
    %v1168 = vmul.f32 %v1154, 1.442695
    %v1169 = vpow.pop %v1168
    %v1170 = vmul.f32 %v1155, 1.442695
    %v1171 = vpow.pop %v1170
    %v1173 = vsel %vm1123, %v1157, 0
    %v1176 = vsel %vm1123, %v1159, 0
    %v1179 = vsel %vm1123, %v1161, 0
    %v1182 = vsel %vm1123, %v1163, 0
    %v1185 = vsel %vm1123, %v1165, 0
    %v1188 = vsel %vm1123, %v1167, 0
    %v1191 = vsel %vm1123, %v1169, 0
    %v1194 = vsel %vm1123, %v1171, 0
    %1196 = vmatpush.msra.mxu0 0.0
    %1197 = vmatpush.msra.mxu0 0.0
    %1198 = vmatpush.msra.mxu0 0.0
    %1199 = vmatpush.msra.mxu0 0.0
    %1200 = vmatpush.msra.mxu0 0.0
    %1201 = vmatpush.msra.mxu0 0.0
    %1202 = vmatpush.msra.mxu0 0.0
    %1203 = vmatpush.msra.mxu0 0.0
    %1204 = vmatpush.msra.mxu0 %v136
    %1205 = vmatpush.msra.mxu0 %v135
    %1206 = vmatpush.msra.mxu0 %v134
    %1207 = vmatpush.msra.mxu0 %v133
    %1208 = vmatpush.msra.mxu0 %v132
    %1209 = vmatpush.msra.mxu0 %v131
    %1210 = vmatpush.msra.mxu0 %v130
    %1211 = vmatpush.msra.mxu0 %v129
    %1212 = vmatmul.f32.gmra.mxu0 %v1173
    %v1213 = vpop.f32.mrf.mxu0
    %v1214 = vadd.f32 0.0, %v1213
    %1215 = vmatmul.f32.gmra.mxu0 %v1176
    %v1216 = vpop.f32.mrf.mxu0
    %v1217 = vadd.f32 0.0, %v1216
    %1218 = vmatmul.f32.gmra.mxu0 %v1179
    %v1219 = vpop.f32.mrf.mxu0
    %v1220 = vadd.f32 0.0, %v1219
    %1221 = vmatmul.f32.gmra.mxu0 %v1182
    %v1222 = vpop.f32.mrf.mxu0
    %v1223 = vadd.f32 0.0, %v1222
    %1224 = vmatmul.f32.gmra.mxu0 %v1185
    %v1225 = vpop.f32.mrf.mxu0
    %v1226 = vadd.f32 0.0, %v1225
    %1227 = vmatmul.f32.gmra.mxu0 %v1188
    %v1228 = vpop.f32.mrf.mxu0
    %v1229 = vadd.f32 0.0, %v1228
    %1230 = vmatmul.f32.gmra.mxu0 %v1191
    %v1231 = vpop.f32.mrf.mxu0
    %v1232 = vadd.f32 0.0, %v1231
    %1233 = vmatmul.f32.gmra.mxu0 %v1194
    %v1234 = vpop.f32.mrf.mxu0
    %v1235 = vadd.f32 0.0, %v1234
    %1236 = vdwg.mxu0
    %v1237 = vrcp.pop %v1214
    %v1238 = vrcp.pop %v1217
    %v1239 = vrcp.pop %v1220
    %v1240 = vrcp.pop %v1223
    %v1241 = vrcp.pop %v1226
    %v1242 = vrcp.pop %v1229
    %v1243 = vrcp.pop %v1232
    %v1244 = vrcp.pop %v1235
    %v1245 = vmul.f32 %v1157, %v1237
    %v1246 = vmul.f32 %v1159, %v1238
    %v1247 = vmul.f32 %v1161, %v1239
    %v1248 = vmul.f32 %v1163, %v1240
    %v1249 = vmul.f32 %v1165, %v1241
    %v1250 = vmul.f32 %v1167, %v1242
    %v1251 = vmul.f32 %v1169, %v1243
    %v1252 = vmul.f32 %v1171, %v1244
    %v1254 = vsel %vm1123, %v1245, 0
    %1256 = vmatpush.msra.mxu0 0.0
    %1257 = vmatpush.msra.mxu0 0.0
    %1258 = vmatpush.msra.mxu0 0.0
    %1259 = vmatpush.msra.mxu0 0.0
    %1260 = vmatpush.msra.mxu0 0.0
    %1261 = vmatpush.msra.mxu0 0.0
    %1262 = vmatpush.msra.mxu0 0.0
    %1263 = vmatpush.msra.mxu0 0.0
    %1264 = vmatpush.msra.mxu0 %v666
    %1265 = vmatpush.msra.mxu0 %v665
    %1266 = vmatpush.msra.mxu0 %v664
    %1267 = vmatpush.msra.mxu0 %v663
    %1268 = vmatpush.msra.mxu0 %v662
    %1269 = vmatpush.msra.mxu0 %v661
    %1270 = vmatpush.msra.mxu0 %v660
    %1271 = vmatpush.msra.mxu0 %v659
    %1272 = vmatmul.f32.gmra.mxu0 %v1254
    %v1273 = vpop.f32.mrf.mxu0
    %v1274 = vadd.f32 0.0, %v1273
    %1275 = vdwg.mxu0
    %v1277 = vsel %vm1123, %v1246, 0
    %1279 = vmatpush.msra.mxu0 0.0
    %1280 = vmatpush.msra.mxu0 0.0
    %1281 = vmatpush.msra.mxu0 0.0
    %1282 = vmatpush.msra.mxu0 0.0
    %1283 = vmatpush.msra.mxu0 0.0
    %1284 = vmatpush.msra.mxu0 0.0
    %1285 = vmatpush.msra.mxu0 0.0
    %1286 = vmatpush.msra.mxu0 0.0
    %1287 = vmatpush.msra.mxu0 %v674
    %1288 = vmatpush.msra.mxu0 %v673
    %1289 = vmatpush.msra.mxu0 %v672
    %1290 = vmatpush.msra.mxu0 %v671
    %1291 = vmatpush.msra.mxu0 %v670
    %1292 = vmatpush.msra.mxu0 %v669
    %1293 = vmatpush.msra.mxu0 %v668
    %1294 = vmatpush.msra.mxu0 %v667
    %1295 = vmatmul.f32.gmra.mxu0 %v1277
    %v1296 = vpop.f32.mrf.mxu0
    %v1297 = vadd.f32 0.0, %v1296
    %1298 = vdwg.mxu0
    %v1300 = vsel %vm1123, %v1247, 0
    %1302 = vmatpush.msra.mxu0 0.0
    %1303 = vmatpush.msra.mxu0 0.0
    %1304 = vmatpush.msra.mxu0 0.0
    %1305 = vmatpush.msra.mxu0 0.0
    %1306 = vmatpush.msra.mxu0 0.0
    %1307 = vmatpush.msra.mxu0 0.0
    %1308 = vmatpush.msra.mxu0 0.0
    %1309 = vmatpush.msra.mxu0 0.0
    %1310 = vmatpush.msra.mxu0 %v682
    %1311 = vmatpush.msra.mxu0 %v681
    %1312 = vmatpush.msra.mxu0 %v680
    %1313 = vmatpush.msra.mxu0 %v679
    %1314 = vmatpush.msra.mxu0 %v678
    %1315 = vmatpush.msra.mxu0 %v677
    %1316 = vmatpush.msra.mxu0 %v676
    %1317 = vmatpush.msra.mxu0 %v675
    %1318 = vmatmul.f32.gmra.mxu0 %v1300
    %v1319 = vpop.f32.mrf.mxu0
    %v1320 = vadd.f32 0.0, %v1319
    %1321 = vdwg.mxu0
    %v1323 = vsel %vm1123, %v1248, 0
    %1325 = vmatpush.msra.mxu0 0.0
    %1326 = vmatpush.msra.mxu0 0.0
    %1327 = vmatpush.msra.mxu0 0.0
    %1328 = vmatpush.msra.mxu0 0.0
    %1329 = vmatpush.msra.mxu0 0.0
    %1330 = vmatpush.msra.mxu0 0.0
    %1331 = vmatpush.msra.mxu0 0.0
    %1332 = vmatpush.msra.mxu0 0.0
    %1333 = vmatpush.msra.mxu0 %v690
    %1334 = vmatpush.msra.mxu0 %v689
    %1335 = vmatpush.msra.mxu0 %v688
    %1336 = vmatpush.msra.mxu0 %v687
    %1337 = vmatpush.msra.mxu0 %v686
    %1338 = vmatpush.msra.mxu0 %v685
    %1339 = vmatpush.msra.mxu0 %v684
    %1340 = vmatpush.msra.mxu0 %v683
    %1341 = vmatmul.f32.gmra.mxu0 %v1323
    %v1342 = vpop.f32.mrf.mxu0
    %v1343 = vadd.f32 0.0, %v1342
    %1344 = vdwg.mxu0
    %v1346 = vsel %vm1123, %v1249, 0
    %1348 = vmatpush.msra.mxu0 0.0
    %1349 = vmatpush.msra.mxu0 0.0
    %1350 = vmatpush.msra.mxu0 0.0
    %1351 = vmatpush.msra.mxu0 0.0
    %1352 = vmatpush.msra.mxu0 0.0
    %1353 = vmatpush.msra.mxu0 0.0
    %1354 = vmatpush.msra.mxu0 0.0
    %1355 = vmatpush.msra.mxu0 0.0
    %1356 = vmatpush.msra.mxu0 %v698
    %1357 = vmatpush.msra.mxu0 %v697
    %1358 = vmatpush.msra.mxu0 %v696
    %1359 = vmatpush.msra.mxu0 %v695
    %1360 = vmatpush.msra.mxu0 %v694
    %1361 = vmatpush.msra.mxu0 %v693
    %1362 = vmatpush.msra.mxu0 %v692
    %1363 = vmatpush.msra.mxu0 %v691
    %1364 = vmatmul.f32.gmra.mxu0 %v1346
    %v1365 = vpop.f32.mrf.mxu0
    %v1366 = vadd.f32 0.0, %v1365
    %1367 = vdwg.mxu0
    %v1369 = vsel %vm1123, %v1250, 0
    %1371 = vmatpush.msra.mxu0 0.0
    %1372 = vmatpush.msra.mxu0 0.0
    %1373 = vmatpush.msra.mxu0 0.0
    %1374 = vmatpush.msra.mxu0 0.0
    %1375 = vmatpush.msra.mxu0 0.0
    %1376 = vmatpush.msra.mxu0 0.0
    %1377 = vmatpush.msra.mxu0 0.0
    %1378 = vmatpush.msra.mxu0 0.0
    %1379 = vmatpush.msra.mxu0 %v706
    %1380 = vmatpush.msra.mxu0 %v705
    %1381 = vmatpush.msra.mxu0 %v704
    %1382 = vmatpush.msra.mxu0 %v703
    %1383 = vmatpush.msra.mxu0 %v702
    %1384 = vmatpush.msra.mxu0 %v701
    %1385 = vmatpush.msra.mxu0 %v700
    %1386 = vmatpush.msra.mxu0 %v699
    %1387 = vmatmul.f32.gmra.mxu0 %v1369
    %v1388 = vpop.f32.mrf.mxu0
    %v1389 = vadd.f32 0.0, %v1388
    %1390 = vdwg.mxu0
    %v1392 = vsel %vm1123, %v1251, 0
    %1394 = vmatpush.msra.mxu0 0.0
    %1395 = vmatpush.msra.mxu0 0.0
    %1396 = vmatpush.msra.mxu0 0.0
    %1397 = vmatpush.msra.mxu0 0.0
    %1398 = vmatpush.msra.mxu0 0.0
    %1399 = vmatpush.msra.mxu0 0.0
    %1400 = vmatpush.msra.mxu0 0.0
    %1401 = vmatpush.msra.mxu0 0.0
    %1402 = vmatpush.msra.mxu0 %v714
    %1403 = vmatpush.msra.mxu0 %v713
    %1404 = vmatpush.msra.mxu0 %v712
    %1405 = vmatpush.msra.mxu0 %v711
    %1406 = vmatpush.msra.mxu0 %v710
    %1407 = vmatpush.msra.mxu0 %v709
    %1408 = vmatpush.msra.mxu0 %v708
    %1409 = vmatpush.msra.mxu0 %v707
    %1410 = vmatmul.f32.gmra.mxu0 %v1392
    %v1411 = vpop.f32.mrf.mxu0
    %v1412 = vadd.f32 0.0, %v1411
    %1413 = vdwg.mxu0
    %v1415 = vsel %vm1123, %v1252, 0
    %1417 = vmatpush.msra.mxu0 0.0
    %1418 = vmatpush.msra.mxu0 0.0
    %1419 = vmatpush.msra.mxu0 0.0
    %1420 = vmatpush.msra.mxu0 0.0
    %1421 = vmatpush.msra.mxu0 0.0
    %1422 = vmatpush.msra.mxu0 0.0
    %1423 = vmatpush.msra.mxu0 0.0
    %1424 = vmatpush.msra.mxu0 0.0
    %1425 = vmatpush.msra.mxu0 %v722
    %1426 = vmatpush.msra.mxu0 %v721
    %1427 = vmatpush.msra.mxu0 %v720
    %1428 = vmatpush.msra.mxu0 %v719
    %1429 = vmatpush.msra.mxu0 %v718
    %1430 = vmatpush.msra.mxu0 %v717
    %1431 = vmatpush.msra.mxu0 %v716
    %1432 = vmatpush.msra.mxu0 %v715
    %1433 = vmatmul.f32.gmra.mxu0 %v1415
    %v1434 = vpop.f32.mrf.mxu0
    %v1435 = vadd.f32 0.0, %v1434
    %1436 = vdwg.mxu0
    %v1437 = vld [vmem:[%s15] sm:$0xff]
    %v1438 = vld [vmem:[%s15 + $0x8] sm:$0xff]
    %v1439 = vld [vmem:[%s15 + $0x10] sm:$0xff]
    %v1440 = vld [vmem:[%s15 + $0x18] sm:$0xff]
    %v1441 = vld [vmem:[%s16] sm:$0x1]
    %v1443 = vperm.slane %v1441, 0
    %v1446 = vsel %vm218, %v1274, 0
    %v1449 = vsel %vm218, %v1297, 0
    %v1452 = vsel %vm218, %v1320, 0
    %v1455 = vsel %vm218, %v1343, 0
    %v1458 = vsel %vm218, %v1366, 0
    %v1461 = vsel %vm218, %v1389, 0
    %v1464 = vsel %vm218, %v1412, 0
    %v1467 = vsel %vm218, %v1435, 0
    %1469 = vmatpush.msra.mxu0 0.0
    %1470 = vmatpush.msra.mxu0 0.0
    %1471 = vmatpush.msra.mxu0 0.0
    %1472 = vmatpush.msra.mxu0 0.0
    %1473 = vmatpush.msra.mxu0 0.0
    %1474 = vmatpush.msra.mxu0 0.0
    %1475 = vmatpush.msra.mxu0 0.0
    %1476 = vmatpush.msra.mxu0 0.0
    %1477 = vmatpush.msra.mxu0 0.0
    %1478 = vmatpush.msra.mxu0 0.0
    %1479 = vmatpush.msra.mxu0 0.0
    %1480 = vmatpush.msra.mxu0 0.0
    %1481 = vmatpush.msra.mxu0 %v1440
    %1482 = vmatpush.msra.mxu0 %v1439
    %1483 = vmatpush.msra.mxu0 %v1438
    %1484 = vmatpush.msra.mxu0 %v1437
    %1485 = vmatmul.f32.gmra.mxu0 %v1446
    %v1486 = vpop.f32.mrf.mxu0
    %v1487 = vadd.f32 %v1443, %v1486
    %1488 = vmatmul.f32.gmra.mxu0 %v1449
    %v1489 = vpop.f32.mrf.mxu0
    %v1490 = vadd.f32 %v1443, %v1489
    %1491 = vmatmul.f32.gmra.mxu0 %v1452
    %v1492 = vpop.f32.mrf.mxu0
    %v1493 = vadd.f32 %v1443, %v1492
    %1494 = vmatmul.f32.gmra.mxu0 %v1455
    %v1495 = vpop.f32.mrf.mxu0
    %v1496 = vadd.f32 %v1443, %v1495
    %1497 = vmatmul.f32.gmra.mxu0 %v1458
    %v1498 = vpop.f32.mrf.mxu0
    %v1499 = vadd.f32 %v1443, %v1498
    %1500 = vmatmul.f32.gmra.mxu0 %v1461
    %v1501 = vpop.f32.mrf.mxu0
    %v1502 = vadd.f32 %v1443, %v1501
    %1503 = vmatmul.f32.gmra.mxu0 %v1464
    %v1504 = vpop.f32.mrf.mxu0
    %v1505 = vadd.f32 %v1443, %v1504
    %1506 = vmatmul.f32.gmra.mxu0 %v1467
    %v1507 = vpop.f32.mrf.mxu0
    %v1508 = vadd.f32 %v1443, %v1507
    %1509 = vdwg.mxu0
    %v1510 = vadd.f32 %v193, %v1487
    %v1511 = vadd.f32 %v196, %v1490
    %v1512 = vadd.f32 %v199, %v1493
    %v1513 = vadd.f32 %v202, %v1496
    %v1514 = vadd.f32 %v205, %v1499
    %v1515 = vadd.f32 %v208, %v1502
    %v1516 = vadd.f32 %v211, %v1505
    %v1517 = vadd.f32 %v214, %v1508
    %v1518 = vld [vmem:[%s17] sm:$0x1]
    %v1519 = vld [vmem:[%s18] sm:$0x1]
    %v1520 = vsel %vm218, %v1510, 0.0
    %1521 = vadd.xlane.f32.xlu0 %v1520
    %v1522 = vpop.xlane.xlu0 %1521
    %v1523 = vsel %vm218, %v1511, 0.0
    %1524 = vadd.xlane.f32.xlu0 %v1523
    %v1525 = vpop.xlane.xlu0 %1524
    %v1526 = vsel %vm218, %v1512, 0.0
    %1527 = vadd.xlane.f32.xlu0 %v1526
    %v1528 = vpop.xlane.xlu0 %1527
    %v1529 = vsel %vm218, %v1513, 0.0
    %1530 = vadd.xlane.f32.xlu0 %v1529
    %v1531 = vpop.xlane.xlu0 %1530
    %v1532 = vsel %vm218, %v1514, 0.0
    %1533 = vadd.xlane.f32.xlu0 %v1532
    %v1534 = vpop.xlane.xlu0 %1533
    %v1535 = vsel %vm218, %v1515, 0.0
    %1536 = vadd.xlane.f32.xlu0 %v1535
    %v1537 = vpop.xlane.xlu0 %1536
    %v1538 = vsel %vm218, %v1516, 0.0
    %1539 = vadd.xlane.f32.xlu0 %v1538
    %v1540 = vpop.xlane.xlu0 %1539
    %v1541 = vsel %vm218, %v1517, 0.0
    %1542 = vadd.xlane.f32.xlu0 %v1541
    %v1543 = vpop.xlane.xlu0 %1542
    %v1544 = vmul.f32 %v1522, %v249
    %v1545 = vmul.f32 %v1525, %v249
    %v1546 = vmul.f32 %v1528, %v249
    %v1547 = vmul.f32 %v1531, %v249
    %v1548 = vmul.f32 %v1534, %v249
    %v1549 = vmul.f32 %v1537, %v249
    %v1550 = vmul.f32 %v1540, %v249
    %v1551 = vmul.f32 %v1543, %v249
    %v1552 = vsub.f32 %v1510, %v1544
    %v1553 = vsub.f32 %v1511, %v1545
    %v1554 = vsub.f32 %v1512, %v1546
    %v1555 = vsub.f32 %v1513, %v1547
    %v1556 = vsub.f32 %v1514, %v1548
    %v1557 = vsub.f32 %v1515, %v1549
    %v1558 = vsub.f32 %v1516, %v1550
    %v1559 = vsub.f32 %v1517, %v1551
    %v1560 = vmul.f32 %v1552, %v1552
    %v1561 = vmul.f32 %v1553, %v1553
    %v1562 = vmul.f32 %v1554, %v1554
    %v1563 = vmul.f32 %v1555, %v1555
    %v1564 = vmul.f32 %v1556, %v1556
    %v1565 = vmul.f32 %v1557, %v1557
    %v1566 = vmul.f32 %v1558, %v1558
    %v1567 = vmul.f32 %v1559, %v1559
    %v1568 = vsel %vm218, %v1560, 0.0
    %1569 = vadd.xlane.f32.xlu0 %v1568
    %v1570 = vpop.xlane.xlu0 %1569
    %v1571 = vsel %vm218, %v1561, 0.0
    %1572 = vadd.xlane.f32.xlu0 %v1571
    %v1573 = vpop.xlane.xlu0 %1572
    %v1574 = vsel %vm218, %v1562, 0.0
    %1575 = vadd.xlane.f32.xlu0 %v1574
    %v1576 = vpop.xlane.xlu0 %1575
    %v1577 = vsel %vm218, %v1563, 0.0
    %1578 = vadd.xlane.f32.xlu0 %v1577
    %v1579 = vpop.xlane.xlu0 %1578
    %v1580 = vsel %vm218, %v1564, 0.0
    %1581 = vadd.xlane.f32.xlu0 %v1580
    %v1582 = vpop.xlane.xlu0 %1581
    %v1583 = vsel %vm218, %v1565, 0.0
    %1584 = vadd.xlane.f32.xlu0 %v1583
    %v1585 = vpop.xlane.xlu0 %1584
    %v1586 = vsel %vm218, %v1566, 0.0
    %1587 = vadd.xlane.f32.xlu0 %v1586
    %v1588 = vpop.xlane.xlu0 %1587
    %v1589 = vsel %vm218, %v1567, 0.0
    %1590 = vadd.xlane.f32.xlu0 %v1589
    %v1591 = vpop.xlane.xlu0 %1590
    %v1592 = vmul.f32 %v1570, %v249
    %v1593 = vmul.f32 %v1573, %v249
    %v1594 = vmul.f32 %v1576, %v249
    %v1595 = vmul.f32 %v1579, %v249
    %v1596 = vmul.f32 %v1582, %v249
    %v1597 = vmul.f32 %v1585, %v249
    %v1598 = vmul.f32 %v1588, %v249
    %v1599 = vmul.f32 %v1591, %v249
    %v1600 = vadd.f32 %v1592, 1e-05
    %v1601 = vadd.f32 %v1593, 1e-05
    %v1602 = vadd.f32 %v1594, 1e-05
    %v1603 = vadd.f32 %v1595, 1e-05
    %v1604 = vadd.f32 %v1596, 1e-05
    %v1605 = vadd.f32 %v1597, 1e-05
    %v1606 = vadd.f32 %v1598, 1e-05
    %v1607 = vadd.f32 %v1599, 1e-05
    %v1608 = vrsqrt.pop %v1600
    %v1609 = vmul.f32 %v1608, %v1600
    %v1610 = vmul.f32 %v1609, %v1608
    %v1611 = vmul.f32 0.5, %v1610
    %v1612 = vsub.f32 1.5, %v1611
    %v1613 = vmul.f32 %v1608, %v1612
    %vm1614 = vweird.f32 %v1600
    %vm1615 = vweird.f32 %v1608
    %vm1616 = vmor %vm1614, %vm1615
    %v1617 = vsel %vm1616, %v1608, %v1613
    %v1618 = vrsqrt.pop %v1601
    %v1619 = vmul.f32 %v1618, %v1601
    %v1620 = vmul.f32 %v1619, %v1618
    %v1621 = vmul.f32 0.5, %v1620
    %v1622 = vsub.f32 1.5, %v1621
    %v1623 = vmul.f32 %v1618, %v1622
    %vm1624 = vweird.f32 %v1601
    %vm1625 = vweird.f32 %v1618
    %vm1626 = vmor %vm1624, %vm1625
    %v1627 = vsel %vm1626, %v1618, %v1623
    %v1628 = vrsqrt.pop %v1602
    %v1629 = vmul.f32 %v1628, %v1602
    %v1630 = vmul.f32 %v1629, %v1628
    %v1631 = vmul.f32 0.5, %v1630
    %v1632 = vsub.f32 1.5, %v1631
    %v1633 = vmul.f32 %v1628, %v1632
    %vm1634 = vweird.f32 %v1602
    %vm1635 = vweird.f32 %v1628
    %vm1636 = vmor %vm1634, %vm1635
    %v1637 = vsel %vm1636, %v1628, %v1633
    %v1638 = vrsqrt.pop %v1603
    %v1639 = vmul.f32 %v1638, %v1603
    %v1640 = vmul.f32 %v1639, %v1638
    %v1641 = vmul.f32 0.5, %v1640
    %v1642 = vsub.f32 1.5, %v1641
    %v1643 = vmul.f32 %v1638, %v1642
    %vm1644 = vweird.f32 %v1603
    %vm1645 = vweird.f32 %v1638
    %vm1646 = vmor %vm1644, %vm1645
    %v1647 = vsel %vm1646, %v1638, %v1643
    %v1648 = vrsqrt.pop %v1604
    %v1649 = vmul.f32 %v1648, %v1604
    %v1650 = vmul.f32 %v1649, %v1648
    %v1651 = vmul.f32 0.5, %v1650
    %v1652 = vsub.f32 1.5, %v1651
    %v1653 = vmul.f32 %v1648, %v1652
    %vm1654 = vweird.f32 %v1604
    %vm1655 = vweird.f32 %v1648
    %vm1656 = vmor %vm1654, %vm1655
    %v1657 = vsel %vm1656, %v1648, %v1653
    %v1658 = vrsqrt.pop %v1605
    %v1659 = vmul.f32 %v1658, %v1605
    %v1660 = vmul.f32 %v1659, %v1658
    %v1661 = vmul.f32 0.5, %v1660
    %v1662 = vsub.f32 1.5, %v1661
    %v1663 = vmul.f32 %v1658, %v1662
    %vm1664 = vweird.f32 %v1605
    %vm1665 = vweird.f32 %v1658
    %vm1666 = vmor %vm1664, %vm1665
    %v1667 = vsel %vm1666, %v1658, %v1663
    %v1668 = vrsqrt.pop %v1606
    %v1669 = vmul.f32 %v1668, %v1606
    %v1670 = vmul.f32 %v1669, %v1668
    %v1671 = vmul.f32 0.5, %v1670
    %v1672 = vsub.f32 1.5, %v1671
    %v1673 = vmul.f32 %v1668, %v1672
    %vm1674 = vweird.f32 %v1606
    %vm1675 = vweird.f32 %v1668
    %vm1676 = vmor %vm1674, %vm1675
    %v1677 = vsel %vm1676, %v1668, %v1673
    %v1678 = vrsqrt.pop %v1607
    %v1679 = vmul.f32 %v1678, %v1607
    %v1680 = vmul.f32 %v1679, %v1678
    %v1681 = vmul.f32 0.5, %v1680
    %v1682 = vsub.f32 1.5, %v1681
    %v1683 = vmul.f32 %v1678, %v1682
    %vm1684 = vweird.f32 %v1607
    %vm1685 = vweird.f32 %v1678
    %vm1686 = vmor %vm1684, %vm1685
    %v1687 = vsel %vm1686, %v1678, %v1683
    %v1688 = vmul.f32 %v1552, %v1617
    %v1689 = vmul.f32 %v1553, %v1627
    %v1690 = vmul.f32 %v1554, %v1637
    %v1691 = vmul.f32 %v1555, %v1647
    %v1692 = vmul.f32 %v1556, %v1657
    %v1693 = vmul.f32 %v1557, %v1667
    %v1694 = vmul.f32 %v1558, %v1677
    %v1695 = vmul.f32 %v1559, %v1687
    %v1697 = vperm.slane %v1518, 0
    %v1699 = vmul.f32 %v1688, %v1697
    %v1700 = vmul.f32 %v1689, %v1697
    %v1701 = vmul.f32 %v1690, %v1697
    %v1702 = vmul.f32 %v1691, %v1697
    %v1703 = vmul.f32 %v1692, %v1697
    %v1704 = vmul.f32 %v1693, %v1697
    %v1705 = vmul.f32 %v1694, %v1697
    %v1706 = vmul.f32 %v1695, %v1697
    %v1708 = vperm.slane %v1519, 0
    %v1710 = vadd.f32 %v1699, %v1708
    %v1711 = vadd.f32 %v1700, %v1708
    %v1712 = vadd.f32 %v1701, %v1708
    %v1713 = vadd.f32 %v1702, %v1708
    %v1714 = vadd.f32 %v1703, %v1708
    %v1715 = vadd.f32 %v1704, %v1708
    %v1716 = vadd.f32 %v1705, %v1708
    %v1717 = vadd.f32 %v1706, %v1708
    %v1718 = vld [vmem:[%s19] sm:$0xff]
    %v1719 = vld [vmem:[%s19 + $0x8] sm:$0xff]
    %v1720 = vld [vmem:[%s19 + $0x10] sm:$0xff]
    %v1721 = vld [vmem:[%s19 + $0x18] sm:$0xff]
    %v1722 = vld [vmem:[%s20] sm:$0x1]
    %v1724 = vperm.slane %v1722, 0
    %v1727 = vsel %vm218, %v1710, 0
    %v1730 = vsel %vm218, %v1711, 0
    %v1733 = vsel %vm218, %v1712, 0
    %v1736 = vsel %vm218, %v1713, 0
    %v1739 = vsel %vm218, %v1714, 0
    %v1742 = vsel %vm218, %v1715, 0
    %v1745 = vsel %vm218, %v1716, 0
    %v1748 = vsel %vm218, %v1717, 0
    %1750 = vmatpush.msra.mxu0 0.0
    %1751 = vmatpush.msra.mxu0 0.0
    %1752 = vmatpush.msra.mxu0 0.0
    %1753 = vmatpush.msra.mxu0 0.0
    %1754 = vmatpush.msra.mxu0 0.0
    %1755 = vmatpush.msra.mxu0 0.0
    %1756 = vmatpush.msra.mxu0 0.0
    %1757 = vmatpush.msra.mxu0 0.0
    %1758 = vmatpush.msra.mxu0 0.0
    %1759 = vmatpush.msra.mxu0 0.0
    %1760 = vmatpush.msra.mxu0 0.0
    %1761 = vmatpush.msra.mxu0 0.0
    %1762 = vmatpush.msra.mxu0 %v1721
    %1763 = vmatpush.msra.mxu0 %v1720
    %1764 = vmatpush.msra.mxu0 %v1719
    %1765 = vmatpush.msra.mxu0 %v1718
    %1766 = vmatmul.f32.gmra.mxu0 %v1727
    %v1767 = vpop.f32.mrf.mxu0
    %v1768 = vadd.f32 %v1724, %v1767
    %1769 = vmatmul.f32.gmra.mxu0 %v1730
    %v1770 = vpop.f32.mrf.mxu0
    %v1771 = vadd.f32 %v1724, %v1770
    %1772 = vmatmul.f32.gmra.mxu0 %v1733
    %v1773 = vpop.f32.mrf.mxu0
    %v1774 = vadd.f32 %v1724, %v1773
    %1775 = vmatmul.f32.gmra.mxu0 %v1736
    %v1776 = vpop.f32.mrf.mxu0
    %v1777 = vadd.f32 %v1724, %v1776
    %1778 = vmatmul.f32.gmra.mxu0 %v1739
    %v1779 = vpop.f32.mrf.mxu0
    %v1780 = vadd.f32 %v1724, %v1779
    %1781 = vmatmul.f32.gmra.mxu0 %v1742
    %v1782 = vpop.f32.mrf.mxu0
    %v1783 = vadd.f32 %v1724, %v1782
    %1784 = vmatmul.f32.gmra.mxu0 %v1745
    %v1785 = vpop.f32.mrf.mxu0
    %v1786 = vadd.f32 %v1724, %v1785
    %1787 = vmatmul.f32.gmra.mxu0 %v1748
    %v1788 = vpop.f32.mrf.mxu0
    %v1789 = vadd.f32 %v1724, %v1788
    %1790 = vdwg.mxu0
    %v1791 = vmul.f32 %v1768, 0.5
    %v1792 = vmul.f32 %v1771, 0.5
    %v1793 = vmul.f32 %v1774, 0.5
    %v1794 = vmul.f32 %v1777, 0.5
    %v1795 = vmul.f32 %v1780, 0.5
    %v1796 = vmul.f32 %v1783, 0.5
    %v1797 = vmul.f32 %v1786, 0.5
    %v1798 = vmul.f32 %v1789, 0.5
    %v1799 = vrcp.pop 1.4142135
    %v1800 = vmul.f32 1.4142135, %v1799
    %v1801 = vsub.f32 1.0, %v1800
    %v1802 = vmul.f32 %v1799, %v1801
    %v1803 = vadd.f32 %v1799, %v1802
    %vm1804 = vweird.f32 %v1799
    %v1805 = vsel %vm1804, %v1799, %v1803
    %v1806 = vmul.f32 %v1768, %v1805
    %v1807 = vmul.f32 %v1771, %v1805
    %v1808 = vmul.f32 %v1774, %v1805
    %v1809 = vmul.f32 %v1777, %v1805
    %v1810 = vmul.f32 %v1780, %v1805
    %v1811 = vmul.f32 %v1783, %v1805
    %v1812 = vmul.f32 %v1786, %v1805
    %v1813 = vmul.f32 %v1789, %v1805
    %v1814 = vmul.f32 %v1806, %v1806
    %v1815 = vmin.f32 16.0, %v1814
    %v1816 = vmul.f32 %v1815, 2.1237322e-06
    %v1817 = vadd.f32 %v1816, 0.00028619796
    %v1818 = vmul.f32 %v1815, %v1817
    %v1819 = vadd.f32 %v1818, 0.0036580483
    %v1820 = vmul.f32 %v1815, %v1819
    %v1821 = vadd.f32 %v1820, 0.05243302
    %v1822 = vmul.f32 %v1815, %v1821
    %v1823 = vadd.f32 %v1822, 0.18741608
    %v1824 = vmul.f32 %v1815, %v1823
    %v1825 = vadd.f32 %v1824, 1.1283791
    %v1826 = vmul.f32 %v1806, %v1825
    %v1827 = vmul.f32 %v1815, 3.8918573e-05
    %v1828 = vadd.f32 %v1827, 0.001143296
    %v1829 = vmul.f32 %v1815, %v1828
    %v1830 = vadd.f32 %v1829, 0.014752088
    %v1831 = vmul.f32 %v1815, %v1830
    %v1832 = vadd.f32 %v1831, 0.112945676
    %v1833 = vmul.f32 %v1815, %v1832
    %v1834 = vadd.f32 %v1833, 0.4994258
    %v1835 = vmul.f32 %v1815, %v1834
    %v1836 = vadd.f32 %v1835, 1.0
    %v1837 = vrcp.pop %v1836
    %v1838 = vmul.f32 %v1836, %v1837
    %v1839 = vsub.f32 1.0, %v1838
    %v1840 = vmul.f32 %v1837, %v1839
    %v1841 = vadd.f32 %v1837, %v1840
    %vm1842 = vweird.f32 %v1836
    %vm1843 = vweird.f32 %v1837
    %vm1844 = vmor %vm1842, %vm1843
    %v1845 = vsel %vm1844, %v1837, %v1841
    %v1846 = vand.u32 2147483647, %v1836
    %vm1847 = vcmp.eq.f32.partialorder %v1846, 8.507059e+37
    %v1848 = vand.u32 %v1836, 2147483648
    %v1849 = vor.u32 1.1754944e-38, %v1848
    %v1850 = vsel %vm1847, %v1849, %v1845
    %v1851 = vmul.f32 %v1826, %v1850
    %v1852 = vmin.f32 %v1851, 1.0
    %v1853 = vmax.f32 %v1852, -1.0
    %v1854 = vmul.f32 %v1807, %v1807
    %v1855 = vmin.f32 16.0, %v1854
    %v1856 = vmul.f32 %v1855, 2.1237322e-06
    %v1857 = vadd.f32 %v1856, 0.00028619796
    %v1858 = vmul.f32 %v1855, %v1857
    %v1859 = vadd.f32 %v1858, 0.0036580483
    %v1860 = vmul.f32 %v1855, %v1859
    %v1861 = vadd.f32 %v1860, 0.05243302
    %v1862 = vmul.f32 %v1855, %v1861
    %v1863 = vadd.f32 %v1862, 0.18741608
    %v1864 = vmul.f32 %v1855, %v1863
    %v1865 = vadd.f32 %v1864, 1.1283791
    %v1866 = vmul.f32 %v1807, %v1865
    %v1867 = vmul.f32 %v1855, 3.8918573e-05
    %v1868 = vadd.f32 %v1867, 0.001143296
    %v1869 = vmul.f32 %v1855, %v1868
    %v1870 = vadd.f32 %v1869, 0.014752088
    %v1871 = vmul.f32 %v1855, %v1870
    %v1872 = vadd.f32 %v1871, 0.112945676
    %v1873 = vmul.f32 %v1855, %v1872
    %v1874 = vadd.f32 %v1873, 0.4994258
    %v1875 = vmul.f32 %v1855, %v1874
    %v1876 = vadd.f32 %v1875, 1.0
    %v1877 = vrcp.pop %v1876
    %v1878 = vmul.f32 %v1876, %v1877
    %v1879 = vsub.f32 1.0, %v1878
    %v1880 = vmul.f32 %v1877, %v1879
    %v1881 = vadd.f32 %v1877, %v1880
    %vm1882 = vweird.f32 %v1876
    %vm1883 = vweird.f32 %v1877
    %vm1884 = vmor %vm1882, %vm1883
    %v1885 = vsel %vm1884, %v1877, %v1881
    %v1886 = vand.u32 2147483647, %v1876
    %vm1887 = vcmp.eq.f32.partialorder %v1886, 8.507059e+37
    %v1888 = vand.u32 %v1876, 2147483648
    %v1889 = vor.u32 1.1754944e-38, %v1888
    %v1890 = vsel %vm1887, %v1889, %v1885
    %v1891 = vmul.f32 %v1866, %v1890
    %v1892 = vmin.f32 %v1891, 1.0
    %v1893 = vmax.f32 %v1892, -1.0
    %v1894 = vmul.f32 %v1808, %v1808
    %v1895 = vmin.f32 16.0, %v1894
    %v1896 = vmul.f32 %v1895, 2.1237322e-06
    %v1897 = vadd.f32 %v1896, 0.00028619796
    %v1898 = vmul.f32 %v1895, %v1897
    %v1899 = vadd.f32 %v1898, 0.0036580483
    %v1900 = vmul.f32 %v1895, %v1899
    %v1901 = vadd.f32 %v1900, 0.05243302
    %v1902 = vmul.f32 %v1895, %v1901
    %v1903 = vadd.f32 %v1902, 0.18741608
    %v1904 = vmul.f32 %v1895, %v1903
    %v1905 = vadd.f32 %v1904, 1.1283791
    %v1906 = vmul.f32 %v1808, %v1905
    %v1907 = vmul.f32 %v1895, 3.8918573e-05
    %v1908 = vadd.f32 %v1907, 0.001143296
    %v1909 = vmul.f32 %v1895, %v1908
    %v1910 = vadd.f32 %v1909, 0.014752088
    %v1911 = vmul.f32 %v1895, %v1910
    %v1912 = vadd.f32 %v1911, 0.112945676
    %v1913 = vmul.f32 %v1895, %v1912
    %v1914 = vadd.f32 %v1913, 0.4994258
    %v1915 = vmul.f32 %v1895, %v1914
    %v1916 = vadd.f32 %v1915, 1.0
    %v1917 = vrcp.pop %v1916
    %v1918 = vmul.f32 %v1916, %v1917
    %v1919 = vsub.f32 1.0, %v1918
    %v1920 = vmul.f32 %v1917, %v1919
    %v1921 = vadd.f32 %v1917, %v1920
    %vm1922 = vweird.f32 %v1916
    %vm1923 = vweird.f32 %v1917
    %vm1924 = vmor %vm1922, %vm1923
    %v1925 = vsel %vm1924, %v1917, %v1921
    %v1926 = vand.u32 2147483647, %v1916
    %vm1927 = vcmp.eq.f32.partialorder %v1926, 8.507059e+37
    %v1928 = vand.u32 %v1916, 2147483648
    %v1929 = vor.u32 1.1754944e-38, %v1928
    %v1930 = vsel %vm1927, %v1929, %v1925
    %v1931 = vmul.f32 %v1906, %v1930
    %v1932 = vmin.f32 %v1931, 1.0
    %v1933 = vmax.f32 %v1932, -1.0
    %v1934 = vmul.f32 %v1809, %v1809
    %v1935 = vmin.f32 16.0, %v1934
    %v1936 = vmul.f32 %v1935, 2.1237322e-06
    %v1937 = vadd.f32 %v1936, 0.00028619796
    %v1938 = vmul.f32 %v1935, %v1937
    %v1939 = vadd.f32 %v1938, 0.0036580483
    %v1940 = vmul.f32 %v1935, %v1939
    %v1941 = vadd.f32 %v1940, 0.05243302
    %v1942 = vmul.f32 %v1935, %v1941
    %v1943 = vadd.f32 %v1942, 0.18741608
    %v1944 = vmul.f32 %v1935, %v1943
    %v1945 = vadd.f32 %v1944, 1.1283791
    %v1946 = vmul.f32 %v1809, %v1945
    %v1947 = vmul.f32 %v1935, 3.8918573e-05
    %v1948 = vadd.f32 %v1947, 0.001143296
    %v1949 = vmul.f32 %v1935, %v1948
    %v1950 = vadd.f32 %v1949, 0.014752088
    %v1951 = vmul.f32 %v1935, %v1950
    %v1952 = vadd.f32 %v1951, 0.112945676
    %v1953 = vmul.f32 %v1935, %v1952
    %v1954 = vadd.f32 %v1953, 0.4994258
    %v1955 = vmul.f32 %v1935, %v1954
    %v1956 = vadd.f32 %v1955, 1.0
    %v1957 = vrcp.pop %v1956
    %v1958 = vmul.f32 %v1956, %v1957
    %v1959 = vsub.f32 1.0, %v1958
    %v1960 = vmul.f32 %v1957, %v1959
    %v1961 = vadd.f32 %v1957, %v1960
    %vm1962 = vweird.f32 %v1956
    %vm1963 = vweird.f32 %v1957
    %vm1964 = vmor %vm1962, %vm1963
    %v1965 = vsel %vm1964, %v1957, %v1961
    %v1966 = vand.u32 2147483647, %v1956
    %vm1967 = vcmp.eq.f32.partialorder %v1966, 8.507059e+37
    %v1968 = vand.u32 %v1956, 2147483648
    %v1969 = vor.u32 1.1754944e-38, %v1968
    %v1970 = vsel %vm1967, %v1969, %v1965
    %v1971 = vmul.f32 %v1946, %v1970
    %v1972 = vmin.f32 %v1971, 1.0
    %v1973 = vmax.f32 %v1972, -1.0
    %v1974 = vmul.f32 %v1810, %v1810
    %v1975 = vmin.f32 16.0, %v1974
    %v1976 = vmul.f32 %v1975, 2.1237322e-06
    %v1977 = vadd.f32 %v1976, 0.00028619796
    %v1978 = vmul.f32 %v1975, %v1977
    %v1979 = vadd.f32 %v1978, 0.0036580483
    %v1980 = vmul.f32 %v1975, %v1979
    %v1981 = vadd.f32 %v1980, 0.05243302
    %v1982 = vmul.f32 %v1975, %v1981
    %v1983 = vadd.f32 %v1982, 0.18741608
    %v1984 = vmul.f32 %v1975, %v1983
    %v1985 = vadd.f32 %v1984, 1.1283791
    %v1986 = vmul.f32 %v1810, %v1985
    %v1987 = vmul.f32 %v1975, 3.8918573e-05
    %v1988 = vadd.f32 %v1987, 0.001143296
    %v1989 = vmul.f32 %v1975, %v1988
    %v1990 = vadd.f32 %v1989, 0.014752088
    %v1991 = vmul.f32 %v1975, %v1990
    %v1992 = vadd.f32 %v1991, 0.112945676
    %v1993 = vmul.f32 %v1975, %v1992
    %v1994 = vadd.f32 %v1993, 0.4994258
    %v1995 = vmul.f32 %v1975, %v1994
    %v1996 = vadd.f32 %v1995, 1.0
    %v1997 = vrcp.pop %v1996
    %v1998 = vmul.f32 %v1996, %v1997
    %v1999 = vsub.f32 1.0, %v1998
    %v2000 = vmul.f32 %v1997, %v1999
    %v2001 = vadd.f32 %v1997, %v2000
    %vm2002 = vweird.f32 %v1996
    %vm2003 = vweird.f32 %v1997
    %vm2004 = vmor %vm2002, %vm2003
    %v2005 = vsel %vm2004, %v1997, %v2001
    %v2006 = vand.u32 2147483647, %v1996
    %vm2007 = vcmp.eq.f32.partialorder %v2006, 8.507059e+37
    %v2008 = vand.u32 %v1996, 2147483648
    %v2009 = vor.u32 1.1754944e-38, %v2008
    %v2010 = vsel %vm2007, %v2009, %v2005
    %v2011 = vmul.f32 %v1986, %v2010
    %v2012 = vmin.f32 %v2011, 1.0
    %v2013 = vmax.f32 %v2012, -1.0
    %v2014 = vmul.f32 %v1811, %v1811
    %v2015 = vmin.f32 16.0, %v2014
    %v2016 = vmul.f32 %v2015, 2.1237322e-06
    %v2017 = vadd.f32 %v2016, 0.00028619796
    %v2018 = vmul.f32 %v2015, %v2017
    %v2019 = vadd.f32 %v2018, 0.0036580483
    %v2020 = vmul.f32 %v2015, %v2019
    %v2021 = vadd.f32 %v2020, 0.05243302
    %v2022 = vmul.f32 %v2015, %v2021
    %v2023 = vadd.f32 %v2022, 0.18741608
    %v2024 = vmul.f32 %v2015, %v2023
    %v2025 = vadd.f32 %v2024, 1.1283791
    %v2026 = vmul.f32 %v1811, %v2025
    %v2027 = vmul.f32 %v2015, 3.8918573e-05
    %v2028 = vadd.f32 %v2027, 0.001143296
    %v2029 = vmul.f32 %v2015, %v2028
    %v2030 = vadd.f32 %v2029, 0.014752088
    %v2031 = vmul.f32 %v2015, %v2030
    %v2032 = vadd.f32 %v2031, 0.112945676
    %v2033 = vmul.f32 %v2015, %v2032
    %v2034 = vadd.f32 %v2033, 0.4994258
    %v2035 = vmul.f32 %v2015, %v2034
    %v2036 = vadd.f32 %v2035, 1.0
    %v2037 = vrcp.pop %v2036
    %v2038 = vmul.f32 %v2036, %v2037
    %v2039 = vsub.f32 1.0, %v2038
    %v2040 = vmul.f32 %v2037, %v2039
    %v2041 = vadd.f32 %v2037, %v2040
    %vm2042 = vweird.f32 %v2036
    %vm2043 = vweird.f32 %v2037
    %vm2044 = vmor %vm2042, %vm2043
    %v2045 = vsel %vm2044, %v2037, %v2041
    %v2046 = vand.u32 2147483647, %v2036
    %vm2047 = vcmp.eq.f32.partialorder %v2046, 8.507059e+37
    %v2048 = vand.u32 %v2036, 2147483648
    %v2049 = vor.u32 1.1754944e-38, %v2048
    %v2050 = vsel %vm2047, %v2049, %v2045
    %v2051 = vmul.f32 %v2026, %v2050
    %v2052 = vmin.f32 %v2051, 1.0
    %v2053 = vmax.f32 %v2052, -1.0
    %v2054 = vmul.f32 %v1812, %v1812
    %v2055 = vmin.f32 16.0, %v2054
    %v2056 = vmul.f32 %v2055, 2.1237322e-06
    %v2057 = vadd.f32 %v2056, 0.00028619796
    %v2058 = vmul.f32 %v2055, %v2057
    %v2059 = vadd.f32 %v2058, 0.0036580483
    %v2060 = vmul.f32 %v2055, %v2059
    %v2061 = vadd.f32 %v2060, 0.05243302
    %v2062 = vmul.f32 %v2055, %v2061
    %v2063 = vadd.f32 %v2062, 0.18741608
    %v2064 = vmul.f32 %v2055, %v2063
    %v2065 = vadd.f32 %v2064, 1.1283791
    %v2066 = vmul.f32 %v1812, %v2065
    %v2067 = vmul.f32 %v2055, 3.8918573e-05
    %v2068 = vadd.f32 %v2067, 0.001143296
    %v2069 = vmul.f32 %v2055, %v2068
    %v2070 = vadd.f32 %v2069, 0.014752088
    %v2071 = vmul.f32 %v2055, %v2070
    %v2072 = vadd.f32 %v2071, 0.112945676
    %v2073 = vmul.f32 %v2055, %v2072
    %v2074 = vadd.f32 %v2073, 0.4994258
    %v2075 = vmul.f32 %v2055, %v2074
    %v2076 = vadd.f32 %v2075, 1.0
    %v2077 = vrcp.pop %v2076
    %v2078 = vmul.f32 %v2076, %v2077
    %v2079 = vsub.f32 1.0, %v2078
    %v2080 = vmul.f32 %v2077, %v2079
    %v2081 = vadd.f32 %v2077, %v2080
    %vm2082 = vweird.f32 %v2076
    %vm2083 = vweird.f32 %v2077
    %vm2084 = vmor %vm2082, %vm2083
    %v2085 = vsel %vm2084, %v2077, %v2081
    %v2086 = vand.u32 2147483647, %v2076
    %vm2087 = vcmp.eq.f32.partialorder %v2086, 8.507059e+37
    %v2088 = vand.u32 %v2076, 2147483648
    %v2089 = vor.u32 1.1754944e-38, %v2088
    %v2090 = vsel %vm2087, %v2089, %v2085
    %v2091 = vmul.f32 %v2066, %v2090
    %v2092 = vmin.f32 %v2091, 1.0
    %v2093 = vmax.f32 %v2092, -1.0
    %v2094 = vmul.f32 %v1813, %v1813
    %v2095 = vmin.f32 16.0, %v2094
    %v2096 = vmul.f32 %v2095, 2.1237322e-06
    %v2097 = vadd.f32 %v2096, 0.00028619796
    %v2098 = vmul.f32 %v2095, %v2097
    %v2099 = vadd.f32 %v2098, 0.0036580483
    %v2100 = vmul.f32 %v2095, %v2099
    %v2101 = vadd.f32 %v2100, 0.05243302
    %v2102 = vmul.f32 %v2095, %v2101
    %v2103 = vadd.f32 %v2102, 0.18741608
    %v2104 = vmul.f32 %v2095, %v2103
    %v2105 = vadd.f32 %v2104, 1.1283791
    %v2106 = vmul.f32 %v1813, %v2105
    %v2107 = vmul.f32 %v2095, 3.8918573e-05
    %v2108 = vadd.f32 %v2107, 0.001143296
    %v2109 = vmul.f32 %v2095, %v2108
    %v2110 = vadd.f32 %v2109, 0.014752088
    %v2111 = vmul.f32 %v2095, %v2110
    %v2112 = vadd.f32 %v2111, 0.112945676
    %v2113 = vmul.f32 %v2095, %v2112
    %v2114 = vadd.f32 %v2113, 0.4994258
    %v2115 = vmul.f32 %v2095, %v2114
    %v2116 = vadd.f32 %v2115, 1.0
    %v2117 = vrcp.pop %v2116
    %v2118 = vmul.f32 %v2116, %v2117
    %v2119 = vsub.f32 1.0, %v2118
    %v2120 = vmul.f32 %v2117, %v2119
    %v2121 = vadd.f32 %v2117, %v2120
    %vm2122 = vweird.f32 %v2116
    %vm2123 = vweird.f32 %v2117
    %vm2124 = vmor %vm2122, %vm2123
    %v2125 = vsel %vm2124, %v2117, %v2121
    %v2126 = vand.u32 2147483647, %v2116
    %vm2127 = vcmp.eq.f32.partialorder %v2126, 8.507059e+37
    %v2128 = vand.u32 %v2116, 2147483648
    %v2129 = vor.u32 1.1754944e-38, %v2128
    %v2130 = vsel %vm2127, %v2129, %v2125
    %v2131 = vmul.f32 %v2106, %v2130
    %v2132 = vmin.f32 %v2131, 1.0
    %v2133 = vmax.f32 %v2132, -1.0
    %v2134 = vadd.f32 %v1853, 1.0
    %v2135 = vadd.f32 %v1893, 1.0
    %v2136 = vadd.f32 %v1933, 1.0
    %v2137 = vadd.f32 %v1973, 1.0
    %v2138 = vadd.f32 %v2013, 1.0
    %v2139 = vadd.f32 %v2053, 1.0
    %v2140 = vadd.f32 %v2093, 1.0
    %v2141 = vadd.f32 %v2133, 1.0
    %v2142 = vmul.f32 %v1791, %v2134
    %v2143 = vmul.f32 %v1792, %v2135
    %v2144 = vmul.f32 %v1793, %v2136
    %v2145 = vmul.f32 %v1794, %v2137
    %v2146 = vmul.f32 %v1795, %v2138
    %v2147 = vmul.f32 %v1796, %v2139
    %v2148 = vmul.f32 %v1797, %v2140
    %v2149 = vmul.f32 %v1798, %v2141
    %v2150 = vld [vmem:[%s21] sm:$0xff]
    %v2151 = vld [vmem:[%s21 + $0x8] sm:$0xff]
    %v2152 = vld [vmem:[%s21 + $0x10] sm:$0xff]
    %v2153 = vld [vmem:[%s21 + $0x18] sm:$0xff]
    %v2154 = vld [vmem:[%s21 + $0x20] sm:$0xff]
    %v2155 = vld [vmem:[%s21 + $0x28] sm:$0xff]
    %v2156 = vld [vmem:[%s21 + $0x30] sm:$0xff]
    %v2157 = vld [vmem:[%s21 + $0x38] sm:$0xff]
    %v2158 = vld [vmem:[%s21 + $0x40] sm:$0xff]
    %v2159 = vld [vmem:[%s21 + $0x48] sm:$0xff]
    %v2160 = vld [vmem:[%s21 + $0x50] sm:$0xff]
    %v2161 = vld [vmem:[%s21 + $0x58] sm:$0xff]
    %v2162 = vld [vmem:[%s21 + $0x60] sm:$0xff]
    %v2163 = vld [vmem:[%s21 + $0x68] sm:$0xff]
    %v2164 = vld [vmem:[%s21 + $0x70] sm:$0xff]
    %v2165 = vld [vmem:[%s21 + $0x78] sm:$0xff]
    %v2166 = vld [vmem:[%s22] sm:$0x1]
    %v2168 = vperm.slane %v2166, 0
    %2170 = vmatpush.msra.mxu0 %v2165
    %2171 = vmatpush.msra.mxu0 %v2164
    %2172 = vmatpush.msra.mxu0 %v2163
    %2173 = vmatpush.msra.mxu0 %v2162
    %2174 = vmatpush.msra.mxu0 %v2161
    %2175 = vmatpush.msra.mxu0 %v2160
    %2176 = vmatpush.msra.mxu0 %v2159
    %2177 = vmatpush.msra.mxu0 %v2158
    %2178 = vmatpush.msra.mxu0 %v2157
    %2179 = vmatpush.msra.mxu0 %v2156
    %2180 = vmatpush.msra.mxu0 %v2155
    %2181 = vmatpush.msra.mxu0 %v2154
    %2182 = vmatpush.msra.mxu0 %v2153
    %2183 = vmatpush.msra.mxu0 %v2152
    %2184 = vmatpush.msra.mxu0 %v2151
    %2185 = vmatpush.msra.mxu0 %v2150
    %2186 = vmatmul.f32.gmra.mxu0 %v2142
    %v2187 = vpop.f32.mrf.mxu0
    %v2188 = vadd.f32 %v2168, %v2187
    %2189 = vmatmul.f32.gmra.mxu0 %v2143
    %v2190 = vpop.f32.mrf.mxu0
    %v2191 = vadd.f32 %v2168, %v2190
    %2192 = vmatmul.f32.gmra.mxu0 %v2144
    %v2193 = vpop.f32.mrf.mxu0
    %v2194 = vadd.f32 %v2168, %v2193
    %2195 = vmatmul.f32.gmra.mxu0 %v2145
    %v2196 = vpop.f32.mrf.mxu0
    %v2197 = vadd.f32 %v2168, %v2196
    %2198 = vmatmul.f32.gmra.mxu0 %v2146
    %v2199 = vpop.f32.mrf.mxu0
    %v2200 = vadd.f32 %v2168, %v2199
    %2201 = vmatmul.f32.gmra.mxu0 %v2147
    %v2202 = vpop.f32.mrf.mxu0
    %v2203 = vadd.f32 %v2168, %v2202
    %2204 = vmatmul.f32.gmra.mxu0 %v2148
    %v2205 = vpop.f32.mrf.mxu0
    %v2206 = vadd.f32 %v2168, %v2205
    %2207 = vmatmul.f32.gmra.mxu0 %v2149
    %v2208 = vpop.f32.mrf.mxu0
    %v2209 = vadd.f32 %v2168, %v2208
    %2210 = vdwg.mxu0
    %v2211 = vadd.f32 %v1510, %v2188
    %v2212 = vadd.f32 %v1511, %v2191
    %v2213 = vadd.f32 %v1512, %v2194
    %v2214 = vadd.f32 %v1513, %v2197
    %v2215 = vadd.f32 %v1514, %v2200
    %v2216 = vadd.f32 %v1515, %v2203
    %v2217 = vadd.f32 %v1516, %v2206
    %v2218 = vadd.f32 %v1517, %v2209
    %s2219 = scalar_lea.vmem %s7, 1
    %v2220 = vld [vmem:[%s2219] sm:$0x1]
    %s2221 = scalar_lea.vmem %s8, 1
    %v2222 = vld [vmem:[%s2221] sm:$0x1]
    %v2223 = vsel %vm218, %v2211, 0.0
    %2224 = vadd.xlane.f32.xlu0 %v2223
    %v2225 = vpop.xlane.xlu0 %2224
    %v2226 = vsel %vm218, %v2212, 0.0
    %2227 = vadd.xlane.f32.xlu0 %v2226
    %v2228 = vpop.xlane.xlu0 %2227
    %v2229 = vsel %vm218, %v2213, 0.0
    %2230 = vadd.xlane.f32.xlu0 %v2229
    %v2231 = vpop.xlane.xlu0 %2230
    %v2232 = vsel %vm218, %v2214, 0.0
    %2233 = vadd.xlane.f32.xlu0 %v2232
    %v2234 = vpop.xlane.xlu0 %2233
    %v2235 = vsel %vm218, %v2215, 0.0
    %2236 = vadd.xlane.f32.xlu0 %v2235
    %v2237 = vpop.xlane.xlu0 %2236
    %v2238 = vsel %vm218, %v2216, 0.0
    %2239 = vadd.xlane.f32.xlu0 %v2238
    %v2240 = vpop.xlane.xlu0 %2239
    %v2241 = vsel %vm218, %v2217, 0.0
    %2242 = vadd.xlane.f32.xlu0 %v2241
    %v2243 = vpop.xlane.xlu0 %2242
    %v2244 = vsel %vm218, %v2218, 0.0
    %2245 = vadd.xlane.f32.xlu0 %v2244
    %v2246 = vpop.xlane.xlu0 %2245
    %v2247 = vmul.f32 %v2225, %v249
    %v2248 = vmul.f32 %v2228, %v249
    %v2249 = vmul.f32 %v2231, %v249
    %v2250 = vmul.f32 %v2234, %v249
    %v2251 = vmul.f32 %v2237, %v249
    %v2252 = vmul.f32 %v2240, %v249
    %v2253 = vmul.f32 %v2243, %v249
    %v2254 = vmul.f32 %v2246, %v249
    %v2255 = vsub.f32 %v2211, %v2247
    %v2256 = vsub.f32 %v2212, %v2248
    %v2257 = vsub.f32 %v2213, %v2249
    %v2258 = vsub.f32 %v2214, %v2250
    %v2259 = vsub.f32 %v2215, %v2251
    %v2260 = vsub.f32 %v2216, %v2252
    %v2261 = vsub.f32 %v2217, %v2253
    %v2262 = vsub.f32 %v2218, %v2254
    %v2263 = vmul.f32 %v2255, %v2255
    %v2264 = vmul.f32 %v2256, %v2256
    %v2265 = vmul.f32 %v2257, %v2257
    %v2266 = vmul.f32 %v2258, %v2258
    %v2267 = vmul.f32 %v2259, %v2259
    %v2268 = vmul.f32 %v2260, %v2260
    %v2269 = vmul.f32 %v2261, %v2261
    %v2270 = vmul.f32 %v2262, %v2262
    %v2271 = vsel %vm218, %v2263, 0.0
    %2272 = vadd.xlane.f32.xlu0 %v2271
    %v2273 = vpop.xlane.xlu0 %2272
    %v2274 = vsel %vm218, %v2264, 0.0
    %2275 = vadd.xlane.f32.xlu0 %v2274
    %v2276 = vpop.xlane.xlu0 %2275
    %v2277 = vsel %vm218, %v2265, 0.0
    %2278 = vadd.xlane.f32.xlu0 %v2277
    %v2279 = vpop.xlane.xlu0 %2278
    %v2280 = vsel %vm218, %v2266, 0.0
    %2281 = vadd.xlane.f32.xlu0 %v2280
    %v2282 = vpop.xlane.xlu0 %2281
    %v2283 = vsel %vm218, %v2267, 0.0
    %2284 = vadd.xlane.f32.xlu0 %v2283
    %v2285 = vpop.xlane.xlu0 %2284
    %v2286 = vsel %vm218, %v2268, 0.0
    %2287 = vadd.xlane.f32.xlu0 %v2286
    %v2288 = vpop.xlane.xlu0 %2287
    %v2289 = vsel %vm218, %v2269, 0.0
    %2290 = vadd.xlane.f32.xlu0 %v2289
    %v2291 = vpop.xlane.xlu0 %2290
    %v2292 = vsel %vm218, %v2270, 0.0
    %2293 = vadd.xlane.f32.xlu0 %v2292
    %v2294 = vpop.xlane.xlu0 %2293
    %v2295 = vmul.f32 %v2273, %v249
    %v2296 = vmul.f32 %v2276, %v249
    %v2297 = vmul.f32 %v2279, %v249
    %v2298 = vmul.f32 %v2282, %v249
    %v2299 = vmul.f32 %v2285, %v249
    %v2300 = vmul.f32 %v2288, %v249
    %v2301 = vmul.f32 %v2291, %v249
    %v2302 = vmul.f32 %v2294, %v249
    %v2303 = vadd.f32 %v2295, 1e-05
    %v2304 = vadd.f32 %v2296, 1e-05
    %v2305 = vadd.f32 %v2297, 1e-05
    %v2306 = vadd.f32 %v2298, 1e-05
    %v2307 = vadd.f32 %v2299, 1e-05
    %v2308 = vadd.f32 %v2300, 1e-05
    %v2309 = vadd.f32 %v2301, 1e-05
    %v2310 = vadd.f32 %v2302, 1e-05
    %v2311 = vrsqrt.pop %v2303
    %v2312 = vmul.f32 %v2311, %v2303
    %v2313 = vmul.f32 %v2312, %v2311
    %v2314 = vmul.f32 0.5, %v2313
    %v2315 = vsub.f32 1.5, %v2314
    %v2316 = vmul.f32 %v2311, %v2315
    %vm2317 = vweird.f32 %v2303
    %vm2318 = vweird.f32 %v2311
    %vm2319 = vmor %vm2317, %vm2318
    %v2320 = vsel %vm2319, %v2311, %v2316
    %v2321 = vrsqrt.pop %v2304
    %v2322 = vmul.f32 %v2321, %v2304
    %v2323 = vmul.f32 %v2322, %v2321
    %v2324 = vmul.f32 0.5, %v2323
    %v2325 = vsub.f32 1.5, %v2324
    %v2326 = vmul.f32 %v2321, %v2325
    %vm2327 = vweird.f32 %v2304
    %vm2328 = vweird.f32 %v2321
    %vm2329 = vmor %vm2327, %vm2328
    %v2330 = vsel %vm2329, %v2321, %v2326
    %v2331 = vrsqrt.pop %v2305
    %v2332 = vmul.f32 %v2331, %v2305
    %v2333 = vmul.f32 %v2332, %v2331
    %v2334 = vmul.f32 0.5, %v2333
    %v2335 = vsub.f32 1.5, %v2334
    %v2336 = vmul.f32 %v2331, %v2335
    %vm2337 = vweird.f32 %v2305
    %vm2338 = vweird.f32 %v2331
    %vm2339 = vmor %vm2337, %vm2338
    %v2340 = vsel %vm2339, %v2331, %v2336
    %v2341 = vrsqrt.pop %v2306
    %v2342 = vmul.f32 %v2341, %v2306
    %v2343 = vmul.f32 %v2342, %v2341
    %v2344 = vmul.f32 0.5, %v2343
    %v2345 = vsub.f32 1.5, %v2344
    %v2346 = vmul.f32 %v2341, %v2345
    %vm2347 = vweird.f32 %v2306
    %vm2348 = vweird.f32 %v2341
    %vm2349 = vmor %vm2347, %vm2348
    %v2350 = vsel %vm2349, %v2341, %v2346
    %v2351 = vrsqrt.pop %v2307
    %v2352 = vmul.f32 %v2351, %v2307
    %v2353 = vmul.f32 %v2352, %v2351
    %v2354 = vmul.f32 0.5, %v2353
    %v2355 = vsub.f32 1.5, %v2354
    %v2356 = vmul.f32 %v2351, %v2355
    %vm2357 = vweird.f32 %v2307
    %vm2358 = vweird.f32 %v2351
    %vm2359 = vmor %vm2357, %vm2358
    %v2360 = vsel %vm2359, %v2351, %v2356
    %v2361 = vrsqrt.pop %v2308
    %v2362 = vmul.f32 %v2361, %v2308
    %v2363 = vmul.f32 %v2362, %v2361
    %v2364 = vmul.f32 0.5, %v2363
    %v2365 = vsub.f32 1.5, %v2364
    %v2366 = vmul.f32 %v2361, %v2365
    %vm2367 = vweird.f32 %v2308
    %vm2368 = vweird.f32 %v2361
    %vm2369 = vmor %vm2367, %vm2368
    %v2370 = vsel %vm2369, %v2361, %v2366
    %v2371 = vrsqrt.pop %v2309
    %v2372 = vmul.f32 %v2371, %v2309
    %v2373 = vmul.f32 %v2372, %v2371
    %v2374 = vmul.f32 0.5, %v2373
    %v2375 = vsub.f32 1.5, %v2374
    %v2376 = vmul.f32 %v2371, %v2375
    %vm2377 = vweird.f32 %v2309
    %vm2378 = vweird.f32 %v2371
    %vm2379 = vmor %vm2377, %vm2378
    %v2380 = vsel %vm2379, %v2371, %v2376
    %v2381 = vrsqrt.pop %v2310
    %v2382 = vmul.f32 %v2381, %v2310
    %v2383 = vmul.f32 %v2382, %v2381
    %v2384 = vmul.f32 0.5, %v2383
    %v2385 = vsub.f32 1.5, %v2384
    %v2386 = vmul.f32 %v2381, %v2385
    %vm2387 = vweird.f32 %v2310
    %vm2388 = vweird.f32 %v2381
    %vm2389 = vmor %vm2387, %vm2388
    %v2390 = vsel %vm2389, %v2381, %v2386
    %v2391 = vmul.f32 %v2255, %v2320
    %v2392 = vmul.f32 %v2256, %v2330
    %v2393 = vmul.f32 %v2257, %v2340
    %v2394 = vmul.f32 %v2258, %v2350
    %v2395 = vmul.f32 %v2259, %v2360
    %v2396 = vmul.f32 %v2260, %v2370
    %v2397 = vmul.f32 %v2261, %v2380
    %v2398 = vmul.f32 %v2262, %v2390
    %v2400 = vperm.slane %v2220, 0
    %v2402 = vmul.f32 %v2391, %v2400
    %v2403 = vmul.f32 %v2392, %v2400
    %v2404 = vmul.f32 %v2393, %v2400
    %v2405 = vmul.f32 %v2394, %v2400
    %v2406 = vmul.f32 %v2395, %v2400
    %v2407 = vmul.f32 %v2396, %v2400
    %v2408 = vmul.f32 %v2397, %v2400
    %v2409 = vmul.f32 %v2398, %v2400
    %v2411 = vperm.slane %v2222, 0
    %v2413 = vadd.f32 %v2402, %v2411
    %v2414 = vadd.f32 %v2403, %v2411
    %v2415 = vadd.f32 %v2404, %v2411
    %v2416 = vadd.f32 %v2405, %v2411
    %v2417 = vadd.f32 %v2406, %v2411
    %v2418 = vadd.f32 %v2407, %v2411
    %v2419 = vadd.f32 %v2408, %v2411
    %v2420 = vadd.f32 %v2409, %v2411
    %s2421 = scalar_lea.vmem %s9, 32
    %v2422 = vld [vmem:[%s2421] sm:$0xff]
    %v2423 = vld [vmem:[%s2421 + $0x8] sm:$0xff]
    %v2424 = vld [vmem:[%s2421 + $0x10] sm:$0xff]
    %v2425 = vld [vmem:[%s2421 + $0x18] sm:$0xff]
    %s2426 = scalar_lea.vmem %s10, 1
    %v2427 = vld [vmem:[%s2426] sm:$0x1]
    %v2429 = vperm.slane %v2427, 0
    %v2432 = vsel %vm218, %v2413, 0
    %v2435 = vsel %vm218, %v2414, 0
    %v2438 = vsel %vm218, %v2415, 0
    %v2441 = vsel %vm218, %v2416, 0
    %v2444 = vsel %vm218, %v2417, 0
    %v2447 = vsel %vm218, %v2418, 0
    %v2450 = vsel %vm218, %v2419, 0
    %v2453 = vsel %vm218, %v2420, 0
    %2455 = vmatpush.msra.mxu0 0.0
    %2456 = vmatpush.msra.mxu0 0.0
    %2457 = vmatpush.msra.mxu0 0.0
    %2458 = vmatpush.msra.mxu0 0.0
    %2459 = vmatpush.msra.mxu0 0.0
    %2460 = vmatpush.msra.mxu0 0.0
    %2461 = vmatpush.msra.mxu0 0.0
    %2462 = vmatpush.msra.mxu0 0.0
    %2463 = vmatpush.msra.mxu0 0.0
    %2464 = vmatpush.msra.mxu0 0.0
    %2465 = vmatpush.msra.mxu0 0.0
    %2466 = vmatpush.msra.mxu0 0.0
    %2467 = vmatpush.msra.mxu0 %v2425
    %2468 = vmatpush.msra.mxu0 %v2424
    %2469 = vmatpush.msra.mxu0 %v2423
    %2470 = vmatpush.msra.mxu0 %v2422
    %2471 = vmatmul.f32.gmra.mxu0 %v2432
    %v2472 = vpop.f32.mrf.mxu0
    %v2473 = vadd.f32 %v2429, %v2472
    %2474 = vmatmul.f32.gmra.mxu0 %v2435
    %v2475 = vpop.f32.mrf.mxu0
    %v2476 = vadd.f32 %v2429, %v2475
    %2477 = vmatmul.f32.gmra.mxu0 %v2438
    %v2478 = vpop.f32.mrf.mxu0
    %v2479 = vadd.f32 %v2429, %v2478
    %2480 = vmatmul.f32.gmra.mxu0 %v2441
    %v2481 = vpop.f32.mrf.mxu0
    %v2482 = vadd.f32 %v2429, %v2481
    %2483 = vmatmul.f32.gmra.mxu0 %v2444
    %v2484 = vpop.f32.mrf.mxu0
    %v2485 = vadd.f32 %v2429, %v2484
    %2486 = vmatmul.f32.gmra.mxu0 %v2447
    %v2487 = vpop.f32.mrf.mxu0
    %v2488 = vadd.f32 %v2429, %v2487
    %2489 = vmatmul.f32.gmra.mxu0 %v2450
    %v2490 = vpop.f32.mrf.mxu0
    %v2491 = vadd.f32 %v2429, %v2490
    %2492 = vmatmul.f32.gmra.mxu0 %v2453
    %v2493 = vpop.f32.mrf.mxu0
    %v2494 = vadd.f32 %v2429, %v2493
    %2495 = vdwg.mxu0
    %s2496 = scalar_lea.vmem %s11, 32
    %v2497 = vld [vmem:[%s2496] sm:$0xff]
    %v2498 = vld [vmem:[%s2496 + $0x8] sm:$0xff]
    %v2499 = vld [vmem:[%s2496 + $0x10] sm:$0xff]
    %v2500 = vld [vmem:[%s2496 + $0x18] sm:$0xff]
    %s2501 = scalar_lea.vmem %s12, 1
    %v2502 = vld [vmem:[%s2501] sm:$0x1]
    %v2504 = vperm.slane %v2502, 0
    %2506 = vmatpush.msra.mxu0 0.0
    %2507 = vmatpush.msra.mxu0 0.0
    %2508 = vmatpush.msra.mxu0 0.0
    %2509 = vmatpush.msra.mxu0 0.0
    %2510 = vmatpush.msra.mxu0 0.0
    %2511 = vmatpush.msra.mxu0 0.0
    %2512 = vmatpush.msra.mxu0 0.0
    %2513 = vmatpush.msra.mxu0 0.0
    %2514 = vmatpush.msra.mxu0 0.0
    %2515 = vmatpush.msra.mxu0 0.0
    %2516 = vmatpush.msra.mxu0 0.0
    %2517 = vmatpush.msra.mxu0 0.0
    %2518 = vmatpush.msra.mxu0 %v2500
    %2519 = vmatpush.msra.mxu0 %v2499
    %2520 = vmatpush.msra.mxu0 %v2498
    %2521 = vmatpush.msra.mxu0 %v2497
    %2522 = vmatmul.f32.gmra.mxu0 %v2432
    %v2523 = vpop.f32.mrf.mxu0
    %v2524 = vadd.f32 %v2504, %v2523
    %2525 = vmatmul.f32.gmra.mxu0 %v2435
    %v2526 = vpop.f32.mrf.mxu0
    %v2527 = vadd.f32 %v2504, %v2526
    %2528 = vmatmul.f32.gmra.mxu0 %v2438
    %v2529 = vpop.f32.mrf.mxu0
    %v2530 = vadd.f32 %v2504, %v2529
    %2531 = vmatmul.f32.gmra.mxu0 %v2441
    %v2532 = vpop.f32.mrf.mxu0
    %v2533 = vadd.f32 %v2504, %v2532
    %2534 = vmatmul.f32.gmra.mxu0 %v2444
    %v2535 = vpop.f32.mrf.mxu0
    %v2536 = vadd.f32 %v2504, %v2535
    %2537 = vmatmul.f32.gmra.mxu0 %v2447
    %v2538 = vpop.f32.mrf.mxu0
    %v2539 = vadd.f32 %v2504, %v2538
    %2540 = vmatmul.f32.gmra.mxu0 %v2450
    %v2541 = vpop.f32.mrf.mxu0
    %v2542 = vadd.f32 %v2504, %v2541
    %2543 = vmatmul.f32.gmra.mxu0 %v2453
    %v2544 = vpop.f32.mrf.mxu0
    %v2545 = vadd.f32 %v2504, %v2544
    %2546 = vdwg.mxu0
    %s2547 = scalar_lea.vmem %s13, 32
    %v2548 = vld [vmem:[%s2547] sm:$0xff]
    %v2549 = vld [vmem:[%s2547 + $0x8] sm:$0xff]
    %v2550 = vld [vmem:[%s2547 + $0x10] sm:$0xff]
    %v2551 = vld [vmem:[%s2547 + $0x18] sm:$0xff]
    %s2552 = scalar_lea.vmem %s14, 1
    %v2553 = vld [vmem:[%s2552] sm:$0x1]
    %v2555 = vperm.slane %v2553, 0
    %2557 = vmatpush.msra.mxu0 0.0
    %2558 = vmatpush.msra.mxu0 0.0
    %2559 = vmatpush.msra.mxu0 0.0
    %2560 = vmatpush.msra.mxu0 0.0
    %2561 = vmatpush.msra.mxu0 0.0
    %2562 = vmatpush.msra.mxu0 0.0
    %2563 = vmatpush.msra.mxu0 0.0
    %2564 = vmatpush.msra.mxu0 0.0
    %2565 = vmatpush.msra.mxu0 0.0
    %2566 = vmatpush.msra.mxu0 0.0
    %2567 = vmatpush.msra.mxu0 0.0
    %2568 = vmatpush.msra.mxu0 0.0
    %2569 = vmatpush.msra.mxu0 %v2551
    %2570 = vmatpush.msra.mxu0 %v2550
    %2571 = vmatpush.msra.mxu0 %v2549
    %2572 = vmatpush.msra.mxu0 %v2548
    %2573 = vmatmul.f32.gmra.mxu0 %v2432
    %v2574 = vpop.f32.mrf.mxu0
    %v2575 = vadd.f32 %v2555, %v2574
    %2576 = vmatmul.f32.gmra.mxu0 %v2435
    %v2577 = vpop.f32.mrf.mxu0
    %v2578 = vadd.f32 %v2555, %v2577
    %2579 = vmatmul.f32.gmra.mxu0 %v2438
    %v2580 = vpop.f32.mrf.mxu0
    %v2581 = vadd.f32 %v2555, %v2580
    %2582 = vmatmul.f32.gmra.mxu0 %v2441
    %v2583 = vpop.f32.mrf.mxu0
    %v2584 = vadd.f32 %v2555, %v2583
    %2585 = vmatmul.f32.gmra.mxu0 %v2444
    %v2586 = vpop.f32.mrf.mxu0
    %v2587 = vadd.f32 %v2555, %v2586
    %2588 = vmatmul.f32.gmra.mxu0 %v2447
    %v2589 = vpop.f32.mrf.mxu0
    %v2590 = vadd.f32 %v2555, %v2589
    %2591 = vmatmul.f32.gmra.mxu0 %v2450
    %v2592 = vpop.f32.mrf.mxu0
    %v2593 = vadd.f32 %v2555, %v2592
    %2594 = vmatmul.f32.gmra.mxu0 %v2453
    %v2595 = vpop.f32.mrf.mxu0
    %v2596 = vadd.f32 %v2555, %v2595
    %2597 = vdwg.mxu0
    %v2598 = vmul.f32 %v2524, %v121
    %v2599 = vmul.f32 %v2524, %v122
    %v2600 = vmul.f32 %v2524, %v123
    %v2601 = vmul.f32 %v2524, %v124
    %v2602 = vmul.f32 %v2524, %v125
    %v2603 = vmul.f32 %v2524, %v126
    %v2604 = vmul.f32 %v2524, %v127
    %v2605 = vmul.f32 %v2524, %v128
    %v2606 = vmul.f32 %v2527, %v121
    %v2607 = vmul.f32 %v2527, %v122
    %v2608 = vmul.f32 %v2527, %v123
    %v2609 = vmul.f32 %v2527, %v124
    %v2610 = vmul.f32 %v2527, %v125
    %v2611 = vmul.f32 %v2527, %v126
    %v2612 = vmul.f32 %v2527, %v127
    %v2613 = vmul.f32 %v2527, %v128
    %v2614 = vmul.f32 %v2530, %v121
    %v2615 = vmul.f32 %v2530, %v122
    %v2616 = vmul.f32 %v2530, %v123
    %v2617 = vmul.f32 %v2530, %v124
    %v2618 = vmul.f32 %v2530, %v125
    %v2619 = vmul.f32 %v2530, %v126
    %v2620 = vmul.f32 %v2530, %v127
    %v2621 = vmul.f32 %v2530, %v128
    %v2622 = vmul.f32 %v2533, %v121
    %v2623 = vmul.f32 %v2533, %v122
    %v2624 = vmul.f32 %v2533, %v123
    %v2625 = vmul.f32 %v2533, %v124
    %v2626 = vmul.f32 %v2533, %v125
    %v2627 = vmul.f32 %v2533, %v126
    %v2628 = vmul.f32 %v2533, %v127
    %v2629 = vmul.f32 %v2533, %v128
    %v2630 = vmul.f32 %v2536, %v121
    %v2631 = vmul.f32 %v2536, %v122
    %v2632 = vmul.f32 %v2536, %v123
    %v2633 = vmul.f32 %v2536, %v124
    %v2634 = vmul.f32 %v2536, %v125
    %v2635 = vmul.f32 %v2536, %v126
    %v2636 = vmul.f32 %v2536, %v127
    %v2637 = vmul.f32 %v2536, %v128
    %v2638 = vmul.f32 %v2539, %v121
    %v2639 = vmul.f32 %v2539, %v122
    %v2640 = vmul.f32 %v2539, %v123
    %v2641 = vmul.f32 %v2539, %v124
    %v2642 = vmul.f32 %v2539, %v125
    %v2643 = vmul.f32 %v2539, %v126
    %v2644 = vmul.f32 %v2539, %v127
    %v2645 = vmul.f32 %v2539, %v128
    %v2646 = vmul.f32 %v2542, %v121
    %v2647 = vmul.f32 %v2542, %v122
    %v2648 = vmul.f32 %v2542, %v123
    %v2649 = vmul.f32 %v2542, %v124
    %v2650 = vmul.f32 %v2542, %v125
    %v2651 = vmul.f32 %v2542, %v126
    %v2652 = vmul.f32 %v2542, %v127
    %v2653 = vmul.f32 %v2542, %v128
    %v2654 = vmul.f32 %v2545, %v121
    %v2655 = vmul.f32 %v2545, %v122
    %v2656 = vmul.f32 %v2545, %v123
    %v2657 = vmul.f32 %v2545, %v124
    %v2658 = vmul.f32 %v2545, %v125
    %v2659 = vmul.f32 %v2545, %v126
    %v2660 = vmul.f32 %v2545, %v127
    %v2661 = vmul.f32 %v2545, %v128
    %v2662 = vmul.f32 %v2575, %v121
    %v2663 = vmul.f32 %v2575, %v122
    %v2664 = vmul.f32 %v2575, %v123
    %v2665 = vmul.f32 %v2575, %v124
    %v2666 = vmul.f32 %v2575, %v125
    %v2667 = vmul.f32 %v2575, %v126
    %v2668 = vmul.f32 %v2575, %v127
    %v2669 = vmul.f32 %v2575, %v128
    %v2670 = vmul.f32 %v2578, %v121
    %v2671 = vmul.f32 %v2578, %v122
    %v2672 = vmul.f32 %v2578, %v123
    %v2673 = vmul.f32 %v2578, %v124
    %v2674 = vmul.f32 %v2578, %v125
    %v2675 = vmul.f32 %v2578, %v126
    %v2676 = vmul.f32 %v2578, %v127
    %v2677 = vmul.f32 %v2578, %v128
    %v2678 = vmul.f32 %v2581, %v121
    %v2679 = vmul.f32 %v2581, %v122
    %v2680 = vmul.f32 %v2581, %v123
    %v2681 = vmul.f32 %v2581, %v124
    %v2682 = vmul.f32 %v2581, %v125
    %v2683 = vmul.f32 %v2581, %v126
    %v2684 = vmul.f32 %v2581, %v127
    %v2685 = vmul.f32 %v2581, %v128
    %v2686 = vmul.f32 %v2584, %v121
    %v2687 = vmul.f32 %v2584, %v122
    %v2688 = vmul.f32 %v2584, %v123
    %v2689 = vmul.f32 %v2584, %v124
    %v2690 = vmul.f32 %v2584, %v125
    %v2691 = vmul.f32 %v2584, %v126
    %v2692 = vmul.f32 %v2584, %v127
    %v2693 = vmul.f32 %v2584, %v128
    %v2694 = vmul.f32 %v2587, %v121
    %v2695 = vmul.f32 %v2587, %v122
    %v2696 = vmul.f32 %v2587, %v123
    %v2697 = vmul.f32 %v2587, %v124
    %v2698 = vmul.f32 %v2587, %v125
    %v2699 = vmul.f32 %v2587, %v126
    %v2700 = vmul.f32 %v2587, %v127
    %v2701 = vmul.f32 %v2587, %v128
    %v2702 = vmul.f32 %v2590, %v121
    %v2703 = vmul.f32 %v2590, %v122
    %v2704 = vmul.f32 %v2590, %v123
    %v2705 = vmul.f32 %v2590, %v124
    %v2706 = vmul.f32 %v2590, %v125
    %v2707 = vmul.f32 %v2590, %v126
    %v2708 = vmul.f32 %v2590, %v127
    %v2709 = vmul.f32 %v2590, %v128
    %v2710 = vmul.f32 %v2593, %v121
    %v2711 = vmul.f32 %v2593, %v122
    %v2712 = vmul.f32 %v2593, %v123
    %v2713 = vmul.f32 %v2593, %v124
    %v2714 = vmul.f32 %v2593, %v125
    %v2715 = vmul.f32 %v2593, %v126
    %v2716 = vmul.f32 %v2593, %v127
    %v2717 = vmul.f32 %v2593, %v128
    %v2718 = vmul.f32 %v2596, %v121
    %v2719 = vmul.f32 %v2596, %v122
    %v2720 = vmul.f32 %v2596, %v123
    %v2721 = vmul.f32 %v2596, %v124
    %v2722 = vmul.f32 %v2596, %v125
    %v2723 = vmul.f32 %v2596, %v126
    %v2724 = vmul.f32 %v2596, %v127
    %v2725 = vmul.f32 %v2596, %v128
    %v2727 = vsel %vm218, %v2473, 0
    %v2730 = vsel %vm218, %v2598, 0
    %v2733 = vsel %vm218, %v2599, 0
    %v2736 = vsel %vm218, %v2600, 0
    %v2739 = vsel %vm218, %v2601, 0
    %v2742 = vsel %vm218, %v2602, 0
    %v2745 = vsel %vm218, %v2603, 0
    %v2748 = vsel %vm218, %v2604, 0
    %v2751 = vsel %vm218, %v2605, 0
    %2753 = vmatpush.xpose.msra.mxu0 0.0
    %2754 = vmatpush.xpose.msra.mxu0 0.0
    %2755 = vmatpush.xpose.msra.mxu0 0.0
    %2756 = vmatpush.xpose.msra.mxu0 0.0
    %2757 = vmatpush.xpose.msra.mxu0 0.0
    %2758 = vmatpush.xpose.msra.mxu0 0.0
    %2759 = vmatpush.xpose.msra.mxu0 0.0
    %2760 = vmatpush.xpose.msra.mxu0 0.0
    %2761 = vmatpush.xpose.msra.mxu0 %v2751
    %2762 = vmatpush.xpose.msra.mxu0 %v2748
    %2763 = vmatpush.xpose.msra.mxu0 %v2745
    %2764 = vmatpush.xpose.msra.mxu0 %v2742
    %2765 = vmatpush.xpose.msra.mxu0 %v2739
    %2766 = vmatpush.xpose.msra.mxu0 %v2736
    %2767 = vmatpush.xpose.msra.mxu0 %v2733
    %2768 = vmatpush.xpose.msra.mxu0 %v2730
    %2769 = vmatmul.f32.gmra.mxu0 %v2727
    %v2770 = vpop.f32.mrf.mxu0
    %v2771 = vadd.f32 %v731, %v2770
    %2772 = vdwg.mxu0
    %v2774 = vsel %vm218, %v2476, 0
    %v2777 = vsel %vm218, %v2606, 0
    %v2780 = vsel %vm218, %v2607, 0
    %v2783 = vsel %vm218, %v2608, 0
    %v2786 = vsel %vm218, %v2609, 0
    %v2789 = vsel %vm218, %v2610, 0
    %v2792 = vsel %vm218, %v2611, 0
    %v2795 = vsel %vm218, %v2612, 0
    %v2798 = vsel %vm218, %v2613, 0
    %2800 = vmatpush.xpose.msra.mxu0 0.0
    %2801 = vmatpush.xpose.msra.mxu0 0.0
    %2802 = vmatpush.xpose.msra.mxu0 0.0
    %2803 = vmatpush.xpose.msra.mxu0 0.0
    %2804 = vmatpush.xpose.msra.mxu0 0.0
    %2805 = vmatpush.xpose.msra.mxu0 0.0
    %2806 = vmatpush.xpose.msra.mxu0 0.0
    %2807 = vmatpush.xpose.msra.mxu0 0.0
    %2808 = vmatpush.xpose.msra.mxu0 %v2798
    %2809 = vmatpush.xpose.msra.mxu0 %v2795
    %2810 = vmatpush.xpose.msra.mxu0 %v2792
    %2811 = vmatpush.xpose.msra.mxu0 %v2789
    %2812 = vmatpush.xpose.msra.mxu0 %v2786
    %2813 = vmatpush.xpose.msra.mxu0 %v2783
    %2814 = vmatpush.xpose.msra.mxu0 %v2780
    %2815 = vmatpush.xpose.msra.mxu0 %v2777
    %2816 = vmatmul.f32.gmra.mxu0 %v2774
    %v2817 = vpop.f32.mrf.mxu0
    %v2818 = vadd.f32 %v732, %v2817
    %2819 = vdwg.mxu0
    %v2821 = vsel %vm218, %v2479, 0
    %v2824 = vsel %vm218, %v2614, 0
    %v2827 = vsel %vm218, %v2615, 0
    %v2830 = vsel %vm218, %v2616, 0
    %v2833 = vsel %vm218, %v2617, 0
    %v2836 = vsel %vm218, %v2618, 0
    %v2839 = vsel %vm218, %v2619, 0
    %v2842 = vsel %vm218, %v2620, 0
    %v2845 = vsel %vm218, %v2621, 0
    %2847 = vmatpush.xpose.msra.mxu0 0.0
    %2848 = vmatpush.xpose.msra.mxu0 0.0
    %2849 = vmatpush.xpose.msra.mxu0 0.0
    %2850 = vmatpush.xpose.msra.mxu0 0.0
    %2851 = vmatpush.xpose.msra.mxu0 0.0
    %2852 = vmatpush.xpose.msra.mxu0 0.0
    %2853 = vmatpush.xpose.msra.mxu0 0.0
    %2854 = vmatpush.xpose.msra.mxu0 0.0
    %2855 = vmatpush.xpose.msra.mxu0 %v2845
    %2856 = vmatpush.xpose.msra.mxu0 %v2842
    %2857 = vmatpush.xpose.msra.mxu0 %v2839
    %2858 = vmatpush.xpose.msra.mxu0 %v2836
    %2859 = vmatpush.xpose.msra.mxu0 %v2833
    %2860 = vmatpush.xpose.msra.mxu0 %v2830
    %2861 = vmatpush.xpose.msra.mxu0 %v2827
    %2862 = vmatpush.xpose.msra.mxu0 %v2824
    %2863 = vmatmul.f32.gmra.mxu0 %v2821
    %v2864 = vpop.f32.mrf.mxu0
    %v2865 = vadd.f32 %v733, %v2864
    %2866 = vdwg.mxu0
    %v2868 = vsel %vm218, %v2482, 0
    %v2871 = vsel %vm218, %v2622, 0
    %v2874 = vsel %vm218, %v2623, 0
    %v2877 = vsel %vm218, %v2624, 0
    %v2880 = vsel %vm218, %v2625, 0
    %v2883 = vsel %vm218, %v2626, 0
    %v2886 = vsel %vm218, %v2627, 0
    %v2889 = vsel %vm218, %v2628, 0
    %v2892 = vsel %vm218, %v2629, 0
    %2894 = vmatpush.xpose.msra.mxu0 0.0
    %2895 = vmatpush.xpose.msra.mxu0 0.0
    %2896 = vmatpush.xpose.msra.mxu0 0.0
    %2897 = vmatpush.xpose.msra.mxu0 0.0
    %2898 = vmatpush.xpose.msra.mxu0 0.0
    %2899 = vmatpush.xpose.msra.mxu0 0.0
    %2900 = vmatpush.xpose.msra.mxu0 0.0
    %2901 = vmatpush.xpose.msra.mxu0 0.0
    %2902 = vmatpush.xpose.msra.mxu0 %v2892
    %2903 = vmatpush.xpose.msra.mxu0 %v2889
    %2904 = vmatpush.xpose.msra.mxu0 %v2886
    %2905 = vmatpush.xpose.msra.mxu0 %v2883
    %2906 = vmatpush.xpose.msra.mxu0 %v2880
    %2907 = vmatpush.xpose.msra.mxu0 %v2877
    %2908 = vmatpush.xpose.msra.mxu0 %v2874
    %2909 = vmatpush.xpose.msra.mxu0 %v2871
    %2910 = vmatmul.f32.gmra.mxu0 %v2868
    %v2911 = vpop.f32.mrf.mxu0
    %v2912 = vadd.f32 %v734, %v2911
    %2913 = vdwg.mxu0
    %v2915 = vsel %vm218, %v2485, 0
    %v2918 = vsel %vm218, %v2630, 0
    %v2921 = vsel %vm218, %v2631, 0
    %v2924 = vsel %vm218, %v2632, 0
    %v2927 = vsel %vm218, %v2633, 0
    %v2930 = vsel %vm218, %v2634, 0
    %v2933 = vsel %vm218, %v2635, 0
    %v2936 = vsel %vm218, %v2636, 0
    %v2939 = vsel %vm218, %v2637, 0
    %2941 = vmatpush.xpose.msra.mxu0 0.0
    %2942 = vmatpush.xpose.msra.mxu0 0.0
    %2943 = vmatpush.xpose.msra.mxu0 0.0
    %2944 = vmatpush.xpose.msra.mxu0 0.0
    %2945 = vmatpush.xpose.msra.mxu0 0.0
    %2946 = vmatpush.xpose.msra.mxu0 0.0
    %2947 = vmatpush.xpose.msra.mxu0 0.0
    %2948 = vmatpush.xpose.msra.mxu0 0.0
    %2949 = vmatpush.xpose.msra.mxu0 %v2939
    %2950 = vmatpush.xpose.msra.mxu0 %v2936
    %2951 = vmatpush.xpose.msra.mxu0 %v2933
    %2952 = vmatpush.xpose.msra.mxu0 %v2930
    %2953 = vmatpush.xpose.msra.mxu0 %v2927
    %2954 = vmatpush.xpose.msra.mxu0 %v2924
    %2955 = vmatpush.xpose.msra.mxu0 %v2921
    %2956 = vmatpush.xpose.msra.mxu0 %v2918
    %2957 = vmatmul.f32.gmra.mxu0 %v2915
    %v2958 = vpop.f32.mrf.mxu0
    %v2959 = vadd.f32 %v735, %v2958
    %2960 = vdwg.mxu0
    %v2962 = vsel %vm218, %v2488, 0
    %v2965 = vsel %vm218, %v2638, 0
    %v2968 = vsel %vm218, %v2639, 0
    %v2971 = vsel %vm218, %v2640, 0
    %v2974 = vsel %vm218, %v2641, 0
    %v2977 = vsel %vm218, %v2642, 0
    %v2980 = vsel %vm218, %v2643, 0
    %v2983 = vsel %vm218, %v2644, 0
    %v2986 = vsel %vm218, %v2645, 0
    %2988 = vmatpush.xpose.msra.mxu0 0.0
    %2989 = vmatpush.xpose.msra.mxu0 0.0
    %2990 = vmatpush.xpose.msra.mxu0 0.0
    %2991 = vmatpush.xpose.msra.mxu0 0.0
    %2992 = vmatpush.xpose.msra.mxu0 0.0
    %2993 = vmatpush.xpose.msra.mxu0 0.0
    %2994 = vmatpush.xpose.msra.mxu0 0.0
    %2995 = vmatpush.xpose.msra.mxu0 0.0
    %2996 = vmatpush.xpose.msra.mxu0 %v2986
    %2997 = vmatpush.xpose.msra.mxu0 %v2983
    %2998 = vmatpush.xpose.msra.mxu0 %v2980
    %2999 = vmatpush.xpose.msra.mxu0 %v2977
    %3000 = vmatpush.xpose.msra.mxu0 %v2974
    %3001 = vmatpush.xpose.msra.mxu0 %v2971
    %3002 = vmatpush.xpose.msra.mxu0 %v2968
    %3003 = vmatpush.xpose.msra.mxu0 %v2965
    %3004 = vmatmul.f32.gmra.mxu0 %v2962
    %v3005 = vpop.f32.mrf.mxu0
    %v3006 = vadd.f32 %v736, %v3005
    %3007 = vdwg.mxu0
    %v3009 = vsel %vm218, %v2491, 0
    %v3012 = vsel %vm218, %v2646, 0
    %v3015 = vsel %vm218, %v2647, 0
    %v3018 = vsel %vm218, %v2648, 0
    %v3021 = vsel %vm218, %v2649, 0
    %v3024 = vsel %vm218, %v2650, 0
    %v3027 = vsel %vm218, %v2651, 0
    %v3030 = vsel %vm218, %v2652, 0
    %v3033 = vsel %vm218, %v2653, 0
    %3035 = vmatpush.xpose.msra.mxu0 0.0
    %3036 = vmatpush.xpose.msra.mxu0 0.0
    %3037 = vmatpush.xpose.msra.mxu0 0.0
    %3038 = vmatpush.xpose.msra.mxu0 0.0
    %3039 = vmatpush.xpose.msra.mxu0 0.0
    %3040 = vmatpush.xpose.msra.mxu0 0.0
    %3041 = vmatpush.xpose.msra.mxu0 0.0
    %3042 = vmatpush.xpose.msra.mxu0 0.0
    %3043 = vmatpush.xpose.msra.mxu0 %v3033
    %3044 = vmatpush.xpose.msra.mxu0 %v3030
    %3045 = vmatpush.xpose.msra.mxu0 %v3027
    %3046 = vmatpush.xpose.msra.mxu0 %v3024
    %3047 = vmatpush.xpose.msra.mxu0 %v3021
    %3048 = vmatpush.xpose.msra.mxu0 %v3018
    %3049 = vmatpush.xpose.msra.mxu0 %v3015
    %3050 = vmatpush.xpose.msra.mxu0 %v3012
    %3051 = vmatmul.f32.gmra.mxu0 %v3009
    %v3052 = vpop.f32.mrf.mxu0
    %v3053 = vadd.f32 %v737, %v3052
    %3054 = vdwg.mxu0
    %v3056 = vsel %vm218, %v2494, 0
    %v3059 = vsel %vm218, %v2654, 0
    %v3062 = vsel %vm218, %v2655, 0
    %v3065 = vsel %vm218, %v2656, 0
    %v3068 = vsel %vm218, %v2657, 0
    %v3071 = vsel %vm218, %v2658, 0
    %v3074 = vsel %vm218, %v2659, 0
    %v3077 = vsel %vm218, %v2660, 0
    %v3080 = vsel %vm218, %v2661, 0
    %3082 = vmatpush.xpose.msra.mxu0 0.0
    %3083 = vmatpush.xpose.msra.mxu0 0.0
    %3084 = vmatpush.xpose.msra.mxu0 0.0
    %3085 = vmatpush.xpose.msra.mxu0 0.0
    %3086 = vmatpush.xpose.msra.mxu0 0.0
    %3087 = vmatpush.xpose.msra.mxu0 0.0
    %3088 = vmatpush.xpose.msra.mxu0 0.0
    %3089 = vmatpush.xpose.msra.mxu0 0.0
    %3090 = vmatpush.xpose.msra.mxu0 %v3080
    %3091 = vmatpush.xpose.msra.mxu0 %v3077
    %3092 = vmatpush.xpose.msra.mxu0 %v3074
    %3093 = vmatpush.xpose.msra.mxu0 %v3071
    %3094 = vmatpush.xpose.msra.mxu0 %v3068
    %3095 = vmatpush.xpose.msra.mxu0 %v3065
    %3096 = vmatpush.xpose.msra.mxu0 %v3062
    %3097 = vmatpush.xpose.msra.mxu0 %v3059
    %3098 = vmatmul.f32.gmra.mxu0 %v3056
    %v3099 = vpop.f32.mrf.mxu0
    %v3100 = vadd.f32 %v738, %v3099
    %3101 = vdwg.mxu0
    %v3102 = vsel %vm1123, %v2771, -inf
    %3103 = vmax.xlane.f32.xlu0 %v3102
    %v3104 = vpop.xlane.xlu0 %3103
    %v3105 = vsel %vm1123, %v2818, -inf
    %3106 = vmax.xlane.f32.xlu0 %v3105
    %v3107 = vpop.xlane.xlu0 %3106
    %v3108 = vsel %vm1123, %v2865, -inf
    %3109 = vmax.xlane.f32.xlu0 %v3108
    %v3110 = vpop.xlane.xlu0 %3109
    %v3111 = vsel %vm1123, %v2912, -inf
    %3112 = vmax.xlane.f32.xlu0 %v3111
    %v3113 = vpop.xlane.xlu0 %3112
    %v3114 = vsel %vm1123, %v2959, -inf
    %3115 = vmax.xlane.f32.xlu0 %v3114
    %v3116 = vpop.xlane.xlu0 %3115
    %v3117 = vsel %vm1123, %v3006, -inf
    %3118 = vmax.xlane.f32.xlu0 %v3117
    %v3119 = vpop.xlane.xlu0 %3118
    %v3120 = vsel %vm1123, %v3053, -inf
    %3121 = vmax.xlane.f32.xlu0 %v3120
    %v3122 = vpop.xlane.xlu0 %3121
    %v3123 = vsel %vm1123, %v3100, -inf
    %3124 = vmax.xlane.f32.xlu0 %v3123
    %v3125 = vpop.xlane.xlu0 %3124
    %v3126 = vsub.f32 %v2771, %v3104
    %v3127 = vsub.f32 %v2818, %v3107
    %v3128 = vsub.f32 %v2865, %v3110
    %v3129 = vsub.f32 %v2912, %v3113
    %v3130 = vsub.f32 %v2959, %v3116
    %v3131 = vsub.f32 %v3006, %v3119
    %v3132 = vsub.f32 %v3053, %v3122
    %v3133 = vsub.f32 %v3100, %v3125
    %v3134 = vmul.f32 %v3126, 1.442695
    %v3135 = vpow.pop %v3134
    %v3136 = vmul.f32 %v3127, 1.442695
    %v3137 = vpow.pop %v3136
    %v3138 = vmul.f32 %v3128, 1.442695
    %v3139 = vpow.pop %v3138
    %v3140 = vmul.f32 %v3129, 1.442695
    %v3141 = vpow.pop %v3140
    %v3142 = vmul.f32 %v3130, 1.442695
    %v3143 = vpow.pop %v3142
    %v3144 = vmul.f32 %v3131, 1.442695
    %v3145 = vpow.pop %v3144
    %v3146 = vmul.f32 %v3132, 1.442695
    %v3147 = vpow.pop %v3146
    %v3148 = vmul.f32 %v3133, 1.442695
    %v3149 = vpow.pop %v3148
    %v3151 = vsel %vm1123, %v3135, 0
    %v3154 = vsel %vm1123, %v3137, 0
    %v3157 = vsel %vm1123, %v3139, 0
    %v3160 = vsel %vm1123, %v3141, 0
    %v3163 = vsel %vm1123, %v3143, 0
    %v3166 = vsel %vm1123, %v3145, 0
    %v3169 = vsel %vm1123, %v3147, 0
    %v3172 = vsel %vm1123, %v3149, 0
    %3174 = vmatpush.msra.mxu0 0.0
    %3175 = vmatpush.msra.mxu0 0.0
    %3176 = vmatpush.msra.mxu0 0.0
    %3177 = vmatpush.msra.mxu0 0.0
    %3178 = vmatpush.msra.mxu0 0.0
    %3179 = vmatpush.msra.mxu0 0.0
    %3180 = vmatpush.msra.mxu0 0.0
    %3181 = vmatpush.msra.mxu0 0.0
    %3182 = vmatpush.msra.mxu0 %v136
    %3183 = vmatpush.msra.mxu0 %v135
    %3184 = vmatpush.msra.mxu0 %v134
    %3185 = vmatpush.msra.mxu0 %v133
    %3186 = vmatpush.msra.mxu0 %v132
    %3187 = vmatpush.msra.mxu0 %v131
    %3188 = vmatpush.msra.mxu0 %v130
    %3189 = vmatpush.msra.mxu0 %v129
    %3190 = vmatmul.f32.gmra.mxu0 %v3151
    %v3191 = vpop.f32.mrf.mxu0
    %v3192 = vadd.f32 0.0, %v3191
    %3193 = vmatmul.f32.gmra.mxu0 %v3154
    %v3194 = vpop.f32.mrf.mxu0
    %v3195 = vadd.f32 0.0, %v3194
    %3196 = vmatmul.f32.gmra.mxu0 %v3157
    %v3197 = vpop.f32.mrf.mxu0
    %v3198 = vadd.f32 0.0, %v3197
    %3199 = vmatmul.f32.gmra.mxu0 %v3160
    %v3200 = vpop.f32.mrf.mxu0
    %v3201 = vadd.f32 0.0, %v3200
    %3202 = vmatmul.f32.gmra.mxu0 %v3163
    %v3203 = vpop.f32.mrf.mxu0
    %v3204 = vadd.f32 0.0, %v3203
    %3205 = vmatmul.f32.gmra.mxu0 %v3166
    %v3206 = vpop.f32.mrf.mxu0
    %v3207 = vadd.f32 0.0, %v3206
    %3208 = vmatmul.f32.gmra.mxu0 %v3169
    %v3209 = vpop.f32.mrf.mxu0
    %v3210 = vadd.f32 0.0, %v3209
    %3211 = vmatmul.f32.gmra.mxu0 %v3172
    %v3212 = vpop.f32.mrf.mxu0
    %v3213 = vadd.f32 0.0, %v3212
    %3214 = vdwg.mxu0
    %v3215 = vrcp.pop %v3192
    %v3216 = vrcp.pop %v3195
    %v3217 = vrcp.pop %v3198
    %v3218 = vrcp.pop %v3201
    %v3219 = vrcp.pop %v3204
    %v3220 = vrcp.pop %v3207
    %v3221 = vrcp.pop %v3210
    %v3222 = vrcp.pop %v3213
    %v3223 = vmul.f32 %v3135, %v3215
    %v3224 = vmul.f32 %v3137, %v3216
    %v3225 = vmul.f32 %v3139, %v3217
    %v3226 = vmul.f32 %v3141, %v3218
    %v3227 = vmul.f32 %v3143, %v3219
    %v3228 = vmul.f32 %v3145, %v3220
    %v3229 = vmul.f32 %v3147, %v3221
    %v3230 = vmul.f32 %v3149, %v3222
    %v3232 = vsel %vm1123, %v3223, 0
    %3234 = vmatpush.msra.mxu0 0.0
    %3235 = vmatpush.msra.mxu0 0.0
    %3236 = vmatpush.msra.mxu0 0.0
    %3237 = vmatpush.msra.mxu0 0.0
    %3238 = vmatpush.msra.mxu0 0.0
    %3239 = vmatpush.msra.mxu0 0.0
    %3240 = vmatpush.msra.mxu0 0.0
    %3241 = vmatpush.msra.mxu0 0.0
    %3242 = vmatpush.msra.mxu0 %v2669
    %3243 = vmatpush.msra.mxu0 %v2668
    %3244 = vmatpush.msra.mxu0 %v2667
    %3245 = vmatpush.msra.mxu0 %v2666
    %3246 = vmatpush.msra.mxu0 %v2665
    %3247 = vmatpush.msra.mxu0 %v2664
    %3248 = vmatpush.msra.mxu0 %v2663
    %3249 = vmatpush.msra.mxu0 %v2662
    %3250 = vmatmul.f32.gmra.mxu0 %v3232
    %v3251 = vpop.f32.mrf.mxu0
    %v3252 = vadd.f32 0.0, %v3251
    %3253 = vdwg.mxu0
    %v3255 = vsel %vm1123, %v3224, 0
    %3257 = vmatpush.msra.mxu0 0.0
    %3258 = vmatpush.msra.mxu0 0.0
    %3259 = vmatpush.msra.mxu0 0.0
    %3260 = vmatpush.msra.mxu0 0.0
    %3261 = vmatpush.msra.mxu0 0.0
    %3262 = vmatpush.msra.mxu0 0.0
    %3263 = vmatpush.msra.mxu0 0.0
    %3264 = vmatpush.msra.mxu0 0.0
    %3265 = vmatpush.msra.mxu0 %v2677
    %3266 = vmatpush.msra.mxu0 %v2676
    %3267 = vmatpush.msra.mxu0 %v2675
    %3268 = vmatpush.msra.mxu0 %v2674
    %3269 = vmatpush.msra.mxu0 %v2673
    %3270 = vmatpush.msra.mxu0 %v2672
    %3271 = vmatpush.msra.mxu0 %v2671
    %3272 = vmatpush.msra.mxu0 %v2670
    %3273 = vmatmul.f32.gmra.mxu0 %v3255
    %v3274 = vpop.f32.mrf.mxu0
    %v3275 = vadd.f32 0.0, %v3274
    %3276 = vdwg.mxu0
    %v3278 = vsel %vm1123, %v3225, 0
    %3280 = vmatpush.msra.mxu0 0.0
    %3281 = vmatpush.msra.mxu0 0.0
    %3282 = vmatpush.msra.mxu0 0.0
    %3283 = vmatpush.msra.mxu0 0.0
    %3284 = vmatpush.msra.mxu0 0.0
    %3285 = vmatpush.msra.mxu0 0.0
    %3286 = vmatpush.msra.mxu0 0.0
    %3287 = vmatpush.msra.mxu0 0.0
    %3288 = vmatpush.msra.mxu0 %v2685
    %3289 = vmatpush.msra.mxu0 %v2684
    %3290 = vmatpush.msra.mxu0 %v2683
    %3291 = vmatpush.msra.mxu0 %v2682
    %3292 = vmatpush.msra.mxu0 %v2681
    %3293 = vmatpush.msra.mxu0 %v2680
    %3294 = vmatpush.msra.mxu0 %v2679
    %3295 = vmatpush.msra.mxu0 %v2678
    %3296 = vmatmul.f32.gmra.mxu0 %v3278
    %v3297 = vpop.f32.mrf.mxu0
    %v3298 = vadd.f32 0.0, %v3297
    %3299 = vdwg.mxu0
    %v3301 = vsel %vm1123, %v3226, 0
    %3303 = vmatpush.msra.mxu0 0.0
    %3304 = vmatpush.msra.mxu0 0.0
    %3305 = vmatpush.msra.mxu0 0.0
    %3306 = vmatpush.msra.mxu0 0.0
    %3307 = vmatpush.msra.mxu0 0.0
    %3308 = vmatpush.msra.mxu0 0.0
    %3309 = vmatpush.msra.mxu0 0.0
    %3310 = vmatpush.msra.mxu0 0.0
    %3311 = vmatpush.msra.mxu0 %v2693
    %3312 = vmatpush.msra.mxu0 %v2692
    %3313 = vmatpush.msra.mxu0 %v2691
    %3314 = vmatpush.msra.mxu0 %v2690
    %3315 = vmatpush.msra.mxu0 %v2689
    %3316 = vmatpush.msra.mxu0 %v2688
    %3317 = vmatpush.msra.mxu0 %v2687
    %3318 = vmatpush.msra.mxu0 %v2686
    %3319 = vmatmul.f32.gmra.mxu0 %v3301
    %v3320 = vpop.f32.mrf.mxu0
    %v3321 = vadd.f32 0.0, %v3320
    %3322 = vdwg.mxu0
    %v3324 = vsel %vm1123, %v3227, 0
    %3326 = vmatpush.msra.mxu0 0.0
    %3327 = vmatpush.msra.mxu0 0.0
    %3328 = vmatpush.msra.mxu0 0.0
    %3329 = vmatpush.msra.mxu0 0.0
    %3330 = vmatpush.msra.mxu0 0.0
    %3331 = vmatpush.msra.mxu0 0.0
    %3332 = vmatpush.msra.mxu0 0.0
    %3333 = vmatpush.msra.mxu0 0.0
    %3334 = vmatpush.msra.mxu0 %v2701
    %3335 = vmatpush.msra.mxu0 %v2700
    %3336 = vmatpush.msra.mxu0 %v2699
    %3337 = vmatpush.msra.mxu0 %v2698
    %3338 = vmatpush.msra.mxu0 %v2697
    %3339 = vmatpush.msra.mxu0 %v2696
    %3340 = vmatpush.msra.mxu0 %v2695
    %3341 = vmatpush.msra.mxu0 %v2694
    %3342 = vmatmul.f32.gmra.mxu0 %v3324
    %v3343 = vpop.f32.mrf.mxu0
    %v3344 = vadd.f32 0.0, %v3343
    %3345 = vdwg.mxu0
    %v3347 = vsel %vm1123, %v3228, 0
    %3349 = vmatpush.msra.mxu0 0.0
    %3350 = vmatpush.msra.mxu0 0.0
    %3351 = vmatpush.msra.mxu0 0.0
    %3352 = vmatpush.msra.mxu0 0.0
    %3353 = vmatpush.msra.mxu0 0.0
    %3354 = vmatpush.msra.mxu0 0.0
    %3355 = vmatpush.msra.mxu0 0.0
    %3356 = vmatpush.msra.mxu0 0.0
    %3357 = vmatpush.msra.mxu0 %v2709
    %3358 = vmatpush.msra.mxu0 %v2708
    %3359 = vmatpush.msra.mxu0 %v2707
    %3360 = vmatpush.msra.mxu0 %v2706
    %3361 = vmatpush.msra.mxu0 %v2705
    %3362 = vmatpush.msra.mxu0 %v2704
    %3363 = vmatpush.msra.mxu0 %v2703
    %3364 = vmatpush.msra.mxu0 %v2702
    %3365 = vmatmul.f32.gmra.mxu0 %v3347
    %v3366 = vpop.f32.mrf.mxu0
    %v3367 = vadd.f32 0.0, %v3366
    %3368 = vdwg.mxu0
    %v3370 = vsel %vm1123, %v3229, 0
    %3372 = vmatpush.msra.mxu0 0.0
    %3373 = vmatpush.msra.mxu0 0.0
    %3374 = vmatpush.msra.mxu0 0.0
    %3375 = vmatpush.msra.mxu0 0.0
    %3376 = vmatpush.msra.mxu0 0.0
    %3377 = vmatpush.msra.mxu0 0.0
    %3378 = vmatpush.msra.mxu0 0.0
    %3379 = vmatpush.msra.mxu0 0.0
    %3380 = vmatpush.msra.mxu0 %v2717
    %3381 = vmatpush.msra.mxu0 %v2716
    %3382 = vmatpush.msra.mxu0 %v2715
    %3383 = vmatpush.msra.mxu0 %v2714
    %3384 = vmatpush.msra.mxu0 %v2713
    %3385 = vmatpush.msra.mxu0 %v2712
    %3386 = vmatpush.msra.mxu0 %v2711
    %3387 = vmatpush.msra.mxu0 %v2710
    %3388 = vmatmul.f32.gmra.mxu0 %v3370
    %v3389 = vpop.f32.mrf.mxu0
    %v3390 = vadd.f32 0.0, %v3389
    %3391 = vdwg.mxu0
    %v3393 = vsel %vm1123, %v3230, 0
    %3395 = vmatpush.msra.mxu0 0.0
    %3396 = vmatpush.msra.mxu0 0.0
    %3397 = vmatpush.msra.mxu0 0.0
    %3398 = vmatpush.msra.mxu0 0.0
    %3399 = vmatpush.msra.mxu0 0.0
    %3400 = vmatpush.msra.mxu0 0.0
    %3401 = vmatpush.msra.mxu0 0.0
    %3402 = vmatpush.msra.mxu0 0.0
    %3403 = vmatpush.msra.mxu0 %v2725
    %3404 = vmatpush.msra.mxu0 %v2724
    %3405 = vmatpush.msra.mxu0 %v2723
    %3406 = vmatpush.msra.mxu0 %v2722
    %3407 = vmatpush.msra.mxu0 %v2721
    %3408 = vmatpush.msra.mxu0 %v2720
    %3409 = vmatpush.msra.mxu0 %v2719
    %3410 = vmatpush.msra.mxu0 %v2718
    %3411 = vmatmul.f32.gmra.mxu0 %v3393
    %v3412 = vpop.f32.mrf.mxu0
    %v3413 = vadd.f32 0.0, %v3412
    %3414 = vdwg.mxu0
    %s3415 = scalar_lea.vmem %s15, 32
    %v3416 = vld [vmem:[%s3415] sm:$0xff]
    %v3417 = vld [vmem:[%s3415 + $0x8] sm:$0xff]
    %v3418 = vld [vmem:[%s3415 + $0x10] sm:$0xff]
    %v3419 = vld [vmem:[%s3415 + $0x18] sm:$0xff]
    %s3420 = scalar_lea.vmem %s16, 1
    %v3421 = vld [vmem:[%s3420] sm:$0x1]
    %v3423 = vperm.slane %v3421, 0
    %v3426 = vsel %vm218, %v3252, 0
    %v3429 = vsel %vm218, %v3275, 0
    %v3432 = vsel %vm218, %v3298, 0
    %v3435 = vsel %vm218, %v3321, 0
    %v3438 = vsel %vm218, %v3344, 0
    %v3441 = vsel %vm218, %v3367, 0
    %v3444 = vsel %vm218, %v3390, 0
    %v3447 = vsel %vm218, %v3413, 0
    %3449 = vmatpush.msra.mxu0 0.0
    %3450 = vmatpush.msra.mxu0 0.0
    %3451 = vmatpush.msra.mxu0 0.0
    %3452 = vmatpush.msra.mxu0 0.0
    %3453 = vmatpush.msra.mxu0 0.0
    %3454 = vmatpush.msra.mxu0 0.0
    %3455 = vmatpush.msra.mxu0 0.0
    %3456 = vmatpush.msra.mxu0 0.0
    %3457 = vmatpush.msra.mxu0 0.0
    %3458 = vmatpush.msra.mxu0 0.0
    %3459 = vmatpush.msra.mxu0 0.0
    %3460 = vmatpush.msra.mxu0 0.0
    %3461 = vmatpush.msra.mxu0 %v3419
    %3462 = vmatpush.msra.mxu0 %v3418
    %3463 = vmatpush.msra.mxu0 %v3417
    %3464 = vmatpush.msra.mxu0 %v3416
    %3465 = vmatmul.f32.gmra.mxu0 %v3426
    %v3466 = vpop.f32.mrf.mxu0
    %v3467 = vadd.f32 %v3423, %v3466
    %3468 = vmatmul.f32.gmra.mxu0 %v3429
    %v3469 = vpop.f32.mrf.mxu0
    %v3470 = vadd.f32 %v3423, %v3469
    %3471 = vmatmul.f32.gmra.mxu0 %v3432
    %v3472 = vpop.f32.mrf.mxu0
    %v3473 = vadd.f32 %v3423, %v3472
    %3474 = vmatmul.f32.gmra.mxu0 %v3435
    %v3475 = vpop.f32.mrf.mxu0
    %v3476 = vadd.f32 %v3423, %v3475
    %3477 = vmatmul.f32.gmra.mxu0 %v3438
    %v3478 = vpop.f32.mrf.mxu0
    %v3479 = vadd.f32 %v3423, %v3478
    %3480 = vmatmul.f32.gmra.mxu0 %v3441
    %v3481 = vpop.f32.mrf.mxu0
    %v3482 = vadd.f32 %v3423, %v3481
    %3483 = vmatmul.f32.gmra.mxu0 %v3444
    %v3484 = vpop.f32.mrf.mxu0
    %v3485 = vadd.f32 %v3423, %v3484
    %3486 = vmatmul.f32.gmra.mxu0 %v3447
    %v3487 = vpop.f32.mrf.mxu0
    %v3488 = vadd.f32 %v3423, %v3487
    %3489 = vdwg.mxu0
    %v3490 = vadd.f32 %v2211, %v3467
    %v3491 = vadd.f32 %v2212, %v3470
    %v3492 = vadd.f32 %v2213, %v3473
    %v3493 = vadd.f32 %v2214, %v3476
    %v3494 = vadd.f32 %v2215, %v3479
    %v3495 = vadd.f32 %v2216, %v3482
    %v3496 = vadd.f32 %v2217, %v3485
    %v3497 = vadd.f32 %v2218, %v3488
    %s3498 = scalar_lea.vmem %s17, 1
    %v3499 = vld [vmem:[%s3498] sm:$0x1]
    %s3500 = scalar_lea.vmem %s18, 1
    %v3501 = vld [vmem:[%s3500] sm:$0x1]
    %v3502 = vsel %vm218, %v3490, 0.0
    %3503 = vadd.xlane.f32.xlu0 %v3502
    %v3504 = vpop.xlane.xlu0 %3503
    %v3505 = vsel %vm218, %v3491, 0.0
    %3506 = vadd.xlane.f32.xlu0 %v3505
    %v3507 = vpop.xlane.xlu0 %3506
    %v3508 = vsel %vm218, %v3492, 0.0
    %3509 = vadd.xlane.f32.xlu0 %v3508
    %v3510 = vpop.xlane.xlu0 %3509
    %v3511 = vsel %vm218, %v3493, 0.0
    %3512 = vadd.xlane.f32.xlu0 %v3511
    %v3513 = vpop.xlane.xlu0 %3512
    %v3514 = vsel %vm218, %v3494, 0.0
    %3515 = vadd.xlane.f32.xlu0 %v3514
    %v3516 = vpop.xlane.xlu0 %3515
    %v3517 = vsel %vm218, %v3495, 0.0
    %3518 = vadd.xlane.f32.xlu0 %v3517
    %v3519 = vpop.xlane.xlu0 %3518
    %v3520 = vsel %vm218, %v3496, 0.0
    %3521 = vadd.xlane.f32.xlu0 %v3520
    %v3522 = vpop.xlane.xlu0 %3521
    %v3523 = vsel %vm218, %v3497, 0.0
    %3524 = vadd.xlane.f32.xlu0 %v3523
    %v3525 = vpop.xlane.xlu0 %3524
    %v3526 = vmul.f32 %v3504, %v249
    %v3527 = vmul.f32 %v3507, %v249
    %v3528 = vmul.f32 %v3510, %v249
    %v3529 = vmul.f32 %v3513, %v249
    %v3530 = vmul.f32 %v3516, %v249
    %v3531 = vmul.f32 %v3519, %v249
    %v3532 = vmul.f32 %v3522, %v249
    %v3533 = vmul.f32 %v3525, %v249
    %v3534 = vsub.f32 %v3490, %v3526
    %v3535 = vsub.f32 %v3491, %v3527
    %v3536 = vsub.f32 %v3492, %v3528
    %v3537 = vsub.f32 %v3493, %v3529
    %v3538 = vsub.f32 %v3494, %v3530
    %v3539 = vsub.f32 %v3495, %v3531
    %v3540 = vsub.f32 %v3496, %v3532
    %v3541 = vsub.f32 %v3497, %v3533
    %v3542 = vmul.f32 %v3534, %v3534
    %v3543 = vmul.f32 %v3535, %v3535
    %v3544 = vmul.f32 %v3536, %v3536
    %v3545 = vmul.f32 %v3537, %v3537
    %v3546 = vmul.f32 %v3538, %v3538
    %v3547 = vmul.f32 %v3539, %v3539
    %v3548 = vmul.f32 %v3540, %v3540
    %v3549 = vmul.f32 %v3541, %v3541
    %v3550 = vsel %vm218, %v3542, 0.0
    %3551 = vadd.xlane.f32.xlu0 %v3550
    %v3552 = vpop.xlane.xlu0 %3551
    %v3553 = vsel %vm218, %v3543, 0.0
    %3554 = vadd.xlane.f32.xlu0 %v3553
    %v3555 = vpop.xlane.xlu0 %3554
    %v3556 = vsel %vm218, %v3544, 0.0
    %3557 = vadd.xlane.f32.xlu0 %v3556
    %v3558 = vpop.xlane.xlu0 %3557
    %v3559 = vsel %vm218, %v3545, 0.0
    %3560 = vadd.xlane.f32.xlu0 %v3559
    %v3561 = vpop.xlane.xlu0 %3560
    %v3562 = vsel %vm218, %v3546, 0.0
    %3563 = vadd.xlane.f32.xlu0 %v3562
    %v3564 = vpop.xlane.xlu0 %3563
    %v3565 = vsel %vm218, %v3547, 0.0
    %3566 = vadd.xlane.f32.xlu0 %v3565
    %v3567 = vpop.xlane.xlu0 %3566
    %v3568 = vsel %vm218, %v3548, 0.0
    %3569 = vadd.xlane.f32.xlu0 %v3568
    %v3570 = vpop.xlane.xlu0 %3569
    %v3571 = vsel %vm218, %v3549, 0.0
    %3572 = vadd.xlane.f32.xlu0 %v3571
    %v3573 = vpop.xlane.xlu0 %3572
    %v3574 = vmul.f32 %v3552, %v249
    %v3575 = vmul.f32 %v3555, %v249
    %v3576 = vmul.f32 %v3558, %v249
    %v3577 = vmul.f32 %v3561, %v249
    %v3578 = vmul.f32 %v3564, %v249
    %v3579 = vmul.f32 %v3567, %v249
    %v3580 = vmul.f32 %v3570, %v249
    %v3581 = vmul.f32 %v3573, %v249
    %v3582 = vadd.f32 %v3574, 1e-05
    %v3583 = vadd.f32 %v3575, 1e-05
    %v3584 = vadd.f32 %v3576, 1e-05
    %v3585 = vadd.f32 %v3577, 1e-05
    %v3586 = vadd.f32 %v3578, 1e-05
    %v3587 = vadd.f32 %v3579, 1e-05
    %v3588 = vadd.f32 %v3580, 1e-05
    %v3589 = vadd.f32 %v3581, 1e-05
    %v3590 = vrsqrt.pop %v3582
    %v3591 = vmul.f32 %v3590, %v3582
    %v3592 = vmul.f32 %v3591, %v3590
    %v3593 = vmul.f32 0.5, %v3592
    %v3594 = vsub.f32 1.5, %v3593
    %v3595 = vmul.f32 %v3590, %v3594
    %vm3596 = vweird.f32 %v3582
    %vm3597 = vweird.f32 %v3590
    %vm3598 = vmor %vm3596, %vm3597
    %v3599 = vsel %vm3598, %v3590, %v3595
    %v3600 = vrsqrt.pop %v3583
    %v3601 = vmul.f32 %v3600, %v3583
    %v3602 = vmul.f32 %v3601, %v3600
    %v3603 = vmul.f32 0.5, %v3602
    %v3604 = vsub.f32 1.5, %v3603
    %v3605 = vmul.f32 %v3600, %v3604
    %vm3606 = vweird.f32 %v3583
    %vm3607 = vweird.f32 %v3600
    %vm3608 = vmor %vm3606, %vm3607
    %v3609 = vsel %vm3608, %v3600, %v3605
    %v3610 = vrsqrt.pop %v3584
    %v3611 = vmul.f32 %v3610, %v3584
    %v3612 = vmul.f32 %v3611, %v3610
    %v3613 = vmul.f32 0.5, %v3612
    %v3614 = vsub.f32 1.5, %v3613
    %v3615 = vmul.f32 %v3610, %v3614
    %vm3616 = vweird.f32 %v3584
    %vm3617 = vweird.f32 %v3610
    %vm3618 = vmor %vm3616, %vm3617
    %v3619 = vsel %vm3618, %v3610, %v3615
    %v3620 = vrsqrt.pop %v3585
    %v3621 = vmul.f32 %v3620, %v3585
    %v3622 = vmul.f32 %v3621, %v3620
    %v3623 = vmul.f32 0.5, %v3622
    %v3624 = vsub.f32 1.5, %v3623
    %v3625 = vmul.f32 %v3620, %v3624
    %vm3626 = vweird.f32 %v3585
    %vm3627 = vweird.f32 %v3620
    %vm3628 = vmor %vm3626, %vm3627
    %v3629 = vsel %vm3628, %v3620, %v3625
    %v3630 = vrsqrt.pop %v3586
    %v3631 = vmul.f32 %v3630, %v3586
    %v3632 = vmul.f32 %v3631, %v3630
    %v3633 = vmul.f32 0.5, %v3632
    %v3634 = vsub.f32 1.5, %v3633
    %v3635 = vmul.f32 %v3630, %v3634
    %vm3636 = vweird.f32 %v3586
    %vm3637 = vweird.f32 %v3630
    %vm3638 = vmor %vm3636, %vm3637
    %v3639 = vsel %vm3638, %v3630, %v3635
    %v3640 = vrsqrt.pop %v3587
    %v3641 = vmul.f32 %v3640, %v3587
    %v3642 = vmul.f32 %v3641, %v3640
    %v3643 = vmul.f32 0.5, %v3642
    %v3644 = vsub.f32 1.5, %v3643
    %v3645 = vmul.f32 %v3640, %v3644
    %vm3646 = vweird.f32 %v3587
    %vm3647 = vweird.f32 %v3640
    %vm3648 = vmor %vm3646, %vm3647
    %v3649 = vsel %vm3648, %v3640, %v3645
    %v3650 = vrsqrt.pop %v3588
    %v3651 = vmul.f32 %v3650, %v3588
    %v3652 = vmul.f32 %v3651, %v3650
    %v3653 = vmul.f32 0.5, %v3652
    %v3654 = vsub.f32 1.5, %v3653
    %v3655 = vmul.f32 %v3650, %v3654
    %vm3656 = vweird.f32 %v3588
    %vm3657 = vweird.f32 %v3650
    %vm3658 = vmor %vm3656, %vm3657
    %v3659 = vsel %vm3658, %v3650, %v3655
    %v3660 = vrsqrt.pop %v3589
    %v3661 = vmul.f32 %v3660, %v3589
    %v3662 = vmul.f32 %v3661, %v3660
    %v3663 = vmul.f32 0.5, %v3662
    %v3664 = vsub.f32 1.5, %v3663
    %v3665 = vmul.f32 %v3660, %v3664
    %vm3666 = vweird.f32 %v3589
    %vm3667 = vweird.f32 %v3660
    %vm3668 = vmor %vm3666, %vm3667
    %v3669 = vsel %vm3668, %v3660, %v3665
    %v3670 = vmul.f32 %v3534, %v3599
    %v3671 = vmul.f32 %v3535, %v3609
    %v3672 = vmul.f32 %v3536, %v3619
    %v3673 = vmul.f32 %v3537, %v3629
    %v3674 = vmul.f32 %v3538, %v3639
    %v3675 = vmul.f32 %v3539, %v3649
    %v3676 = vmul.f32 %v3540, %v3659
    %v3677 = vmul.f32 %v3541, %v3669
    %v3679 = vperm.slane %v3499, 0
    %v3681 = vmul.f32 %v3670, %v3679
    %v3682 = vmul.f32 %v3671, %v3679
    %v3683 = vmul.f32 %v3672, %v3679
    %v3684 = vmul.f32 %v3673, %v3679
    %v3685 = vmul.f32 %v3674, %v3679
    %v3686 = vmul.f32 %v3675, %v3679
    %v3687 = vmul.f32 %v3676, %v3679
    %v3688 = vmul.f32 %v3677, %v3679
    %v3690 = vperm.slane %v3501, 0
    %v3692 = vadd.f32 %v3681, %v3690
    %v3693 = vadd.f32 %v3682, %v3690
    %v3694 = vadd.f32 %v3683, %v3690
    %v3695 = vadd.f32 %v3684, %v3690
    %v3696 = vadd.f32 %v3685, %v3690
    %v3697 = vadd.f32 %v3686, %v3690
    %v3698 = vadd.f32 %v3687, %v3690
    %v3699 = vadd.f32 %v3688, %v3690
    %s3700 = scalar_lea.vmem %s19, 32
    %v3701 = vld [vmem:[%s3700] sm:$0xff]
    %v3702 = vld [vmem:[%s3700 + $0x8] sm:$0xff]
    %v3703 = vld [vmem:[%s3700 + $0x10] sm:$0xff]
    %v3704 = vld [vmem:[%s3700 + $0x18] sm:$0xff]
    %s3705 = scalar_lea.vmem %s20, 1
    %v3706 = vld [vmem:[%s3705] sm:$0x1]
    %v3708 = vperm.slane %v3706, 0
    %v3711 = vsel %vm218, %v3692, 0
    %v3714 = vsel %vm218, %v3693, 0
    %v3717 = vsel %vm218, %v3694, 0
    %v3720 = vsel %vm218, %v3695, 0
    %v3723 = vsel %vm218, %v3696, 0
    %v3726 = vsel %vm218, %v3697, 0
    %v3729 = vsel %vm218, %v3698, 0
    %v3732 = vsel %vm218, %v3699, 0
    %3734 = vmatpush.msra.mxu0 0.0
    %3735 = vmatpush.msra.mxu0 0.0
    %3736 = vmatpush.msra.mxu0 0.0
    %3737 = vmatpush.msra.mxu0 0.0
    %3738 = vmatpush.msra.mxu0 0.0
    %3739 = vmatpush.msra.mxu0 0.0
    %3740 = vmatpush.msra.mxu0 0.0
    %3741 = vmatpush.msra.mxu0 0.0
    %3742 = vmatpush.msra.mxu0 0.0
    %3743 = vmatpush.msra.mxu0 0.0
    %3744 = vmatpush.msra.mxu0 0.0
    %3745 = vmatpush.msra.mxu0 0.0
    %3746 = vmatpush.msra.mxu0 %v3704
    %3747 = vmatpush.msra.mxu0 %v3703
    %3748 = vmatpush.msra.mxu0 %v3702
    %3749 = vmatpush.msra.mxu0 %v3701
    %3750 = vmatmul.f32.gmra.mxu0 %v3711
    %v3751 = vpop.f32.mrf.mxu0
    %v3752 = vadd.f32 %v3708, %v3751
    %3753 = vmatmul.f32.gmra.mxu0 %v3714
    %v3754 = vpop.f32.mrf.mxu0
    %v3755 = vadd.f32 %v3708, %v3754
    %3756 = vmatmul.f32.gmra.mxu0 %v3717
    %v3757 = vpop.f32.mrf.mxu0
    %v3758 = vadd.f32 %v3708, %v3757
    %3759 = vmatmul.f32.gmra.mxu0 %v3720
    %v3760 = vpop.f32.mrf.mxu0
    %v3761 = vadd.f32 %v3708, %v3760
    %3762 = vmatmul.f32.gmra.mxu0 %v3723
    %v3763 = vpop.f32.mrf.mxu0
    %v3764 = vadd.f32 %v3708, %v3763
    %3765 = vmatmul.f32.gmra.mxu0 %v3726
    %v3766 = vpop.f32.mrf.mxu0
    %v3767 = vadd.f32 %v3708, %v3766
    %3768 = vmatmul.f32.gmra.mxu0 %v3729
    %v3769 = vpop.f32.mrf.mxu0
    %v3770 = vadd.f32 %v3708, %v3769
    %3771 = vmatmul.f32.gmra.mxu0 %v3732
    %v3772 = vpop.f32.mrf.mxu0
    %v3773 = vadd.f32 %v3708, %v3772
    %3774 = vdwg.mxu0
    %v3775 = vmul.f32 %v3752, 0.5
    %v3776 = vmul.f32 %v3755, 0.5
    %v3777 = vmul.f32 %v3758, 0.5
    %v3778 = vmul.f32 %v3761, 0.5
    %v3779 = vmul.f32 %v3764, 0.5
    %v3780 = vmul.f32 %v3767, 0.5
    %v3781 = vmul.f32 %v3770, 0.5
    %v3782 = vmul.f32 %v3773, 0.5
    %v3783 = vmul.f32 %v3752, %v1805
    %v3784 = vmul.f32 %v3755, %v1805
    %v3785 = vmul.f32 %v3758, %v1805
    %v3786 = vmul.f32 %v3761, %v1805
    %v3787 = vmul.f32 %v3764, %v1805
    %v3788 = vmul.f32 %v3767, %v1805
    %v3789 = vmul.f32 %v3770, %v1805
    %v3790 = vmul.f32 %v3773, %v1805
    %v3791 = vmul.f32 %v3783, %v3783
    %v3792 = vmin.f32 16.0, %v3791
    %v3793 = vmul.f32 %v3792, 2.1237322e-06
    %v3794 = vadd.f32 %v3793, 0.00028619796
    %v3795 = vmul.f32 %v3792, %v3794
    %v3796 = vadd.f32 %v3795, 0.0036580483
    %v3797 = vmul.f32 %v3792, %v3796
    %v3798 = vadd.f32 %v3797, 0.05243302
    %v3799 = vmul.f32 %v3792, %v3798
    %v3800 = vadd.f32 %v3799, 0.18741608
    %v3801 = vmul.f32 %v3792, %v3800
    %v3802 = vadd.f32 %v3801, 1.1283791
    %v3803 = vmul.f32 %v3783, %v3802
    %v3804 = vmul.f32 %v3792, 3.8918573e-05
    %v3805 = vadd.f32 %v3804, 0.001143296
    %v3806 = vmul.f32 %v3792, %v3805
    %v3807 = vadd.f32 %v3806, 0.014752088
    %v3808 = vmul.f32 %v3792, %v3807
    %v3809 = vadd.f32 %v3808, 0.112945676
    %v3810 = vmul.f32 %v3792, %v3809
    %v3811 = vadd.f32 %v3810, 0.4994258
    %v3812 = vmul.f32 %v3792, %v3811
    %v3813 = vadd.f32 %v3812, 1.0
    %v3814 = vrcp.pop %v3813
    %v3815 = vmul.f32 %v3813, %v3814
    %v3816 = vsub.f32 1.0, %v3815
    %v3817 = vmul.f32 %v3814, %v3816
    %v3818 = vadd.f32 %v3814, %v3817
    %vm3819 = vweird.f32 %v3813
    %vm3820 = vweird.f32 %v3814
    %vm3821 = vmor %vm3819, %vm3820
    %v3822 = vsel %vm3821, %v3814, %v3818
    %v3823 = vand.u32 2147483647, %v3813
    %vm3824 = vcmp.eq.f32.partialorder %v3823, 8.507059e+37
    %v3825 = vand.u32 %v3813, 2147483648
    %v3826 = vor.u32 1.1754944e-38, %v3825
    %v3827 = vsel %vm3824, %v3826, %v3822
    %v3828 = vmul.f32 %v3803, %v3827
    %v3829 = vmin.f32 %v3828, 1.0
    %v3830 = vmax.f32 %v3829, -1.0
    %v3831 = vmul.f32 %v3784, %v3784
    %v3832 = vmin.f32 16.0, %v3831
    %v3833 = vmul.f32 %v3832, 2.1237322e-06
    %v3834 = vadd.f32 %v3833, 0.00028619796
    %v3835 = vmul.f32 %v3832, %v3834
    %v3836 = vadd.f32 %v3835, 0.0036580483
    %v3837 = vmul.f32 %v3832, %v3836
    %v3838 = vadd.f32 %v3837, 0.05243302
    %v3839 = vmul.f32 %v3832, %v3838
    %v3840 = vadd.f32 %v3839, 0.18741608
    %v3841 = vmul.f32 %v3832, %v3840
    %v3842 = vadd.f32 %v3841, 1.1283791
    %v3843 = vmul.f32 %v3784, %v3842
    %v3844 = vmul.f32 %v3832, 3.8918573e-05
    %v3845 = vadd.f32 %v3844, 0.001143296
    %v3846 = vmul.f32 %v3832, %v3845
    %v3847 = vadd.f32 %v3846, 0.014752088
    %v3848 = vmul.f32 %v3832, %v3847
    %v3849 = vadd.f32 %v3848, 0.112945676
    %v3850 = vmul.f32 %v3832, %v3849
    %v3851 = vadd.f32 %v3850, 0.4994258
    %v3852 = vmul.f32 %v3832, %v3851
    %v3853 = vadd.f32 %v3852, 1.0
    %v3854 = vrcp.pop %v3853
    %v3855 = vmul.f32 %v3853, %v3854
    %v3856 = vsub.f32 1.0, %v3855
    %v3857 = vmul.f32 %v3854, %v3856
    %v3858 = vadd.f32 %v3854, %v3857
    %vm3859 = vweird.f32 %v3853
    %vm3860 = vweird.f32 %v3854
    %vm3861 = vmor %vm3859, %vm3860
    %v3862 = vsel %vm3861, %v3854, %v3858
    %v3863 = vand.u32 2147483647, %v3853
    %vm3864 = vcmp.eq.f32.partialorder %v3863, 8.507059e+37
    %v3865 = vand.u32 %v3853, 2147483648
    %v3866 = vor.u32 1.1754944e-38, %v3865
    %v3867 = vsel %vm3864, %v3866, %v3862
    %v3868 = vmul.f32 %v3843, %v3867
    %v3869 = vmin.f32 %v3868, 1.0
    %v3870 = vmax.f32 %v3869, -1.0
    %v3871 = vmul.f32 %v3785, %v3785
    %v3872 = vmin.f32 16.0, %v3871
    %v3873 = vmul.f32 %v3872, 2.1237322e-06
    %v3874 = vadd.f32 %v3873, 0.00028619796
    %v3875 = vmul.f32 %v3872, %v3874
    %v3876 = vadd.f32 %v3875, 0.0036580483
    %v3877 = vmul.f32 %v3872, %v3876
    %v3878 = vadd.f32 %v3877, 0.05243302
    %v3879 = vmul.f32 %v3872, %v3878
    %v3880 = vadd.f32 %v3879, 0.18741608
    %v3881 = vmul.f32 %v3872, %v3880
    %v3882 = vadd.f32 %v3881, 1.1283791
    %v3883 = vmul.f32 %v3785, %v3882
    %v3884 = vmul.f32 %v3872, 3.8918573e-05
    %v3885 = vadd.f32 %v3884, 0.001143296
    %v3886 = vmul.f32 %v3872, %v3885
    %v3887 = vadd.f32 %v3886, 0.014752088
    %v3888 = vmul.f32 %v3872, %v3887
    %v3889 = vadd.f32 %v3888, 0.112945676
    %v3890 = vmul.f32 %v3872, %v3889
    %v3891 = vadd.f32 %v3890, 0.4994258
    %v3892 = vmul.f32 %v3872, %v3891
    %v3893 = vadd.f32 %v3892, 1.0
    %v3894 = vrcp.pop %v3893
    %v3895 = vmul.f32 %v3893, %v3894
    %v3896 = vsub.f32 1.0, %v3895
    %v3897 = vmul.f32 %v3894, %v3896
    %v3898 = vadd.f32 %v3894, %v3897
    %vm3899 = vweird.f32 %v3893
    %vm3900 = vweird.f32 %v3894
    %vm3901 = vmor %vm3899, %vm3900
    %v3902 = vsel %vm3901, %v3894, %v3898
    %v3903 = vand.u32 2147483647, %v3893
    %vm3904 = vcmp.eq.f32.partialorder %v3903, 8.507059e+37
    %v3905 = vand.u32 %v3893, 2147483648
    %v3906 = vor.u32 1.1754944e-38, %v3905
    %v3907 = vsel %vm3904, %v3906, %v3902
    %v3908 = vmul.f32 %v3883, %v3907
    %v3909 = vmin.f32 %v3908, 1.0
    %v3910 = vmax.f32 %v3909, -1.0
    %v3911 = vmul.f32 %v3786, %v3786
    %v3912 = vmin.f32 16.0, %v3911
    %v3913 = vmul.f32 %v3912, 2.1237322e-06
    %v3914 = vadd.f32 %v3913, 0.00028619796
    %v3915 = vmul.f32 %v3912, %v3914
    %v3916 = vadd.f32 %v3915, 0.0036580483
    %v3917 = vmul.f32 %v3912, %v3916
    %v3918 = vadd.f32 %v3917, 0.05243302
    %v3919 = vmul.f32 %v3912, %v3918
    %v3920 = vadd.f32 %v3919, 0.18741608
    %v3921 = vmul.f32 %v3912, %v3920
    %v3922 = vadd.f32 %v3921, 1.1283791
    %v3923 = vmul.f32 %v3786, %v3922
    %v3924 = vmul.f32 %v3912, 3.8918573e-05
    %v3925 = vadd.f32 %v3924, 0.001143296
    %v3926 = vmul.f32 %v3912, %v3925
    %v3927 = vadd.f32 %v3926, 0.014752088
    %v3928 = vmul.f32 %v3912, %v3927
    %v3929 = vadd.f32 %v3928, 0.112945676
    %v3930 = vmul.f32 %v3912, %v3929
    %v3931 = vadd.f32 %v3930, 0.4994258
    %v3932 = vmul.f32 %v3912, %v3931
    %v3933 = vadd.f32 %v3932, 1.0
    %v3934 = vrcp.pop %v3933
    %v3935 = vmul.f32 %v3933, %v3934
    %v3936 = vsub.f32 1.0, %v3935
    %v3937 = vmul.f32 %v3934, %v3936
    %v3938 = vadd.f32 %v3934, %v3937
    %vm3939 = vweird.f32 %v3933
    %vm3940 = vweird.f32 %v3934
    %vm3941 = vmor %vm3939, %vm3940
    %v3942 = vsel %vm3941, %v3934, %v3938
    %v3943 = vand.u32 2147483647, %v3933
    %vm3944 = vcmp.eq.f32.partialorder %v3943, 8.507059e+37
    %v3945 = vand.u32 %v3933, 2147483648
    %v3946 = vor.u32 1.1754944e-38, %v3945
    %v3947 = vsel %vm3944, %v3946, %v3942
    %v3948 = vmul.f32 %v3923, %v3947
    %v3949 = vmin.f32 %v3948, 1.0
    %v3950 = vmax.f32 %v3949, -1.0
    %v3951 = vmul.f32 %v3787, %v3787
    %v3952 = vmin.f32 16.0, %v3951
    %v3953 = vmul.f32 %v3952, 2.1237322e-06
    %v3954 = vadd.f32 %v3953, 0.00028619796
    %v3955 = vmul.f32 %v3952, %v3954
    %v3956 = vadd.f32 %v3955, 0.0036580483
    %v3957 = vmul.f32 %v3952, %v3956
    %v3958 = vadd.f32 %v3957, 0.05243302
    %v3959 = vmul.f32 %v3952, %v3958
    %v3960 = vadd.f32 %v3959, 0.18741608
    %v3961 = vmul.f32 %v3952, %v3960
    %v3962 = vadd.f32 %v3961, 1.1283791
    %v3963 = vmul.f32 %v3787, %v3962
    %v3964 = vmul.f32 %v3952, 3.8918573e-05
    %v3965 = vadd.f32 %v3964, 0.001143296
    %v3966 = vmul.f32 %v3952, %v3965
    %v3967 = vadd.f32 %v3966, 0.014752088
    %v3968 = vmul.f32 %v3952, %v3967
    %v3969 = vadd.f32 %v3968, 0.112945676
    %v3970 = vmul.f32 %v3952, %v3969
    %v3971 = vadd.f32 %v3970, 0.4994258
    %v3972 = vmul.f32 %v3952, %v3971
    %v3973 = vadd.f32 %v3972, 1.0
    %v3974 = vrcp.pop %v3973
    %v3975 = vmul.f32 %v3973, %v3974
    %v3976 = vsub.f32 1.0, %v3975
    %v3977 = vmul.f32 %v3974, %v3976
    %v3978 = vadd.f32 %v3974, %v3977
    %vm3979 = vweird.f32 %v3973
    %vm3980 = vweird.f32 %v3974
    %vm3981 = vmor %vm3979, %vm3980
    %v3982 = vsel %vm3981, %v3974, %v3978
    %v3983 = vand.u32 2147483647, %v3973
    %vm3984 = vcmp.eq.f32.partialorder %v3983, 8.507059e+37
    %v3985 = vand.u32 %v3973, 2147483648
    %v3986 = vor.u32 1.1754944e-38, %v3985
    %v3987 = vsel %vm3984, %v3986, %v3982
    %v3988 = vmul.f32 %v3963, %v3987
    %v3989 = vmin.f32 %v3988, 1.0
    %v3990 = vmax.f32 %v3989, -1.0
    %v3991 = vmul.f32 %v3788, %v3788
    %v3992 = vmin.f32 16.0, %v3991
    %v3993 = vmul.f32 %v3992, 2.1237322e-06
    %v3994 = vadd.f32 %v3993, 0.00028619796
    %v3995 = vmul.f32 %v3992, %v3994
    %v3996 = vadd.f32 %v3995, 0.0036580483
    %v3997 = vmul.f32 %v3992, %v3996
    %v3998 = vadd.f32 %v3997, 0.05243302
    %v3999 = vmul.f32 %v3992, %v3998
    %v4000 = vadd.f32 %v3999, 0.18741608
    %v4001 = vmul.f32 %v3992, %v4000
    %v4002 = vadd.f32 %v4001, 1.1283791
    %v4003 = vmul.f32 %v3788, %v4002
    %v4004 = vmul.f32 %v3992, 3.8918573e-05
    %v4005 = vadd.f32 %v4004, 0.001143296
    %v4006 = vmul.f32 %v3992, %v4005
    %v4007 = vadd.f32 %v4006, 0.014752088
    %v4008 = vmul.f32 %v3992, %v4007
    %v4009 = vadd.f32 %v4008, 0.112945676
    %v4010 = vmul.f32 %v3992, %v4009
    %v4011 = vadd.f32 %v4010, 0.4994258
    %v4012 = vmul.f32 %v3992, %v4011
    %v4013 = vadd.f32 %v4012, 1.0
    %v4014 = vrcp.pop %v4013
    %v4015 = vmul.f32 %v4013, %v4014
    %v4016 = vsub.f32 1.0, %v4015
    %v4017 = vmul.f32 %v4014, %v4016
    %v4018 = vadd.f32 %v4014, %v4017
    %vm4019 = vweird.f32 %v4013
    %vm4020 = vweird.f32 %v4014
    %vm4021 = vmor %vm4019, %vm4020
    %v4022 = vsel %vm4021, %v4014, %v4018
    %v4023 = vand.u32 2147483647, %v4013
    %vm4024 = vcmp.eq.f32.partialorder %v4023, 8.507059e+37
    %v4025 = vand.u32 %v4013, 2147483648
    %v4026 = vor.u32 1.1754944e-38, %v4025
    %v4027 = vsel %vm4024, %v4026, %v4022
    %v4028 = vmul.f32 %v4003, %v4027
    %v4029 = vmin.f32 %v4028, 1.0
    %v4030 = vmax.f32 %v4029, -1.0
    %v4031 = vmul.f32 %v3789, %v3789
    %v4032 = vmin.f32 16.0, %v4031
    %v4033 = vmul.f32 %v4032, 2.1237322e-06
    %v4034 = vadd.f32 %v4033, 0.00028619796
    %v4035 = vmul.f32 %v4032, %v4034
    %v4036 = vadd.f32 %v4035, 0.0036580483
    %v4037 = vmul.f32 %v4032, %v4036
    %v4038 = vadd.f32 %v4037, 0.05243302
    %v4039 = vmul.f32 %v4032, %v4038
    %v4040 = vadd.f32 %v4039, 0.18741608
    %v4041 = vmul.f32 %v4032, %v4040
    %v4042 = vadd.f32 %v4041, 1.1283791
    %v4043 = vmul.f32 %v3789, %v4042
    %v4044 = vmul.f32 %v4032, 3.8918573e-05
    %v4045 = vadd.f32 %v4044, 0.001143296
    %v4046 = vmul.f32 %v4032, %v4045
    %v4047 = vadd.f32 %v4046, 0.014752088
    %v4048 = vmul.f32 %v4032, %v4047
    %v4049 = vadd.f32 %v4048, 0.112945676
    %v4050 = vmul.f32 %v4032, %v4049
    %v4051 = vadd.f32 %v4050, 0.4994258
    %v4052 = vmul.f32 %v4032, %v4051
    %v4053 = vadd.f32 %v4052, 1.0
    %v4054 = vrcp.pop %v4053
    %v4055 = vmul.f32 %v4053, %v4054
    %v4056 = vsub.f32 1.0, %v4055
    %v4057 = vmul.f32 %v4054, %v4056
    %v4058 = vadd.f32 %v4054, %v4057
    %vm4059 = vweird.f32 %v4053
    %vm4060 = vweird.f32 %v4054
    %vm4061 = vmor %vm4059, %vm4060
    %v4062 = vsel %vm4061, %v4054, %v4058
    %v4063 = vand.u32 2147483647, %v4053
    %vm4064 = vcmp.eq.f32.partialorder %v4063, 8.507059e+37
    %v4065 = vand.u32 %v4053, 2147483648
    %v4066 = vor.u32 1.1754944e-38, %v4065
    %v4067 = vsel %vm4064, %v4066, %v4062
    %v4068 = vmul.f32 %v4043, %v4067
    %v4069 = vmin.f32 %v4068, 1.0
    %v4070 = vmax.f32 %v4069, -1.0
    %v4071 = vmul.f32 %v3790, %v3790
    %v4072 = vmin.f32 16.0, %v4071
    %v4073 = vmul.f32 %v4072, 2.1237322e-06
    %v4074 = vadd.f32 %v4073, 0.00028619796
    %v4075 = vmul.f32 %v4072, %v4074
    %v4076 = vadd.f32 %v4075, 0.0036580483
    %v4077 = vmul.f32 %v4072, %v4076
    %v4078 = vadd.f32 %v4077, 0.05243302
    %v4079 = vmul.f32 %v4072, %v4078
    %v4080 = vadd.f32 %v4079, 0.18741608
    %v4081 = vmul.f32 %v4072, %v4080
    %v4082 = vadd.f32 %v4081, 1.1283791
    %v4083 = vmul.f32 %v3790, %v4082
    %v4084 = vmul.f32 %v4072, 3.8918573e-05
    %v4085 = vadd.f32 %v4084, 0.001143296
    %v4086 = vmul.f32 %v4072, %v4085
    %v4087 = vadd.f32 %v4086, 0.014752088
    %v4088 = vmul.f32 %v4072, %v4087
    %v4089 = vadd.f32 %v4088, 0.112945676
    %v4090 = vmul.f32 %v4072, %v4089
    %v4091 = vadd.f32 %v4090, 0.4994258
    %v4092 = vmul.f32 %v4072, %v4091
    %v4093 = vadd.f32 %v4092, 1.0
    %v4094 = vrcp.pop %v4093
    %v4095 = vmul.f32 %v4093, %v4094
    %v4096 = vsub.f32 1.0, %v4095
    %v4097 = vmul.f32 %v4094, %v4096
    %v4098 = vadd.f32 %v4094, %v4097
    %vm4099 = vweird.f32 %v4093
    %vm4100 = vweird.f32 %v4094
    %vm4101 = vmor %vm4099, %vm4100
    %v4102 = vsel %vm4101, %v4094, %v4098
    %v4103 = vand.u32 2147483647, %v4093
    %vm4104 = vcmp.eq.f32.partialorder %v4103, 8.507059e+37
    %v4105 = vand.u32 %v4093, 2147483648
    %v4106 = vor.u32 1.1754944e-38, %v4105
    %v4107 = vsel %vm4104, %v4106, %v4102
    %v4108 = vmul.f32 %v4083, %v4107
    %v4109 = vmin.f32 %v4108, 1.0
    %v4110 = vmax.f32 %v4109, -1.0
    %v4111 = vadd.f32 %v3830, 1.0
    %v4112 = vadd.f32 %v3870, 1.0
    %v4113 = vadd.f32 %v3910, 1.0
    %v4114 = vadd.f32 %v3950, 1.0
    %v4115 = vadd.f32 %v3990, 1.0
    %v4116 = vadd.f32 %v4030, 1.0
    %v4117 = vadd.f32 %v4070, 1.0
    %v4118 = vadd.f32 %v4110, 1.0
    %v4119 = vmul.f32 %v3775, %v4111
    %v4120 = vmul.f32 %v3776, %v4112
    %v4121 = vmul.f32 %v3777, %v4113
    %v4122 = vmul.f32 %v3778, %v4114
    %v4123 = vmul.f32 %v3779, %v4115
    %v4124 = vmul.f32 %v3780, %v4116
    %v4125 = vmul.f32 %v3781, %v4117
    %v4126 = vmul.f32 %v3782, %v4118
    %s4127 = scalar_lea.vmem %s21, 128
    %v4128 = vld [vmem:[%s4127] sm:$0xff]
    %v4129 = vld [vmem:[%s4127 + $0x8] sm:$0xff]
    %v4130 = vld [vmem:[%s4127 + $0x10] sm:$0xff]
    %v4131 = vld [vmem:[%s4127 + $0x18] sm:$0xff]
    %v4132 = vld [vmem:[%s4127 + $0x20] sm:$0xff]
    %v4133 = vld [vmem:[%s4127 + $0x28] sm:$0xff]
    %v4134 = vld [vmem:[%s4127 + $0x30] sm:$0xff]
    %v4135 = vld [vmem:[%s4127 + $0x38] sm:$0xff]
    %v4136 = vld [vmem:[%s4127 + $0x40] sm:$0xff]
    %v4137 = vld [vmem:[%s4127 + $0x48] sm:$0xff]
    %v4138 = vld [vmem:[%s4127 + $0x50] sm:$0xff]
    %v4139 = vld [vmem:[%s4127 + $0x58] sm:$0xff]
    %v4140 = vld [vmem:[%s4127 + $0x60] sm:$0xff]
    %v4141 = vld [vmem:[%s4127 + $0x68] sm:$0xff]
    %v4142 = vld [vmem:[%s4127 + $0x70] sm:$0xff]
    %v4143 = vld [vmem:[%s4127 + $0x78] sm:$0xff]
    %s4144 = scalar_lea.vmem %s22, 1
    %v4145 = vld [vmem:[%s4144] sm:$0x1]
    %v4147 = vperm.slane %v4145, 0
    %4149 = vmatpush.msra.mxu0 %v4143
    %4150 = vmatpush.msra.mxu0 %v4142
    %4151 = vmatpush.msra.mxu0 %v4141
    %4152 = vmatpush.msra.mxu0 %v4140
    %4153 = vmatpush.msra.mxu0 %v4139
    %4154 = vmatpush.msra.mxu0 %v4138
    %4155 = vmatpush.msra.mxu0 %v4137
    %4156 = vmatpush.msra.mxu0 %v4136
    %4157 = vmatpush.msra.mxu0 %v4135
    %4158 = vmatpush.msra.mxu0 %v4134
    %4159 = vmatpush.msra.mxu0 %v4133
    %4160 = vmatpush.msra.mxu0 %v4132
    %4161 = vmatpush.msra.mxu0 %v4131
    %4162 = vmatpush.msra.mxu0 %v4130
    %4163 = vmatpush.msra.mxu0 %v4129
    %4164 = vmatpush.msra.mxu0 %v4128
    %4165 = vmatmul.f32.gmra.mxu0 %v4119
    %v4166 = vpop.f32.mrf.mxu0
    %v4167 = vadd.f32 %v4147, %v4166
    %4168 = vmatmul.f32.gmra.mxu0 %v4120
    %v4169 = vpop.f32.mrf.mxu0
    %v4170 = vadd.f32 %v4147, %v4169
    %4171 = vmatmul.f32.gmra.mxu0 %v4121
    %v4172 = vpop.f32.mrf.mxu0
    %v4173 = vadd.f32 %v4147, %v4172
    %4174 = vmatmul.f32.gmra.mxu0 %v4122
    %v4175 = vpop.f32.mrf.mxu0
    %v4176 = vadd.f32 %v4147, %v4175
    %4177 = vmatmul.f32.gmra.mxu0 %v4123
    %v4178 = vpop.f32.mrf.mxu0
    %v4179 = vadd.f32 %v4147, %v4178
    %4180 = vmatmul.f32.gmra.mxu0 %v4124
    %v4181 = vpop.f32.mrf.mxu0
    %v4182 = vadd.f32 %v4147, %v4181
    %4183 = vmatmul.f32.gmra.mxu0 %v4125
    %v4184 = vpop.f32.mrf.mxu0
    %v4185 = vadd.f32 %v4147, %v4184
    %4186 = vmatmul.f32.gmra.mxu0 %v4126
    %v4187 = vpop.f32.mrf.mxu0
    %v4188 = vadd.f32 %v4147, %v4187
    %4189 = vdwg.mxu0
    %v4190 = vadd.f32 %v3490, %v4167
    %v4191 = vadd.f32 %v3491, %v4170
    %v4192 = vadd.f32 %v3492, %v4173
    %v4193 = vadd.f32 %v3493, %v4176
    %v4194 = vadd.f32 %v3494, %v4179
    %v4195 = vadd.f32 %v3495, %v4182
    %v4196 = vadd.f32 %v3496, %v4185
    %v4197 = vadd.f32 %v3497, %v4188
    %s4198 = scalar_lea.vmem %s7, 2
    %v4199 = vld [vmem:[%s4198] sm:$0x1]
    %s4200 = scalar_lea.vmem %s8, 2
    %v4201 = vld [vmem:[%s4200] sm:$0x1]
    %v4202 = vsel %vm218, %v4190, 0.0
    %4203 = vadd.xlane.f32.xlu0 %v4202
    %v4204 = vpop.xlane.xlu0 %4203
    %v4205 = vsel %vm218, %v4191, 0.0
    %4206 = vadd.xlane.f32.xlu0 %v4205
    %v4207 = vpop.xlane.xlu0 %4206
    %v4208 = vsel %vm218, %v4192, 0.0
    %4209 = vadd.xlane.f32.xlu0 %v4208
    %v4210 = vpop.xlane.xlu0 %4209
    %v4211 = vsel %vm218, %v4193, 0.0
    %4212 = vadd.xlane.f32.xlu0 %v4211
    %v4213 = vpop.xlane.xlu0 %4212
    %v4214 = vsel %vm218, %v4194, 0.0
    %4215 = vadd.xlane.f32.xlu0 %v4214
    %v4216 = vpop.xlane.xlu0 %4215
    %v4217 = vsel %vm218, %v4195, 0.0
    %4218 = vadd.xlane.f32.xlu0 %v4217
    %v4219 = vpop.xlane.xlu0 %4218
    %v4220 = vsel %vm218, %v4196, 0.0
    %4221 = vadd.xlane.f32.xlu0 %v4220
    %v4222 = vpop.xlane.xlu0 %4221
    %v4223 = vsel %vm218, %v4197, 0.0
    %4224 = vadd.xlane.f32.xlu0 %v4223
    %v4225 = vpop.xlane.xlu0 %4224
    %v4226 = vmul.f32 %v4204, %v249
    %v4227 = vmul.f32 %v4207, %v249
    %v4228 = vmul.f32 %v4210, %v249
    %v4229 = vmul.f32 %v4213, %v249
    %v4230 = vmul.f32 %v4216, %v249
    %v4231 = vmul.f32 %v4219, %v249
    %v4232 = vmul.f32 %v4222, %v249
    %v4233 = vmul.f32 %v4225, %v249
    %v4234 = vsub.f32 %v4190, %v4226
    %v4235 = vsub.f32 %v4191, %v4227
    %v4236 = vsub.f32 %v4192, %v4228
    %v4237 = vsub.f32 %v4193, %v4229
    %v4238 = vsub.f32 %v4194, %v4230
    %v4239 = vsub.f32 %v4195, %v4231
    %v4240 = vsub.f32 %v4196, %v4232
    %v4241 = vsub.f32 %v4197, %v4233
    %v4242 = vmul.f32 %v4234, %v4234
    %v4243 = vmul.f32 %v4235, %v4235
    %v4244 = vmul.f32 %v4236, %v4236
    %v4245 = vmul.f32 %v4237, %v4237
    %v4246 = vmul.f32 %v4238, %v4238
    %v4247 = vmul.f32 %v4239, %v4239
    %v4248 = vmul.f32 %v4240, %v4240
    %v4249 = vmul.f32 %v4241, %v4241
    %v4250 = vsel %vm218, %v4242, 0.0
    %4251 = vadd.xlane.f32.xlu0 %v4250
    %v4252 = vpop.xlane.xlu0 %4251
    %v4253 = vsel %vm218, %v4243, 0.0
    %4254 = vadd.xlane.f32.xlu0 %v4253
    %v4255 = vpop.xlane.xlu0 %4254
    %v4256 = vsel %vm218, %v4244, 0.0
    %4257 = vadd.xlane.f32.xlu0 %v4256
    %v4258 = vpop.xlane.xlu0 %4257
    %v4259 = vsel %vm218, %v4245, 0.0
    %4260 = vadd.xlane.f32.xlu0 %v4259
    %v4261 = vpop.xlane.xlu0 %4260
    %v4262 = vsel %vm218, %v4246, 0.0
    %4263 = vadd.xlane.f32.xlu0 %v4262
    %v4264 = vpop.xlane.xlu0 %4263
    %v4265 = vsel %vm218, %v4247, 0.0
    %4266 = vadd.xlane.f32.xlu0 %v4265
    %v4267 = vpop.xlane.xlu0 %4266
    %v4268 = vsel %vm218, %v4248, 0.0
    %4269 = vadd.xlane.f32.xlu0 %v4268
    %v4270 = vpop.xlane.xlu0 %4269
    %v4271 = vsel %vm218, %v4249, 0.0
    %4272 = vadd.xlane.f32.xlu0 %v4271
    %v4273 = vpop.xlane.xlu0 %4272
    %v4274 = vmul.f32 %v4252, %v249
    %v4275 = vmul.f32 %v4255, %v249
    %v4276 = vmul.f32 %v4258, %v249
    %v4277 = vmul.f32 %v4261, %v249
    %v4278 = vmul.f32 %v4264, %v249
    %v4279 = vmul.f32 %v4267, %v249
    %v4280 = vmul.f32 %v4270, %v249
    %v4281 = vmul.f32 %v4273, %v249
    %v4282 = vadd.f32 %v4274, 1e-05
    %v4283 = vadd.f32 %v4275, 1e-05
    %v4284 = vadd.f32 %v4276, 1e-05
    %v4285 = vadd.f32 %v4277, 1e-05
    %v4286 = vadd.f32 %v4278, 1e-05
    %v4287 = vadd.f32 %v4279, 1e-05
    %v4288 = vadd.f32 %v4280, 1e-05
    %v4289 = vadd.f32 %v4281, 1e-05
    %v4290 = vrsqrt.pop %v4282
    %v4291 = vmul.f32 %v4290, %v4282
    %v4292 = vmul.f32 %v4291, %v4290
    %v4293 = vmul.f32 0.5, %v4292
    %v4294 = vsub.f32 1.5, %v4293
    %v4295 = vmul.f32 %v4290, %v4294
    %vm4296 = vweird.f32 %v4282
    %vm4297 = vweird.f32 %v4290
    %vm4298 = vmor %vm4296, %vm4297
    %v4299 = vsel %vm4298, %v4290, %v4295
    %v4300 = vrsqrt.pop %v4283
    %v4301 = vmul.f32 %v4300, %v4283
    %v4302 = vmul.f32 %v4301, %v4300
    %v4303 = vmul.f32 0.5, %v4302
    %v4304 = vsub.f32 1.5, %v4303
    %v4305 = vmul.f32 %v4300, %v4304
    %vm4306 = vweird.f32 %v4283
    %vm4307 = vweird.f32 %v4300
    %vm4308 = vmor %vm4306, %vm4307
    %v4309 = vsel %vm4308, %v4300, %v4305
    %v4310 = vrsqrt.pop %v4284
    %v4311 = vmul.f32 %v4310, %v4284
    %v4312 = vmul.f32 %v4311, %v4310
    %v4313 = vmul.f32 0.5, %v4312
    %v4314 = vsub.f32 1.5, %v4313
    %v4315 = vmul.f32 %v4310, %v4314
    %vm4316 = vweird.f32 %v4284
    %vm4317 = vweird.f32 %v4310
    %vm4318 = vmor %vm4316, %vm4317
    %v4319 = vsel %vm4318, %v4310, %v4315
    %v4320 = vrsqrt.pop %v4285
    %v4321 = vmul.f32 %v4320, %v4285
    %v4322 = vmul.f32 %v4321, %v4320
    %v4323 = vmul.f32 0.5, %v4322
    %v4324 = vsub.f32 1.5, %v4323
    %v4325 = vmul.f32 %v4320, %v4324
    %vm4326 = vweird.f32 %v4285
    %vm4327 = vweird.f32 %v4320
    %vm4328 = vmor %vm4326, %vm4327
    %v4329 = vsel %vm4328, %v4320, %v4325
    %v4330 = vrsqrt.pop %v4286
    %v4331 = vmul.f32 %v4330, %v4286
    %v4332 = vmul.f32 %v4331, %v4330
    %v4333 = vmul.f32 0.5, %v4332
    %v4334 = vsub.f32 1.5, %v4333
    %v4335 = vmul.f32 %v4330, %v4334
    %vm4336 = vweird.f32 %v4286
    %vm4337 = vweird.f32 %v4330
    %vm4338 = vmor %vm4336, %vm4337
    %v4339 = vsel %vm4338, %v4330, %v4335
    %v4340 = vrsqrt.pop %v4287
    %v4341 = vmul.f32 %v4340, %v4287
    %v4342 = vmul.f32 %v4341, %v4340
    %v4343 = vmul.f32 0.5, %v4342
    %v4344 = vsub.f32 1.5, %v4343
    %v4345 = vmul.f32 %v4340, %v4344
    %vm4346 = vweird.f32 %v4287
    %vm4347 = vweird.f32 %v4340
    %vm4348 = vmor %vm4346, %vm4347
    %v4349 = vsel %vm4348, %v4340, %v4345
    %v4350 = vrsqrt.pop %v4288
    %v4351 = vmul.f32 %v4350, %v4288
    %v4352 = vmul.f32 %v4351, %v4350
    %v4353 = vmul.f32 0.5, %v4352
    %v4354 = vsub.f32 1.5, %v4353
    %v4355 = vmul.f32 %v4350, %v4354
    %vm4356 = vweird.f32 %v4288
    %vm4357 = vweird.f32 %v4350
    %vm4358 = vmor %vm4356, %vm4357
    %v4359 = vsel %vm4358, %v4350, %v4355
    %v4360 = vrsqrt.pop %v4289
    %v4361 = vmul.f32 %v4360, %v4289
    %v4362 = vmul.f32 %v4361, %v4360
    %v4363 = vmul.f32 0.5, %v4362
    %v4364 = vsub.f32 1.5, %v4363
    %v4365 = vmul.f32 %v4360, %v4364
    %vm4366 = vweird.f32 %v4289
    %vm4367 = vweird.f32 %v4360
    %vm4368 = vmor %vm4366, %vm4367
    %v4369 = vsel %vm4368, %v4360, %v4365
    %v4370 = vmul.f32 %v4234, %v4299
    %v4371 = vmul.f32 %v4235, %v4309
    %v4372 = vmul.f32 %v4236, %v4319
    %v4373 = vmul.f32 %v4237, %v4329
    %v4374 = vmul.f32 %v4238, %v4339
    %v4375 = vmul.f32 %v4239, %v4349
    %v4376 = vmul.f32 %v4240, %v4359
    %v4377 = vmul.f32 %v4241, %v4369
    %v4379 = vperm.slane %v4199, 0
    %v4381 = vmul.f32 %v4370, %v4379
    %v4382 = vmul.f32 %v4371, %v4379
    %v4383 = vmul.f32 %v4372, %v4379
    %v4384 = vmul.f32 %v4373, %v4379
    %v4385 = vmul.f32 %v4374, %v4379
    %v4386 = vmul.f32 %v4375, %v4379
    %v4387 = vmul.f32 %v4376, %v4379
    %v4388 = vmul.f32 %v4377, %v4379
    %v4390 = vperm.slane %v4201, 0
    %v4392 = vadd.f32 %v4381, %v4390
    %v4393 = vadd.f32 %v4382, %v4390
    %v4394 = vadd.f32 %v4383, %v4390
    %v4395 = vadd.f32 %v4384, %v4390
    %v4396 = vadd.f32 %v4385, %v4390
    %v4397 = vadd.f32 %v4386, %v4390
    %v4398 = vadd.f32 %v4387, %v4390
    %v4399 = vadd.f32 %v4388, %v4390
    %s4400 = scalar_lea.vmem %s9, 64
    %v4401 = vld [vmem:[%s4400] sm:$0xff]
    %v4402 = vld [vmem:[%s4400 + $0x8] sm:$0xff]
    %v4403 = vld [vmem:[%s4400 + $0x10] sm:$0xff]
    %v4404 = vld [vmem:[%s4400 + $0x18] sm:$0xff]
    %s4405 = scalar_lea.vmem %s10, 2
    %v4406 = vld [vmem:[%s4405] sm:$0x1]
    %v4408 = vperm.slane %v4406, 0
    %v4411 = vsel %vm218, %v4392, 0
    %v4414 = vsel %vm218, %v4393, 0
    %v4417 = vsel %vm218, %v4394, 0
    %v4420 = vsel %vm218, %v4395, 0
    %v4423 = vsel %vm218, %v4396, 0
    %v4426 = vsel %vm218, %v4397, 0
    %v4429 = vsel %vm218, %v4398, 0
    %v4432 = vsel %vm218, %v4399, 0
    %4434 = vmatpush.msra.mxu0 0.0
    %4435 = vmatpush.msra.mxu0 0.0
    %4436 = vmatpush.msra.mxu0 0.0
    %4437 = vmatpush.msra.mxu0 0.0
    %4438 = vmatpush.msra.mxu0 0.0
    %4439 = vmatpush.msra.mxu0 0.0
    %4440 = vmatpush.msra.mxu0 0.0
    %4441 = vmatpush.msra.mxu0 0.0
    %4442 = vmatpush.msra.mxu0 0.0
    %4443 = vmatpush.msra.mxu0 0.0
    %4444 = vmatpush.msra.mxu0 0.0
    %4445 = vmatpush.msra.mxu0 0.0
    %4446 = vmatpush.msra.mxu0 %v4404
    %4447 = vmatpush.msra.mxu0 %v4403
    %4448 = vmatpush.msra.mxu0 %v4402
    %4449 = vmatpush.msra.mxu0 %v4401
    %4450 = vmatmul.f32.gmra.mxu0 %v4411
    %v4451 = vpop.f32.mrf.mxu0
    %v4452 = vadd.f32 %v4408, %v4451
    %4453 = vmatmul.f32.gmra.mxu0 %v4414
    %v4454 = vpop.f32.mrf.mxu0
    %v4455 = vadd.f32 %v4408, %v4454
    %4456 = vmatmul.f32.gmra.mxu0 %v4417
    %v4457 = vpop.f32.mrf.mxu0
    %v4458 = vadd.f32 %v4408, %v4457
    %4459 = vmatmul.f32.gmra.mxu0 %v4420
    %v4460 = vpop.f32.mrf.mxu0
    %v4461 = vadd.f32 %v4408, %v4460
    %4462 = vmatmul.f32.gmra.mxu0 %v4423
    %v4463 = vpop.f32.mrf.mxu0
    %v4464 = vadd.f32 %v4408, %v4463
    %4465 = vmatmul.f32.gmra.mxu0 %v4426
    %v4466 = vpop.f32.mrf.mxu0
    %v4467 = vadd.f32 %v4408, %v4466
    %4468 = vmatmul.f32.gmra.mxu0 %v4429
    %v4469 = vpop.f32.mrf.mxu0
    %v4470 = vadd.f32 %v4408, %v4469
    %4471 = vmatmul.f32.gmra.mxu0 %v4432
    %v4472 = vpop.f32.mrf.mxu0
    %v4473 = vadd.f32 %v4408, %v4472
    %4474 = vdwg.mxu0
    %s4475 = scalar_lea.vmem %s11, 64
    %v4476 = vld [vmem:[%s4475] sm:$0xff]
    %v4477 = vld [vmem:[%s4475 + $0x8] sm:$0xff]
    %v4478 = vld [vmem:[%s4475 + $0x10] sm:$0xff]
    %v4479 = vld [vmem:[%s4475 + $0x18] sm:$0xff]
    %s4480 = scalar_lea.vmem %s12, 2
    %v4481 = vld [vmem:[%s4480] sm:$0x1]
    %v4483 = vperm.slane %v4481, 0
    %4485 = vmatpush.msra.mxu0 0.0
    %4486 = vmatpush.msra.mxu0 0.0
    %4487 = vmatpush.msra.mxu0 0.0
    %4488 = vmatpush.msra.mxu0 0.0
    %4489 = vmatpush.msra.mxu0 0.0
    %4490 = vmatpush.msra.mxu0 0.0
    %4491 = vmatpush.msra.mxu0 0.0
    %4492 = vmatpush.msra.mxu0 0.0
    %4493 = vmatpush.msra.mxu0 0.0
    %4494 = vmatpush.msra.mxu0 0.0
    %4495 = vmatpush.msra.mxu0 0.0
    %4496 = vmatpush.msra.mxu0 0.0
    %4497 = vmatpush.msra.mxu0 %v4479
    %4498 = vmatpush.msra.mxu0 %v4478
    %4499 = vmatpush.msra.mxu0 %v4477
    %4500 = vmatpush.msra.mxu0 %v4476
    %4501 = vmatmul.f32.gmra.mxu0 %v4411
    %v4502 = vpop.f32.mrf.mxu0
    %v4503 = vadd.f32 %v4483, %v4502
    %4504 = vmatmul.f32.gmra.mxu0 %v4414
    %v4505 = vpop.f32.mrf.mxu0
    %v4506 = vadd.f32 %v4483, %v4505
    %4507 = vmatmul.f32.gmra.mxu0 %v4417
    %v4508 = vpop.f32.mrf.mxu0
    %v4509 = vadd.f32 %v4483, %v4508
    %4510 = vmatmul.f32.gmra.mxu0 %v4420
    %v4511 = vpop.f32.mrf.mxu0
    %v4512 = vadd.f32 %v4483, %v4511
    %4513 = vmatmul.f32.gmra.mxu0 %v4423
    %v4514 = vpop.f32.mrf.mxu0
    %v4515 = vadd.f32 %v4483, %v4514
    %4516 = vmatmul.f32.gmra.mxu0 %v4426
    %v4517 = vpop.f32.mrf.mxu0
    %v4518 = vadd.f32 %v4483, %v4517
    %4519 = vmatmul.f32.gmra.mxu0 %v4429
    %v4520 = vpop.f32.mrf.mxu0
    %v4521 = vadd.f32 %v4483, %v4520
    %4522 = vmatmul.f32.gmra.mxu0 %v4432
    %v4523 = vpop.f32.mrf.mxu0
    %v4524 = vadd.f32 %v4483, %v4523
    %4525 = vdwg.mxu0
    %s4526 = scalar_lea.vmem %s13, 64
    %v4527 = vld [vmem:[%s4526] sm:$0xff]
    %v4528 = vld [vmem:[%s4526 + $0x8] sm:$0xff]
    %v4529 = vld [vmem:[%s4526 + $0x10] sm:$0xff]
    %v4530 = vld [vmem:[%s4526 + $0x18] sm:$0xff]
    %s4531 = scalar_lea.vmem %s14, 2
    %v4532 = vld [vmem:[%s4531] sm:$0x1]
    %v4534 = vperm.slane %v4532, 0
    %4536 = vmatpush.msra.mxu0 0.0
    %4537 = vmatpush.msra.mxu0 0.0
    %4538 = vmatpush.msra.mxu0 0.0
    %4539 = vmatpush.msra.mxu0 0.0
    %4540 = vmatpush.msra.mxu0 0.0
    %4541 = vmatpush.msra.mxu0 0.0
    %4542 = vmatpush.msra.mxu0 0.0
    %4543 = vmatpush.msra.mxu0 0.0
    %4544 = vmatpush.msra.mxu0 0.0
    %4545 = vmatpush.msra.mxu0 0.0
    %4546 = vmatpush.msra.mxu0 0.0
    %4547 = vmatpush.msra.mxu0 0.0
    %4548 = vmatpush.msra.mxu0 %v4530
    %4549 = vmatpush.msra.mxu0 %v4529
    %4550 = vmatpush.msra.mxu0 %v4528
    %4551 = vmatpush.msra.mxu0 %v4527
    %4552 = vmatmul.f32.gmra.mxu0 %v4411
    %v4553 = vpop.f32.mrf.mxu0
    %v4554 = vadd.f32 %v4534, %v4553
    %4555 = vmatmul.f32.gmra.mxu0 %v4414
    %v4556 = vpop.f32.mrf.mxu0
    %v4557 = vadd.f32 %v4534, %v4556
    %4558 = vmatmul.f32.gmra.mxu0 %v4417
    %v4559 = vpop.f32.mrf.mxu0
    %v4560 = vadd.f32 %v4534, %v4559
    %4561 = vmatmul.f32.gmra.mxu0 %v4420
    %v4562 = vpop.f32.mrf.mxu0
    %v4563 = vadd.f32 %v4534, %v4562
    %4564 = vmatmul.f32.gmra.mxu0 %v4423
    %v4565 = vpop.f32.mrf.mxu0
    %v4566 = vadd.f32 %v4534, %v4565
    %4567 = vmatmul.f32.gmra.mxu0 %v4426
    %v4568 = vpop.f32.mrf.mxu0
    %v4569 = vadd.f32 %v4534, %v4568
    %4570 = vmatmul.f32.gmra.mxu0 %v4429
    %v4571 = vpop.f32.mrf.mxu0
    %v4572 = vadd.f32 %v4534, %v4571
    %4573 = vmatmul.f32.gmra.mxu0 %v4432
    %v4574 = vpop.f32.mrf.mxu0
    %v4575 = vadd.f32 %v4534, %v4574
    %4576 = vdwg.mxu0
    %v4577 = vmul.f32 %v4503, %v121
    %v4578 = vmul.f32 %v4503, %v122
    %v4579 = vmul.f32 %v4503, %v123
    %v4580 = vmul.f32 %v4503, %v124
    %v4581 = vmul.f32 %v4503, %v125
    %v4582 = vmul.f32 %v4503, %v126
    %v4583 = vmul.f32 %v4503, %v127
    %v4584 = vmul.f32 %v4503, %v128
    %v4585 = vmul.f32 %v4506, %v121
    %v4586 = vmul.f32 %v4506, %v122
    %v4587 = vmul.f32 %v4506, %v123
    %v4588 = vmul.f32 %v4506, %v124
    %v4589 = vmul.f32 %v4506, %v125
    %v4590 = vmul.f32 %v4506, %v126
    %v4591 = vmul.f32 %v4506, %v127
    %v4592 = vmul.f32 %v4506, %v128
    %v4593 = vmul.f32 %v4509, %v121
    %v4594 = vmul.f32 %v4509, %v122
    %v4595 = vmul.f32 %v4509, %v123
    %v4596 = vmul.f32 %v4509, %v124
    %v4597 = vmul.f32 %v4509, %v125
    %v4598 = vmul.f32 %v4509, %v126
    %v4599 = vmul.f32 %v4509, %v127
    %v4600 = vmul.f32 %v4509, %v128
    %v4601 = vmul.f32 %v4512, %v121
    %v4602 = vmul.f32 %v4512, %v122
    %v4603 = vmul.f32 %v4512, %v123
    %v4604 = vmul.f32 %v4512, %v124
    %v4605 = vmul.f32 %v4512, %v125
    %v4606 = vmul.f32 %v4512, %v126
    %v4607 = vmul.f32 %v4512, %v127
    %v4608 = vmul.f32 %v4512, %v128
    %v4609 = vmul.f32 %v4515, %v121
    %v4610 = vmul.f32 %v4515, %v122
    %v4611 = vmul.f32 %v4515, %v123
    %v4612 = vmul.f32 %v4515, %v124
    %v4613 = vmul.f32 %v4515, %v125
    %v4614 = vmul.f32 %v4515, %v126
    %v4615 = vmul.f32 %v4515, %v127
    %v4616 = vmul.f32 %v4515, %v128
    %v4617 = vmul.f32 %v4518, %v121
    %v4618 = vmul.f32 %v4518, %v122
    %v4619 = vmul.f32 %v4518, %v123
    %v4620 = vmul.f32 %v4518, %v124
    %v4621 = vmul.f32 %v4518, %v125
    %v4622 = vmul.f32 %v4518, %v126
    %v4623 = vmul.f32 %v4518, %v127
    %v4624 = vmul.f32 %v4518, %v128
    %v4625 = vmul.f32 %v4521, %v121
    %v4626 = vmul.f32 %v4521, %v122
    %v4627 = vmul.f32 %v4521, %v123
    %v4628 = vmul.f32 %v4521, %v124
    %v4629 = vmul.f32 %v4521, %v125
    %v4630 = vmul.f32 %v4521, %v126
    %v4631 = vmul.f32 %v4521, %v127
    %v4632 = vmul.f32 %v4521, %v128
    %v4633 = vmul.f32 %v4524, %v121
    %v4634 = vmul.f32 %v4524, %v122
    %v4635 = vmul.f32 %v4524, %v123
    %v4636 = vmul.f32 %v4524, %v124
    %v4637 = vmul.f32 %v4524, %v125
    %v4638 = vmul.f32 %v4524, %v126
    %v4639 = vmul.f32 %v4524, %v127
    %v4640 = vmul.f32 %v4524, %v128
    %v4641 = vmul.f32 %v4554, %v121
    %v4642 = vmul.f32 %v4554, %v122
    %v4643 = vmul.f32 %v4554, %v123
    %v4644 = vmul.f32 %v4554, %v124
    %v4645 = vmul.f32 %v4554, %v125
    %v4646 = vmul.f32 %v4554, %v126
    %v4647 = vmul.f32 %v4554, %v127
    %v4648 = vmul.f32 %v4554, %v128
    %v4649 = vmul.f32 %v4557, %v121
    %v4650 = vmul.f32 %v4557, %v122
    %v4651 = vmul.f32 %v4557, %v123
    %v4652 = vmul.f32 %v4557, %v124
    %v4653 = vmul.f32 %v4557, %v125
    %v4654 = vmul.f32 %v4557, %v126
    %v4655 = vmul.f32 %v4557, %v127
    %v4656 = vmul.f32 %v4557, %v128
    %v4657 = vmul.f32 %v4560, %v121
    %v4658 = vmul.f32 %v4560, %v122
    %v4659 = vmul.f32 %v4560, %v123
    %v4660 = vmul.f32 %v4560, %v124
    %v4661 = vmul.f32 %v4560, %v125
    %v4662 = vmul.f32 %v4560, %v126
    %v4663 = vmul.f32 %v4560, %v127
    %v4664 = vmul.f32 %v4560, %v128
    %v4665 = vmul.f32 %v4563, %v121
    %v4666 = vmul.f32 %v4563, %v122
    %v4667 = vmul.f32 %v4563, %v123
    %v4668 = vmul.f32 %v4563, %v124
    %v4669 = vmul.f32 %v4563, %v125
    %v4670 = vmul.f32 %v4563, %v126
    %v4671 = vmul.f32 %v4563, %v127
    %v4672 = vmul.f32 %v4563, %v128
    %v4673 = vmul.f32 %v4566, %v121
    %v4674 = vmul.f32 %v4566, %v122
    %v4675 = vmul.f32 %v4566, %v123
    %v4676 = vmul.f32 %v4566, %v124
    %v4677 = vmul.f32 %v4566, %v125
    %v4678 = vmul.f32 %v4566, %v126
    %v4679 = vmul.f32 %v4566, %v127
    %v4680 = vmul.f32 %v4566, %v128
    %v4681 = vmul.f32 %v4569, %v121
    %v4682 = vmul.f32 %v4569, %v122
    %v4683 = vmul.f32 %v4569, %v123
    %v4684 = vmul.f32 %v4569, %v124
    %v4685 = vmul.f32 %v4569, %v125
    %v4686 = vmul.f32 %v4569, %v126
    %v4687 = vmul.f32 %v4569, %v127
    %v4688 = vmul.f32 %v4569, %v128
    %v4689 = vmul.f32 %v4572, %v121
    %v4690 = vmul.f32 %v4572, %v122
    %v4691 = vmul.f32 %v4572, %v123
    %v4692 = vmul.f32 %v4572, %v124
    %v4693 = vmul.f32 %v4572, %v125
    %v4694 = vmul.f32 %v4572, %v126
    %v4695 = vmul.f32 %v4572, %v127
    %v4696 = vmul.f32 %v4572, %v128
    %v4697 = vmul.f32 %v4575, %v121
    %v4698 = vmul.f32 %v4575, %v122
    %v4699 = vmul.f32 %v4575, %v123
    %v4700 = vmul.f32 %v4575, %v124
    %v4701 = vmul.f32 %v4575, %v125
    %v4702 = vmul.f32 %v4575, %v126
    %v4703 = vmul.f32 %v4575, %v127
    %v4704 = vmul.f32 %v4575, %v128
    %v4706 = vsel %vm218, %v4452, 0
    %v4709 = vsel %vm218, %v4577, 0
    %v4712 = vsel %vm218, %v4578, 0
    %v4715 = vsel %vm218, %v4579, 0
    %v4718 = vsel %vm218, %v4580, 0
    %v4721 = vsel %vm218, %v4581, 0
    %v4724 = vsel %vm218, %v4582, 0
    %v4727 = vsel %vm218, %v4583, 0
    %v4730 = vsel %vm218, %v4584, 0
    %4732 = vmatpush.xpose.msra.mxu0 0.0
    %4733 = vmatpush.xpose.msra.mxu0 0.0
    %4734 = vmatpush.xpose.msra.mxu0 0.0
    %4735 = vmatpush.xpose.msra.mxu0 0.0
    %4736 = vmatpush.xpose.msra.mxu0 0.0
    %4737 = vmatpush.xpose.msra.mxu0 0.0
    %4738 = vmatpush.xpose.msra.mxu0 0.0
    %4739 = vmatpush.xpose.msra.mxu0 0.0
    %4740 = vmatpush.xpose.msra.mxu0 %v4730
    %4741 = vmatpush.xpose.msra.mxu0 %v4727
    %4742 = vmatpush.xpose.msra.mxu0 %v4724
    %4743 = vmatpush.xpose.msra.mxu0 %v4721
    %4744 = vmatpush.xpose.msra.mxu0 %v4718
    %4745 = vmatpush.xpose.msra.mxu0 %v4715
    %4746 = vmatpush.xpose.msra.mxu0 %v4712
    %4747 = vmatpush.xpose.msra.mxu0 %v4709
    %4748 = vmatmul.f32.gmra.mxu0 %v4706
    %v4749 = vpop.f32.mrf.mxu0
    %v4750 = vadd.f32 %v731, %v4749
    %4751 = vdwg.mxu0
    %v4753 = vsel %vm218, %v4455, 0
    %v4756 = vsel %vm218, %v4585, 0
    %v4759 = vsel %vm218, %v4586, 0
    %v4762 = vsel %vm218, %v4587, 0
    %v4765 = vsel %vm218, %v4588, 0
    %v4768 = vsel %vm218, %v4589, 0
    %v4771 = vsel %vm218, %v4590, 0
    %v4774 = vsel %vm218, %v4591, 0
    %v4777 = vsel %vm218, %v4592, 0
    %4779 = vmatpush.xpose.msra.mxu0 0.0
    %4780 = vmatpush.xpose.msra.mxu0 0.0
    %4781 = vmatpush.xpose.msra.mxu0 0.0
    %4782 = vmatpush.xpose.msra.mxu0 0.0
    %4783 = vmatpush.xpose.msra.mxu0 0.0
    %4784 = vmatpush.xpose.msra.mxu0 0.0
    %4785 = vmatpush.xpose.msra.mxu0 0.0
    %4786 = vmatpush.xpose.msra.mxu0 0.0
    %4787 = vmatpush.xpose.msra.mxu0 %v4777
    %4788 = vmatpush.xpose.msra.mxu0 %v4774
    %4789 = vmatpush.xpose.msra.mxu0 %v4771
    %4790 = vmatpush.xpose.msra.mxu0 %v4768
    %4791 = vmatpush.xpose.msra.mxu0 %v4765
    %4792 = vmatpush.xpose.msra.mxu0 %v4762
    %4793 = vmatpush.xpose.msra.mxu0 %v4759
    %4794 = vmatpush.xpose.msra.mxu0 %v4756
    %4795 = vmatmul.f32.gmra.mxu0 %v4753
    %v4796 = vpop.f32.mrf.mxu0
    %v4797 = vadd.f32 %v732, %v4796
    %4798 = vdwg.mxu0
    %v4800 = vsel %vm218, %v4458, 0
    %v4803 = vsel %vm218, %v4593, 0
    %v4806 = vsel %vm218, %v4594, 0
    %v4809 = vsel %vm218, %v4595, 0
    %v4812 = vsel %vm218, %v4596, 0
    %v4815 = vsel %vm218, %v4597, 0
    %v4818 = vsel %vm218, %v4598, 0
    %v4821 = vsel %vm218, %v4599, 0
    %v4824 = vsel %vm218, %v4600, 0
    %4826 = vmatpush.xpose.msra.mxu0 0.0
    %4827 = vmatpush.xpose.msra.mxu0 0.0
    %4828 = vmatpush.xpose.msra.mxu0 0.0
    %4829 = vmatpush.xpose.msra.mxu0 0.0
    %4830 = vmatpush.xpose.msra.mxu0 0.0
    %4831 = vmatpush.xpose.msra.mxu0 0.0
    %4832 = vmatpush.xpose.msra.mxu0 0.0
    %4833 = vmatpush.xpose.msra.mxu0 0.0
    %4834 = vmatpush.xpose.msra.mxu0 %v4824
    %4835 = vmatpush.xpose.msra.mxu0 %v4821
    %4836 = vmatpush.xpose.msra.mxu0 %v4818
    %4837 = vmatpush.xpose.msra.mxu0 %v4815
    %4838 = vmatpush.xpose.msra.mxu0 %v4812
    %4839 = vmatpush.xpose.msra.mxu0 %v4809
    %4840 = vmatpush.xpose.msra.mxu0 %v4806
    %4841 = vmatpush.xpose.msra.mxu0 %v4803
    %4842 = vmatmul.f32.gmra.mxu0 %v4800
    %v4843 = vpop.f32.mrf.mxu0
    %v4844 = vadd.f32 %v733, %v4843
    %4845 = vdwg.mxu0
    %v4847 = vsel %vm218, %v4461, 0
    %v4850 = vsel %vm218, %v4601, 0
    %v4853 = vsel %vm218, %v4602, 0
    %v4856 = vsel %vm218, %v4603, 0
    %v4859 = vsel %vm218, %v4604, 0
    %v4862 = vsel %vm218, %v4605, 0
    %v4865 = vsel %vm218, %v4606, 0
    %v4868 = vsel %vm218, %v4607, 0
    %v4871 = vsel %vm218, %v4608, 0
    %4873 = vmatpush.xpose.msra.mxu0 0.0
    %4874 = vmatpush.xpose.msra.mxu0 0.0
    %4875 = vmatpush.xpose.msra.mxu0 0.0
    %4876 = vmatpush.xpose.msra.mxu0 0.0
    %4877 = vmatpush.xpose.msra.mxu0 0.0
    %4878 = vmatpush.xpose.msra.mxu0 0.0
    %4879 = vmatpush.xpose.msra.mxu0 0.0
    %4880 = vmatpush.xpose.msra.mxu0 0.0
    %4881 = vmatpush.xpose.msra.mxu0 %v4871
    %4882 = vmatpush.xpose.msra.mxu0 %v4868
    %4883 = vmatpush.xpose.msra.mxu0 %v4865
    %4884 = vmatpush.xpose.msra.mxu0 %v4862
    %4885 = vmatpush.xpose.msra.mxu0 %v4859
    %4886 = vmatpush.xpose.msra.mxu0 %v4856
    %4887 = vmatpush.xpose.msra.mxu0 %v4853
    %4888 = vmatpush.xpose.msra.mxu0 %v4850
    %4889 = vmatmul.f32.gmra.mxu0 %v4847
    %v4890 = vpop.f32.mrf.mxu0
    %v4891 = vadd.f32 %v734, %v4890
    %4892 = vdwg.mxu0
    %v4894 = vsel %vm218, %v4464, 0
    %v4897 = vsel %vm218, %v4609, 0
    %v4900 = vsel %vm218, %v4610, 0
    %v4903 = vsel %vm218, %v4611, 0
    %v4906 = vsel %vm218, %v4612, 0
    %v4909 = vsel %vm218, %v4613, 0
    %v4912 = vsel %vm218, %v4614, 0
    %v4915 = vsel %vm218, %v4615, 0
    %v4918 = vsel %vm218, %v4616, 0
    %4920 = vmatpush.xpose.msra.mxu0 0.0
    %4921 = vmatpush.xpose.msra.mxu0 0.0
    %4922 = vmatpush.xpose.msra.mxu0 0.0
    %4923 = vmatpush.xpose.msra.mxu0 0.0
    %4924 = vmatpush.xpose.msra.mxu0 0.0
    %4925 = vmatpush.xpose.msra.mxu0 0.0
    %4926 = vmatpush.xpose.msra.mxu0 0.0
    %4927 = vmatpush.xpose.msra.mxu0 0.0
    %4928 = vmatpush.xpose.msra.mxu0 %v4918
    %4929 = vmatpush.xpose.msra.mxu0 %v4915
    %4930 = vmatpush.xpose.msra.mxu0 %v4912
    %4931 = vmatpush.xpose.msra.mxu0 %v4909
    %4932 = vmatpush.xpose.msra.mxu0 %v4906
    %4933 = vmatpush.xpose.msra.mxu0 %v4903
    %4934 = vmatpush.xpose.msra.mxu0 %v4900
    %4935 = vmatpush.xpose.msra.mxu0 %v4897
    %4936 = vmatmul.f32.gmra.mxu0 %v4894
    %v4937 = vpop.f32.mrf.mxu0
    %v4938 = vadd.f32 %v735, %v4937
    %4939 = vdwg.mxu0
    %v4941 = vsel %vm218, %v4467, 0
    %v4944 = vsel %vm218, %v4617, 0
    %v4947 = vsel %vm218, %v4618, 0
    %v4950 = vsel %vm218, %v4619, 0
    %v4953 = vsel %vm218, %v4620, 0
    %v4956 = vsel %vm218, %v4621, 0
    %v4959 = vsel %vm218, %v4622, 0
    %v4962 = vsel %vm218, %v4623, 0
    %v4965 = vsel %vm218, %v4624, 0
    %4967 = vmatpush.xpose.msra.mxu0 0.0
    %4968 = vmatpush.xpose.msra.mxu0 0.0
    %4969 = vmatpush.xpose.msra.mxu0 0.0
    %4970 = vmatpush.xpose.msra.mxu0 0.0
    %4971 = vmatpush.xpose.msra.mxu0 0.0
    %4972 = vmatpush.xpose.msra.mxu0 0.0
    %4973 = vmatpush.xpose.msra.mxu0 0.0
    %4974 = vmatpush.xpose.msra.mxu0 0.0
    %4975 = vmatpush.xpose.msra.mxu0 %v4965
    %4976 = vmatpush.xpose.msra.mxu0 %v4962
    %4977 = vmatpush.xpose.msra.mxu0 %v4959
    %4978 = vmatpush.xpose.msra.mxu0 %v4956
    %4979 = vmatpush.xpose.msra.mxu0 %v4953
    %4980 = vmatpush.xpose.msra.mxu0 %v4950
    %4981 = vmatpush.xpose.msra.mxu0 %v4947
    %4982 = vmatpush.xpose.msra.mxu0 %v4944
    %4983 = vmatmul.f32.gmra.mxu0 %v4941
    %v4984 = vpop.f32.mrf.mxu0
    %v4985 = vadd.f32 %v736, %v4984
    %4986 = vdwg.mxu0
    %v4988 = vsel %vm218, %v4470, 0
    %v4991 = vsel %vm218, %v4625, 0
    %v4994 = vsel %vm218, %v4626, 0
    %v4997 = vsel %vm218, %v4627, 0
    %v5000 = vsel %vm218, %v4628, 0
    %v5003 = vsel %vm218, %v4629, 0
    %v5006 = vsel %vm218, %v4630, 0
    %v5009 = vsel %vm218, %v4631, 0
    %v5012 = vsel %vm218, %v4632, 0
    %5014 = vmatpush.xpose.msra.mxu0 0.0
    %5015 = vmatpush.xpose.msra.mxu0 0.0
    %5016 = vmatpush.xpose.msra.mxu0 0.0
    %5017 = vmatpush.xpose.msra.mxu0 0.0
    %5018 = vmatpush.xpose.msra.mxu0 0.0
    %5019 = vmatpush.xpose.msra.mxu0 0.0
    %5020 = vmatpush.xpose.msra.mxu0 0.0
    %5021 = vmatpush.xpose.msra.mxu0 0.0
    %5022 = vmatpush.xpose.msra.mxu0 %v5012
    %5023 = vmatpush.xpose.msra.mxu0 %v5009
    %5024 = vmatpush.xpose.msra.mxu0 %v5006
    %5025 = vmatpush.xpose.msra.mxu0 %v5003
    %5026 = vmatpush.xpose.msra.mxu0 %v5000
    %5027 = vmatpush.xpose.msra.mxu0 %v4997
    %5028 = vmatpush.xpose.msra.mxu0 %v4994
    %5029 = vmatpush.xpose.msra.mxu0 %v4991
    %5030 = vmatmul.f32.gmra.mxu0 %v4988
    %v5031 = vpop.f32.mrf.mxu0
    %v5032 = vadd.f32 %v737, %v5031
    %5033 = vdwg.mxu0
    %v5035 = vsel %vm218, %v4473, 0
    %v5038 = vsel %vm218, %v4633, 0
    %v5041 = vsel %vm218, %v4634, 0
    %v5044 = vsel %vm218, %v4635, 0
    %v5047 = vsel %vm218, %v4636, 0
    %v5050 = vsel %vm218, %v4637, 0
    %v5053 = vsel %vm218, %v4638, 0
    %v5056 = vsel %vm218, %v4639, 0
    %v5059 = vsel %vm218, %v4640, 0
    %5061 = vmatpush.xpose.msra.mxu0 0.0
    %5062 = vmatpush.xpose.msra.mxu0 0.0
    %5063 = vmatpush.xpose.msra.mxu0 0.0
    %5064 = vmatpush.xpose.msra.mxu0 0.0
    %5065 = vmatpush.xpose.msra.mxu0 0.0
    %5066 = vmatpush.xpose.msra.mxu0 0.0
    %5067 = vmatpush.xpose.msra.mxu0 0.0
    %5068 = vmatpush.xpose.msra.mxu0 0.0
    %5069 = vmatpush.xpose.msra.mxu0 %v5059
    %5070 = vmatpush.xpose.msra.mxu0 %v5056
    %5071 = vmatpush.xpose.msra.mxu0 %v5053
    %5072 = vmatpush.xpose.msra.mxu0 %v5050
    %5073 = vmatpush.xpose.msra.mxu0 %v5047
    %5074 = vmatpush.xpose.msra.mxu0 %v5044
    %5075 = vmatpush.xpose.msra.mxu0 %v5041
    %5076 = vmatpush.xpose.msra.mxu0 %v5038
    %5077 = vmatmul.f32.gmra.mxu0 %v5035
    %v5078 = vpop.f32.mrf.mxu0
    %v5079 = vadd.f32 %v738, %v5078
    %5080 = vdwg.mxu0
    %v5081 = vsel %vm1123, %v4750, -inf
    %5082 = vmax.xlane.f32.xlu0 %v5081
    %v5083 = vpop.xlane.xlu0 %5082
    %v5084 = vsel %vm1123, %v4797, -inf
    %5085 = vmax.xlane.f32.xlu0 %v5084
    %v5086 = vpop.xlane.xlu0 %5085
    %v5087 = vsel %vm1123, %v4844, -inf
    %5088 = vmax.xlane.f32.xlu0 %v5087
    %v5089 = vpop.xlane.xlu0 %5088
    %v5090 = vsel %vm1123, %v4891, -inf
    %5091 = vmax.xlane.f32.xlu0 %v5090
    %v5092 = vpop.xlane.xlu0 %5091
    %v5093 = vsel %vm1123, %v4938, -inf
    %5094 = vmax.xlane.f32.xlu0 %v5093
    %v5095 = vpop.xlane.xlu0 %5094
    %v5096 = vsel %vm1123, %v4985, -inf
    %5097 = vmax.xlane.f32.xlu0 %v5096
    %v5098 = vpop.xlane.xlu0 %5097
    %v5099 = vsel %vm1123, %v5032, -inf
    %5100 = vmax.xlane.f32.xlu0 %v5099
    %v5101 = vpop.xlane.xlu0 %5100
    %v5102 = vsel %vm1123, %v5079, -inf
    %5103 = vmax.xlane.f32.xlu0 %v5102
    %v5104 = vpop.xlane.xlu0 %5103
    %v5105 = vsub.f32 %v4750, %v5083
    %v5106 = vsub.f32 %v4797, %v5086
    %v5107 = vsub.f32 %v4844, %v5089
    %v5108 = vsub.f32 %v4891, %v5092
    %v5109 = vsub.f32 %v4938, %v5095
    %v5110 = vsub.f32 %v4985, %v5098
    %v5111 = vsub.f32 %v5032, %v5101
    %v5112 = vsub.f32 %v5079, %v5104
    %v5113 = vmul.f32 %v5105, 1.442695
    %v5114 = vpow.pop %v5113
    %v5115 = vmul.f32 %v5106, 1.442695
    %v5116 = vpow.pop %v5115
    %v5117 = vmul.f32 %v5107, 1.442695
    %v5118 = vpow.pop %v5117
    %v5119 = vmul.f32 %v5108, 1.442695
    %v5120 = vpow.pop %v5119
    %v5121 = vmul.f32 %v5109, 1.442695
    %v5122 = vpow.pop %v5121
    %v5123 = vmul.f32 %v5110, 1.442695
    %v5124 = vpow.pop %v5123
    %v5125 = vmul.f32 %v5111, 1.442695
    %v5126 = vpow.pop %v5125
    %v5127 = vmul.f32 %v5112, 1.442695
    %v5128 = vpow.pop %v5127
    %v5130 = vsel %vm1123, %v5114, 0
    %v5133 = vsel %vm1123, %v5116, 0
    %v5136 = vsel %vm1123, %v5118, 0
    %v5139 = vsel %vm1123, %v5120, 0
    %v5142 = vsel %vm1123, %v5122, 0
    %v5145 = vsel %vm1123, %v5124, 0
    %v5148 = vsel %vm1123, %v5126, 0
    %v5151 = vsel %vm1123, %v5128, 0
    %5153 = vmatpush.msra.mxu0 0.0
    %5154 = vmatpush.msra.mxu0 0.0
    %5155 = vmatpush.msra.mxu0 0.0
    %5156 = vmatpush.msra.mxu0 0.0
    %5157 = vmatpush.msra.mxu0 0.0
    %5158 = vmatpush.msra.mxu0 0.0
    %5159 = vmatpush.msra.mxu0 0.0
    %5160 = vmatpush.msra.mxu0 0.0
    %5161 = vmatpush.msra.mxu0 %v136
    %5162 = vmatpush.msra.mxu0 %v135
    %5163 = vmatpush.msra.mxu0 %v134
    %5164 = vmatpush.msra.mxu0 %v133
    %5165 = vmatpush.msra.mxu0 %v132
    %5166 = vmatpush.msra.mxu0 %v131
    %5167 = vmatpush.msra.mxu0 %v130
    %5168 = vmatpush.msra.mxu0 %v129
    %5169 = vmatmul.f32.gmra.mxu0 %v5130
    %v5170 = vpop.f32.mrf.mxu0
    %v5171 = vadd.f32 0.0, %v5170
    %5172 = vmatmul.f32.gmra.mxu0 %v5133
    %v5173 = vpop.f32.mrf.mxu0
    %v5174 = vadd.f32 0.0, %v5173
    %5175 = vmatmul.f32.gmra.mxu0 %v5136
    %v5176 = vpop.f32.mrf.mxu0
    %v5177 = vadd.f32 0.0, %v5176
    %5178 = vmatmul.f32.gmra.mxu0 %v5139
    %v5179 = vpop.f32.mrf.mxu0
    %v5180 = vadd.f32 0.0, %v5179
    %5181 = vmatmul.f32.gmra.mxu0 %v5142
    %v5182 = vpop.f32.mrf.mxu0
    %v5183 = vadd.f32 0.0, %v5182
    %5184 = vmatmul.f32.gmra.mxu0 %v5145
    %v5185 = vpop.f32.mrf.mxu0
    %v5186 = vadd.f32 0.0, %v5185
    %5187 = vmatmul.f32.gmra.mxu0 %v5148
    %v5188 = vpop.f32.mrf.mxu0
    %v5189 = vadd.f32 0.0, %v5188
    %5190 = vmatmul.f32.gmra.mxu0 %v5151
    %v5191 = vpop.f32.mrf.mxu0
    %v5192 = vadd.f32 0.0, %v5191
    %5193 = vdwg.mxu0
    %v5194 = vrcp.pop %v5171
    %v5195 = vrcp.pop %v5174
    %v5196 = vrcp.pop %v5177
    %v5197 = vrcp.pop %v5180
    %v5198 = vrcp.pop %v5183
    %v5199 = vrcp.pop %v5186
    %v5200 = vrcp.pop %v5189
    %v5201 = vrcp.pop %v5192
    %v5202 = vmul.f32 %v5114, %v5194
    %v5203 = vmul.f32 %v5116, %v5195
    %v5204 = vmul.f32 %v5118, %v5196
    %v5205 = vmul.f32 %v5120, %v5197
    %v5206 = vmul.f32 %v5122, %v5198
    %v5207 = vmul.f32 %v5124, %v5199
    %v5208 = vmul.f32 %v5126, %v5200
    %v5209 = vmul.f32 %v5128, %v5201
    %v5211 = vsel %vm1123, %v5202, 0
    %5213 = vmatpush.msra.mxu0 0.0
    %5214 = vmatpush.msra.mxu0 0.0
    %5215 = vmatpush.msra.mxu0 0.0
    %5216 = vmatpush.msra.mxu0 0.0
    %5217 = vmatpush.msra.mxu0 0.0
    %5218 = vmatpush.msra.mxu0 0.0
    %5219 = vmatpush.msra.mxu0 0.0
    %5220 = vmatpush.msra.mxu0 0.0
    %5221 = vmatpush.msra.mxu0 %v4648
    %5222 = vmatpush.msra.mxu0 %v4647
    %5223 = vmatpush.msra.mxu0 %v4646
    %5224 = vmatpush.msra.mxu0 %v4645
    %5225 = vmatpush.msra.mxu0 %v4644
    %5226 = vmatpush.msra.mxu0 %v4643
    %5227 = vmatpush.msra.mxu0 %v4642
    %5228 = vmatpush.msra.mxu0 %v4641
    %5229 = vmatmul.f32.gmra.mxu0 %v5211
    %v5230 = vpop.f32.mrf.mxu0
    %v5231 = vadd.f32 0.0, %v5230
    %5232 = vdwg.mxu0
    %v5234 = vsel %vm1123, %v5203, 0
    %5236 = vmatpush.msra.mxu0 0.0
    %5237 = vmatpush.msra.mxu0 0.0
    %5238 = vmatpush.msra.mxu0 0.0
    %5239 = vmatpush.msra.mxu0 0.0
    %5240 = vmatpush.msra.mxu0 0.0
    %5241 = vmatpush.msra.mxu0 0.0
    %5242 = vmatpush.msra.mxu0 0.0
    %5243 = vmatpush.msra.mxu0 0.0
    %5244 = vmatpush.msra.mxu0 %v4656
    %5245 = vmatpush.msra.mxu0 %v4655
    %5246 = vmatpush.msra.mxu0 %v4654
    %5247 = vmatpush.msra.mxu0 %v4653
    %5248 = vmatpush.msra.mxu0 %v4652
    %5249 = vmatpush.msra.mxu0 %v4651
    %5250 = vmatpush.msra.mxu0 %v4650
    %5251 = vmatpush.msra.mxu0 %v4649
    %5252 = vmatmul.f32.gmra.mxu0 %v5234
    %v5253 = vpop.f32.mrf.mxu0
    %v5254 = vadd.f32 0.0, %v5253
    %5255 = vdwg.mxu0
    %v5257 = vsel %vm1123, %v5204, 0
    %5259 = vmatpush.msra.mxu0 0.0
    %5260 = vmatpush.msra.mxu0 0.0
    %5261 = vmatpush.msra.mxu0 0.0
    %5262 = vmatpush.msra.mxu0 0.0
    %5263 = vmatpush.msra.mxu0 0.0
    %5264 = vmatpush.msra.mxu0 0.0
    %5265 = vmatpush.msra.mxu0 0.0
    %5266 = vmatpush.msra.mxu0 0.0
    %5267 = vmatpush.msra.mxu0 %v4664
    %5268 = vmatpush.msra.mxu0 %v4663
    %5269 = vmatpush.msra.mxu0 %v4662
    %5270 = vmatpush.msra.mxu0 %v4661
    %5271 = vmatpush.msra.mxu0 %v4660
    %5272 = vmatpush.msra.mxu0 %v4659
    %5273 = vmatpush.msra.mxu0 %v4658
    %5274 = vmatpush.msra.mxu0 %v4657
    %5275 = vmatmul.f32.gmra.mxu0 %v5257
    %v5276 = vpop.f32.mrf.mxu0
    %v5277 = vadd.f32 0.0, %v5276
    %5278 = vdwg.mxu0
    %v5280 = vsel %vm1123, %v5205, 0
    %5282 = vmatpush.msra.mxu0 0.0
    %5283 = vmatpush.msra.mxu0 0.0
    %5284 = vmatpush.msra.mxu0 0.0
    %5285 = vmatpush.msra.mxu0 0.0
    %5286 = vmatpush.msra.mxu0 0.0
    %5287 = vmatpush.msra.mxu0 0.0
    %5288 = vmatpush.msra.mxu0 0.0
    %5289 = vmatpush.msra.mxu0 0.0
    %5290 = vmatpush.msra.mxu0 %v4672
    %5291 = vmatpush.msra.mxu0 %v4671
    %5292 = vmatpush.msra.mxu0 %v4670
    %5293 = vmatpush.msra.mxu0 %v4669
    %5294 = vmatpush.msra.mxu0 %v4668
    %5295 = vmatpush.msra.mxu0 %v4667
    %5296 = vmatpush.msra.mxu0 %v4666
    %5297 = vmatpush.msra.mxu0 %v4665
    %5298 = vmatmul.f32.gmra.mxu0 %v5280
    %v5299 = vpop.f32.mrf.mxu0
    %v5300 = vadd.f32 0.0, %v5299
    %5301 = vdwg.mxu0
    %v5303 = vsel %vm1123, %v5206, 0
    %5305 = vmatpush.msra.mxu0 0.0
    %5306 = vmatpush.msra.mxu0 0.0
    %5307 = vmatpush.msra.mxu0 0.0
    %5308 = vmatpush.msra.mxu0 0.0
    %5309 = vmatpush.msra.mxu0 0.0
    %5310 = vmatpush.msra.mxu0 0.0
    %5311 = vmatpush.msra.mxu0 0.0
    %5312 = vmatpush.msra.mxu0 0.0
    %5313 = vmatpush.msra.mxu0 %v4680
    %5314 = vmatpush.msra.mxu0 %v4679
    %5315 = vmatpush.msra.mxu0 %v4678
    %5316 = vmatpush.msra.mxu0 %v4677
    %5317 = vmatpush.msra.mxu0 %v4676
    %5318 = vmatpush.msra.mxu0 %v4675
    %5319 = vmatpush.msra.mxu0 %v4674
    %5320 = vmatpush.msra.mxu0 %v4673
    %5321 = vmatmul.f32.gmra.mxu0 %v5303
    %v5322 = vpop.f32.mrf.mxu0
    %v5323 = vadd.f32 0.0, %v5322
    %5324 = vdwg.mxu0
    %v5326 = vsel %vm1123, %v5207, 0
    %5328 = vmatpush.msra.mxu0 0.0
    %5329 = vmatpush.msra.mxu0 0.0
    %5330 = vmatpush.msra.mxu0 0.0
    %5331 = vmatpush.msra.mxu0 0.0
    %5332 = vmatpush.msra.mxu0 0.0
    %5333 = vmatpush.msra.mxu0 0.0
    %5334 = vmatpush.msra.mxu0 0.0
    %5335 = vmatpush.msra.mxu0 0.0
    %5336 = vmatpush.msra.mxu0 %v4688
    %5337 = vmatpush.msra.mxu0 %v4687
    %5338 = vmatpush.msra.mxu0 %v4686
    %5339 = vmatpush.msra.mxu0 %v4685
    %5340 = vmatpush.msra.mxu0 %v4684
    %5341 = vmatpush.msra.mxu0 %v4683
    %5342 = vmatpush.msra.mxu0 %v4682
    %5343 = vmatpush.msra.mxu0 %v4681
    %5344 = vmatmul.f32.gmra.mxu0 %v5326
    %v5345 = vpop.f32.mrf.mxu0
    %v5346 = vadd.f32 0.0, %v5345
    %5347 = vdwg.mxu0
    %v5349 = vsel %vm1123, %v5208, 0
    %5351 = vmatpush.msra.mxu0 0.0
    %5352 = vmatpush.msra.mxu0 0.0
    %5353 = vmatpush.msra.mxu0 0.0
    %5354 = vmatpush.msra.mxu0 0.0
    %5355 = vmatpush.msra.mxu0 0.0
    %5356 = vmatpush.msra.mxu0 0.0
    %5357 = vmatpush.msra.mxu0 0.0
    %5358 = vmatpush.msra.mxu0 0.0
    %5359 = vmatpush.msra.mxu0 %v4696
    %5360 = vmatpush.msra.mxu0 %v4695
    %5361 = vmatpush.msra.mxu0 %v4694
    %5362 = vmatpush.msra.mxu0 %v4693
    %5363 = vmatpush.msra.mxu0 %v4692
    %5364 = vmatpush.msra.mxu0 %v4691
    %5365 = vmatpush.msra.mxu0 %v4690
    %5366 = vmatpush.msra.mxu0 %v4689
    %5367 = vmatmul.f32.gmra.mxu0 %v5349
    %v5368 = vpop.f32.mrf.mxu0
    %v5369 = vadd.f32 0.0, %v5368
    %5370 = vdwg.mxu0
    %v5372 = vsel %vm1123, %v5209, 0
    %5374 = vmatpush.msra.mxu0 0.0
    %5375 = vmatpush.msra.mxu0 0.0
    %5376 = vmatpush.msra.mxu0 0.0
    %5377 = vmatpush.msra.mxu0 0.0
    %5378 = vmatpush.msra.mxu0 0.0
    %5379 = vmatpush.msra.mxu0 0.0
    %5380 = vmatpush.msra.mxu0 0.0
    %5381 = vmatpush.msra.mxu0 0.0
    %5382 = vmatpush.msra.mxu0 %v4704
    %5383 = vmatpush.msra.mxu0 %v4703
    %5384 = vmatpush.msra.mxu0 %v4702
    %5385 = vmatpush.msra.mxu0 %v4701
    %5386 = vmatpush.msra.mxu0 %v4700
    %5387 = vmatpush.msra.mxu0 %v4699
    %5388 = vmatpush.msra.mxu0 %v4698
    %5389 = vmatpush.msra.mxu0 %v4697
    %5390 = vmatmul.f32.gmra.mxu0 %v5372
    %v5391 = vpop.f32.mrf.mxu0
    %v5392 = vadd.f32 0.0, %v5391
    %5393 = vdwg.mxu0
    %s5394 = scalar_lea.vmem %s15, 64
    %v5395 = vld [vmem:[%s5394] sm:$0xff]
    %v5396 = vld [vmem:[%s5394 + $0x8] sm:$0xff]
    %v5397 = vld [vmem:[%s5394 + $0x10] sm:$0xff]
    %v5398 = vld [vmem:[%s5394 + $0x18] sm:$0xff]
    %s5399 = scalar_lea.vmem %s16, 2
    %v5400 = vld [vmem:[%s5399] sm:$0x1]
    %v5402 = vperm.slane %v5400, 0
    %v5405 = vsel %vm218, %v5231, 0
    %v5408 = vsel %vm218, %v5254, 0
    %v5411 = vsel %vm218, %v5277, 0
    %v5414 = vsel %vm218, %v5300, 0
    %v5417 = vsel %vm218, %v5323, 0
    %v5420 = vsel %vm218, %v5346, 0
    %v5423 = vsel %vm218, %v5369, 0
    %v5426 = vsel %vm218, %v5392, 0
    %5428 = vmatpush.msra.mxu0 0.0
    %5429 = vmatpush.msra.mxu0 0.0
    %5430 = vmatpush.msra.mxu0 0.0
    %5431 = vmatpush.msra.mxu0 0.0
    %5432 = vmatpush.msra.mxu0 0.0
    %5433 = vmatpush.msra.mxu0 0.0
    %5434 = vmatpush.msra.mxu0 0.0
    %5435 = vmatpush.msra.mxu0 0.0
    %5436 = vmatpush.msra.mxu0 0.0
    %5437 = vmatpush.msra.mxu0 0.0
    %5438 = vmatpush.msra.mxu0 0.0
    %5439 = vmatpush.msra.mxu0 0.0
    %5440 = vmatpush.msra.mxu0 %v5398
    %5441 = vmatpush.msra.mxu0 %v5397
    %5442 = vmatpush.msra.mxu0 %v5396
    %5443 = vmatpush.msra.mxu0 %v5395
    %5444 = vmatmul.f32.gmra.mxu0 %v5405
    %v5445 = vpop.f32.mrf.mxu0
    %v5446 = vadd.f32 %v5402, %v5445
    %5447 = vmatmul.f32.gmra.mxu0 %v5408
    %v5448 = vpop.f32.mrf.mxu0
    %v5449 = vadd.f32 %v5402, %v5448
    %5450 = vmatmul.f32.gmra.mxu0 %v5411
    %v5451 = vpop.f32.mrf.mxu0
    %v5452 = vadd.f32 %v5402, %v5451
    %5453 = vmatmul.f32.gmra.mxu0 %v5414
    %v5454 = vpop.f32.mrf.mxu0
    %v5455 = vadd.f32 %v5402, %v5454
    %5456 = vmatmul.f32.gmra.mxu0 %v5417
    %v5457 = vpop.f32.mrf.mxu0
    %v5458 = vadd.f32 %v5402, %v5457
    %5459 = vmatmul.f32.gmra.mxu0 %v5420
    %v5460 = vpop.f32.mrf.mxu0
    %v5461 = vadd.f32 %v5402, %v5460
    %5462 = vmatmul.f32.gmra.mxu0 %v5423
    %v5463 = vpop.f32.mrf.mxu0
    %v5464 = vadd.f32 %v5402, %v5463
    %5465 = vmatmul.f32.gmra.mxu0 %v5426
    %v5466 = vpop.f32.mrf.mxu0
    %v5467 = vadd.f32 %v5402, %v5466
    %5468 = vdwg.mxu0
    %v5469 = vadd.f32 %v4190, %v5446
    %v5470 = vadd.f32 %v4191, %v5449
    %v5471 = vadd.f32 %v4192, %v5452
    %v5472 = vadd.f32 %v4193, %v5455
    %v5473 = vadd.f32 %v4194, %v5458
    %v5474 = vadd.f32 %v4195, %v5461
    %v5475 = vadd.f32 %v4196, %v5464
    %v5476 = vadd.f32 %v4197, %v5467
    %s5477 = scalar_lea.vmem %s17, 2
    %v5478 = vld [vmem:[%s5477] sm:$0x1]
    %s5479 = scalar_lea.vmem %s18, 2
    %v5480 = vld [vmem:[%s5479] sm:$0x1]
    %v5481 = vsel %vm218, %v5469, 0.0
    %5482 = vadd.xlane.f32.xlu0 %v5481
    %v5483 = vpop.xlane.xlu0 %5482
    %v5484 = vsel %vm218, %v5470, 0.0
    %5485 = vadd.xlane.f32.xlu0 %v5484
    %v5486 = vpop.xlane.xlu0 %5485
    %v5487 = vsel %vm218, %v5471, 0.0
    %5488 = vadd.xlane.f32.xlu0 %v5487
    %v5489 = vpop.xlane.xlu0 %5488
    %v5490 = vsel %vm218, %v5472, 0.0
    %5491 = vadd.xlane.f32.xlu0 %v5490
    %v5492 = vpop.xlane.xlu0 %5491
    %v5493 = vsel %vm218, %v5473, 0.0
    %5494 = vadd.xlane.f32.xlu0 %v5493
    %v5495 = vpop.xlane.xlu0 %5494
    %v5496 = vsel %vm218, %v5474, 0.0
    %5497 = vadd.xlane.f32.xlu0 %v5496
    %v5498 = vpop.xlane.xlu0 %5497
    %v5499 = vsel %vm218, %v5475, 0.0
    %5500 = vadd.xlane.f32.xlu0 %v5499
    %v5501 = vpop.xlane.xlu0 %5500
    %v5502 = vsel %vm218, %v5476, 0.0
    %5503 = vadd.xlane.f32.xlu0 %v5502
    %v5504 = vpop.xlane.xlu0 %5503
    %v5505 = vmul.f32 %v5483, %v249
    %v5506 = vmul.f32 %v5486, %v249
    %v5507 = vmul.f32 %v5489, %v249
    %v5508 = vmul.f32 %v5492, %v249
    %v5509 = vmul.f32 %v5495, %v249
    %v5510 = vmul.f32 %v5498, %v249
    %v5511 = vmul.f32 %v5501, %v249
    %v5512 = vmul.f32 %v5504, %v249
    %v5513 = vsub.f32 %v5469, %v5505
    %v5514 = vsub.f32 %v5470, %v5506
    %v5515 = vsub.f32 %v5471, %v5507
    %v5516 = vsub.f32 %v5472, %v5508
    %v5517 = vsub.f32 %v5473, %v5509
    %v5518 = vsub.f32 %v5474, %v5510
    %v5519 = vsub.f32 %v5475, %v5511
    %v5520 = vsub.f32 %v5476, %v5512
    %v5521 = vmul.f32 %v5513, %v5513
    %v5522 = vmul.f32 %v5514, %v5514
    %v5523 = vmul.f32 %v5515, %v5515
    %v5524 = vmul.f32 %v5516, %v5516
    %v5525 = vmul.f32 %v5517, %v5517
    %v5526 = vmul.f32 %v5518, %v5518
    %v5527 = vmul.f32 %v5519, %v5519
    %v5528 = vmul.f32 %v5520, %v5520
    %v5529 = vsel %vm218, %v5521, 0.0
    %5530 = vadd.xlane.f32.xlu0 %v5529
    %v5531 = vpop.xlane.xlu0 %5530
    %v5532 = vsel %vm218, %v5522, 0.0
    %5533 = vadd.xlane.f32.xlu0 %v5532
    %v5534 = vpop.xlane.xlu0 %5533
    %v5535 = vsel %vm218, %v5523, 0.0
    %5536 = vadd.xlane.f32.xlu0 %v5535
    %v5537 = vpop.xlane.xlu0 %5536
    %v5538 = vsel %vm218, %v5524, 0.0
    %5539 = vadd.xlane.f32.xlu0 %v5538
    %v5540 = vpop.xlane.xlu0 %5539
    %v5541 = vsel %vm218, %v5525, 0.0
    %5542 = vadd.xlane.f32.xlu0 %v5541
    %v5543 = vpop.xlane.xlu0 %5542
    %v5544 = vsel %vm218, %v5526, 0.0
    %5545 = vadd.xlane.f32.xlu0 %v5544
    %v5546 = vpop.xlane.xlu0 %5545
    %v5547 = vsel %vm218, %v5527, 0.0
    %5548 = vadd.xlane.f32.xlu0 %v5547
    %v5549 = vpop.xlane.xlu0 %5548
    %v5550 = vsel %vm218, %v5528, 0.0
    %5551 = vadd.xlane.f32.xlu0 %v5550
    %v5552 = vpop.xlane.xlu0 %5551
    %v5553 = vmul.f32 %v5531, %v249
    %v5554 = vmul.f32 %v5534, %v249
    %v5555 = vmul.f32 %v5537, %v249
    %v5556 = vmul.f32 %v5540, %v249
    %v5557 = vmul.f32 %v5543, %v249
    %v5558 = vmul.f32 %v5546, %v249
    %v5559 = vmul.f32 %v5549, %v249
    %v5560 = vmul.f32 %v5552, %v249
    %v5561 = vadd.f32 %v5553, 1e-05
    %v5562 = vadd.f32 %v5554, 1e-05
    %v5563 = vadd.f32 %v5555, 1e-05
    %v5564 = vadd.f32 %v5556, 1e-05
    %v5565 = vadd.f32 %v5557, 1e-05
    %v5566 = vadd.f32 %v5558, 1e-05
    %v5567 = vadd.f32 %v5559, 1e-05
    %v5568 = vadd.f32 %v5560, 1e-05
    %v5569 = vrsqrt.pop %v5561
    %v5570 = vmul.f32 %v5569, %v5561
    %v5571 = vmul.f32 %v5570, %v5569
    %v5572 = vmul.f32 0.5, %v5571
    %v5573 = vsub.f32 1.5, %v5572
    %v5574 = vmul.f32 %v5569, %v5573
    %vm5575 = vweird.f32 %v5561
    %vm5576 = vweird.f32 %v5569
    %vm5577 = vmor %vm5575, %vm5576
    %v5578 = vsel %vm5577, %v5569, %v5574
    %v5579 = vrsqrt.pop %v5562
    %v5580 = vmul.f32 %v5579, %v5562
    %v5581 = vmul.f32 %v5580, %v5579
    %v5582 = vmul.f32 0.5, %v5581
    %v5583 = vsub.f32 1.5, %v5582
    %v5584 = vmul.f32 %v5579, %v5583
    %vm5585 = vweird.f32 %v5562
    %vm5586 = vweird.f32 %v5579
    %vm5587 = vmor %vm5585, %vm5586
    %v5588 = vsel %vm5587, %v5579, %v5584
    %v5589 = vrsqrt.pop %v5563
    %v5590 = vmul.f32 %v5589, %v5563
    %v5591 = vmul.f32 %v5590, %v5589
    %v5592 = vmul.f32 0.5, %v5591
    %v5593 = vsub.f32 1.5, %v5592
    %v5594 = vmul.f32 %v5589, %v5593
    %vm5595 = vweird.f32 %v5563
    %vm5596 = vweird.f32 %v5589
    %vm5597 = vmor %vm5595, %vm5596
    %v5598 = vsel %vm5597, %v5589, %v5594
    %v5599 = vrsqrt.pop %v5564
    %v5600 = vmul.f32 %v5599, %v5564
    %v5601 = vmul.f32 %v5600, %v5599
    %v5602 = vmul.f32 0.5, %v5601
    %v5603 = vsub.f32 1.5, %v5602
    %v5604 = vmul.f32 %v5599, %v5603
    %vm5605 = vweird.f32 %v5564
    %vm5606 = vweird.f32 %v5599
    %vm5607 = vmor %vm5605, %vm5606
    %v5608 = vsel %vm5607, %v5599, %v5604
    %v5609 = vrsqrt.pop %v5565
    %v5610 = vmul.f32 %v5609, %v5565
    %v5611 = vmul.f32 %v5610, %v5609
    %v5612 = vmul.f32 0.5, %v5611
    %v5613 = vsub.f32 1.5, %v5612
    %v5614 = vmul.f32 %v5609, %v5613
    %vm5615 = vweird.f32 %v5565
    %vm5616 = vweird.f32 %v5609
    %vm5617 = vmor %vm5615, %vm5616
    %v5618 = vsel %vm5617, %v5609, %v5614
    %v5619 = vrsqrt.pop %v5566
    %v5620 = vmul.f32 %v5619, %v5566
    %v5621 = vmul.f32 %v5620, %v5619
    %v5622 = vmul.f32 0.5, %v5621
    %v5623 = vsub.f32 1.5, %v5622
    %v5624 = vmul.f32 %v5619, %v5623
    %vm5625 = vweird.f32 %v5566
    %vm5626 = vweird.f32 %v5619
    %vm5627 = vmor %vm5625, %vm5626
    %v5628 = vsel %vm5627, %v5619, %v5624
    %v5629 = vrsqrt.pop %v5567
    %v5630 = vmul.f32 %v5629, %v5567
    %v5631 = vmul.f32 %v5630, %v5629
    %v5632 = vmul.f32 0.5, %v5631
    %v5633 = vsub.f32 1.5, %v5632
    %v5634 = vmul.f32 %v5629, %v5633
    %vm5635 = vweird.f32 %v5567
    %vm5636 = vweird.f32 %v5629
    %vm5637 = vmor %vm5635, %vm5636
    %v5638 = vsel %vm5637, %v5629, %v5634
    %v5639 = vrsqrt.pop %v5568
    %v5640 = vmul.f32 %v5639, %v5568
    %v5641 = vmul.f32 %v5640, %v5639
    %v5642 = vmul.f32 0.5, %v5641
    %v5643 = vsub.f32 1.5, %v5642
    %v5644 = vmul.f32 %v5639, %v5643
    %vm5645 = vweird.f32 %v5568
    %vm5646 = vweird.f32 %v5639
    %vm5647 = vmor %vm5645, %vm5646
    %v5648 = vsel %vm5647, %v5639, %v5644
    %v5649 = vmul.f32 %v5513, %v5578
    %v5650 = vmul.f32 %v5514, %v5588
    %v5651 = vmul.f32 %v5515, %v5598
    %v5652 = vmul.f32 %v5516, %v5608
    %v5653 = vmul.f32 %v5517, %v5618
    %v5654 = vmul.f32 %v5518, %v5628
    %v5655 = vmul.f32 %v5519, %v5638
    %v5656 = vmul.f32 %v5520, %v5648
    %v5658 = vperm.slane %v5478, 0
    %v5660 = vmul.f32 %v5649, %v5658
    %v5661 = vmul.f32 %v5650, %v5658
    %v5662 = vmul.f32 %v5651, %v5658
    %v5663 = vmul.f32 %v5652, %v5658
    %v5664 = vmul.f32 %v5653, %v5658
    %v5665 = vmul.f32 %v5654, %v5658
    %v5666 = vmul.f32 %v5655, %v5658
    %v5667 = vmul.f32 %v5656, %v5658
    %v5669 = vperm.slane %v5480, 0
    %v5671 = vadd.f32 %v5660, %v5669
    %v5672 = vadd.f32 %v5661, %v5669
    %v5673 = vadd.f32 %v5662, %v5669
    %v5674 = vadd.f32 %v5663, %v5669
    %v5675 = vadd.f32 %v5664, %v5669
    %v5676 = vadd.f32 %v5665, %v5669
    %v5677 = vadd.f32 %v5666, %v5669
    %v5678 = vadd.f32 %v5667, %v5669
    %s5679 = scalar_lea.vmem %s19, 64
    %v5680 = vld [vmem:[%s5679] sm:$0xff]
    %v5681 = vld [vmem:[%s5679 + $0x8] sm:$0xff]
    %v5682 = vld [vmem:[%s5679 + $0x10] sm:$0xff]
    %v5683 = vld [vmem:[%s5679 + $0x18] sm:$0xff]
    %s5684 = scalar_lea.vmem %s20, 2
    %v5685 = vld [vmem:[%s5684] sm:$0x1]
    %v5687 = vperm.slane %v5685, 0
    %v5690 = vsel %vm218, %v5671, 0
    %v5693 = vsel %vm218, %v5672, 0
    %v5696 = vsel %vm218, %v5673, 0
    %v5699 = vsel %vm218, %v5674, 0
    %v5702 = vsel %vm218, %v5675, 0
    %v5705 = vsel %vm218, %v5676, 0
    %v5708 = vsel %vm218, %v5677, 0
    %v5711 = vsel %vm218, %v5678, 0
    %5713 = vmatpush.msra.mxu0 0.0
    %5714 = vmatpush.msra.mxu0 0.0
    %5715 = vmatpush.msra.mxu0 0.0
    %5716 = vmatpush.msra.mxu0 0.0
    %5717 = vmatpush.msra.mxu0 0.0
    %5718 = vmatpush.msra.mxu0 0.0
    %5719 = vmatpush.msra.mxu0 0.0
    %5720 = vmatpush.msra.mxu0 0.0
    %5721 = vmatpush.msra.mxu0 0.0
    %5722 = vmatpush.msra.mxu0 0.0
    %5723 = vmatpush.msra.mxu0 0.0
    %5724 = vmatpush.msra.mxu0 0.0
    %5725 = vmatpush.msra.mxu0 %v5683
    %5726 = vmatpush.msra.mxu0 %v5682
    %5727 = vmatpush.msra.mxu0 %v5681
    %5728 = vmatpush.msra.mxu0 %v5680
    %5729 = vmatmul.f32.gmra.mxu0 %v5690
    %v5730 = vpop.f32.mrf.mxu0
    %v5731 = vadd.f32 %v5687, %v5730
    %5732 = vmatmul.f32.gmra.mxu0 %v5693
    %v5733 = vpop.f32.mrf.mxu0
    %v5734 = vadd.f32 %v5687, %v5733
    %5735 = vmatmul.f32.gmra.mxu0 %v5696
    %v5736 = vpop.f32.mrf.mxu0
    %v5737 = vadd.f32 %v5687, %v5736
    %5738 = vmatmul.f32.gmra.mxu0 %v5699
    %v5739 = vpop.f32.mrf.mxu0
    %v5740 = vadd.f32 %v5687, %v5739
    %5741 = vmatmul.f32.gmra.mxu0 %v5702
    %v5742 = vpop.f32.mrf.mxu0
    %v5743 = vadd.f32 %v5687, %v5742
    %5744 = vmatmul.f32.gmra.mxu0 %v5705
    %v5745 = vpop.f32.mrf.mxu0
    %v5746 = vadd.f32 %v5687, %v5745
    %5747 = vmatmul.f32.gmra.mxu0 %v5708
    %v5748 = vpop.f32.mrf.mxu0
    %v5749 = vadd.f32 %v5687, %v5748
    %5750 = vmatmul.f32.gmra.mxu0 %v5711
    %v5751 = vpop.f32.mrf.mxu0
    %v5752 = vadd.f32 %v5687, %v5751
    %5753 = vdwg.mxu0
    %v5754 = vmul.f32 %v5731, 0.5
    %v5755 = vmul.f32 %v5734, 0.5
    %v5756 = vmul.f32 %v5737, 0.5
    %v5757 = vmul.f32 %v5740, 0.5
    %v5758 = vmul.f32 %v5743, 0.5
    %v5759 = vmul.f32 %v5746, 0.5
    %v5760 = vmul.f32 %v5749, 0.5
    %v5761 = vmul.f32 %v5752, 0.5
    %v5762 = vmul.f32 %v5731, %v1805
    %v5763 = vmul.f32 %v5734, %v1805
    %v5764 = vmul.f32 %v5737, %v1805
    %v5765 = vmul.f32 %v5740, %v1805
    %v5766 = vmul.f32 %v5743, %v1805
    %v5767 = vmul.f32 %v5746, %v1805
    %v5768 = vmul.f32 %v5749, %v1805
    %v5769 = vmul.f32 %v5752, %v1805
    %v5770 = vmul.f32 %v5762, %v5762
    %v5771 = vmin.f32 16.0, %v5770
    %v5772 = vmul.f32 %v5771, 2.1237322e-06
    %v5773 = vadd.f32 %v5772, 0.00028619796
    %v5774 = vmul.f32 %v5771, %v5773
    %v5775 = vadd.f32 %v5774, 0.0036580483
    %v5776 = vmul.f32 %v5771, %v5775
    %v5777 = vadd.f32 %v5776, 0.05243302
    %v5778 = vmul.f32 %v5771, %v5777
    %v5779 = vadd.f32 %v5778, 0.18741608
    %v5780 = vmul.f32 %v5771, %v5779
    %v5781 = vadd.f32 %v5780, 1.1283791
    %v5782 = vmul.f32 %v5762, %v5781
    %v5783 = vmul.f32 %v5771, 3.8918573e-05
    %v5784 = vadd.f32 %v5783, 0.001143296
    %v5785 = vmul.f32 %v5771, %v5784
    %v5786 = vadd.f32 %v5785, 0.014752088
    %v5787 = vmul.f32 %v5771, %v5786
    %v5788 = vadd.f32 %v5787, 0.112945676
    %v5789 = vmul.f32 %v5771, %v5788
    %v5790 = vadd.f32 %v5789, 0.4994258
    %v5791 = vmul.f32 %v5771, %v5790
    %v5792 = vadd.f32 %v5791, 1.0
    %v5793 = vrcp.pop %v5792
    %v5794 = vmul.f32 %v5792, %v5793
    %v5795 = vsub.f32 1.0, %v5794
    %v5796 = vmul.f32 %v5793, %v5795
    %v5797 = vadd.f32 %v5793, %v5796
    %vm5798 = vweird.f32 %v5792
    %vm5799 = vweird.f32 %v5793
    %vm5800 = vmor %vm5798, %vm5799
    %v5801 = vsel %vm5800, %v5793, %v5797
    %v5802 = vand.u32 2147483647, %v5792
    %vm5803 = vcmp.eq.f32.partialorder %v5802, 8.507059e+37
    %v5804 = vand.u32 %v5792, 2147483648
    %v5805 = vor.u32 1.1754944e-38, %v5804
    %v5806 = vsel %vm5803, %v5805, %v5801
    %v5807 = vmul.f32 %v5782, %v5806
    %v5808 = vmin.f32 %v5807, 1.0
    %v5809 = vmax.f32 %v5808, -1.0
    %v5810 = vmul.f32 %v5763, %v5763
    %v5811 = vmin.f32 16.0, %v5810
    %v5812 = vmul.f32 %v5811, 2.1237322e-06
    %v5813 = vadd.f32 %v5812, 0.00028619796
    %v5814 = vmul.f32 %v5811, %v5813
    %v5815 = vadd.f32 %v5814, 0.0036580483
    %v5816 = vmul.f32 %v5811, %v5815
    %v5817 = vadd.f32 %v5816, 0.05243302
    %v5818 = vmul.f32 %v5811, %v5817
    %v5819 = vadd.f32 %v5818, 0.18741608
    %v5820 = vmul.f32 %v5811, %v5819
    %v5821 = vadd.f32 %v5820, 1.1283791
    %v5822 = vmul.f32 %v5763, %v5821
    %v5823 = vmul.f32 %v5811, 3.8918573e-05
    %v5824 = vadd.f32 %v5823, 0.001143296
    %v5825 = vmul.f32 %v5811, %v5824
    %v5826 = vadd.f32 %v5825, 0.014752088
    %v5827 = vmul.f32 %v5811, %v5826
    %v5828 = vadd.f32 %v5827, 0.112945676
    %v5829 = vmul.f32 %v5811, %v5828
    %v5830 = vadd.f32 %v5829, 0.4994258
    %v5831 = vmul.f32 %v5811, %v5830
    %v5832 = vadd.f32 %v5831, 1.0
    %v5833 = vrcp.pop %v5832
    %v5834 = vmul.f32 %v5832, %v5833
    %v5835 = vsub.f32 1.0, %v5834
    %v5836 = vmul.f32 %v5833, %v5835
    %v5837 = vadd.f32 %v5833, %v5836
    %vm5838 = vweird.f32 %v5832
    %vm5839 = vweird.f32 %v5833
    %vm5840 = vmor %vm5838, %vm5839
    %v5841 = vsel %vm5840, %v5833, %v5837
    %v5842 = vand.u32 2147483647, %v5832
    %vm5843 = vcmp.eq.f32.partialorder %v5842, 8.507059e+37
    %v5844 = vand.u32 %v5832, 2147483648
    %v5845 = vor.u32 1.1754944e-38, %v5844
    %v5846 = vsel %vm5843, %v5845, %v5841
    %v5847 = vmul.f32 %v5822, %v5846
    %v5848 = vmin.f32 %v5847, 1.0
    %v5849 = vmax.f32 %v5848, -1.0
    %v5850 = vmul.f32 %v5764, %v5764
    %v5851 = vmin.f32 16.0, %v5850
    %v5852 = vmul.f32 %v5851, 2.1237322e-06
    %v5853 = vadd.f32 %v5852, 0.00028619796
    %v5854 = vmul.f32 %v5851, %v5853
    %v5855 = vadd.f32 %v5854, 0.0036580483
    %v5856 = vmul.f32 %v5851, %v5855
    %v5857 = vadd.f32 %v5856, 0.05243302
    %v5858 = vmul.f32 %v5851, %v5857
    %v5859 = vadd.f32 %v5858, 0.18741608
    %v5860 = vmul.f32 %v5851, %v5859
    %v5861 = vadd.f32 %v5860, 1.1283791
    %v5862 = vmul.f32 %v5764, %v5861
    %v5863 = vmul.f32 %v5851, 3.8918573e-05
    %v5864 = vadd.f32 %v5863, 0.001143296
    %v5865 = vmul.f32 %v5851, %v5864
    %v5866 = vadd.f32 %v5865, 0.014752088
    %v5867 = vmul.f32 %v5851, %v5866
    %v5868 = vadd.f32 %v5867, 0.112945676
    %v5869 = vmul.f32 %v5851, %v5868
    %v5870 = vadd.f32 %v5869, 0.4994258
    %v5871 = vmul.f32 %v5851, %v5870
    %v5872 = vadd.f32 %v5871, 1.0
    %v5873 = vrcp.pop %v5872
    %v5874 = vmul.f32 %v5872, %v5873
    %v5875 = vsub.f32 1.0, %v5874
    %v5876 = vmul.f32 %v5873, %v5875
    %v5877 = vadd.f32 %v5873, %v5876
    %vm5878 = vweird.f32 %v5872
    %vm5879 = vweird.f32 %v5873
    %vm5880 = vmor %vm5878, %vm5879
    %v5881 = vsel %vm5880, %v5873, %v5877
    %v5882 = vand.u32 2147483647, %v5872
    %vm5883 = vcmp.eq.f32.partialorder %v5882, 8.507059e+37
    %v5884 = vand.u32 %v5872, 2147483648
    %v5885 = vor.u32 1.1754944e-38, %v5884
    %v5886 = vsel %vm5883, %v5885, %v5881
    %v5887 = vmul.f32 %v5862, %v5886
    %v5888 = vmin.f32 %v5887, 1.0
    %v5889 = vmax.f32 %v5888, -1.0
    %v5890 = vmul.f32 %v5765, %v5765
    %v5891 = vmin.f32 16.0, %v5890
    %v5892 = vmul.f32 %v5891, 2.1237322e-06
    %v5893 = vadd.f32 %v5892, 0.00028619796
    %v5894 = vmul.f32 %v5891, %v5893
    %v5895 = vadd.f32 %v5894, 0.0036580483
    %v5896 = vmul.f32 %v5891, %v5895
    %v5897 = vadd.f32 %v5896, 0.05243302
    %v5898 = vmul.f32 %v5891, %v5897
    %v5899 = vadd.f32 %v5898, 0.18741608
    %v5900 = vmul.f32 %v5891, %v5899
    %v5901 = vadd.f32 %v5900, 1.1283791
    %v5902 = vmul.f32 %v5765, %v5901
    %v5903 = vmul.f32 %v5891, 3.8918573e-05
    %v5904 = vadd.f32 %v5903, 0.001143296
    %v5905 = vmul.f32 %v5891, %v5904
    %v5906 = vadd.f32 %v5905, 0.014752088
    %v5907 = vmul.f32 %v5891, %v5906
    %v5908 = vadd.f32 %v5907, 0.112945676
    %v5909 = vmul.f32 %v5891, %v5908
    %v5910 = vadd.f32 %v5909, 0.4994258
    %v5911 = vmul.f32 %v5891, %v5910
    %v5912 = vadd.f32 %v5911, 1.0
    %v5913 = vrcp.pop %v5912
    %v5914 = vmul.f32 %v5912, %v5913
    %v5915 = vsub.f32 1.0, %v5914
    %v5916 = vmul.f32 %v5913, %v5915
    %v5917 = vadd.f32 %v5913, %v5916
    %vm5918 = vweird.f32 %v5912
    %vm5919 = vweird.f32 %v5913
    %vm5920 = vmor %vm5918, %vm5919
    %v5921 = vsel %vm5920, %v5913, %v5917
    %v5922 = vand.u32 2147483647, %v5912
    %vm5923 = vcmp.eq.f32.partialorder %v5922, 8.507059e+37
    %v5924 = vand.u32 %v5912, 2147483648
    %v5925 = vor.u32 1.1754944e-38, %v5924
    %v5926 = vsel %vm5923, %v5925, %v5921
    %v5927 = vmul.f32 %v5902, %v5926
    %v5928 = vmin.f32 %v5927, 1.0
    %v5929 = vmax.f32 %v5928, -1.0
    %v5930 = vmul.f32 %v5766, %v5766
    %v5931 = vmin.f32 16.0, %v5930
    %v5932 = vmul.f32 %v5931, 2.1237322e-06
    %v5933 = vadd.f32 %v5932, 0.00028619796
    %v5934 = vmul.f32 %v5931, %v5933
    %v5935 = vadd.f32 %v5934, 0.0036580483
    %v5936 = vmul.f32 %v5931, %v5935
    %v5937 = vadd.f32 %v5936, 0.05243302
    %v5938 = vmul.f32 %v5931, %v5937
    %v5939 = vadd.f32 %v5938, 0.18741608
    %v5940 = vmul.f32 %v5931, %v5939
    %v5941 = vadd.f32 %v5940, 1.1283791
    %v5942 = vmul.f32 %v5766, %v5941
    %v5943 = vmul.f32 %v5931, 3.8918573e-05
    %v5944 = vadd.f32 %v5943, 0.001143296
    %v5945 = vmul.f32 %v5931, %v5944
    %v5946 = vadd.f32 %v5945, 0.014752088
    %v5947 = vmul.f32 %v5931, %v5946
    %v5948 = vadd.f32 %v5947, 0.112945676
    %v5949 = vmul.f32 %v5931, %v5948
    %v5950 = vadd.f32 %v5949, 0.4994258
    %v5951 = vmul.f32 %v5931, %v5950
    %v5952 = vadd.f32 %v5951, 1.0
    %v5953 = vrcp.pop %v5952
    %v5954 = vmul.f32 %v5952, %v5953
    %v5955 = vsub.f32 1.0, %v5954
    %v5956 = vmul.f32 %v5953, %v5955
    %v5957 = vadd.f32 %v5953, %v5956
    %vm5958 = vweird.f32 %v5952
    %vm5959 = vweird.f32 %v5953
    %vm5960 = vmor %vm5958, %vm5959
    %v5961 = vsel %vm5960, %v5953, %v5957
    %v5962 = vand.u32 2147483647, %v5952
    %vm5963 = vcmp.eq.f32.partialorder %v5962, 8.507059e+37
    %v5964 = vand.u32 %v5952, 2147483648
    %v5965 = vor.u32 1.1754944e-38, %v5964
    %v5966 = vsel %vm5963, %v5965, %v5961
    %v5967 = vmul.f32 %v5942, %v5966
    %v5968 = vmin.f32 %v5967, 1.0
    %v5969 = vmax.f32 %v5968, -1.0
    %v5970 = vmul.f32 %v5767, %v5767
    %v5971 = vmin.f32 16.0, %v5970
    %v5972 = vmul.f32 %v5971, 2.1237322e-06
    %v5973 = vadd.f32 %v5972, 0.00028619796
    %v5974 = vmul.f32 %v5971, %v5973
    %v5975 = vadd.f32 %v5974, 0.0036580483
    %v5976 = vmul.f32 %v5971, %v5975
    %v5977 = vadd.f32 %v5976, 0.05243302
    %v5978 = vmul.f32 %v5971, %v5977
    %v5979 = vadd.f32 %v5978, 0.18741608
    %v5980 = vmul.f32 %v5971, %v5979
    %v5981 = vadd.f32 %v5980, 1.1283791
    %v5982 = vmul.f32 %v5767, %v5981
    %v5983 = vmul.f32 %v5971, 3.8918573e-05
    %v5984 = vadd.f32 %v5983, 0.001143296
    %v5985 = vmul.f32 %v5971, %v5984
    %v5986 = vadd.f32 %v5985, 0.014752088
    %v5987 = vmul.f32 %v5971, %v5986
    %v5988 = vadd.f32 %v5987, 0.112945676
    %v5989 = vmul.f32 %v5971, %v5988
    %v5990 = vadd.f32 %v5989, 0.4994258
    %v5991 = vmul.f32 %v5971, %v5990
    %v5992 = vadd.f32 %v5991, 1.0
    %v5993 = vrcp.pop %v5992
    %v5994 = vmul.f32 %v5992, %v5993
    %v5995 = vsub.f32 1.0, %v5994
    %v5996 = vmul.f32 %v5993, %v5995
    %v5997 = vadd.f32 %v5993, %v5996
    %vm5998 = vweird.f32 %v5992
    %vm5999 = vweird.f32 %v5993
    %vm6000 = vmor %vm5998, %vm5999
    %v6001 = vsel %vm6000, %v5993, %v5997
    %v6002 = vand.u32 2147483647, %v5992
    %vm6003 = vcmp.eq.f32.partialorder %v6002, 8.507059e+37
    %v6004 = vand.u32 %v5992, 2147483648
    %v6005 = vor.u32 1.1754944e-38, %v6004
    %v6006 = vsel %vm6003, %v6005, %v6001
    %v6007 = vmul.f32 %v5982, %v6006
    %v6008 = vmin.f32 %v6007, 1.0
    %v6009 = vmax.f32 %v6008, -1.0
    %v6010 = vmul.f32 %v5768, %v5768
    %v6011 = vmin.f32 16.0, %v6010
    %v6012 = vmul.f32 %v6011, 2.1237322e-06
    %v6013 = vadd.f32 %v6012, 0.00028619796
    %v6014 = vmul.f32 %v6011, %v6013
    %v6015 = vadd.f32 %v6014, 0.0036580483
    %v6016 = vmul.f32 %v6011, %v6015
    %v6017 = vadd.f32 %v6016, 0.05243302
    %v6018 = vmul.f32 %v6011, %v6017
    %v6019 = vadd.f32 %v6018, 0.18741608
    %v6020 = vmul.f32 %v6011, %v6019
    %v6021 = vadd.f32 %v6020, 1.1283791
    %v6022 = vmul.f32 %v5768, %v6021
    %v6023 = vmul.f32 %v6011, 3.8918573e-05
    %v6024 = vadd.f32 %v6023, 0.001143296
    %v6025 = vmul.f32 %v6011, %v6024
    %v6026 = vadd.f32 %v6025, 0.014752088
    %v6027 = vmul.f32 %v6011, %v6026
    %v6028 = vadd.f32 %v6027, 0.112945676
    %v6029 = vmul.f32 %v6011, %v6028
    %v6030 = vadd.f32 %v6029, 0.4994258
    %v6031 = vmul.f32 %v6011, %v6030
    %v6032 = vadd.f32 %v6031, 1.0
    %v6033 = vrcp.pop %v6032
    %v6034 = vmul.f32 %v6032, %v6033
    %v6035 = vsub.f32 1.0, %v6034
    %v6036 = vmul.f32 %v6033, %v6035
    %v6037 = vadd.f32 %v6033, %v6036
    %vm6038 = vweird.f32 %v6032
    %vm6039 = vweird.f32 %v6033
    %vm6040 = vmor %vm6038, %vm6039
    %v6041 = vsel %vm6040, %v6033, %v6037
    %v6042 = vand.u32 2147483647, %v6032
    %vm6043 = vcmp.eq.f32.partialorder %v6042, 8.507059e+37
    %v6044 = vand.u32 %v6032, 2147483648
    %v6045 = vor.u32 1.1754944e-38, %v6044
    %v6046 = vsel %vm6043, %v6045, %v6041
    %v6047 = vmul.f32 %v6022, %v6046
    %v6048 = vmin.f32 %v6047, 1.0
    %v6049 = vmax.f32 %v6048, -1.0
    %v6050 = vmul.f32 %v5769, %v5769
    %v6051 = vmin.f32 16.0, %v6050
    %v6052 = vmul.f32 %v6051, 2.1237322e-06
    %v6053 = vadd.f32 %v6052, 0.00028619796
    %v6054 = vmul.f32 %v6051, %v6053
    %v6055 = vadd.f32 %v6054, 0.0036580483
    %v6056 = vmul.f32 %v6051, %v6055
    %v6057 = vadd.f32 %v6056, 0.05243302
    %v6058 = vmul.f32 %v6051, %v6057
    %v6059 = vadd.f32 %v6058, 0.18741608
    %v6060 = vmul.f32 %v6051, %v6059
    %v6061 = vadd.f32 %v6060, 1.1283791
    %v6062 = vmul.f32 %v5769, %v6061
    %v6063 = vmul.f32 %v6051, 3.8918573e-05
    %v6064 = vadd.f32 %v6063, 0.001143296
    %v6065 = vmul.f32 %v6051, %v6064
    %v6066 = vadd.f32 %v6065, 0.014752088
    %v6067 = vmul.f32 %v6051, %v6066
    %v6068 = vadd.f32 %v6067, 0.112945676
    %v6069 = vmul.f32 %v6051, %v6068
    %v6070 = vadd.f32 %v6069, 0.4994258
    %v6071 = vmul.f32 %v6051, %v6070
    %v6072 = vadd.f32 %v6071, 1.0
    %v6073 = vrcp.pop %v6072
    %v6074 = vmul.f32 %v6072, %v6073
    %v6075 = vsub.f32 1.0, %v6074
    %v6076 = vmul.f32 %v6073, %v6075
    %v6077 = vadd.f32 %v6073, %v6076
    %vm6078 = vweird.f32 %v6072
    %vm6079 = vweird.f32 %v6073
    %vm6080 = vmor %vm6078, %vm6079
    %v6081 = vsel %vm6080, %v6073, %v6077
    %v6082 = vand.u32 2147483647, %v6072
    %vm6083 = vcmp.eq.f32.partialorder %v6082, 8.507059e+37
    %v6084 = vand.u32 %v6072, 2147483648
    %v6085 = vor.u32 1.1754944e-38, %v6084
    %v6086 = vsel %vm6083, %v6085, %v6081
    %v6087 = vmul.f32 %v6062, %v6086
    %v6088 = vmin.f32 %v6087, 1.0
    %v6089 = vmax.f32 %v6088, -1.0
    %v6090 = vadd.f32 %v5809, 1.0
    %v6091 = vadd.f32 %v5849, 1.0
    %v6092 = vadd.f32 %v5889, 1.0
    %v6093 = vadd.f32 %v5929, 1.0
    %v6094 = vadd.f32 %v5969, 1.0
    %v6095 = vadd.f32 %v6009, 1.0
    %v6096 = vadd.f32 %v6049, 1.0
    %v6097 = vadd.f32 %v6089, 1.0
    %v6098 = vmul.f32 %v5754, %v6090
    %v6099 = vmul.f32 %v5755, %v6091
    %v6100 = vmul.f32 %v5756, %v6092
    %v6101 = vmul.f32 %v5757, %v6093
    %v6102 = vmul.f32 %v5758, %v6094
    %v6103 = vmul.f32 %v5759, %v6095
    %v6104 = vmul.f32 %v5760, %v6096
    %v6105 = vmul.f32 %v5761, %v6097
    %s6106 = scalar_lea.vmem %s21, 256
    %v6107 = vld [vmem:[%s6106] sm:$0xff]
    %v6108 = vld [vmem:[%s6106 + $0x8] sm:$0xff]
    %v6109 = vld [vmem:[%s6106 + $0x10] sm:$0xff]
    %v6110 = vld [vmem:[%s6106 + $0x18] sm:$0xff]
    %v6111 = vld [vmem:[%s6106 + $0x20] sm:$0xff]
    %v6112 = vld [vmem:[%s6106 + $0x28] sm:$0xff]
    %v6113 = vld [vmem:[%s6106 + $0x30] sm:$0xff]
    %v6114 = vld [vmem:[%s6106 + $0x38] sm:$0xff]
    %v6115 = vld [vmem:[%s6106 + $0x40] sm:$0xff]
    %v6116 = vld [vmem:[%s6106 + $0x48] sm:$0xff]
    %v6117 = vld [vmem:[%s6106 + $0x50] sm:$0xff]
    %v6118 = vld [vmem:[%s6106 + $0x58] sm:$0xff]
    %v6119 = vld [vmem:[%s6106 + $0x60] sm:$0xff]
    %v6120 = vld [vmem:[%s6106 + $0x68] sm:$0xff]
    %v6121 = vld [vmem:[%s6106 + $0x70] sm:$0xff]
    %v6122 = vld [vmem:[%s6106 + $0x78] sm:$0xff]
    %s6123 = scalar_lea.vmem %s22, 2
    %v6124 = vld [vmem:[%s6123] sm:$0x1]
    %v6126 = vperm.slane %v6124, 0
    %6128 = vmatpush.msra.mxu0 %v6122
    %6129 = vmatpush.msra.mxu0 %v6121
    %6130 = vmatpush.msra.mxu0 %v6120
    %6131 = vmatpush.msra.mxu0 %v6119
    %6132 = vmatpush.msra.mxu0 %v6118
    %6133 = vmatpush.msra.mxu0 %v6117
    %6134 = vmatpush.msra.mxu0 %v6116
    %6135 = vmatpush.msra.mxu0 %v6115
    %6136 = vmatpush.msra.mxu0 %v6114
    %6137 = vmatpush.msra.mxu0 %v6113
    %6138 = vmatpush.msra.mxu0 %v6112
    %6139 = vmatpush.msra.mxu0 %v6111
    %6140 = vmatpush.msra.mxu0 %v6110
    %6141 = vmatpush.msra.mxu0 %v6109
    %6142 = vmatpush.msra.mxu0 %v6108
    %6143 = vmatpush.msra.mxu0 %v6107
    %6144 = vmatmul.f32.gmra.mxu0 %v6098
    %v6145 = vpop.f32.mrf.mxu0
    %v6146 = vadd.f32 %v6126, %v6145
    %6147 = vmatmul.f32.gmra.mxu0 %v6099
    %v6148 = vpop.f32.mrf.mxu0
    %v6149 = vadd.f32 %v6126, %v6148
    %6150 = vmatmul.f32.gmra.mxu0 %v6100
    %v6151 = vpop.f32.mrf.mxu0
    %v6152 = vadd.f32 %v6126, %v6151
    %6153 = vmatmul.f32.gmra.mxu0 %v6101
    %v6154 = vpop.f32.mrf.mxu0
    %v6155 = vadd.f32 %v6126, %v6154
    %6156 = vmatmul.f32.gmra.mxu0 %v6102
    %v6157 = vpop.f32.mrf.mxu0
    %v6158 = vadd.f32 %v6126, %v6157
    %6159 = vmatmul.f32.gmra.mxu0 %v6103
    %v6160 = vpop.f32.mrf.mxu0
    %v6161 = vadd.f32 %v6126, %v6160
    %6162 = vmatmul.f32.gmra.mxu0 %v6104
    %v6163 = vpop.f32.mrf.mxu0
    %v6164 = vadd.f32 %v6126, %v6163
    %6165 = vmatmul.f32.gmra.mxu0 %v6105
    %v6166 = vpop.f32.mrf.mxu0
    %v6167 = vadd.f32 %v6126, %v6166
    %6168 = vdwg.mxu0
    %v6169 = vadd.f32 %v5469, %v6146
    %v6170 = vadd.f32 %v5470, %v6149
    %v6171 = vadd.f32 %v5471, %v6152
    %v6172 = vadd.f32 %v5472, %v6155
    %v6173 = vadd.f32 %v5473, %v6158
    %v6174 = vadd.f32 %v5474, %v6161
    %v6175 = vadd.f32 %v5475, %v6164
    %v6176 = vadd.f32 %v5476, %v6167
    %6178 = vset.pattern.permute.xlu0 0
    %6179 = vperm.xlu0 %6178, %v89
    %v6180 = vpop.permute.xlu0 %6179
    %6183 = vset.pattern.permute.xlu0 0
    %6184 = vperm.xlu0 %6183, %v90
    %v6185 = vpop.permute.xlu0 %6184
    %6188 = vset.pattern.permute.xlu0 0
    %6189 = vperm.xlu0 %6188, %v91
    %v6190 = vpop.permute.xlu0 %6189
    %6193 = vset.pattern.permute.xlu0 0
    %6194 = vperm.xlu0 %6193, %v92
    %v6195 = vpop.permute.xlu0 %6194
    %6198 = vset.pattern.permute.xlu0 0
    %6199 = vperm.xlu0 %6198, %v93
    %v6200 = vpop.permute.xlu0 %6199
    %6203 = vset.pattern.permute.xlu0 0
    %6204 = vperm.xlu0 %6203, %v94
    %v6205 = vpop.permute.xlu0 %6204
    %6208 = vset.pattern.permute.xlu0 0
    %6209 = vperm.xlu0 %6208, %v95
    %v6210 = vpop.permute.xlu0 %6209
    %6213 = vset.pattern.permute.xlu0 0
    %6214 = vperm.xlu0 %6213, %v96
    %v6215 = vpop.permute.xlu0 %6214
    %v6217 = vmul.f32 %v6169, %v6180
    %v6218 = vmul.f32 %v6170, %v6185
    %v6219 = vmul.f32 %v6171, %v6190
    %v6220 = vmul.f32 %v6172, %v6195
    %v6221 = vmul.f32 %v6173, %v6200
    %v6222 = vmul.f32 %v6174, %v6205
    %v6223 = vmul.f32 %v6175, %v6210
    %v6224 = vmul.f32 %v6176, %v6215
    %v6225 = vsel %vm218, %v6217, 0.0
    %v6226 = vrot.slane %v6225, 4
    %v6227 = vadd.f32 %v6225, %v6226
    %v6228 = vrot.slane %v6227, 2
    %v6229 = vadd.f32 %v6227, %v6228
    %v6230 = vrot.slane %v6229, 1
    %v6231 = vadd.f32 %v6229, %v6230
    %v6232 = vsel %vm218, %v6218, 0.0
    %v6233 = vrot.slane %v6232, 4
    %v6234 = vadd.f32 %v6232, %v6233
    %v6235 = vrot.slane %v6234, 2
    %v6236 = vadd.f32 %v6234, %v6235
    %v6237 = vrot.slane %v6236, 1
    %v6238 = vadd.f32 %v6236, %v6237
    %v6239 = vsel %vm218, %v6219, 0.0
    %v6240 = vrot.slane %v6239, 4
    %v6241 = vadd.f32 %v6239, %v6240
    %v6242 = vrot.slane %v6241, 2
    %v6243 = vadd.f32 %v6241, %v6242
    %v6244 = vrot.slane %v6243, 1
    %v6245 = vadd.f32 %v6243, %v6244
    %v6246 = vsel %vm218, %v6220, 0.0
    %v6247 = vrot.slane %v6246, 4
    %v6248 = vadd.f32 %v6246, %v6247
    %v6249 = vrot.slane %v6248, 2
    %v6250 = vadd.f32 %v6248, %v6249
    %v6251 = vrot.slane %v6250, 1
    %v6252 = vadd.f32 %v6250, %v6251
    %v6253 = vsel %vm218, %v6221, 0.0
    %v6254 = vrot.slane %v6253, 4
    %v6255 = vadd.f32 %v6253, %v6254
    %v6256 = vrot.slane %v6255, 2
    %v6257 = vadd.f32 %v6255, %v6256
    %v6258 = vrot.slane %v6257, 1
    %v6259 = vadd.f32 %v6257, %v6258
    %v6260 = vsel %vm218, %v6222, 0.0
    %v6261 = vrot.slane %v6260, 4
    %v6262 = vadd.f32 %v6260, %v6261
    %v6263 = vrot.slane %v6262, 2
    %v6264 = vadd.f32 %v6262, %v6263
    %v6265 = vrot.slane %v6264, 1
    %v6266 = vadd.f32 %v6264, %v6265
    %v6267 = vsel %vm218, %v6223, 0.0
    %v6268 = vrot.slane %v6267, 4
    %v6269 = vadd.f32 %v6267, %v6268
    %v6270 = vrot.slane %v6269, 2
    %v6271 = vadd.f32 %v6269, %v6270
    %v6272 = vrot.slane %v6271, 1
    %v6273 = vadd.f32 %v6271, %v6272
    %v6274 = vsel %vm218, %v6224, 0.0
    %v6275 = vrot.slane %v6274, 4
    %v6276 = vadd.f32 %v6274, %v6275
    %v6277 = vrot.slane %v6276, 2
    %v6278 = vadd.f32 %v6276, %v6277
    %v6279 = vrot.slane %v6278, 1
    %v6280 = vadd.f32 %v6278, %v6279
    %vm6281 = vcmask 516096
    %v6282 = vsel %vm6281, %v97, 0.0
    %6283 = vadd.xlane.f32.xlu0 %v6282
    %v6284 = vpop.xlane.xlu0 %6283
    %v6285 = vsel %vm6281, %v98, 0.0
    %6286 = vadd.xlane.f32.xlu0 %v6285
    %v6287 = vpop.xlane.xlu0 %6286
    %v6288 = vsel %vm6281, %v99, 0.0
    %6289 = vadd.xlane.f32.xlu0 %v6288
    %v6290 = vpop.xlane.xlu0 %6289
    %v6291 = vsel %vm6281, %v100, 0.0
    %6292 = vadd.xlane.f32.xlu0 %v6291
    %v6293 = vpop.xlane.xlu0 %6292
    %v6294 = vsel %vm6281, %v101, 0.0
    %6295 = vadd.xlane.f32.xlu0 %v6294
    %v6296 = vpop.xlane.xlu0 %6295
    %v6297 = vsel %vm6281, %v102, 0.0
    %6298 = vadd.xlane.f32.xlu0 %v6297
    %v6299 = vpop.xlane.xlu0 %6298
    %v6300 = vsel %vm6281, %v103, 0.0
    %6301 = vadd.xlane.f32.xlu0 %v6300
    %v6302 = vpop.xlane.xlu0 %6301
    %v6303 = vsel %vm6281, %v104, 0.0
    %6304 = vadd.xlane.f32.xlu0 %v6303
    %v6305 = vpop.xlane.xlu0 %6304
    %v6306 = vmul.f32 %v6284, 0.125
    %v6307 = vmul.f32 %v6287, 0.125
    %v6308 = vmul.f32 %v6290, 0.125
    %v6309 = vmul.f32 %v6293, 0.125
    %v6310 = vmul.f32 %v6296, 0.125
    %v6311 = vmul.f32 %v6299, 0.125
    %v6312 = vmul.f32 %v6302, 0.125
    %v6313 = vmul.f32 %v6305, 0.125
    %v6314 = vmax.f32 %v6306, 1.0
    %v6315 = vmax.f32 %v6307, 1.0
    %v6316 = vmax.f32 %v6308, 1.0
    %v6317 = vmax.f32 %v6309, 1.0
    %v6318 = vmax.f32 %v6310, 1.0
    %v6319 = vmax.f32 %v6311, 1.0
    %v6320 = vmax.f32 %v6312, 1.0
    %v6321 = vmax.f32 %v6313, 1.0
    %v6322 = vperm.slane %v6314, 0
    %v6323 = vperm.slane %v6315, 0
    %v6324 = vperm.slane %v6316, 0
    %v6325 = vperm.slane %v6317, 0
    %v6326 = vperm.slane %v6318, 0
    %v6327 = vperm.slane %v6319, 0
    %v6328 = vperm.slane %v6320, 0
    %v6329 = vperm.slane %v6321, 0
    %v6330 = vrcp.pop %v6322
    %v6331 = vmul.f32 %v6322, %v6330
    %v6332 = vsub.f32 1.0, %v6331
    %v6333 = vmul.f32 %v6330, %v6332
    %v6334 = vadd.f32 %v6330, %v6333
    %vm6335 = vweird.f32 %v6322
    %vm6336 = vweird.f32 %v6330
    %vm6337 = vmor %vm6335, %vm6336
    %v6338 = vsel %vm6337, %v6330, %v6334
    %v6339 = vand.u32 2147483647, %v6322
    %vm6340 = vcmp.eq.f32.partialorder %v6339, 8.507059e+37
    %v6341 = vand.u32 %v6322, 2147483648
    %v6342 = vor.u32 1.1754944e-38, %v6341
    %v6343 = vsel %vm6340, %v6342, %v6338
    %v6344 = vmul.f32 %v6231, %v6343
    %v6345 = vrcp.pop %v6323
    %v6346 = vmul.f32 %v6323, %v6345
    %v6347 = vsub.f32 1.0, %v6346
    %v6348 = vmul.f32 %v6345, %v6347
    %v6349 = vadd.f32 %v6345, %v6348
    %vm6350 = vweird.f32 %v6323
    %vm6351 = vweird.f32 %v6345
    %vm6352 = vmor %vm6350, %vm6351
    %v6353 = vsel %vm6352, %v6345, %v6349
    %v6354 = vand.u32 2147483647, %v6323
    %vm6355 = vcmp.eq.f32.partialorder %v6354, 8.507059e+37
    %v6356 = vand.u32 %v6323, 2147483648
    %v6357 = vor.u32 1.1754944e-38, %v6356
    %v6358 = vsel %vm6355, %v6357, %v6353
    %v6359 = vmul.f32 %v6238, %v6358
    %v6360 = vrcp.pop %v6324
    %v6361 = vmul.f32 %v6324, %v6360
    %v6362 = vsub.f32 1.0, %v6361
    %v6363 = vmul.f32 %v6360, %v6362
    %v6364 = vadd.f32 %v6360, %v6363
    %vm6365 = vweird.f32 %v6324
    %vm6366 = vweird.f32 %v6360
    %vm6367 = vmor %vm6365, %vm6366
    %v6368 = vsel %vm6367, %v6360, %v6364
    %v6369 = vand.u32 2147483647, %v6324
    %vm6370 = vcmp.eq.f32.partialorder %v6369, 8.507059e+37
    %v6371 = vand.u32 %v6324, 2147483648
    %v6372 = vor.u32 1.1754944e-38, %v6371
    %v6373 = vsel %vm6370, %v6372, %v6368
    %v6374 = vmul.f32 %v6245, %v6373
    %v6375 = vrcp.pop %v6325
    %v6376 = vmul.f32 %v6325, %v6375
    %v6377 = vsub.f32 1.0, %v6376
    %v6378 = vmul.f32 %v6375, %v6377
    %v6379 = vadd.f32 %v6375, %v6378
    %vm6380 = vweird.f32 %v6325
    %vm6381 = vweird.f32 %v6375
    %vm6382 = vmor %vm6380, %vm6381
    %v6383 = vsel %vm6382, %v6375, %v6379
    %v6384 = vand.u32 2147483647, %v6325
    %vm6385 = vcmp.eq.f32.partialorder %v6384, 8.507059e+37
    %v6386 = vand.u32 %v6325, 2147483648
    %v6387 = vor.u32 1.1754944e-38, %v6386
    %v6388 = vsel %vm6385, %v6387, %v6383
    %v6389 = vmul.f32 %v6252, %v6388
    %v6390 = vrcp.pop %v6326
    %v6391 = vmul.f32 %v6326, %v6390
    %v6392 = vsub.f32 1.0, %v6391
    %v6393 = vmul.f32 %v6390, %v6392
    %v6394 = vadd.f32 %v6390, %v6393
    %vm6395 = vweird.f32 %v6326
    %vm6396 = vweird.f32 %v6390
    %vm6397 = vmor %vm6395, %vm6396
    %v6398 = vsel %vm6397, %v6390, %v6394
    %v6399 = vand.u32 2147483647, %v6326
    %vm6400 = vcmp.eq.f32.partialorder %v6399, 8.507059e+37
    %v6401 = vand.u32 %v6326, 2147483648
    %v6402 = vor.u32 1.1754944e-38, %v6401
    %v6403 = vsel %vm6400, %v6402, %v6398
    %v6404 = vmul.f32 %v6259, %v6403
    %v6405 = vrcp.pop %v6327
    %v6406 = vmul.f32 %v6327, %v6405
    %v6407 = vsub.f32 1.0, %v6406
    %v6408 = vmul.f32 %v6405, %v6407
    %v6409 = vadd.f32 %v6405, %v6408
    %vm6410 = vweird.f32 %v6327
    %vm6411 = vweird.f32 %v6405
    %vm6412 = vmor %vm6410, %vm6411
    %v6413 = vsel %vm6412, %v6405, %v6409
    %v6414 = vand.u32 2147483647, %v6327
    %vm6415 = vcmp.eq.f32.partialorder %v6414, 8.507059e+37
    %v6416 = vand.u32 %v6327, 2147483648
    %v6417 = vor.u32 1.1754944e-38, %v6416
    %v6418 = vsel %vm6415, %v6417, %v6413
    %v6419 = vmul.f32 %v6266, %v6418
    %v6420 = vrcp.pop %v6328
    %v6421 = vmul.f32 %v6328, %v6420
    %v6422 = vsub.f32 1.0, %v6421
    %v6423 = vmul.f32 %v6420, %v6422
    %v6424 = vadd.f32 %v6420, %v6423
    %vm6425 = vweird.f32 %v6328
    %vm6426 = vweird.f32 %v6420
    %vm6427 = vmor %vm6425, %vm6426
    %v6428 = vsel %vm6427, %v6420, %v6424
    %v6429 = vand.u32 2147483647, %v6328
    %vm6430 = vcmp.eq.f32.partialorder %v6429, 8.507059e+37
    %v6431 = vand.u32 %v6328, 2147483648
    %v6432 = vor.u32 1.1754944e-38, %v6431
    %v6433 = vsel %vm6430, %v6432, %v6428
    %v6434 = vmul.f32 %v6273, %v6433
    %v6435 = vrcp.pop %v6329
    %v6436 = vmul.f32 %v6329, %v6435
    %v6437 = vsub.f32 1.0, %v6436
    %v6438 = vmul.f32 %v6435, %v6437
    %v6439 = vadd.f32 %v6435, %v6438
    %vm6440 = vweird.f32 %v6329
    %vm6441 = vweird.f32 %v6435
    %vm6442 = vmor %vm6440, %vm6441
    %v6443 = vsel %vm6442, %v6435, %v6439
    %v6444 = vand.u32 2147483647, %v6329
    %vm6445 = vcmp.eq.f32.partialorder %v6444, 8.507059e+37
    %v6446 = vand.u32 %v6329, 2147483648
    %v6447 = vor.u32 1.1754944e-38, %v6446
    %v6448 = vsel %vm6445, %v6447, %v6443
    %v6449 = vmul.f32 %v6280, %v6448
    %v6450 = vld [vmem:[%s23] sm:$0xff]
    %v6451 = vld [vmem:[%s23 + $0x8] sm:$0xff]
    %v6452 = vld [vmem:[%s23 + $0x10] sm:$0xff]
    %v6453 = vld [vmem:[%s23 + $0x18] sm:$0xff]
    %v6454 = vld [vmem:[%s24] sm:$0x1]
    %v6456 = vperm.slane %v6454, 0
    %vm6466 = vcmask 1041409
    %v6467 = vsel %vm6466, %v6359, %v6344
    %vm6468 = vcmask 1042434
    %v6469 = vsel %vm6468, %v6374, %v6467
    %vm6470 = vcmask 1043459
    %v6471 = vsel %vm6470, %v6389, %v6469
    %vm6472 = vcmask 1044484
    %v6473 = vsel %vm6472, %v6404, %v6471
    %vm6474 = vcmask 1045509
    %v6475 = vsel %vm6474, %v6419, %v6473
    %vm6476 = vcmask 1046534
    %v6477 = vsel %vm6476, %v6434, %v6475
    %vm6478 = vcmask 1047559
    %v6479 = vsel %vm6478, %v6449, %v6477
    %v6480 = vsel %vm218, %v6479, 0
    %6482 = vmatpush.msra.mxu0 0.0
    %6483 = vmatpush.msra.mxu0 0.0
    %6484 = vmatpush.msra.mxu0 0.0
    %6485 = vmatpush.msra.mxu0 0.0
    %6486 = vmatpush.msra.mxu0 0.0
    %6487 = vmatpush.msra.mxu0 0.0
    %6488 = vmatpush.msra.mxu0 0.0
    %6489 = vmatpush.msra.mxu0 0.0
    %6490 = vmatpush.msra.mxu0 0.0
    %6491 = vmatpush.msra.mxu0 0.0
    %6492 = vmatpush.msra.mxu0 0.0
    %6493 = vmatpush.msra.mxu0 0.0
    %6494 = vmatpush.msra.mxu0 %v6453
    %6495 = vmatpush.msra.mxu0 %v6452
    %6496 = vmatpush.msra.mxu0 %v6451
    %6497 = vmatpush.msra.mxu0 %v6450
    %6498 = vmatmul.f32.gmra.mxu0 %v6480
    %v6499 = vpop.f32.mrf.mxu0
    %v6500 = vadd.f32 %v6456, %v6499
    %6501 = vdwg.mxu0
    %6502 = vst [vmem:[#allocation2] sm:$0xff] %v6500
    // Predicated region
    $region102: #{tpu_custom_call.1} parent=1 // pred_check
      _
    $region103: #{tpu_custom_call.1} parent=1 // pred_check_branch
      %6504 = sbr.rel (0) target = $region105
    $region104: #{tpu_custom_call.1} parent=1 // pred_region
      %6506 = vsyncadd [#allocation3], 0
      %s6508 = sshll.u32 [#allocation2], 4
      %s6509 = int_to_ptr.vmem [resolvable:$true] %s6508
      %s6510 = sshll.u32 %s25, 4
      %s6511 = int_to_ptr.hbm [resolvable:$true] %s6510
      %6513 = dma.vmem_to_hbm [thread:$0]  %s6509, 128, %s6511, [#allocation3]
    $region105: #{tpu_custom_call.1} parent=1 // pred_fallthru
      _
    // Predicated region
    $region106: #{tpu_custom_call.1} parent=1 // pred_check
      _
    $region107: #{tpu_custom_call.1} parent=1 // pred_check_branch
      %6515 = sbr.rel (0) target = $region109
    $region108: #{tpu_custom_call.1} parent=1 // pred_region
      %6517 = dma.done [#allocation3], 128
    $region109: #{tpu_custom_call.1} parent=1 // pred_fallthru
      _
    %6518 = vsyncpa [#allocation3], 1

</llo_original>
